<compile_context>
chip_gen: v5e
topology: v5e:2x2
jax: 0.10.0
libtpu: 0.0.40
codegen_flags: <defaults>
</compile_context>

<pallas_src>
import functools

import jax
import jax.numpy as jnp
from jax.experimental import pallas as pl
from jax.experimental.pallas import tpu as pltpu

VMEM_LIMIT = 32 * 1024 * 1024  # safe on v5e/v6e/v7x; peak kernel use is ~8 MB


def _round_up(x, m):
    return (x + m - 1) // m * m


# ----------------------------- layer-1 conv ---------------------------------
# Input already im2col'd (bf16) in the wrapper over the padded output width:
# (1, OH*W_s, 75) x (75, 128) -> one MXU matmul.

def _conv1_kernel(xc_ref, w_ref, o_ref, s_ref, ss_ref, *, valid_w):
    _, oh, w_s, cout = o_ref.shape
    acc = jnp.dot(xc_ref[0], w_ref[...], preferred_element_type=jnp.float32)
    acc3 = acc.reshape(oh, w_s, cout)                     # W_s % 8 == 0: aligned
    col = jax.lax.broadcasted_iota(jnp.int32, acc3.shape, 1)
    acc3 = jnp.where(col < valid_w, acc3, 0.0)            # zero the pad columns
    o_ref[0] = acc3.astype(o_ref.dtype)
    # per-batch-element per-channel stats of the raw conv output (for BN fold)
    s_ref[...] = jnp.sum(acc3, axis=(0, 1))[None, None, :]
    ss_ref[...] = jnp.sum(acc3 * acc3, axis=(0, 1))[None, None, :]


def conv1_call(x_col, w1col, oh, w_s, valid_w):
    n, p, k = x_col.shape
    cout = w1col.shape[1]
    kernel = functools.partial(_conv1_kernel, valid_w=valid_w)
    return pl.pallas_call(
        kernel,
        out_shape=(jax.ShapeDtypeStruct((n, oh, w_s, cout), jnp.bfloat16),
                   jax.ShapeDtypeStruct((n, 1, cout), jnp.float32),
                   jax.ShapeDtypeStruct((n, 1, cout), jnp.float32)),
        grid=(n,),
        in_specs=[
            pl.BlockSpec((1, p, k), lambda i: (i, 0, 0)),
            pl.BlockSpec((k, cout), lambda i: (0, 0)),
        ],
        out_specs=(pl.BlockSpec((1, oh, w_s, cout), lambda i: (i, 0, 0, 0)),
                   pl.BlockSpec((1, 1, cout), lambda i: (i, 0, 0)),
                   pl.BlockSpec((1, 1, cout), lambda i: (i, 0, 0))),
        compiler_params=pltpu.CompilerParams(
            dimension_semantics=("parallel",),
            vmem_limit_bytes=VMEM_LIMIT),
    )(x_col, w1col)


# --------------- fused [BN+ReLU(+pool)] -> conv kernel (layers 2-4) ----------

def _fused_conv_kernel(y_ref, sc_ref, bi_ref, w_ref, o_ref, s_ref, ss_ref,
                       *, ksz, pre_pool, valid_w):
    scale = sc_ref[0][None, None, :]
    bias = bi_ref[0][None, None, :]
    # Folded training-mode BN + ReLU of the PREVIOUS layer (f32 math).
    a = jnp.maximum(y_ref[0].astype(jnp.float32) * scale + bias, 0.0)

    if pre_pool:
        # 2x2/stride-2 maxpool, copy-free reshapes (no strided ref slicing):
        h, w, c = a.shape
        a = jnp.max(a.reshape(h // 2, 2, w, c), axis=1)    # H pairs (outer split)
        a = a.reshape(h // 2, w // 2, 2 * c)               # W pair -> lane block
        a = jnp.maximum(a[:, :, :c], a[:, :, c:])          # lane-aligned max

    a = a.astype(jnp.bfloat16)                             # bf16 patch assembly
    h, w, cin = a.shape
    oh = h - ksz + 1

    # im2col over the full padded width: column shifts as wrap-around rolls.
    # Wrapped columns only land in output columns >= valid_w (masked below).
    shifted = [a] + [jnp.roll(a, -j, axis=1) for j in range(1, ksz)]
    pieces = [shifted[j][i:i + oh] for i in range(ksz) for j in range(ksz)]
    patches = jnp.concatenate(pieces, axis=-1).reshape(oh * w, ksz * ksz * cin)

    acc = jnp.dot(patches, w_ref[...], preferred_element_type=jnp.float32)
    cout = acc.shape[-1]
    acc3 = acc.reshape(oh, w, cout)                        # aligned (w % 8 == 0)
    col = jax.lax.broadcasted_iota(jnp.int32, acc3.shape, 1)
    acc3 = jnp.where(col < valid_w, acc3, 0.0)

    o_ref[0] = acc3.astype(o_ref.dtype)
    s_ref[...] = jnp.sum(acc3, axis=(0, 1))[None, None, :]
    ss_ref[...] = jnp.sum(acc3 * acc3, axis=(0, 1))[None, None, :]


def fused_conv_call(y, scale, bias, w_col, *, ksz, pre_pool, valid_out_w):
    n, hin, win, cin = y.shape
    h, w_s = (hin // 2, win // 2) if pre_pool else (hin, win)
    oh = h - ksz + 1
    kdim, cout = w_col.shape
    kernel = functools.partial(_fused_conv_kernel, ksz=ksz, pre_pool=pre_pool,
                               valid_w=valid_out_w)
    return pl.pallas_call(
        kernel,
        out_shape=(jax.ShapeDtypeStruct((n, oh, w_s, cout), jnp.bfloat16),
                   jax.ShapeDtypeStruct((n, 1, cout), jnp.float32),
                   jax.ShapeDtypeStruct((n, 1, cout), jnp.float32)),
        grid=(n,),
        in_specs=[
            pl.BlockSpec((1, hin, win, cin), lambda i: (i, 0, 0, 0)),
            pl.BlockSpec((1, cin), lambda i: (0, 0)),
            pl.BlockSpec((1, cin), lambda i: (0, 0)),
            pl.BlockSpec((kdim, cout), lambda i: (0, 0)),
        ],
        out_specs=(pl.BlockSpec((1, oh, w_s, cout), lambda i: (i, 0, 0, 0)),
                   pl.BlockSpec((1, 1, cout), lambda i: (i, 0, 0)),
                   pl.BlockSpec((1, 1, cout), lambda i: (i, 0, 0))),
        compiler_params=pltpu.CompilerParams(
            dimension_semantics=("parallel",),
            vmem_limit_bytes=VMEM_LIMIT),
    )(y, scale.reshape(1, cin), bias.reshape(1, cin), w_col)


# ------------------------------ BN stat folding ------------------------------

def fold_bn(s, ss, count, gamma, beta, eps=1e-5):
    # Training-mode BatchNorm: batch mean + biased variance over (N, H, W).
    mean = jnp.sum(s, axis=0) / count
    var = jnp.maximum(jnp.sum(ss, axis=0) / count - mean * mean, 0.0)
    scale = gamma * jax.lax.rsqrt(var + eps)
    bias = beta - mean * scale
    return scale, bias


# ------------------------------- forward pass --------------------------------

def base_forward(x, pp):
    n, h, w, cin = x.shape
    k1 = 5
    oh1, vw1 = h - k1 + 1, w - k1 + 1             # 28, 28
    w1s = _round_up(vw1, 8)                        # padded output width: 32
    # Layer-1 im2col in the wrapper (bf16) over the padded output width.
    xp = jnp.pad(x, ((0, 0), (0, 0), (0, w1s + k1 - 1 - w), (0, 0)))
    x_col = jnp.concatenate(
        [xp[:, i:i + oh1, j:j + w1s, :] for i in range(k1) for j in range(k1)],
        axis=-1).reshape(n, oh1 * w1s, k1 * k1 * cin).astype(jnp.bfloat16)

    y1, s1, ss1 = conv1_call(x_col, pp["w1col"], oh1, w1s, vw1)
    c1 = pp["g1"].shape[0]                         # real conv1 channels (64)
    sc1, bi1 = fold_bn(s1[:, 0, :c1], ss1[:, 0, :c1], n * oh1 * vw1,
                       pp["g1"], pp["be1"])
    padc = y1.shape[-1] - c1                       # zero affine on pad channels
    sc1 = jnp.concatenate([sc1, jnp.zeros((padc,), sc1.dtype)])
    bi1 = jnp.concatenate([bi1, jnp.zeros((padc,), bi1.dtype)])

    vw2 = vw1 - 2                                  # 26
    y2, s2, ss2 = fused_conv_call(y1, sc1, bi1, pp["w2col"],
                                  ksz=3, pre_pool=False, valid_out_w=vw2)
    sc2, bi2 = fold_bn(s2[:, 0], ss2[:, 0], n * y2.shape[1] * vw2,
                       pp["g2"], pp["be2"])

    vw3 = vw2 // 2 - 2                             # 11
    y3, s3, ss3 = fused_conv_call(y2, sc2, bi2, pp["w3col"],
                                  ksz=3, pre_pool=True, valid_out_w=vw3)
    sc3, bi3 = fold_bn(s3[:, 0], ss3[:, 0], n * y3.shape[1] * vw3,
                       pp["g3"], pp["be3"])

    vw4 = vw3 - 2                                  # 9
    y4, s4, ss4 = fused_conv_call(y3, sc3, bi3, pp["w4col"],
                                  ksz=3, pre_pool=False, valid_out_w=vw4)
    sc4, bi4 = fold_bn(s4[:, 0], ss4[:, 0], n * y4.shape[1] * vw4,
                       pp["g4"], pp["be4"])

    # Final BN + ReLU + 2x2/2 maxpool: ~41 KB -> plain XLA epilogue (review).
    oh4 = y4.shape[1]
    a = jnp.maximum(y4[:, :, :vw4, :].astype(jnp.float32)
                    * sc4[None, None, None, :] + bi4[None, None, None, :], 0.0)
    ph, pw = oh4 // 2, vw4 // 2                    # floor-mode pool: 4, 4
    a = a[:, :2 * ph, :2 * pw, :].reshape(n, ph, 2, pw, 2, a.shape[-1])
    return a.max(axis=(2, 4))


# ------------------------------ params / prep --------------------------------

def init_params(key):
    specs = [  # (kh, kw, cin, cout) matching nn.Conv2d(3,64,5,1) etc.
        (5, 5, 3, 64),
        (3, 3, 64, 128),
        (3, 3, 128, 128),
        (3, 3, 128, 128),
    ]
    params = {}
    keys = jax.random.split(key, 2 * len(specs))
    for idx, (kh, kw, cin, cout) in enumerate(specs, start=1):
        kw_key, kb_key = keys[2 * (idx - 1)], keys[2 * (idx - 1) + 1]
        fan_in = kh * kw * cin
        params[f"w{idx}"] = (jax.random.normal(kw_key, (kh, kw, cin, cout),
                                               jnp.float32)
                             / jnp.sqrt(jnp.float32(fan_in)))
        # Conv biases exist in the module but are exactly absorbed by the
        # following training-mode BatchNorm (mean subtraction): intentionally
        # unused in the compute path.
        params[f"b{idx}"] = (jax.random.normal(kb_key, (cout,), jnp.float32)
                             * 0.01)
        params[f"g{idx}"] = jnp.ones((cout,), jnp.float32)    # BN weight = 1
        params[f"be{idx}"] = jnp.zeros((cout,), jnp.float32)  # BN bias = 0
    return params


def prepare_params(p):
    kh1, kw1, cin1, cout1 = p["w1"].shape             # (5, 5, 3, 64)
    c1p = 128                                         # pad conv1 cout 64 -> 128
    w1 = p["w1"].reshape(kh1 * kw1 * cin1, cout1)     # rows in (kh, kw, cin) order
    w1 = jnp.pad(w1, ((0, 0), (0, c1p - cout1)))      # zero out-channels 64..127
    w2 = jnp.pad(p["w2"], ((0, 0), (0, 0), (0, c1p - cout1), (0, 0)))  # cin->128
    pp = {
        "w1col": w1.astype(jnp.bfloat16),                                  # (75, 128)
        "w2col": w2.reshape(-1, w2.shape[-1]).astype(jnp.bfloat16),        # (1152, 128)
        "w3col": p["w3"].reshape(-1, p["w3"].shape[-1]).astype(jnp.bfloat16),
        "w4col": p["w4"].reshape(-1, p["w4"].shape[-1]).astype(jnp.bfloat16),
    }
    for i in range(1, 5):
        pp[f"g{i}"] = p[f"g{i}"]
        pp[f"be{i}"] = p[f"be{i}"]
    return pp


if __name__ == "__main__":
    key = jax.random.PRNGKey(0)
    pkey, xkey = jax.random.split(key)
    params = init_params(pkey)
    pp = prepare_params(params)

    # NHWC input (equivalent to PyTorch NCHW (2, 3, 32, 32)).
    x = jax.random.normal(xkey, (2, 32, 32, 3), jnp.float32)

    fwd = jax.jit(base_forward)
    out = jax.block_until_ready(fwd(x, pp))

    # 32 ->(5x5) 28 ->(3x3) 26 ->pool 13 ->(3x3) 11 ->(3x3) 9 ->pool 4
    assert out.shape == (2, 4, 4, 128), out.shape
    assert bool(jnp.all(jnp.isfinite(out)))
    print("KERNEL_OK")
</pallas_src>

<mosaic_0001>
module attributes {stable_mosaic.version = 11 : i64} {
  func.func @_conv1_kernel(%arg0: i32, %arg1: memref<1x896x75xbf16, #tpu.memory_space<vmem>>, %arg2: memref<75x128xbf16, #tpu.memory_space<vmem>>, %arg3: memref<1x28x32x128xbf16, #tpu.memory_space<vmem>>, %arg4: memref<1x1x128xf32, #tpu.memory_space<vmem>>, %arg5: memref<1x1x128xf32, #tpu.memory_space<vmem>>) attributes {dimension_semantics = [#tpu.dimension_semantics<parallel>], iteration_bounds = array<i64: 2>, scalar_prefetch = 0 : i64, scratch_operands = 0 : i64, tpu.core_type = #tpu.core_type<tc>, window_params = [{transform_indices = @transform_0, window_bounds = array<i64: 1, 896, 75>}, {pipeline_mode = #tpu.pipeline_mode<synchronous>, transform_indices = @transform_1, window_bounds = array<i64: 75, 128>}, {transform_indices = @transform_2, window_bounds = array<i64: 1, 28, 32, 128>}, {transform_indices = @transform_3, window_bounds = array<i64: 1, 1, 128>}, {transform_indices = @transform_4, window_bounds = array<i64: 1, 1, 128>}]} {
    %c0 = arith.constant 0 : index
    %c0_0 = arith.constant 0 : index
    %c0_1 = arith.constant 0 : index
    %0 = vector.load %arg1[%c0, %c0_0, %c0_1] : memref<1x896x75xbf16, #tpu.memory_space<vmem>>, vector<1x896x75xbf16>
    %1 = vector.shape_cast %0 : vector<1x896x75xbf16> to vector<896x75xbf16>
    %c0_2 = arith.constant 0 : index
    %c0_3 = arith.constant 0 : index
    %2 = vector.load %arg2[%c0_2, %c0_3] : memref<75x128xbf16, #tpu.memory_space<vmem>>, vector<75x128xbf16>
    %cst = arith.constant dense<0.000000e+00> : vector<896x128xf32>
    %3 = tpu.matmul %1, %2, %cst {dimension_numbers = #tpu.dot_dimension_numbers<[1], [0], [0], [1], [0, 0, 1, 1], [], []>} : vector<896x75xbf16>, vector<75x128xbf16>, vector<896x128xf32> -> vector<896x128xf32>
    %4 = vector.shape_cast %3 : vector<896x128xf32> to vector<28x32x128xf32>
    %5 = tpu.iota {dimensions = array<i32: 1>} : vector<28x32x128xi32>
    %c28_i32 = arith.constant 28 : i32
    %6 = vector.broadcast %c28_i32 : i32 to vector<28x32x128xi32>
    %7 = arith.cmpi slt, %5, %6 : vector<28x32x128xi32>
    %cst_4 = arith.constant 0.000000e+00 : f32
    %8 = vector.broadcast %cst_4 : f32 to vector<28x32x128xf32>
    %9 = arith.select %7, %4, %8 : vector<28x32x128xi1>, vector<28x32x128xf32>
    %10 = arith.truncf %9 : vector<28x32x128xf32> to vector<28x32x128xbf16>
    %c0_5 = arith.constant 0 : index
    %c0_6 = arith.constant 0 : index
    %c0_7 = arith.constant 0 : index
    %c0_8 = arith.constant 0 : index
    %11 = vector.load %arg3[%c0_5, %c0_6, %c0_7, %c0_8] : memref<1x28x32x128xbf16, #tpu.memory_space<vmem>>, vector<1x28x32x128xbf16>
    %12 = vector.shape_cast %11 : vector<1x28x32x128xbf16> to vector<28x32x128xbf16>
    %13 = vector.shape_cast %10 : vector<28x32x128xbf16> to vector<1x28x32x128xbf16>
    tpu.vector_store %arg3[%c0_5, %c0_6, %c0_7, %c0_8], %13 {strides = array<i32>} : memref<1x28x32x128xbf16, #tpu.memory_space<vmem>>, vector<1x28x32x128xbf16>,
    %cst_9 = arith.constant dense<0.000000e+00> : vector<128xf32>
    %14 = vector.multi_reduction <add>, %9, %cst_9 [0, 1] : vector<28x32x128xf32> to vector<128xf32>
    %15 = vector.shape_cast %14 : vector<128xf32> to vector<1x1x128xf32>
    %c0_10 = arith.constant 0 : index
    %c0_11 = arith.constant 0 : index
    %c0_12 = arith.constant 0 : index
    %16 = vector.load %arg4[%c0_10, %c0_11, %c0_12] : memref<1x1x128xf32, #tpu.memory_space<vmem>>, vector<1x1x128xf32>
    tpu.vector_store %arg4[%c0_10, %c0_11, %c0_12], %15 {strides = array<i32>} : memref<1x1x128xf32, #tpu.memory_space<vmem>>, vector<1x1x128xf32>,
    %17 = arith.mulf %9, %9 : vector<28x32x128xf32>
    %cst_13 = arith.constant dense<0.000000e+00> : vector<128xf32>
    %18 = vector.multi_reduction <add>, %17, %cst_13 [0, 1] : vector<28x32x128xf32> to vector<128xf32>
    %19 = vector.shape_cast %18 : vector<128xf32> to vector<1x1x128xf32>
    %c0_14 = arith.constant 0 : index
    %c0_15 = arith.constant 0 : index
    %c0_16 = arith.constant 0 : index
    %20 = vector.load %arg5[%c0_14, %c0_15, %c0_16] : memref<1x1x128xf32, #tpu.memory_space<vmem>>, vector<1x1x128xf32>
    tpu.vector_store %arg5[%c0_14, %c0_15, %c0_16], %19 {strides = array<i32>} : memref<1x1x128xf32, #tpu.memory_space<vmem>>, vector<1x1x128xf32>,
    return
  }
  func.func @transform_0(%arg0: i32) -> (i32, i32, i32) {
    %c0_i32 = arith.constant 0 : i32
    %c0_i32_0 = arith.constant 0 : i32
    %c0_i32_1 = arith.constant 0 : i32
    return %arg0, %c0_i32, %c0_i32_0 : i32, i32, i32
  }
  func.func @transform_1(%arg0: i32) -> (i32, i32) {
    %c0_i32 = arith.constant 0 : i32
    %c0_i32_0 = arith.constant 0 : i32
    %c0_i32_1 = arith.constant 0 : i32
    return %c0_i32, %c0_i32_0 : i32, i32
  }
  func.func @transform_2(%arg0: i32) -> (i32, i32, i32, i32) {
    %c0_i32 = arith.constant 0 : i32
    %c0_i32_0 = arith.constant 0 : i32
    %c0_i32_1 = arith.constant 0 : i32
    %c0_i32_2 = arith.constant 0 : i32
    return %arg0, %c0_i32, %c0_i32_0, %c0_i32_1 : i32, i32, i32, i32
  }
  func.func @transform_3(%arg0: i32) -> (i32, i32, i32) {
    %c0_i32 = arith.constant 0 : i32
    %c0_i32_0 = arith.constant 0 : i32
    %c0_i32_1 = arith.constant 0 : i32
    return %arg0, %c0_i32, %c0_i32_0 : i32, i32, i32
  }
  func.func @transform_4(%arg0: i32) -> (i32, i32, i32) {
    %c0_i32 = arith.constant 0 : i32
    %c0_i32_0 = arith.constant 0 : i32
    %c0_i32_1 = arith.constant 0 : i32
    return %arg0, %c0_i32, %c0_i32_0 : i32, i32, i32
  }
}

module attributes {stable_mosaic.version = 11 : i64} {
  func.func @_fused_conv_kernel(%arg0: i32, %arg1: memref<1x28x32x128xbf16, #tpu.memory_space<vmem>>, %arg2: memref<1x128xf32, #tpu.memory_space<vmem>>, %arg3: memref<1x128xf32, #tpu.memory_space<vmem>>, %arg4: memref<1152x128xbf16, #tpu.memory_space<vmem>>, %arg5: memref<1x26x32x128xbf16, #tpu.memory_space<vmem>>, %arg6: memref<1x1x128xf32, #tpu.memory_space<vmem>>, %arg7: memref<1x1x128xf32, #tpu.memory_space<vmem>>) attributes {dimension_semantics = [#tpu.dimension_semantics<parallel>], iteration_bounds = array<i64: 2>, scalar_prefetch = 0 : i64, scratch_operands = 0 : i64, tpu.core_type = #tpu.core_type<tc>, window_params = [{transform_indices = @transform_0, window_bounds = array<i64: 1, 28, 32, 128>}, {pipeline_mode = #tpu.pipeline_mode<synchronous>, transform_indices = @transform_1, window_bounds = array<i64: 1, 128>}, {pipeline_mode = #tpu.pipeline_mode<synchronous>, transform_indices = @transform_2, window_bounds = array<i64: 1, 128>}, {pipeline_mode = #tpu.pipeline_mode<synchronous>, transform_indices = @transform_3, window_bounds = array<i64: 1152, 128>}, {transform_indices = @transform_4, window_bounds = array<i64: 1, 26, 32, 128>}, {transform_indices = @transform_5, window_bounds = array<i64: 1, 1, 128>}, {transform_indices = @transform_6, window_bounds = array<i64: 1, 1, 128>}]} {
    %c0 = arith.constant 0 : index
    %c0_0 = arith.constant 0 : index
    %0 = vector.load %arg2[%c0, %c0_0] : memref<1x128xf32, #tpu.memory_space<vmem>>, vector<1x128xf32>
    %1 = vector.shape_cast %0 : vector<1x128xf32> to vector<128xf32>
    %2 = vector.shape_cast %1 : vector<128xf32> to vector<1x1x128xf32>
    %c0_1 = arith.constant 0 : index
    %c0_2 = arith.constant 0 : index
    %3 = vector.load %arg3[%c0_1, %c0_2] : memref<1x128xf32, #tpu.memory_space<vmem>>, vector<1x128xf32>
    %4 = vector.shape_cast %3 : vector<1x128xf32> to vector<128xf32>
    %5 = vector.shape_cast %4 : vector<128xf32> to vector<1x1x128xf32>
    %c0_3 = arith.constant 0 : index
    %c0_4 = arith.constant 0 : index
    %c0_5 = arith.constant 0 : index
    %c0_6 = arith.constant 0 : index
    %6 = vector.load %arg1[%c0_3, %c0_4, %c0_5, %c0_6] : memref<1x28x32x128xbf16, #tpu.memory_space<vmem>>, vector<1x28x32x128xbf16>
    %7 = vector.shape_cast %6 : vector<1x28x32x128xbf16> to vector<28x32x128xbf16>
    %8 = arith.extf %7 : vector<28x32x128xbf16> to vector<28x32x128xf32>
    %9 = vector.broadcast %2 : vector<1x1x128xf32> to vector<28x32x128xf32>
    %10 = arith.mulf %8, %9 : vector<28x32x128xf32>
    %11 = vector.broadcast %5 : vector<1x1x128xf32> to vector<28x32x128xf32>
    %12 = arith.addf %10, %11 : vector<28x32x128xf32>
    %cst = arith.constant 0.000000e+00 : f32
    %13 = vector.broadcast %cst : f32 to vector<28x32x128xf32>
    %14 = arith.maximumf %12, %13 : vector<28x32x128xf32>
    %15 = arith.truncf %14 : vector<28x32x128xf32> to vector<28x32x128xbf16>
    %16 = vector.extract_strided_slice %15 {offsets = [0, 1, 0], sizes = [28, 31, 128], strides = [1, 1, 1]} : vector<28x32x128xbf16> to vector<28x31x128xbf16>
    %17 = vector.extract_strided_slice %15 {offsets = [0, 0, 0], sizes = [28, 1, 128], strides = [1, 1, 1]} : vector<28x32x128xbf16> to vector<28x1x128xbf16>
    %18 = tpu.concatenate %16, %17 in 1 : vector<28x31x128xbf16>, vector<28x1x128xbf16> -> vector<28x32x128xbf16>
    %19 = vector.extract_strided_slice %15 {offsets = [0, 2, 0], sizes = [28, 30, 128], strides = [1, 1, 1]} : vector<28x32x128xbf16> to vector<28x30x128xbf16>
    %20 = vector.extract_strided_slice %15 {offsets = [0, 0, 0], sizes = [28, 2, 128], strides = [1, 1, 1]} : vector<28x32x128xbf16> to vector<28x2x128xbf16>
    %21 = tpu.concatenate %19, %20 in 1 : vector<28x30x128xbf16>, vector<28x2x128xbf16> -> vector<28x32x128xbf16>
    %22 = vector.extract_strided_slice %15 {offsets = [0, 0, 0], sizes = [26, 32, 128], strides = [1, 1, 1]} : vector<28x32x128xbf16> to vector<26x32x128xbf16>
    %23 = vector.extract_strided_slice %18 {offsets = [0, 0, 0], sizes = [26, 32, 128], strides = [1, 1, 1]} : vector<28x32x128xbf16> to vector<26x32x128xbf16>
    %24 = vector.extract_strided_slice %21 {offsets = [0, 0, 0], sizes = [26, 32, 128], strides = [1, 1, 1]} : vector<28x32x128xbf16> to vector<26x32x128xbf16>
    %25 = vector.extract_strided_slice %15 {offsets = [1, 0, 0], sizes = [26, 32, 128], strides = [1, 1, 1]} : vector<28x32x128xbf16> to vector<26x32x128xbf16>
    %26 = vector.extract_strided_slice %18 {offsets = [1, 0, 0], sizes = [26, 32, 128], strides = [1, 1, 1]} : vector<28x32x128xbf16> to vector<26x32x128xbf16>
    %27 = vector.extract_strided_slice %21 {offsets = [1, 0, 0], sizes = [26, 32, 128], strides = [1, 1, 1]} : vector<28x32x128xbf16> to vector<26x32x128xbf16>
    %28 = vector.extract_strided_slice %15 {offsets = [2, 0, 0], sizes = [26, 32, 128], strides = [1, 1, 1]} : vector<28x32x128xbf16> to vector<26x32x128xbf16>
    %29 = vector.extract_strided_slice %18 {offsets = [2, 0, 0], sizes = [26, 32, 128], strides = [1, 1, 1]} : vector<28x32x128xbf16> to vector<26x32x128xbf16>
    %30 = vector.extract_strided_slice %21 {offsets = [2, 0, 0], sizes = [26, 32, 128], strides = [1, 1, 1]} : vector<28x32x128xbf16> to vector<26x32x128xbf16>
    %31 = tpu.concatenate %22, %23, %24, %25, %26, %27, %28, %29, %30 in 2 : vector<26x32x128xbf16>, vector<26x32x128xbf16>, vector<26x32x128xbf16>, vector<26x32x128xbf16>, vector<26x32x128xbf16>, vector<26x32x128xbf16>, vector<26x32x128xbf16>, vector<26x32x128xbf16>, vector<26x32x128xbf16> -> vector<26x32x1152xbf16>
    %32 = vector.shape_cast %31 : vector<26x32x1152xbf16> to vector<832x1152xbf16>
    %c0_7 = arith.constant 0 : index
    %c0_8 = arith.constant 0 : index
    %33 = vector.load %arg4[%c0_7, %c0_8] : memref<1152x128xbf16, #tpu.memory_space<vmem>>, vector<1152x128xbf16>
    %cst_9 = arith.constant dense<0.000000e+00> : vector<832x128xf32>
    %34 = tpu.matmul %32, %33, %cst_9 {dimension_numbers = #tpu.dot_dimension_numbers<[1], [0], [0], [1], [0, 0, 1, 1], [], []>} : vector<832x1152xbf16>, vector<1152x128xbf16>, vector<832x128xf32> -> vector<832x128xf32>
    %35 = vector.shape_cast %34 : vector<832x128xf32> to vector<26x32x128xf32>
    %36 = tpu.iota {dimensions = array<i32: 1>} : vector<26x32x128xi32>
    %c26_i32 = arith.constant 26 : i32
    %37 = vector.broadcast %c26_i32 : i32 to vector<26x32x128xi32>
    %38 = arith.cmpi slt, %36, %37 : vector<26x32x128xi32>
    %cst_10 = arith.constant 0.000000e+00 : f32
    %39 = vector.broadcast %cst_10 : f32 to vector<26x32x128xf32>
    %40 = arith.select %38, %35, %39 : vector<26x32x128xi1>, vector<26x32x128xf32>
    %41 = arith.truncf %40 : vector<26x32x128xf32> to vector<26x32x128xbf16>
    %c0_11 = arith.constant 0 : index
    %c0_12 = arith.constant 0 : index
    %c0_13 = arith.constant 0 : index
    %c0_14 = arith.constant 0 : index
    %42 = vector.load %arg5[%c0_11, %c0_12, %c0_13, %c0_14] : memref<1x26x32x128xbf16, #tpu.memory_space<vmem>>, vector<1x26x32x128xbf16>
    %43 = vector.shape_cast %42 : vector<1x26x32x128xbf16> to vector<26x32x128xbf16>
    %44 = vector.shape_cast %41 : vector<26x32x128xbf16> to vector<1x26x32x128xbf16>
    tpu.vector_store %arg5[%c0_11, %c0_12, %c0_13, %c0_14], %44 {strides = array<i32>} : memref<1x26x32x128xbf16, #tpu.memory_space<vmem>>, vector<1x26x32x128xbf16>,
    %cst_15 = arith.constant dense<0.000000e+00> : vector<128xf32>
    %45 = vector.multi_reduction <add>, %40, %cst_15 [0, 1] : vector<26x32x128xf32> to vector<128xf32>
    %46 = vector.shape_cast %45 : vector<128xf32> to vector<1x1x128xf32>
    %c0_16 = arith.constant 0 : index
    %c0_17 = arith.constant 0 : index
    %c0_18 = arith.constant 0 : index
    %47 = vector.load %arg6[%c0_16, %c0_17, %c0_18] : memref<1x1x128xf32, #tpu.memory_space<vmem>>, vector<1x1x128xf32>
    tpu.vector_store %arg6[%c0_16, %c0_17, %c0_18], %46 {strides = array<i32>} : memref<1x1x128xf32, #tpu.memory_space<vmem>>, vector<1x1x128xf32>,
    %48 = arith.mulf %40, %40 : vector<26x32x128xf32>
    %cst_19 = arith.constant dense<0.000000e+00> : vector<128xf32>
    %49 = vector.multi_reduction <add>, %48, %cst_19 [0, 1] : vector<26x32x128xf32> to vector<128xf32>
    %50 = vector.shape_cast %49 : vector<128xf32> to vector<1x1x128xf32>
    %c0_20 = arith.constant 0 : index
    %c0_21 = arith.constant 0 : index
    %c0_22 = arith.constant 0 : index
    %51 = vector.load %arg7[%c0_20, %c0_21, %c0_22] : memref<1x1x128xf32, #tpu.memory_space<vmem>>, vector<1x1x128xf32>
    tpu.vector_store %arg7[%c0_20, %c0_21, %c0_22], %50 {strides = array<i32>} : memref<1x1x128xf32, #tpu.memory_space<vmem>>, vector<1x1x128xf32>,
    return
  }
  func.func @transform_0(%arg0: i32) -> (i32, i32, i32, i32) {
    %c0_i32 = arith.constant 0 : i32
    %c0_i32_0 = arith.constant 0 : i32
    %c0_i32_1 = arith.constant 0 : i32
    %c0_i32_2 = arith.constant 0 : i32
    return %arg0, %c0_i32, %c0_i32_0, %c0_i32_1 : i32, i32, i32, i32
  }
  func.func @transform_1(%arg0: i32) -> (i32, i32) {
    %c0_i32 = arith.constant 0 : i32
    %c0_i32_0 = arith.constant 0 : i32
    %c0_i32_1 = arith.constant 0 : i32
    return %c0_i32, %c0_i32_0 : i32, i32
  }
  func.func @transform_2(%arg0: i32) -> (i32, i32) {
    %c0_i32 = arith.constant 0 : i32
    %c0_i32_0 = arith.constant 0 : i32
    %c0_i32_1 = arith.constant 0 : i32
    return %c0_i32, %c0_i32_0 : i32, i32
  }
  func.func @transform_3(%arg0: i32) -> (i32, i32) {
    %c0_i32 = arith.constant 0 : i32
    %c0_i32_0 = arith.constant 0 : i32
    %c0_i32_1 = arith.constant 0 : i32
    return %c0_i32, %c0_i32_0 : i32, i32
  }
  func.func @transform_4(%arg0: i32) -> (i32, i32, i32, i32) {
    %c0_i32 = arith.constant 0 : i32
    %c0_i32_0 = arith.constant 0 : i32
    %c0_i32_1 = arith.constant 0 : i32
    %c0_i32_2 = arith.constant 0 : i32
    return %arg0, %c0_i32, %c0_i32_0, %c0_i32_1 : i32, i32, i32, i32
  }
  func.func @transform_5(%arg0: i32) -> (i32, i32, i32) {
    %c0_i32 = arith.constant 0 : i32
    %c0_i32_0 = arith.constant 0 : i32
    %c0_i32_1 = arith.constant 0 : i32
    return %arg0, %c0_i32, %c0_i32_0 : i32, i32, i32
  }
  func.func @transform_6(%arg0: i32) -> (i32, i32, i32) {
    %c0_i32 = arith.constant 0 : i32
    %c0_i32_0 = arith.constant 0 : i32
    %c0_i32_1 = arith.constant 0 : i32
    return %arg0, %c0_i32, %c0_i32_0 : i32, i32, i32
  }
}

module attributes {stable_mosaic.version = 11 : i64} {
  func.func @_fused_conv_kernel(%arg0: i32, %arg1: memref<1x26x32x128xbf16, #tpu.memory_space<vmem>>, %arg2: memref<1x128xf32, #tpu.memory_space<vmem>>, %arg3: memref<1x128xf32, #tpu.memory_space<vmem>>, %arg4: memref<1152x128xbf16, #tpu.memory_space<vmem>>, %arg5: memref<1x11x16x128xbf16, #tpu.memory_space<vmem>>, %arg6: memref<1x1x128xf32, #tpu.memory_space<vmem>>, %arg7: memref<1x1x128xf32, #tpu.memory_space<vmem>>) attributes {dimension_semantics = [#tpu.dimension_semantics<parallel>], iteration_bounds = array<i64: 2>, scalar_prefetch = 0 : i64, scratch_operands = 0 : i64, tpu.core_type = #tpu.core_type<tc>, window_params = [{transform_indices = @transform_0, window_bounds = array<i64: 1, 26, 32, 128>}, {pipeline_mode = #tpu.pipeline_mode<synchronous>, transform_indices = @transform_1, window_bounds = array<i64: 1, 128>}, {pipeline_mode = #tpu.pipeline_mode<synchronous>, transform_indices = @transform_2, window_bounds = array<i64: 1, 128>}, {pipeline_mode = #tpu.pipeline_mode<synchronous>, transform_indices = @transform_3, window_bounds = array<i64: 1152, 128>}, {transform_indices = @transform_4, window_bounds = array<i64: 1, 11, 16, 128>}, {transform_indices = @transform_5, window_bounds = array<i64: 1, 1, 128>}, {transform_indices = @transform_6, window_bounds = array<i64: 1, 1, 128>}]} {
    %c0 = arith.constant 0 : index
    %c0_0 = arith.constant 0 : index
    %0 = vector.load %arg2[%c0, %c0_0] : memref<1x128xf32, #tpu.memory_space<vmem>>, vector<1x128xf32>
    %1 = vector.shape_cast %0 : vector<1x128xf32> to vector<128xf32>
    %2 = vector.shape_cast %1 : vector<128xf32> to vector<1x1x128xf32>
    %c0_1 = arith.constant 0 : index
    %c0_2 = arith.constant 0 : index
    %3 = vector.load %arg3[%c0_1, %c0_2] : memref<1x128xf32, #tpu.memory_space<vmem>>, vector<1x128xf32>
    %4 = vector.shape_cast %3 : vector<1x128xf32> to vector<128xf32>
    %5 = vector.shape_cast %4 : vector<128xf32> to vector<1x1x128xf32>
    %c0_3 = arith.constant 0 : index
    %c0_4 = arith.constant 0 : index
    %c0_5 = arith.constant 0 : index
    %c0_6 = arith.constant 0 : index
    %6 = vector.load %arg1[%c0_3, %c0_4, %c0_5, %c0_6] : memref<1x26x32x128xbf16, #tpu.memory_space<vmem>>, vector<1x26x32x128xbf16>
    %7 = vector.shape_cast %6 : vector<1x26x32x128xbf16> to vector<26x32x128xbf16>
    %8 = arith.extf %7 : vector<26x32x128xbf16> to vector<26x32x128xf32>
    %9 = vector.broadcast %2 : vector<1x1x128xf32> to vector<26x32x128xf32>
    %10 = arith.mulf %8, %9 : vector<26x32x128xf32>
    %11 = vector.broadcast %5 : vector<1x1x128xf32> to vector<26x32x128xf32>
    %12 = arith.addf %10, %11 : vector<26x32x128xf32>
    %cst = arith.constant 0.000000e+00 : f32
    %13 = vector.broadcast %cst : f32 to vector<26x32x128xf32>
    %14 = arith.maximumf %12, %13 : vector<26x32x128xf32>
    %15 = vector.shape_cast %14 : vector<26x32x128xf32> to vector<13x2x32x128xf32>
    %cst_7 = arith.constant dense<0xFF800000> : vector<13x32x128xf32>
    %16 = vector.multi_reduction <maximumf>, %15, %cst_7 [1] : vector<13x2x32x128xf32> to vector<13x32x128xf32>
    %17 = vector.shape_cast %16 : vector<13x32x128xf32> to vector<13x16x256xf32>
    %18 = vector.extract_strided_slice %17 {offsets = [0, 0, 0], sizes = [13, 16, 128], strides = [1, 1, 1]} : vector<13x16x256xf32> to vector<13x16x128xf32>
    %19 = vector.extract_strided_slice %17 {offsets = [0, 0, 128], sizes = [13, 16, 128], strides = [1, 1, 1]} : vector<13x16x256xf32> to vector<13x16x128xf32>
    %20 = arith.maximumf %18, %19 : vector<13x16x128xf32>
    %21 = arith.truncf %20 : vector<13x16x128xf32> to vector<13x16x128xbf16>
    %22 = vector.extract_strided_slice %21 {offsets = [0, 1, 0], sizes = [13, 15, 128], strides = [1, 1, 1]} : vector<13x16x128xbf16> to vector<13x15x128xbf16>
    %23 = vector.extract_strided_slice %21 {offsets = [0, 0, 0], sizes = [13, 1, 128], strides = [1, 1, 1]} : vector<13x16x128xbf16> to vector<13x1x128xbf16>
    %24 = tpu.concatenate %22, %23 in 1 : vector<13x15x128xbf16>, vector<13x1x128xbf16> -> vector<13x16x128xbf16>
    %25 = vector.extract_strided_slice %21 {offsets = [0, 2, 0], sizes = [13, 14, 128], strides = [1, 1, 1]} : vector<13x16x128xbf16> to vector<13x14x128xbf16>
    %26 = vector.extract_strided_slice %21 {offsets = [0, 0, 0], sizes = [13, 2, 128], strides = [1, 1, 1]} : vector<13x16x128xbf16> to vector<13x2x128xbf16>
    %27 = tpu.concatenate %25, %26 in 1 : vector<13x14x128xbf16>, vector<13x2x128xbf16> -> vector<13x16x128xbf16>
    %28 = vector.extract_strided_slice %21 {offsets = [0, 0, 0], sizes = [11, 16, 128], strides = [1, 1, 1]} : vector<13x16x128xbf16> to vector<11x16x128xbf16>
    %29 = vector.extract_strided_slice %24 {offsets = [0, 0, 0], sizes = [11, 16, 128], strides = [1, 1, 1]} : vector<13x16x128xbf16> to vector<11x16x128xbf16>
    %30 = vector.extract_strided_slice %27 {offsets = [0, 0, 0], sizes = [11, 16, 128], strides = [1, 1, 1]} : vector<13x16x128xbf16> to vector<11x16x128xbf16>
    %31 = vector.extract_strided_slice %21 {offsets = [1, 0, 0], sizes = [11, 16, 128], strides = [1, 1, 1]} : vector<13x16x128xbf16> to vector<11x16x128xbf16>
    %32 = vector.extract_strided_slice %24 {offsets = [1, 0, 0], sizes = [11, 16, 128], strides = [1, 1, 1]} : vector<13x16x128xbf16> to vector<11x16x128xbf16>
    %33 = vector.extract_strided_slice %27 {offsets = [1, 0, 0], sizes = [11, 16, 128], strides = [1, 1, 1]} : vector<13x16x128xbf16> to vector<11x16x128xbf16>
    %34 = vector.extract_strided_slice %21 {offsets = [2, 0, 0], sizes = [11, 16, 128], strides = [1, 1, 1]} : vector<13x16x128xbf16> to vector<11x16x128xbf16>
    %35 = vector.extract_strided_slice %24 {offsets = [2, 0, 0], sizes = [11, 16, 128], strides = [1, 1, 1]} : vector<13x16x128xbf16> to vector<11x16x128xbf16>
    %36 = vector.extract_strided_slice %27 {offsets = [2, 0, 0], sizes = [11, 16, 128], strides = [1, 1, 1]} : vector<13x16x128xbf16> to vector<11x16x128xbf16>
    %37 = tpu.concatenate %28, %29, %30, %31, %32, %33, %34, %35, %36 in 2 : vector<11x16x128xbf16>, vector<11x16x128xbf16>, vector<11x16x128xbf16>, vector<11x16x128xbf16>, vector<11x16x128xbf16>, vector<11x16x128xbf16>, vector<11x16x128xbf16>, vector<11x16x128xbf16>, vector<11x16x128xbf16> -> vector<11x16x1152xbf16>
    %38 = vector.shape_cast %37 : vector<11x16x1152xbf16> to vector<176x1152xbf16>
    %c0_8 = arith.constant 0 : index
    %c0_9 = arith.constant 0 : index
    %39 = vector.load %arg4[%c0_8, %c0_9] : memref<1152x128xbf16, #tpu.memory_space<vmem>>, vector<1152x128xbf16>
    %cst_10 = arith.constant dense<0.000000e+00> : vector<176x128xf32>
    %40 = tpu.matmul %38, %39, %cst_10 {dimension_numbers = #tpu.dot_dimension_numbers<[1], [0], [0], [1], [0, 0, 1, 1], [], []>} : vector<176x1152xbf16>, vector<1152x128xbf16>, vector<176x128xf32> -> vector<176x128xf32>
    %41 = vector.shape_cast %40 : vector<176x128xf32> to vector<11x16x128xf32>
    %42 = tpu.iota {dimensions = array<i32: 1>} : vector<11x16x128xi32>
    %c11_i32 = arith.constant 11 : i32
    %43 = vector.broadcast %c11_i32 : i32 to vector<11x16x128xi32>
    %44 = arith.cmpi slt, %42, %43 : vector<11x16x128xi32>
    %cst_11 = arith.constant 0.000000e+00 : f32
    %45 = vector.broadcast %cst_11 : f32 to vector<11x16x128xf32>
    %46 = arith.select %44, %41, %45 : vector<11x16x128xi1>, vector<11x16x128xf32>
    %47 = arith.truncf %46 : vector<11x16x128xf32> to vector<11x16x128xbf16>
    %c0_12 = arith.constant 0 : index
    %c0_13 = arith.constant 0 : index
    %c0_14 = arith.constant 0 : index
    %c0_15 = arith.constant 0 : index
    %48 = vector.load %arg5[%c0_12, %c0_13, %c0_14, %c0_15] : memref<1x11x16x128xbf16, #tpu.memory_space<vmem>>, vector<1x11x16x128xbf16>
    %49 = vector.shape_cast %48 : vector<1x11x16x128xbf16> to vector<11x16x128xbf16>
    %50 = vector.shape_cast %47 : vector<11x16x128xbf16> to vector<1x11x16x128xbf16>
    tpu.vector_store %arg5[%c0_12, %c0_13, %c0_14, %c0_15], %50 {strides = array<i32>} : memref<1x11x16x128xbf16, #tpu.memory_space<vmem>>, vector<1x11x16x128xbf16>,
    %cst_16 = arith.constant dense<0.000000e+00> : vector<128xf32>
    %51 = vector.multi_reduction <add>, %46, %cst_16 [0, 1] : vector<11x16x128xf32> to vector<128xf32>
    %52 = vector.shape_cast %51 : vector<128xf32> to vector<1x1x128xf32>
    %c0_17 = arith.constant 0 : index
    %c0_18 = arith.constant 0 : index
    %c0_19 = arith.constant 0 : index
    %53 = vector.load %arg6[%c0_17, %c0_18, %c0_19] : memref<1x1x128xf32, #tpu.memory_space<vmem>>, vector<1x1x128xf32>
    tpu.vector_store %arg6[%c0_17, %c0_18, %c0_19], %52 {strides = array<i32>} : memref<1x1x128xf32, #tpu.memory_space<vmem>>, vector<1x1x128xf32>,
    %54 = arith.mulf %46, %46 : vector<11x16x128xf32>
    %cst_20 = arith.constant dense<0.000000e+00> : vector<128xf32>
    %55 = vector.multi_reduction <add>, %54, %cst_20 [0, 1] : vector<11x16x128xf32> to vector<128xf32>
    %56 = vector.shape_cast %55 : vector<128xf32> to vector<1x1x128xf32>
    %c0_21 = arith.constant 0 : index
    %c0_22 = arith.constant 0 : index
    %c0_23 = arith.constant 0 : index
    %57 = vector.load %arg7[%c0_21, %c0_22, %c0_23] : memref<1x1x128xf32, #tpu.memory_space<vmem>>, vector<1x1x128xf32>
    tpu.vector_store %arg7[%c0_21, %c0_22, %c0_23], %56 {strides = array<i32>} : memref<1x1x128xf32, #tpu.memory_space<vmem>>, vector<1x1x128xf32>,
    return
  }
  func.func @transform_0(%arg0: i32) -> (i32, i32, i32, i32) {
    %c0_i32 = arith.constant 0 : i32
    %c0_i32_0 = arith.constant 0 : i32
    %c0_i32_1 = arith.constant 0 : i32
    %c0_i32_2 = arith.constant 0 : i32
    return %arg0, %c0_i32, %c0_i32_0, %c0_i32_1 : i32, i32, i32, i32
  }
  func.func @transform_1(%arg0: i32) -> (i32, i32) {
    %c0_i32 = arith.constant 0 : i32
    %c0_i32_0 = arith.constant 0 : i32
    %c0_i32_1 = arith.constant 0 : i32
    return %c0_i32, %c0_i32_0 : i32, i32
  }
  func.func @transform_2(%arg0: i32) -> (i32, i32) {
    %c0_i32 = arith.constant 0 : i32
    %c0_i32_0 = arith.constant 0 : i32
    %c0_i32_1 = arith.constant 0 : i32
    return %c0_i32, %c0_i32_0 : i32, i32
  }
  func.func @transform_3(%arg0: i32) -> (i32, i32) {
    %c0_i32 = arith.constant 0 : i32
    %c0_i32_0 = arith.constant 0 : i32
    %c0_i32_1 = arith.constant 0 : i32
    return %c0_i32, %c0_i32_0 : i32, i32
  }
  func.func @transform_4(%arg0: i32) -> (i32, i32, i32, i32) {
    %c0_i32 = arith.constant 0 : i32
    %c0_i32_0 = arith.constant 0 : i32
    %c0_i32_1 = arith.constant 0 : i32
    %c0_i32_2 = arith.constant 0 : i32
    return %arg0, %c0_i32, %c0_i32_0, %c0_i32_1 : i32, i32, i32, i32
  }
  func.func @transform_5(%arg0: i32) -> (i32, i32, i32) {
    %c0_i32 = arith.constant 0 : i32
    %c0_i32_0 = arith.constant 0 : i32
    %c0_i32_1 = arith.constant 0 : i32
    return %arg0, %c0_i32, %c0_i32_0 : i32, i32, i32
  }
  func.func @transform_6(%arg0: i32) -> (i32, i32, i32) {
    %c0_i32 = arith.constant 0 : i32
    %c0_i32_0 = arith.constant 0 : i32
    %c0_i32_1 = arith.constant 0 : i32
    return %arg0, %c0_i32, %c0_i32_0 : i32, i32, i32
  }
}

module attributes {stable_mosaic.version = 11 : i64} {
  func.func @_fused_conv_kernel(%arg0: i32, %arg1: memref<1x11x16x128xbf16, #tpu.memory_space<vmem>>, %arg2: memref<1x128xf32, #tpu.memory_space<vmem>>, %arg3: memref<1x128xf32, #tpu.memory_space<vmem>>, %arg4: memref<1152x128xbf16, #tpu.memory_space<vmem>>, %arg5: memref<1x9x16x128xbf16, #tpu.memory_space<vmem>>, %arg6: memref<1x1x128xf32, #tpu.memory_space<vmem>>, %arg7: memref<1x1x128xf32, #tpu.memory_space<vmem>>) attributes {dimension_semantics = [#tpu.dimension_semantics<parallel>], iteration_bounds = array<i64: 2>, scalar_prefetch = 0 : i64, scratch_operands = 0 : i64, tpu.core_type = #tpu.core_type<tc>, window_params = [{transform_indices = @transform_0, window_bounds = array<i64: 1, 11, 16, 128>}, {pipeline_mode = #tpu.pipeline_mode<synchronous>, transform_indices = @transform_1, window_bounds = array<i64: 1, 128>}, {pipeline_mode = #tpu.pipeline_mode<synchronous>, transform_indices = @transform_2, window_bounds = array<i64: 1, 128>}, {pipeline_mode = #tpu.pipeline_mode<synchronous>, transform_indices = @transform_3, window_bounds = array<i64: 1152, 128>}, {transform_indices = @transform_4, window_bounds = array<i64: 1, 9, 16, 128>}, {transform_indices = @transform_5, window_bounds = array<i64: 1, 1, 128>}, {transform_indices = @transform_6, window_bounds = array<i64: 1, 1, 128>}]} {
    %c0 = arith.constant 0 : index
    %c0_0 = arith.constant 0 : index
    %0 = vector.load %arg2[%c0, %c0_0] : memref<1x128xf32, #tpu.memory_space<vmem>>, vector<1x128xf32>
    %1 = vector.shape_cast %0 : vector<1x128xf32> to vector<128xf32>
    %2 = vector.shape_cast %1 : vector<128xf32> to vector<1x1x128xf32>
    %c0_1 = arith.constant 0 : index
    %c0_2 = arith.constant 0 : index
    %3 = vector.load %arg3[%c0_1, %c0_2] : memref<1x128xf32, #tpu.memory_space<vmem>>, vector<1x128xf32>
    %4 = vector.shape_cast %3 : vector<1x128xf32> to vector<128xf32>
    %5 = vector.shape_cast %4 : vector<128xf32> to vector<1x1x128xf32>
    %c0_3 = arith.constant 0 : index
    %c0_4 = arith.constant 0 : index
    %c0_5 = arith.constant 0 : index
    %c0_6 = arith.constant 0 : index
    %6 = vector.load %arg1[%c0_3, %c0_4, %c0_5, %c0_6] : memref<1x11x16x128xbf16, #tpu.memory_space<vmem>>, vector<1x11x16x128xbf16>
    %7 = vector.shape_cast %6 : vector<1x11x16x128xbf16> to vector<11x16x128xbf16>
    %8 = arith.extf %7 : vector<11x16x128xbf16> to vector<11x16x128xf32>
    %9 = vector.broadcast %2 : vector<1x1x128xf32> to vector<11x16x128xf32>
    %10 = arith.mulf %8, %9 : vector<11x16x128xf32>
    %11 = vector.broadcast %5 : vector<1x1x128xf32> to vector<11x16x128xf32>
    %12 = arith.addf %10, %11 : vector<11x16x128xf32>
    %cst = arith.constant 0.000000e+00 : f32
    %13 = vector.broadcast %cst : f32 to vector<11x16x128xf32>
    %14 = arith.maximumf %12, %13 : vector<11x16x128xf32>
    %15 = arith.truncf %14 : vector<11x16x128xf32> to vector<11x16x128xbf16>
    %16 = vector.extract_strided_slice %15 {offsets = [0, 1, 0], sizes = [11, 15, 128], strides = [1, 1, 1]} : vector<11x16x128xbf16> to vector<11x15x128xbf16>
    %17 = vector.extract_strided_slice %15 {offsets = [0, 0, 0], sizes = [11, 1, 128], strides = [1, 1, 1]} : vector<11x16x128xbf16> to vector<11x1x128xbf16>
    %18 = tpu.concatenate %16, %17 in 1 : vector<11x15x128xbf16>, vector<11x1x128xbf16> -> vector<11x16x128xbf16>
    %19 = vector.extract_strided_slice %15 {offsets = [0, 2, 0], sizes = [11, 14, 128], strides = [1, 1, 1]} : vector<11x16x128xbf16> to vector<11x14x128xbf16>
    %20 = vector.extract_strided_slice %15 {offsets = [0, 0, 0], sizes = [11, 2, 128], strides = [1, 1, 1]} : vector<11x16x128xbf16> to vector<11x2x128xbf16>
    %21 = tpu.concatenate %19, %20 in 1 : vector<11x14x128xbf16>, vector<11x2x128xbf16> -> vector<11x16x128xbf16>
    %22 = vector.extract_strided_slice %15 {offsets = [0, 0, 0], sizes = [9, 16, 128], strides = [1, 1, 1]} : vector<11x16x128xbf16> to vector<9x16x128xbf16>
    %23 = vector.extract_strided_slice %18 {offsets = [0, 0, 0], sizes = [9, 16, 128], strides = [1, 1, 1]} : vector<11x16x128xbf16> to vector<9x16x128xbf16>
    %24 = vector.extract_strided_slice %21 {offsets = [0, 0, 0], sizes = [9, 16, 128], strides = [1, 1, 1]} : vector<11x16x128xbf16> to vector<9x16x128xbf16>
    %25 = vector.extract_strided_slice %15 {offsets = [1, 0, 0], sizes = [9, 16, 128], strides = [1, 1, 1]} : vector<11x16x128xbf16> to vector<9x16x128xbf16>
    %26 = vector.extract_strided_slice %18 {offsets = [1, 0, 0], sizes = [9, 16, 128], strides = [1, 1, 1]} : vector<11x16x128xbf16> to vector<9x16x128xbf16>
    %27 = vector.extract_strided_slice %21 {offsets = [1, 0, 0], sizes = [9, 16, 128], strides = [1, 1, 1]} : vector<11x16x128xbf16> to vector<9x16x128xbf16>
    %28 = vector.extract_strided_slice %15 {offsets = [2, 0, 0], sizes = [9, 16, 128], strides = [1, 1, 1]} : vector<11x16x128xbf16> to vector<9x16x128xbf16>
    %29 = vector.extract_strided_slice %18 {offsets = [2, 0, 0], sizes = [9, 16, 128], strides = [1, 1, 1]} : vector<11x16x128xbf16> to vector<9x16x128xbf16>
    %30 = vector.extract_strided_slice %21 {offsets = [2, 0, 0], sizes = [9, 16, 128], strides = [1, 1, 1]} : vector<11x16x128xbf16> to vector<9x16x128xbf16>
    %31 = tpu.concatenate %22, %23, %24, %25, %26, %27, %28, %29, %30 in 2 : vector<9x16x128xbf16>, vector<9x16x128xbf16>, vector<9x16x128xbf16>, vector<9x16x128xbf16>, vector<9x16x128xbf16>, vector<9x16x128xbf16>, vector<9x16x128xbf16>, vector<9x16x128xbf16>, vector<9x16x128xbf16> -> vector<9x16x1152xbf16>
    %32 = vector.shape_cast %31 : vector<9x16x1152xbf16> to vector<144x1152xbf16>
    %c0_7 = arith.constant 0 : index
    %c0_8 = arith.constant 0 : index
    %33 = vector.load %arg4[%c0_7, %c0_8] : memref<1152x128xbf16, #tpu.memory_space<vmem>>, vector<1152x128xbf16>
    %cst_9 = arith.constant dense<0.000000e+00> : vector<144x128xf32>
    %34 = tpu.matmul %32, %33, %cst_9 {dimension_numbers = #tpu.dot_dimension_numbers<[1], [0], [0], [1], [0, 0, 1, 1], [], []>} : vector<144x1152xbf16>, vector<1152x128xbf16>, vector<144x128xf32> -> vector<144x128xf32>
    %35 = vector.shape_cast %34 : vector<144x128xf32> to vector<9x16x128xf32>
    %36 = tpu.iota {dimensions = array<i32: 1>} : vector<9x16x128xi32>
    %c9_i32 = arith.constant 9 : i32
    %37 = vector.broadcast %c9_i32 : i32 to vector<9x16x128xi32>
    %38 = arith.cmpi slt, %36, %37 : vector<9x16x128xi32>
    %cst_10 = arith.constant 0.000000e+00 : f32
    %39 = vector.broadcast %cst_10 : f32 to vector<9x16x128xf32>
    %40 = arith.select %38, %35, %39 : vector<9x16x128xi1>, vector<9x16x128xf32>
    %41 = arith.truncf %40 : vector<9x16x128xf32> to vector<9x16x128xbf16>
    %c0_11 = arith.constant 0 : index
    %c0_12 = arith.constant 0 : index
    %c0_13 = arith.constant 0 : index
    %c0_14 = arith.constant 0 : index
    %42 = vector.load %arg5[%c0_11, %c0_12, %c0_13, %c0_14] : memref<1x9x16x128xbf16, #tpu.memory_space<vmem>>, vector<1x9x16x128xbf16>
    %43 = vector.shape_cast %42 : vector<1x9x16x128xbf16> to vector<9x16x128xbf16>
    %44 = vector.shape_cast %41 : vector<9x16x128xbf16> to vector<1x9x16x128xbf16>
    tpu.vector_store %arg5[%c0_11, %c0_12, %c0_13, %c0_14], %44 {strides = array<i32>} : memref<1x9x16x128xbf16, #tpu.memory_space<vmem>>, vector<1x9x16x128xbf16>,
    %cst_15 = arith.constant dense<0.000000e+00> : vector<128xf32>
    %45 = vector.multi_reduction <add>, %40, %cst_15 [0, 1] : vector<9x16x128xf32> to vector<128xf32>
    %46 = vector.shape_cast %45 : vector<128xf32> to vector<1x1x128xf32>
    %c0_16 = arith.constant 0 : index
    %c0_17 = arith.constant 0 : index
    %c0_18 = arith.constant 0 : index
    %47 = vector.load %arg6[%c0_16, %c0_17, %c0_18] : memref<1x1x128xf32, #tpu.memory_space<vmem>>, vector<1x1x128xf32>
    tpu.vector_store %arg6[%c0_16, %c0_17, %c0_18], %46 {strides = array<i32>} : memref<1x1x128xf32, #tpu.memory_space<vmem>>, vector<1x1x128xf32>,
    %48 = arith.mulf %40, %40 : vector<9x16x128xf32>
    %cst_19 = arith.constant dense<0.000000e+00> : vector<128xf32>
    %49 = vector.multi_reduction <add>, %48, %cst_19 [0, 1] : vector<9x16x128xf32> to vector<128xf32>
    %50 = vector.shape_cast %49 : vector<128xf32> to vector<1x1x128xf32>
    %c0_20 = arith.constant 0 : index
    %c0_21 = arith.constant 0 : index
    %c0_22 = arith.constant 0 : index
    %51 = vector.load %arg7[%c0_20, %c0_21, %c0_22] : memref<1x1x128xf32, #tpu.memory_space<vmem>>, vector<1x1x128xf32>
    tpu.vector_store %arg7[%c0_20, %c0_21, %c0_22], %50 {strides = array<i32>} : memref<1x1x128xf32, #tpu.memory_space<vmem>>, vector<1x1x128xf32>,
    return
  }
  func.func @transform_0(%arg0: i32) -> (i32, i32, i32, i32) {
    %c0_i32 = arith.constant 0 : i32
    %c0_i32_0 = arith.constant 0 : i32
    %c0_i32_1 = arith.constant 0 : i32
    %c0_i32_2 = arith.constant 0 : i32
    return %arg0, %c0_i32, %c0_i32_0, %c0_i32_1 : i32, i32, i32, i32
  }
  func.func @transform_1(%arg0: i32) -> (i32, i32) {
    %c0_i32 = arith.constant 0 : i32
    %c0_i32_0 = arith.constant 0 : i32
    %c0_i32_1 = arith.constant 0 : i32
    return %c0_i32, %c0_i32_0 : i32, i32
  }
  func.func @transform_2(%arg0: i32) -> (i32, i32) {
    %c0_i32 = arith.constant 0 : i32
    %c0_i32_0 = arith.constant 0 : i32
    %c0_i32_1 = arith.constant 0 : i32
    return %c0_i32, %c0_i32_0 : i32, i32
  }
  func.func @transform_3(%arg0: i32) -> (i32, i32) {
    %c0_i32 = arith.constant 0 : i32
    %c0_i32_0 = arith.constant 0 : i32
    %c0_i32_1 = arith.constant 0 : i32
    return %c0_i32, %c0_i32_0 : i32, i32
  }
  func.func @transform_4(%arg0: i32) -> (i32, i32, i32, i32) {
    %c0_i32 = arith.constant 0 : i32
    %c0_i32_0 = arith.constant 0 : i32
    %c0_i32_1 = arith.constant 0 : i32
    %c0_i32_2 = arith.constant 0 : i32
    return %arg0, %c0_i32, %c0_i32_0, %c0_i32_1 : i32, i32, i32, i32
  }
  func.func @transform_5(%arg0: i32) -> (i32, i32, i32) {
    %c0_i32 = arith.constant 0 : i32
    %c0_i32_0 = arith.constant 0 : i32
    %c0_i32_1 = arith.constant 0 : i32
    return %arg0, %c0_i32, %c0_i32_0 : i32, i32, i32
  }
  func.func @transform_6(%arg0: i32) -> (i32, i32, i32) {
    %c0_i32 = arith.constant 0 : i32
    %c0_i32_0 = arith.constant 0 : i32
    %c0_i32_1 = arith.constant 0 : i32
    return %arg0, %c0_i32, %c0_i32_0 : i32, i32, i32
  }
}

</mosaic_0001>

<llo_original>
// kernel: base_forward.4
$region0: #{base_forward.4}
  #allocation0 [shape = 'u32[]', space=smem, size = 0x4, offset = 0x4, fixed_abs, tag = 'smem constant byte address 0x4 - core index']
  #allocation1 [shape = 'u32[72,128]{1,0:T(1,128)}', space=vmem, size = 0x9000, scoped, tag = 'internal scratch']
  %s0 = inlined_call_operand.vmem [shape: bf16[2,896,75], index: 0, kind: input, shape index: {}]
  %s1 = inlined_call_operand.vmem [shape: bf16[75,128], index: 1, kind: input, shape index: {}]
  %s2 = inlined_call_operand.vmem [shape: bf16[2,28,32,128], index: 2, kind: output, shape index: {0}]
  %s3 = inlined_call_operand.vmem [shape: f32[2,1,128], index: 3, kind: output, shape index: {1}]
  %s4 = inlined_call_operand.vmem [shape: f32[2,1,128], index: 4, kind: output, shape index: {2}]
  %5 = xla_tuple %s2, %s3, %s4
  %s6 = sld [smem:[#allocation0]]
  $region57: #{base_forward.4} parent=0
    _
  %s8 = ssub.s32 1, %s6
  %s9 = scalar_select 0, %s8, %s6
  loop: start=0, step=1, limit=4
  $region2: #{base_forward.4} parent=0 // loop_pre_header
    _
  $region3: #{base_forward.4} parent=0 // loop_header
    %s11 = sphi 0, %s15
    %p12 = scmp.ge.s32.totalorder %s11, 4
    %s21 = sphi 0, %s23
    %s24 = sphi 0, %s21
    %s25 = sphi 0, %s24
    %s41 = sphi 0, %s25
    %s45 = sphi 0, %s45
    %s47 = sphi 0, %s45
    %s48 = sphi 0, %s47
    %s62 = sphi 0, %s48
    %s68 = sphi 0, %s70
    %s71 = sphi 0, %s68
    %s72 = sphi 0, %s71
    %s88 = sphi 0, %s72
    %s94 = sphi 0, %s96
    %s97 = sphi 0, %s94
    %s98 = sphi 0, %s97
    %s114 = sphi 0, %s98
    %s120 = sphi 0, %s122
    %s123 = sphi 0, %s120
    %s124 = sphi 0, %s123
    %s140 = sphi 0, %s124
  $region4: #{base_forward.4} parent=0 // loop_header_branch
    %14 = sbr.rel (%p12) target = $region8
  $region5: #{base_forward.4} parent=0 // loop_body
    %s16 = ssub.s32 %s11, 1
    %s17 = ssub.s32 %s11, 2
    %s18 = sadd.s32 %s11, 1
    %s19 = ssub.s32 %s11, %s18
    %p20 = scmp.eq.s32.totalorder %s19, 0
    %s22 = sadd.s32 %s21, 1
    %s23 = scalar_select %p20, %s21, %s22
    %p26 = pneg %p20
    %p27 = scmp.eq.s32.totalorder %s11, 1
    %p28 = por %p26, %p27
    %p29 = scmp.ne.s32.totalorder %s21, %s24
    %p30 = scmp.eq.s32.totalorder %s11, 0
    %p31 = por %p29, %p30
    %p32 = scmp.ne.s32.totalorder %s21, %s24
    %p33 = scmp.eq.s32.totalorder %s16, 1
    %p34 = por %p32, %p33
    %p35 = scmp.ne.s32.totalorder %s24, %s25
    %p36 = scmp.eq.s32.totalorder %s16, 0
    %p37 = por %p35, %p36
    %p38 = scmp.ne.s32.totalorder %s24, %s25
    %p39 = scmp.eq.s32.totalorder %s17, 1
    %p40 = por %p38, %p39
    %p42 = scmp.ne.s32.totalorder %s25, %s41
    %p43 = scmp.eq.s32.totalorder %s17, 0
    %p44 = por %p42, %p43
    %s46 = sadd.s32 %s45, 1
    %p49 = scmp.eq.s32.totalorder %s11, 1
    %p50 = scmp.ne.s32.totalorder %s45, %s47
    %p51 = scmp.eq.s32.totalorder %s11, 0
    %p52 = por %p50, %p51
    %p53 = scmp.ne.s32.totalorder %s45, %s47
    %p54 = scmp.eq.s32.totalorder %s16, 1
    %p55 = por %p53, %p54
    %p56 = scmp.ne.s32.totalorder %s47, %s48
    %p57 = scmp.eq.s32.totalorder %s16, 0
    %p58 = por %p56, %p57
    %p59 = scmp.ne.s32.totalorder %s47, %s48
    %p60 = scmp.eq.s32.totalorder %s17, 1
    %p61 = por %p59, %p60
    %p63 = scmp.ne.s32.totalorder %s48, %s62
    %p64 = scmp.eq.s32.totalorder %s17, 0
    %p65 = por %p63, %p64
    %s66 = ssub.s32 %s11, %s18
    %p67 = scmp.eq.s32.totalorder %s66, 0
    %s69 = sadd.s32 %s68, 1
    %s70 = scalar_select %p67, %s68, %s69
    %p73 = pneg %p67
    %p74 = scmp.eq.s32.totalorder %s11, 1
    %p75 = por %p73, %p74
    %p76 = scmp.ne.s32.totalorder %s68, %s71
    %p77 = scmp.eq.s32.totalorder %s11, 0
    %p78 = por %p76, %p77
    %p79 = scmp.ne.s32.totalorder %s68, %s71
    %p80 = scmp.eq.s32.totalorder %s16, 1
    %p81 = por %p79, %p80
    %p82 = scmp.ne.s32.totalorder %s71, %s72
    %p83 = scmp.eq.s32.totalorder %s16, 0
    %p84 = por %p82, %p83
    %p85 = scmp.ne.s32.totalorder %s71, %s72
    %p86 = scmp.eq.s32.totalorder %s17, 1
    %p87 = por %p85, %p86
    %p89 = scmp.ne.s32.totalorder %s72, %s88
    %p90 = scmp.eq.s32.totalorder %s17, 0
    %p91 = por %p89, %p90
    %s92 = ssub.s32 %s11, %s18
    %p93 = scmp.eq.s32.totalorder %s92, 0
    %s95 = sadd.s32 %s94, 1
    %s96 = scalar_select %p93, %s94, %s95
    %p99 = pneg %p93
    %p100 = scmp.eq.s32.totalorder %s11, 1
    %p101 = por %p99, %p100
    %p102 = scmp.ne.s32.totalorder %s94, %s97
    %p103 = scmp.eq.s32.totalorder %s11, 0
    %p104 = por %p102, %p103
    %p105 = scmp.ne.s32.totalorder %s94, %s97
    %p106 = scmp.eq.s32.totalorder %s16, 1
    %p107 = por %p105, %p106
    %p108 = scmp.ne.s32.totalorder %s97, %s98
    %p109 = scmp.eq.s32.totalorder %s16, 0
    %p110 = por %p108, %p109
    %p111 = scmp.ne.s32.totalorder %s97, %s98
    %p112 = scmp.eq.s32.totalorder %s17, 1
    %p113 = por %p111, %p112
    %p115 = scmp.ne.s32.totalorder %s98, %s114
    %p116 = scmp.eq.s32.totalorder %s17, 0
    %p117 = por %p115, %p116
    %s118 = ssub.s32 %s11, %s18
    %p119 = scmp.eq.s32.totalorder %s118, 0
    %s121 = sadd.s32 %s120, 1
    %s122 = scalar_select %p119, %s120, %s121
    %p125 = pneg %p119
    %p126 = scmp.eq.s32.totalorder %s11, 1
    %p127 = por %p125, %p126
    %p128 = scmp.ne.s32.totalorder %s120, %s123
    %p129 = scmp.eq.s32.totalorder %s11, 0
    %p130 = por %p128, %p129
    %p131 = scmp.ne.s32.totalorder %s120, %s123
    %p132 = scmp.eq.s32.totalorder %s16, 1
    %p133 = por %p131, %p132
    %p134 = scmp.ne.s32.totalorder %s123, %s124
    %p135 = scmp.eq.s32.totalorder %s16, 0
    %p136 = por %p134, %p135
    %p137 = scmp.ne.s32.totalorder %s123, %s124
    %p138 = scmp.eq.s32.totalorder %s17, 1
    %p139 = por %p137, %p138
    %p141 = scmp.ne.s32.totalorder %s124, %s140
    %p142 = scmp.eq.s32.totalorder %s17, 0
    %p143 = por %p141, %p142
    %p144 = scmp.le.s32.totalorder 1, %s11
    %p145 = scmp.lt.s32.totalorder %s11, 3
    %p146 = pnand %p144, %p145
    %p147 = pneg %p146
    // Predicated region
    $region9: #{base_forward.4} parent=5 // pred_check
      _
    $region10: #{base_forward.4} parent=5 // pred_check_branch
      %149 = sbr.rel (%p146) target = $region12
    $region11: #{base_forward.4} parent=5 // pred_region
      %s150 = ssub.s32 %s11, 1
      // Predicated region
      $region13: #{base_forward.4} parent=11 // pred_check
        %p151 = pneg %p58
      $region14: #{base_forward.4} parent=11 // pred_check_branch
        %153 = sbr.rel (%p151) target = $region16
      $region15: #{base_forward.4} parent=11 // pred_region
        _
      $region16: #{base_forward.4} parent=11 // pred_fallthru
        _
    $region12: #{base_forward.4} parent=5 // pred_fallthru
      _
    %p154 = scmp.lt.s32.totalorder %s11, 2
    // Predicated region
    $region17: #{base_forward.4} parent=5 // pred_check
      %p155 = pneg %p154
    $region18: #{base_forward.4} parent=5 // pred_check_branch
      %157 = sbr.rel (%p155) target = $region20
    $region19: #{base_forward.4} parent=5 // pred_region
      // Predicated region
      $region21: #{base_forward.4} parent=19 // pred_check
        %p158 = pneg %p31
      $region22: #{base_forward.4} parent=19 // pred_check_branch
        %160 = sbr.rel (%p158) target = $region24
      $region23: #{base_forward.4} parent=19 // pred_region
        %p161 = scmp.lt.s32.totalorder %s11, 1
        %s162 = scalar_select %p161, %s11, 1
        %s163 = smul.addr %s162, 112
        %s164 = smul.addr %s163, 4
        %s165 = scalar_lea.vmem %s0, %s164
      $region24: #{base_forward.4} parent=19 // pred_fallthru
        _
    $region20: #{base_forward.4} parent=5 // pred_fallthru
      _
    %p166 = scmp.le.s32.totalorder 1, %s11
    %p167 = scmp.lt.s32.totalorder %s11, 3
    %p168 = pnand %p166, %p167
    %p169 = pneg %p168
    // Predicated region
    $region25: #{base_forward.4} parent=5 // pred_check
      _
    $region26: #{base_forward.4} parent=5 // pred_check_branch
      %171 = sbr.rel (%p168) target = $region28
    $region27: #{base_forward.4} parent=5 // pred_region
      %s172 = ssub.s32 %s11, 1
      %p173 = scmp.lt.s32.totalorder %s16, 1
      %s174 = scalar_select %p173, %s16, 1
      %s175 = smul.addr %s174, 112
      %s176 = smul.addr %s175, 4
      %s177 = scalar_lea.vmem %s0, %s176
      %p178 = pneg %p37
      %p179 = pneg %p34
      %p180 = pneg %p58
      %p181 = pneg %p55
      %p182 = pneg %p84
      %p183 = pneg %p81
      %p184 = scmp.lt.s32.totalorder %s16, 1
      %s185 = scalar_select %p184, %s16, 1
      %s186 = smul.addr %s185, 112
      %s187 = smul.addr %s186, 4
      %s188 = scalar_lea.vmem %s2, %s187
      %p189 = pneg %p110
      %p190 = pneg %p107
      %p191 = scmp.lt.s32.totalorder %s16, 1
      %s192 = scalar_select %p191, %s16, 1
      %s193 = scalar_lea.vmem %s3, %s192
      %p194 = pneg %p136
      %p195 = pneg %p133
      %p196 = scmp.lt.s32.totalorder %s16, 1
      %s197 = scalar_select %p196, %s16, 1
      %s198 = scalar_lea.vmem %s4, %s197
      %p199 = scmp.lt.s32.totalorder %s16, 1
      %s200 = scalar_select %p199, %s16, 1
      %s201 = smul.addr %s200, 112
      %s202 = smul.addr %s201, 4
      %s203 = scalar_lea.vmem %s0, %s202
      %p204 = scmp.lt.s32.totalorder %s16, 1
      %s205 = scalar_select %p204, %s16, 1
      %s206 = smul.addr %s205, 112
      %s207 = smul.addr %s206, 4
      %s208 = scalar_lea.vmem %s2, %s207
      %p209 = scmp.lt.s32.totalorder %s16, 1
      %s210 = scalar_select %p209, %s16, 1
      %s211 = scalar_lea.vmem %s3, %s210
      %p212 = scmp.lt.s32.totalorder %s16, 1
      %s213 = scalar_select %p212, %s16, 1
      %s214 = scalar_lea.vmem %s4, %s213
      %v216 = vld [vmem:[%s203] sm:$0xf]
      %v217 = vld [vmem:[%s203 + $0x4] sm:$0xf]
      %v218 = vld [vmem:[%s203 + $0x8] sm:$0xf]
      %v219 = vld [vmem:[%s203 + $0xc] sm:$0xf]
      %v220 = vld [vmem:[%s203 + $0x10] sm:$0xf]
      %v221 = vld [vmem:[%s203 + $0x14] sm:$0xf]
      %v222 = vld [vmem:[%s203 + $0x18] sm:$0xf]
      %v223 = vld [vmem:[%s203 + $0x1c] sm:$0xf]
      %v224 = vld [vmem:[%s203 + $0x20] sm:$0xf]
      %v225 = vld [vmem:[%s203 + $0x24] sm:$0xf]
      %v226 = vld [vmem:[%s203 + $0x28] sm:$0xf]
      %v227 = vld [vmem:[%s203 + $0x2c] sm:$0xf]
      %v228 = vld [vmem:[%s203 + $0x30] sm:$0xf]
      %v229 = vld [vmem:[%s203 + $0x34] sm:$0xf]
      %v230 = vld [vmem:[%s203 + $0x38] sm:$0xf]
      %v231 = vld [vmem:[%s203 + $0x3c] sm:$0xf]
      %v232 = vld [vmem:[%s203 + $0x40] sm:$0xf]
      %v233 = vld [vmem:[%s203 + $0x44] sm:$0xf]
      %v234 = vld [vmem:[%s203 + $0x48] sm:$0xf]
      %v235 = vld [vmem:[%s203 + $0x4c] sm:$0xf]
      %v236 = vld [vmem:[%s203 + $0x50] sm:$0xf]
      %v237 = vld [vmem:[%s203 + $0x54] sm:$0xf]
      %v238 = vld [vmem:[%s203 + $0x58] sm:$0xf]
      %v239 = vld [vmem:[%s203 + $0x5c] sm:$0xf]
      %v240 = vld [vmem:[%s203 + $0x60] sm:$0xf]
      %v241 = vld [vmem:[%s203 + $0x64] sm:$0xf]
      %v242 = vld [vmem:[%s203 + $0x68] sm:$0xf]
      %v243 = vld [vmem:[%s203 + $0x6c] sm:$0xf]
      %v244 = vld [vmem:[%s203 + $0x70] sm:$0xf]
      %v245 = vld [vmem:[%s203 + $0x74] sm:$0xf]
      %v246 = vld [vmem:[%s203 + $0x78] sm:$0xf]
      %v247 = vld [vmem:[%s203 + $0x7c] sm:$0xf]
      %v248 = vld [vmem:[%s203 + $0x80] sm:$0xf]
      %v249 = vld [vmem:[%s203 + $0x84] sm:$0xf]
      %v250 = vld [vmem:[%s203 + $0x88] sm:$0xf]
      %v251 = vld [vmem:[%s203 + $0x8c] sm:$0xf]
      %v252 = vld [vmem:[%s203 + $0x90] sm:$0xf]
      %v253 = vld [vmem:[%s203 + $0x94] sm:$0xf]
      %v254 = vld [vmem:[%s203 + $0x98] sm:$0xf]
      %v255 = vld [vmem:[%s203 + $0x9c] sm:$0xf]
      %v256 = vld [vmem:[%s203 + $0xa0] sm:$0xf]
      %v257 = vld [vmem:[%s203 + $0xa4] sm:$0xf]
      %v258 = vld [vmem:[%s203 + $0xa8] sm:$0xf]
      %v259 = vld [vmem:[%s203 + $0xac] sm:$0xf]
      %v260 = vld [vmem:[%s203 + $0xb0] sm:$0xf]
      %v261 = vld [vmem:[%s203 + $0xb4] sm:$0xf]
      %v262 = vld [vmem:[%s203 + $0xb8] sm:$0xf]
      %v263 = vld [vmem:[%s203 + $0xbc] sm:$0xf]
      %v264 = vld [vmem:[%s203 + $0xc0] sm:$0xf]
      %v265 = vld [vmem:[%s203 + $0xc4] sm:$0xf]
      %v266 = vld [vmem:[%s203 + $0xc8] sm:$0xf]
      %v267 = vld [vmem:[%s203 + $0xcc] sm:$0xf]
      %v268 = vld [vmem:[%s203 + $0xd0] sm:$0xf]
      %v269 = vld [vmem:[%s203 + $0xd4] sm:$0xf]
      %v270 = vld [vmem:[%s203 + $0xd8] sm:$0xf]
      %v271 = vld [vmem:[%s203 + $0xdc] sm:$0xf]
      %v272 = vld [vmem:[%s203 + $0xe0] sm:$0xf]
      %v273 = vld [vmem:[%s203 + $0xe4] sm:$0xf]
      %v274 = vld [vmem:[%s203 + $0xe8] sm:$0xf]
      %v275 = vld [vmem:[%s203 + $0xec] sm:$0xf]
      %v276 = vld [vmem:[%s203 + $0xf0] sm:$0xf]
      %v277 = vld [vmem:[%s203 + $0xf4] sm:$0xf]
      %v278 = vld [vmem:[%s203 + $0xf8] sm:$0xf]
      %v279 = vld [vmem:[%s203 + $0xfc] sm:$0xf]
      %v280 = vld [vmem:[%s203 + $0x100] sm:$0xf]
      %v281 = vld [vmem:[%s203 + $0x104] sm:$0xf]
      %v282 = vld [vmem:[%s203 + $0x108] sm:$0xf]
      %v283 = vld [vmem:[%s203 + $0x10c] sm:$0xf]
      %v284 = vld [vmem:[%s203 + $0x110] sm:$0xf]
      %v285 = vld [vmem:[%s203 + $0x114] sm:$0xf]
      %v286 = vld [vmem:[%s203 + $0x118] sm:$0xf]
      %v287 = vld [vmem:[%s203 + $0x11c] sm:$0xf]
      %v288 = vld [vmem:[%s203 + $0x120] sm:$0xf]
      %v289 = vld [vmem:[%s203 + $0x124] sm:$0xf]
      %v290 = vld [vmem:[%s203 + $0x128] sm:$0xf]
      %v291 = vld [vmem:[%s203 + $0x12c] sm:$0xf]
      %v292 = vld [vmem:[%s203 + $0x130] sm:$0xf]
      %v293 = vld [vmem:[%s203 + $0x134] sm:$0xf]
      %v294 = vld [vmem:[%s203 + $0x138] sm:$0xf]
      %v295 = vld [vmem:[%s203 + $0x13c] sm:$0xf]
      %v296 = vld [vmem:[%s203 + $0x140] sm:$0xf]
      %v297 = vld [vmem:[%s203 + $0x144] sm:$0xf]
      %v298 = vld [vmem:[%s203 + $0x148] sm:$0xf]
      %v299 = vld [vmem:[%s203 + $0x14c] sm:$0xf]
      %v300 = vld [vmem:[%s203 + $0x150] sm:$0xf]
      %v301 = vld [vmem:[%s203 + $0x154] sm:$0xf]
      %v302 = vld [vmem:[%s203 + $0x158] sm:$0xf]
      %v303 = vld [vmem:[%s203 + $0x15c] sm:$0xf]
      %v304 = vld [vmem:[%s203 + $0x160] sm:$0xf]
      %v305 = vld [vmem:[%s203 + $0x164] sm:$0xf]
      %v306 = vld [vmem:[%s203 + $0x168] sm:$0xf]
      %v307 = vld [vmem:[%s203 + $0x16c] sm:$0xf]
      %v308 = vld [vmem:[%s203 + $0x170] sm:$0xf]
      %v309 = vld [vmem:[%s203 + $0x174] sm:$0xf]
      %v310 = vld [vmem:[%s203 + $0x178] sm:$0xf]
      %v311 = vld [vmem:[%s203 + $0x17c] sm:$0xf]
      %v312 = vld [vmem:[%s203 + $0x180] sm:$0xf]
      %v313 = vld [vmem:[%s203 + $0x184] sm:$0xf]
      %v314 = vld [vmem:[%s203 + $0x188] sm:$0xf]
      %v315 = vld [vmem:[%s203 + $0x18c] sm:$0xf]
      %v316 = vld [vmem:[%s203 + $0x190] sm:$0xf]
      %v317 = vld [vmem:[%s203 + $0x194] sm:$0xf]
      %v318 = vld [vmem:[%s203 + $0x198] sm:$0xf]
      %v319 = vld [vmem:[%s203 + $0x19c] sm:$0xf]
      %v320 = vld [vmem:[%s203 + $0x1a0] sm:$0xf]
      %v321 = vld [vmem:[%s203 + $0x1a4] sm:$0xf]
      %v322 = vld [vmem:[%s203 + $0x1a8] sm:$0xf]
      %v323 = vld [vmem:[%s203 + $0x1ac] sm:$0xf]
      %v324 = vld [vmem:[%s203 + $0x1b0] sm:$0xf]
      %v325 = vld [vmem:[%s203 + $0x1b4] sm:$0xf]
      %v326 = vld [vmem:[%s203 + $0x1b8] sm:$0xf]
      %v327 = vld [vmem:[%s203 + $0x1bc] sm:$0xf]
      %v328 = vld [vmem:[%s1] sm:$0xf]
      %v329 = vld [vmem:[%s1 + $0x4] sm:$0xf]
      %v330 = vld [vmem:[%s1 + $0x8] sm:$0xf]
      %v331 = vld [vmem:[%s1 + $0xc] sm:$0xf]
      %v332 = vld [vmem:[%s1 + $0x10] sm:$0xf]
      %v333 = vld [vmem:[%s1 + $0x14] sm:$0xf]
      %v334 = vld [vmem:[%s1 + $0x18] sm:$0xf]
      %v335 = vld [vmem:[%s1 + $0x1c] sm:$0xf]
      %v336 = vld [vmem:[%s1 + $0x20] sm:$0xf]
      %v337 = vld [vmem:[%s1 + $0x24] sm:$0x3]
      %v450 = vunpack.c.l.b16 %v216
      %v451 = vunpack.c.l.b16 %v217
      %v452 = vunpack.c.l.b16 %v218
      %v453 = vunpack.c.l.b16 %v219
      %v454 = vunpack.c.l.b16 %v220
      %v455 = vunpack.c.l.b16 %v221
      %v456 = vunpack.c.l.b16 %v222
      %v457 = vunpack.c.l.b16 %v223
      %v458 = vunpack.c.l.b16 %v224
      %v459 = vunpack.c.l.b16 %v225
      %v460 = vunpack.c.l.b16 %v226
      %v461 = vunpack.c.l.b16 %v227
      %v462 = vunpack.c.l.b16 %v228
      %v463 = vunpack.c.l.b16 %v229
      %v464 = vunpack.c.l.b16 %v230
      %v465 = vunpack.c.l.b16 %v231
      %v466 = vunpack.c.l.b16 %v232
      %v467 = vunpack.c.l.b16 %v233
      %v468 = vunpack.c.l.b16 %v234
      %v469 = vunpack.c.l.b16 %v235
      %v470 = vunpack.c.l.b16 %v236
      %v471 = vunpack.c.l.b16 %v237
      %v472 = vunpack.c.l.b16 %v238
      %v473 = vunpack.c.l.b16 %v239
      %v474 = vunpack.c.l.b16 %v240
      %v475 = vunpack.c.l.b16 %v241
      %v476 = vunpack.c.l.b16 %v242
      %v477 = vunpack.c.l.b16 %v243
      %v478 = vunpack.c.l.b16 %v244
      %v479 = vunpack.c.l.b16 %v245
      %v480 = vunpack.c.l.b16 %v246
      %v481 = vunpack.c.l.b16 %v247
      %v482 = vunpack.c.l.b16 %v248
      %v483 = vunpack.c.l.b16 %v249
      %v484 = vunpack.c.l.b16 %v250
      %v485 = vunpack.c.l.b16 %v251
      %v486 = vunpack.c.l.b16 %v252
      %v487 = vunpack.c.l.b16 %v253
      %v488 = vunpack.c.l.b16 %v254
      %v489 = vunpack.c.l.b16 %v255
      %v490 = vunpack.c.l.b16 %v256
      %v491 = vunpack.c.l.b16 %v257
      %v492 = vunpack.c.l.b16 %v258
      %v493 = vunpack.c.l.b16 %v259
      %v494 = vunpack.c.l.b16 %v260
      %v495 = vunpack.c.l.b16 %v261
      %v496 = vunpack.c.l.b16 %v262
      %v497 = vunpack.c.l.b16 %v263
      %v498 = vunpack.c.l.b16 %v264
      %v499 = vunpack.c.l.b16 %v265
      %v500 = vunpack.c.l.b16 %v266
      %v501 = vunpack.c.l.b16 %v267
      %v502 = vunpack.c.l.b16 %v268
      %v503 = vunpack.c.l.b16 %v269
      %v504 = vunpack.c.l.b16 %v270
      %v505 = vunpack.c.l.b16 %v271
      %v506 = vunpack.c.l.b16 %v272
      %v507 = vunpack.c.l.b16 %v273
      %v508 = vunpack.c.l.b16 %v274
      %v509 = vunpack.c.l.b16 %v275
      %v510 = vunpack.c.l.b16 %v276
      %v511 = vunpack.c.l.b16 %v277
      %v512 = vunpack.c.l.b16 %v278
      %v513 = vunpack.c.l.b16 %v279
      %v514 = vunpack.c.l.b16 %v280
      %v515 = vunpack.c.l.b16 %v281
      %v516 = vunpack.c.l.b16 %v282
      %v517 = vunpack.c.l.b16 %v283
      %v518 = vunpack.c.l.b16 %v284
      %v519 = vunpack.c.l.b16 %v285
      %v520 = vunpack.c.l.b16 %v286
      %v521 = vunpack.c.l.b16 %v287
      %v522 = vunpack.c.l.b16 %v288
      %v523 = vunpack.c.l.b16 %v289
      %v524 = vunpack.c.l.b16 %v290
      %v525 = vunpack.c.l.b16 %v291
      %v526 = vunpack.c.l.b16 %v292
      %v527 = vunpack.c.l.b16 %v293
      %v528 = vunpack.c.l.b16 %v294
      %v529 = vunpack.c.l.b16 %v295
      %v530 = vunpack.c.l.b16 %v296
      %v531 = vunpack.c.l.b16 %v297
      %v532 = vunpack.c.l.b16 %v298
      %v533 = vunpack.c.l.b16 %v299
      %v534 = vunpack.c.l.b16 %v300
      %v535 = vunpack.c.l.b16 %v301
      %v536 = vunpack.c.l.b16 %v302
      %v537 = vunpack.c.l.b16 %v303
      %v538 = vunpack.c.l.b16 %v304
      %v539 = vunpack.c.l.b16 %v305
      %v540 = vunpack.c.l.b16 %v306
      %v541 = vunpack.c.l.b16 %v307
      %v542 = vunpack.c.l.b16 %v308
      %v543 = vunpack.c.l.b16 %v309
      %v544 = vunpack.c.l.b16 %v310
      %v545 = vunpack.c.l.b16 %v311
      %v546 = vunpack.c.l.b16 %v312
      %v547 = vunpack.c.l.b16 %v313
      %v548 = vunpack.c.l.b16 %v314
      %v549 = vunpack.c.l.b16 %v315
      %v550 = vunpack.c.l.b16 %v316
      %v551 = vunpack.c.l.b16 %v317
      %v552 = vunpack.c.l.b16 %v318
      %v553 = vunpack.c.l.b16 %v319
      %v554 = vunpack.c.l.b16 %v320
      %v555 = vunpack.c.l.b16 %v321
      %v556 = vunpack.c.l.b16 %v322
      %v557 = vunpack.c.l.b16 %v323
      %v558 = vunpack.c.l.b16 %v324
      %v559 = vunpack.c.l.b16 %v325
      %v560 = vunpack.c.l.b16 %v326
      %v561 = vunpack.c.l.b16 %v327
      %v562 = vpack.c.b16 %v451, %v450
      %v563 = vpack.c.b16 %v453, %v452
      %v564 = vpack.c.b16 %v455, %v454
      %v565 = vpack.c.b16 %v457, %v456
      %v566 = vpack.c.b16 %v459, %v458
      %v567 = vpack.c.b16 %v461, %v460
      %v568 = vpack.c.b16 %v463, %v462
      %v569 = vpack.c.b16 %v465, %v464
      %v570 = vpack.c.b16 %v467, %v466
      %v571 = vpack.c.b16 %v469, %v468
      %v572 = vpack.c.b16 %v471, %v470
      %v573 = vpack.c.b16 %v473, %v472
      %v574 = vpack.c.b16 %v475, %v474
      %v575 = vpack.c.b16 %v477, %v476
      %v576 = vpack.c.b16 %v479, %v478
      %v577 = vpack.c.b16 %v481, %v480
      %v578 = vpack.c.b16 %v483, %v482
      %v579 = vpack.c.b16 %v485, %v484
      %v580 = vpack.c.b16 %v487, %v486
      %v581 = vpack.c.b16 %v489, %v488
      %v582 = vpack.c.b16 %v491, %v490
      %v583 = vpack.c.b16 %v493, %v492
      %v584 = vpack.c.b16 %v495, %v494
      %v585 = vpack.c.b16 %v497, %v496
      %v586 = vpack.c.b16 %v499, %v498
      %v587 = vpack.c.b16 %v501, %v500
      %v588 = vpack.c.b16 %v503, %v502
      %v589 = vpack.c.b16 %v505, %v504
      %v590 = vpack.c.b16 %v507, %v506
      %v591 = vpack.c.b16 %v509, %v508
      %v592 = vpack.c.b16 %v511, %v510
      %v593 = vpack.c.b16 %v513, %v512
      %v594 = vpack.c.b16 %v515, %v514
      %v595 = vpack.c.b16 %v517, %v516
      %v596 = vpack.c.b16 %v519, %v518
      %v597 = vpack.c.b16 %v521, %v520
      %v598 = vpack.c.b16 %v523, %v522
      %v599 = vpack.c.b16 %v525, %v524
      %v600 = vpack.c.b16 %v527, %v526
      %v601 = vpack.c.b16 %v529, %v528
      %v602 = vpack.c.b16 %v531, %v530
      %v603 = vpack.c.b16 %v533, %v532
      %v604 = vpack.c.b16 %v535, %v534
      %v605 = vpack.c.b16 %v537, %v536
      %v606 = vpack.c.b16 %v539, %v538
      %v607 = vpack.c.b16 %v541, %v540
      %v608 = vpack.c.b16 %v543, %v542
      %v609 = vpack.c.b16 %v545, %v544
      %v610 = vpack.c.b16 %v547, %v546
      %v611 = vpack.c.b16 %v549, %v548
      %v612 = vpack.c.b16 %v551, %v550
      %v613 = vpack.c.b16 %v553, %v552
      %v614 = vpack.c.b16 %v555, %v554
      %v615 = vpack.c.b16 %v557, %v556
      %v616 = vpack.c.b16 %v559, %v558
      %v617 = vpack.c.b16 %v561, %v560
      %v628 = vunpack.c.l.b16 %v328
      %v629 = vunpack.c.l.b16 %v329
      %v630 = vunpack.c.l.b16 %v330
      %v631 = vunpack.c.l.b16 %v331
      %v632 = vunpack.c.l.b16 %v332
      %v633 = vunpack.c.l.b16 %v333
      %v634 = vunpack.c.l.b16 %v334
      %v635 = vunpack.c.l.b16 %v335
      %v636 = vunpack.c.l.b16 %v336
      %v637 = vunpack.c.l.b16 %v337
      %v638 = vpack.c.b16 %v629, %v628
      %v639 = vpack.c.b16 %v631, %v630
      %v640 = vpack.c.b16 %v633, %v632
      %v641 = vpack.c.b16 %v635, %v634
      %v642 = vpack.c.b16 %v637, %v636
      %vm647 = vcmask 613376
      %v649 = vsel %vm647, %v562, 0
      %v652 = vsel %vm647, %v563, 0
      %v655 = vsel %vm647, %v564, 0
      %v658 = vsel %vm647, %v565, 0
      %v661 = vsel %vm647, %v566, 0
      %v664 = vsel %vm647, %v567, 0
      %v667 = vsel %vm647, %v568, 0
      %v670 = vsel %vm647, %v569, 0
      %v673 = vsel %vm647, %v570, 0
      %v676 = vsel %vm647, %v571, 0
      %v679 = vsel %vm647, %v572, 0
      %v682 = vsel %vm647, %v573, 0
      %v685 = vsel %vm647, %v574, 0
      %v688 = vsel %vm647, %v575, 0
      %v691 = vsel %vm647, %v576, 0
      %v694 = vsel %vm647, %v577, 0
      %v697 = vsel %vm647, %v578, 0
      %v700 = vsel %vm647, %v579, 0
      %v703 = vsel %vm647, %v580, 0
      %v706 = vsel %vm647, %v581, 0
      %v709 = vsel %vm647, %v582, 0
      %v712 = vsel %vm647, %v583, 0
      %v715 = vsel %vm647, %v584, 0
      %v718 = vsel %vm647, %v585, 0
      %v721 = vsel %vm647, %v586, 0
      %v724 = vsel %vm647, %v587, 0
      %v727 = vsel %vm647, %v588, 0
      %v730 = vsel %vm647, %v589, 0
      %v733 = vsel %vm647, %v590, 0
      %v736 = vsel %vm647, %v591, 0
      %v739 = vsel %vm647, %v592, 0
      %v742 = vsel %vm647, %v593, 0
      %v745 = vsel %vm647, %v594, 0
      %v748 = vsel %vm647, %v595, 0
      %v751 = vsel %vm647, %v596, 0
      %v754 = vsel %vm647, %v597, 0
      %v757 = vsel %vm647, %v598, 0
      %v760 = vsel %vm647, %v599, 0
      %v763 = vsel %vm647, %v600, 0
      %v766 = vsel %vm647, %v601, 0
      %v769 = vsel %vm647, %v602, 0
      %v772 = vsel %vm647, %v603, 0
      %v775 = vsel %vm647, %v604, 0
      %v778 = vsel %vm647, %v605, 0
      %v781 = vsel %vm647, %v606, 0
      %v784 = vsel %vm647, %v607, 0
      %v787 = vsel %vm647, %v608, 0
      %v790 = vsel %vm647, %v609, 0
      %v793 = vsel %vm647, %v610, 0
      %v796 = vsel %vm647, %v611, 0
      %v799 = vsel %vm647, %v612, 0
      %v802 = vsel %vm647, %v613, 0
      %v805 = vsel %vm647, %v614, 0
      %v808 = vsel %vm647, %v615, 0
      %v811 = vsel %vm647, %v616, 0
      %v814 = vsel %vm647, %v617, 0
      %vm816 = vcmask 1044480
      %vm817 = vcmask 1045504
      %v818 = vsel %vm816, 4294967295, 65535
      %v819 = vsel %vm817, %v818, 0
      %v821 = vand.u32 %v642, %v819
      %823 = vmatpush.bf16.msra.mxu0 0
      %824 = vmatpush.bf16.msra.mxu0 0
      %825 = vmatpush.bf16.msra.mxu0 0
      %826 = vmatpush.bf16.msra.mxu0 %v821
      %827 = vmatpush.bf16.msra.mxu0 %v641
      %828 = vmatpush.bf16.msra.mxu0 %v640
      %829 = vmatpush.bf16.msra.mxu0 %v639
      %830 = vmatpush.bf16.msra.mxu0 %v638
      %831 = vmatmul.bf16.gmra.mxu0 %v649
      %v832 = vpop.f32.mrf.mxu0
      %v833 = vadd.f32 0.0, %v832
      %v834 = vpop.f32.mrf.mxu0
      %v835 = vadd.f32 0.0, %v834
      %836 = vmatmul.bf16.gmra.mxu0 %v652
      %v837 = vpop.f32.mrf.mxu0
      %v838 = vadd.f32 0.0, %v837
      %v839 = vpop.f32.mrf.mxu0
      %v840 = vadd.f32 0.0, %v839
      %841 = vmatmul.bf16.gmra.mxu0 %v655
      %v842 = vpop.f32.mrf.mxu0
      %v843 = vadd.f32 0.0, %v842
      %v844 = vpop.f32.mrf.mxu0
      %v845 = vadd.f32 0.0, %v844
      %846 = vmatmul.bf16.gmra.mxu0 %v658
      %v847 = vpop.f32.mrf.mxu0
      %v848 = vadd.f32 0.0, %v847
      %v849 = vpop.f32.mrf.mxu0
      %v850 = vadd.f32 0.0, %v849
      %851 = vmatmul.bf16.gmra.mxu0 %v661
      %v852 = vpop.f32.mrf.mxu0
      %v853 = vadd.f32 0.0, %v852
      %v854 = vpop.f32.mrf.mxu0
      %v855 = vadd.f32 0.0, %v854
      %856 = vmatmul.bf16.gmra.mxu0 %v664
      %v857 = vpop.f32.mrf.mxu0
      %v858 = vadd.f32 0.0, %v857
      %v859 = vpop.f32.mrf.mxu0
      %v860 = vadd.f32 0.0, %v859
      %861 = vmatmul.bf16.gmra.mxu0 %v667
      %v862 = vpop.f32.mrf.mxu0
      %v863 = vadd.f32 0.0, %v862
      %v864 = vpop.f32.mrf.mxu0
      %v865 = vadd.f32 0.0, %v864
      %866 = vmatmul.bf16.gmra.mxu0 %v670
      %v867 = vpop.f32.mrf.mxu0
      %v868 = vadd.f32 0.0, %v867
      %v869 = vpop.f32.mrf.mxu0
      %v870 = vadd.f32 0.0, %v869
      %871 = vmatmul.bf16.gmra.mxu0 %v673
      %v872 = vpop.f32.mrf.mxu0
      %v873 = vadd.f32 0.0, %v872
      %v874 = vpop.f32.mrf.mxu0
      %v875 = vadd.f32 0.0, %v874
      %876 = vmatmul.bf16.gmra.mxu0 %v676
      %v877 = vpop.f32.mrf.mxu0
      %v878 = vadd.f32 0.0, %v877
      %v879 = vpop.f32.mrf.mxu0
      %v880 = vadd.f32 0.0, %v879
      %881 = vmatmul.bf16.gmra.mxu0 %v679
      %v882 = vpop.f32.mrf.mxu0
      %v883 = vadd.f32 0.0, %v882
      %v884 = vpop.f32.mrf.mxu0
      %v885 = vadd.f32 0.0, %v884
      %886 = vmatmul.bf16.gmra.mxu0 %v682
      %v887 = vpop.f32.mrf.mxu0
      %v888 = vadd.f32 0.0, %v887
      %v889 = vpop.f32.mrf.mxu0
      %v890 = vadd.f32 0.0, %v889
      %891 = vmatmul.bf16.gmra.mxu0 %v685
      %v892 = vpop.f32.mrf.mxu0
      %v893 = vadd.f32 0.0, %v892
      %v894 = vpop.f32.mrf.mxu0
      %v895 = vadd.f32 0.0, %v894
      %896 = vmatmul.bf16.gmra.mxu0 %v688
      %v897 = vpop.f32.mrf.mxu0
      %v898 = vadd.f32 0.0, %v897
      %v899 = vpop.f32.mrf.mxu0
      %v900 = vadd.f32 0.0, %v899
      %901 = vmatmul.bf16.gmra.mxu0 %v691
      %v902 = vpop.f32.mrf.mxu0
      %v903 = vadd.f32 0.0, %v902
      %v904 = vpop.f32.mrf.mxu0
      %v905 = vadd.f32 0.0, %v904
      %906 = vmatmul.bf16.gmra.mxu0 %v694
      %v907 = vpop.f32.mrf.mxu0
      %v908 = vadd.f32 0.0, %v907
      %v909 = vpop.f32.mrf.mxu0
      %v910 = vadd.f32 0.0, %v909
      %911 = vmatmul.bf16.gmra.mxu0 %v697
      %v912 = vpop.f32.mrf.mxu0
      %v913 = vadd.f32 0.0, %v912
      %v914 = vpop.f32.mrf.mxu0
      %v915 = vadd.f32 0.0, %v914
      %916 = vmatmul.bf16.gmra.mxu0 %v700
      %v917 = vpop.f32.mrf.mxu0
      %v918 = vadd.f32 0.0, %v917
      %v919 = vpop.f32.mrf.mxu0
      %v920 = vadd.f32 0.0, %v919
      %921 = vmatmul.bf16.gmra.mxu0 %v703
      %v922 = vpop.f32.mrf.mxu0
      %v923 = vadd.f32 0.0, %v922
      %v924 = vpop.f32.mrf.mxu0
      %v925 = vadd.f32 0.0, %v924
      %926 = vmatmul.bf16.gmra.mxu0 %v706
      %v927 = vpop.f32.mrf.mxu0
      %v928 = vadd.f32 0.0, %v927
      %v929 = vpop.f32.mrf.mxu0
      %v930 = vadd.f32 0.0, %v929
      %931 = vmatmul.bf16.gmra.mxu0 %v709
      %v932 = vpop.f32.mrf.mxu0
      %v933 = vadd.f32 0.0, %v932
      %v934 = vpop.f32.mrf.mxu0
      %v935 = vadd.f32 0.0, %v934
      %936 = vmatmul.bf16.gmra.mxu0 %v712
      %v937 = vpop.f32.mrf.mxu0
      %v938 = vadd.f32 0.0, %v937
      %v939 = vpop.f32.mrf.mxu0
      %v940 = vadd.f32 0.0, %v939
      %941 = vmatmul.bf16.gmra.mxu0 %v715
      %v942 = vpop.f32.mrf.mxu0
      %v943 = vadd.f32 0.0, %v942
      %v944 = vpop.f32.mrf.mxu0
      %v945 = vadd.f32 0.0, %v944
      %946 = vmatmul.bf16.gmra.mxu0 %v718
      %v947 = vpop.f32.mrf.mxu0
      %v948 = vadd.f32 0.0, %v947
      %v949 = vpop.f32.mrf.mxu0
      %v950 = vadd.f32 0.0, %v949
      %951 = vmatmul.bf16.gmra.mxu0 %v721
      %v952 = vpop.f32.mrf.mxu0
      %v953 = vadd.f32 0.0, %v952
      %v954 = vpop.f32.mrf.mxu0
      %v955 = vadd.f32 0.0, %v954
      %956 = vmatmul.bf16.gmra.mxu0 %v724
      %v957 = vpop.f32.mrf.mxu0
      %v958 = vadd.f32 0.0, %v957
      %v959 = vpop.f32.mrf.mxu0
      %v960 = vadd.f32 0.0, %v959
      %961 = vmatmul.bf16.gmra.mxu0 %v727
      %v962 = vpop.f32.mrf.mxu0
      %v963 = vadd.f32 0.0, %v962
      %v964 = vpop.f32.mrf.mxu0
      %v965 = vadd.f32 0.0, %v964
      %966 = vmatmul.bf16.gmra.mxu0 %v730
      %v967 = vpop.f32.mrf.mxu0
      %v968 = vadd.f32 0.0, %v967
      %v969 = vpop.f32.mrf.mxu0
      %v970 = vadd.f32 0.0, %v969
      %971 = vmatmul.bf16.gmra.mxu0 %v733
      %v972 = vpop.f32.mrf.mxu0
      %v973 = vadd.f32 0.0, %v972
      %v974 = vpop.f32.mrf.mxu0
      %v975 = vadd.f32 0.0, %v974
      %976 = vmatmul.bf16.gmra.mxu0 %v736
      %v977 = vpop.f32.mrf.mxu0
      %v978 = vadd.f32 0.0, %v977
      %v979 = vpop.f32.mrf.mxu0
      %v980 = vadd.f32 0.0, %v979
      %981 = vmatmul.bf16.gmra.mxu0 %v739
      %v982 = vpop.f32.mrf.mxu0
      %v983 = vadd.f32 0.0, %v982
      %v984 = vpop.f32.mrf.mxu0
      %v985 = vadd.f32 0.0, %v984
      %986 = vmatmul.bf16.gmra.mxu0 %v742
      %v987 = vpop.f32.mrf.mxu0
      %v988 = vadd.f32 0.0, %v987
      %v989 = vpop.f32.mrf.mxu0
      %v990 = vadd.f32 0.0, %v989
      %991 = vmatmul.bf16.gmra.mxu0 %v745
      %v992 = vpop.f32.mrf.mxu0
      %v993 = vadd.f32 0.0, %v992
      %v994 = vpop.f32.mrf.mxu0
      %v995 = vadd.f32 0.0, %v994
      %996 = vmatmul.bf16.gmra.mxu0 %v748
      %v997 = vpop.f32.mrf.mxu0
      %v998 = vadd.f32 0.0, %v997
      %v999 = vpop.f32.mrf.mxu0
      %v1000 = vadd.f32 0.0, %v999
      %1001 = vmatmul.bf16.gmra.mxu0 %v751
      %v1002 = vpop.f32.mrf.mxu0
      %v1003 = vadd.f32 0.0, %v1002
      %v1004 = vpop.f32.mrf.mxu0
      %v1005 = vadd.f32 0.0, %v1004
      %1006 = vmatmul.bf16.gmra.mxu0 %v754
      %v1007 = vpop.f32.mrf.mxu0
      %v1008 = vadd.f32 0.0, %v1007
      %v1009 = vpop.f32.mrf.mxu0
      %v1010 = vadd.f32 0.0, %v1009
      %1011 = vmatmul.bf16.gmra.mxu0 %v757
      %v1012 = vpop.f32.mrf.mxu0
      %v1013 = vadd.f32 0.0, %v1012
      %v1014 = vpop.f32.mrf.mxu0
      %v1015 = vadd.f32 0.0, %v1014
      %1016 = vmatmul.bf16.gmra.mxu0 %v760
      %v1017 = vpop.f32.mrf.mxu0
      %v1018 = vadd.f32 0.0, %v1017
      %v1019 = vpop.f32.mrf.mxu0
      %v1020 = vadd.f32 0.0, %v1019
      %1021 = vmatmul.bf16.gmra.mxu0 %v763
      %v1022 = vpop.f32.mrf.mxu0
      %v1023 = vadd.f32 0.0, %v1022
      %v1024 = vpop.f32.mrf.mxu0
      %v1025 = vadd.f32 0.0, %v1024
      %1026 = vmatmul.bf16.gmra.mxu0 %v766
      %v1027 = vpop.f32.mrf.mxu0
      %v1028 = vadd.f32 0.0, %v1027
      %v1029 = vpop.f32.mrf.mxu0
      %v1030 = vadd.f32 0.0, %v1029
      %1031 = vmatmul.bf16.gmra.mxu0 %v769
      %v1032 = vpop.f32.mrf.mxu0
      %v1033 = vadd.f32 0.0, %v1032
      %v1034 = vpop.f32.mrf.mxu0
      %v1035 = vadd.f32 0.0, %v1034
      %1036 = vmatmul.bf16.gmra.mxu0 %v772
      %v1037 = vpop.f32.mrf.mxu0
      %v1038 = vadd.f32 0.0, %v1037
      %v1039 = vpop.f32.mrf.mxu0
      %v1040 = vadd.f32 0.0, %v1039
      %1041 = vmatmul.bf16.gmra.mxu0 %v775
      %v1042 = vpop.f32.mrf.mxu0
      %v1043 = vadd.f32 0.0, %v1042
      %v1044 = vpop.f32.mrf.mxu0
      %v1045 = vadd.f32 0.0, %v1044
      %1046 = vmatmul.bf16.gmra.mxu0 %v778
      %v1047 = vpop.f32.mrf.mxu0
      %v1048 = vadd.f32 0.0, %v1047
      %v1049 = vpop.f32.mrf.mxu0
      %v1050 = vadd.f32 0.0, %v1049
      %1051 = vmatmul.bf16.gmra.mxu0 %v781
      %v1052 = vpop.f32.mrf.mxu0
      %v1053 = vadd.f32 0.0, %v1052
      %v1054 = vpop.f32.mrf.mxu0
      %v1055 = vadd.f32 0.0, %v1054
      %1056 = vmatmul.bf16.gmra.mxu0 %v784
      %v1057 = vpop.f32.mrf.mxu0
      %v1058 = vadd.f32 0.0, %v1057
      %v1059 = vpop.f32.mrf.mxu0
      %v1060 = vadd.f32 0.0, %v1059
      %1061 = vmatmul.bf16.gmra.mxu0 %v787
      %v1062 = vpop.f32.mrf.mxu0
      %v1063 = vadd.f32 0.0, %v1062
      %v1064 = vpop.f32.mrf.mxu0
      %v1065 = vadd.f32 0.0, %v1064
      %1066 = vmatmul.bf16.gmra.mxu0 %v790
      %v1067 = vpop.f32.mrf.mxu0
      %v1068 = vadd.f32 0.0, %v1067
      %v1069 = vpop.f32.mrf.mxu0
      %v1070 = vadd.f32 0.0, %v1069
      %1071 = vmatmul.bf16.gmra.mxu0 %v793
      %v1072 = vpop.f32.mrf.mxu0
      %v1073 = vadd.f32 0.0, %v1072
      %v1074 = vpop.f32.mrf.mxu0
      %v1075 = vadd.f32 0.0, %v1074
      %1076 = vmatmul.bf16.gmra.mxu0 %v796
      %v1077 = vpop.f32.mrf.mxu0
      %v1078 = vadd.f32 0.0, %v1077
      %v1079 = vpop.f32.mrf.mxu0
      %v1080 = vadd.f32 0.0, %v1079
      %1081 = vmatmul.bf16.gmra.mxu0 %v799
      %v1082 = vpop.f32.mrf.mxu0
      %v1083 = vadd.f32 0.0, %v1082
      %v1084 = vpop.f32.mrf.mxu0
      %v1085 = vadd.f32 0.0, %v1084
      %1086 = vmatmul.bf16.gmra.mxu0 %v802
      %v1087 = vpop.f32.mrf.mxu0
      %v1088 = vadd.f32 0.0, %v1087
      %v1089 = vpop.f32.mrf.mxu0
      %v1090 = vadd.f32 0.0, %v1089
      %1091 = vmatmul.bf16.gmra.mxu0 %v805
      %v1092 = vpop.f32.mrf.mxu0
      %v1093 = vadd.f32 0.0, %v1092
      %v1094 = vpop.f32.mrf.mxu0
      %v1095 = vadd.f32 0.0, %v1094
      %1096 = vmatmul.bf16.gmra.mxu0 %v808
      %v1097 = vpop.f32.mrf.mxu0
      %v1098 = vadd.f32 0.0, %v1097
      %v1099 = vpop.f32.mrf.mxu0
      %v1100 = vadd.f32 0.0, %v1099
      %1101 = vmatmul.bf16.gmra.mxu0 %v811
      %v1102 = vpop.f32.mrf.mxu0
      %v1103 = vadd.f32 0.0, %v1102
      %v1104 = vpop.f32.mrf.mxu0
      %v1105 = vadd.f32 0.0, %v1104
      %1106 = vmatmul.bf16.gmra.mxu0 %v814
      %v1107 = vpop.f32.mrf.mxu0
      %v1108 = vadd.f32 0.0, %v1107
      %v1109 = vpop.f32.mrf.mxu0
      %v1110 = vadd.f32 0.0, %v1109
      %1111 = vdwg.mxu0
      %v1112 = vlaneseq
      %v1113 = vshrl.u32 %v1112, 7
      %v1114 = vadd.s32 %v1113, 8
      %v1115 = vadd.s32 %v1113, 16
      %v1116 = vadd.s32 %v1113, 24
      %vm1117 = vcmp.lt.s32.totalorder %v1113, 28
      %vm1118 = vcmp.lt.s32.totalorder %v1114, 28
      %vm1119 = vcmp.lt.s32.totalorder %v1115, 28
      %vm1120 = vcmp.lt.s32.totalorder %v1116, 28
      %v1121 = vsel %vm1117, %v833, 0.0
      %v1122 = vsel %vm1118, %v835, 0.0
      %v1123 = vsel %vm1119, %v838, 0.0
      %v1124 = vsel %vm1120, %v840, 0.0
      %v1125 = vsel %vm1117, %v843, 0.0
      %v1126 = vsel %vm1118, %v845, 0.0
      %v1127 = vsel %vm1119, %v848, 0.0
      %v1128 = vsel %vm1120, %v850, 0.0
      %v1129 = vsel %vm1117, %v853, 0.0
      %v1130 = vsel %vm1118, %v855, 0.0
      %v1131 = vsel %vm1119, %v858, 0.0
      %v1132 = vsel %vm1120, %v860, 0.0
      %v1133 = vsel %vm1117, %v863, 0.0
      %v1134 = vsel %vm1118, %v865, 0.0
      %v1135 = vsel %vm1119, %v868, 0.0
      %v1136 = vsel %vm1120, %v870, 0.0
      %v1137 = vsel %vm1117, %v873, 0.0
      %v1138 = vsel %vm1118, %v875, 0.0
      %v1139 = vsel %vm1119, %v878, 0.0
      %v1140 = vsel %vm1120, %v880, 0.0
      %v1141 = vsel %vm1117, %v883, 0.0
      %v1142 = vsel %vm1118, %v885, 0.0
      %v1143 = vsel %vm1119, %v888, 0.0
      %v1144 = vsel %vm1120, %v890, 0.0
      %v1145 = vsel %vm1117, %v893, 0.0
      %v1146 = vsel %vm1118, %v895, 0.0
      %v1147 = vsel %vm1119, %v898, 0.0
      %v1148 = vsel %vm1120, %v900, 0.0
      %v1149 = vsel %vm1117, %v903, 0.0
      %v1150 = vsel %vm1118, %v905, 0.0
      %v1151 = vsel %vm1119, %v908, 0.0
      %v1152 = vsel %vm1120, %v910, 0.0
      %v1153 = vsel %vm1117, %v913, 0.0
      %v1154 = vsel %vm1118, %v915, 0.0
      %v1155 = vsel %vm1119, %v918, 0.0
      %v1156 = vsel %vm1120, %v920, 0.0
      %v1157 = vsel %vm1117, %v923, 0.0
      %v1158 = vsel %vm1118, %v925, 0.0
      %v1159 = vsel %vm1119, %v928, 0.0
      %v1160 = vsel %vm1120, %v930, 0.0
      %v1161 = vsel %vm1117, %v933, 0.0
      %v1162 = vsel %vm1118, %v935, 0.0
      %v1163 = vsel %vm1119, %v938, 0.0
      %v1164 = vsel %vm1120, %v940, 0.0
      %v1165 = vsel %vm1117, %v943, 0.0
      %v1166 = vsel %vm1118, %v945, 0.0
      %v1167 = vsel %vm1119, %v948, 0.0
      %v1168 = vsel %vm1120, %v950, 0.0
      %v1169 = vsel %vm1117, %v953, 0.0
      %v1170 = vsel %vm1118, %v955, 0.0
      %v1171 = vsel %vm1119, %v958, 0.0
      %v1172 = vsel %vm1120, %v960, 0.0
      %v1173 = vsel %vm1117, %v963, 0.0
      %v1174 = vsel %vm1118, %v965, 0.0
      %v1175 = vsel %vm1119, %v968, 0.0
      %v1176 = vsel %vm1120, %v970, 0.0
      %v1177 = vsel %vm1117, %v973, 0.0
      %v1178 = vsel %vm1118, %v975, 0.0
      %v1179 = vsel %vm1119, %v978, 0.0
      %v1180 = vsel %vm1120, %v980, 0.0
      %v1181 = vsel %vm1117, %v983, 0.0
      %v1182 = vsel %vm1118, %v985, 0.0
      %v1183 = vsel %vm1119, %v988, 0.0
      %v1184 = vsel %vm1120, %v990, 0.0
      %v1185 = vsel %vm1117, %v993, 0.0
      %v1186 = vsel %vm1118, %v995, 0.0
      %v1187 = vsel %vm1119, %v998, 0.0
      %v1188 = vsel %vm1120, %v1000, 0.0
      %v1189 = vsel %vm1117, %v1003, 0.0
      %v1190 = vsel %vm1118, %v1005, 0.0
      %v1191 = vsel %vm1119, %v1008, 0.0
      %v1192 = vsel %vm1120, %v1010, 0.0
      %v1193 = vsel %vm1117, %v1013, 0.0
      %v1194 = vsel %vm1118, %v1015, 0.0
      %v1195 = vsel %vm1119, %v1018, 0.0
      %v1196 = vsel %vm1120, %v1020, 0.0
      %v1197 = vsel %vm1117, %v1023, 0.0
      %v1198 = vsel %vm1118, %v1025, 0.0
      %v1199 = vsel %vm1119, %v1028, 0.0
      %v1200 = vsel %vm1120, %v1030, 0.0
      %v1201 = vsel %vm1117, %v1033, 0.0
      %v1202 = vsel %vm1118, %v1035, 0.0
      %v1203 = vsel %vm1119, %v1038, 0.0
      %v1204 = vsel %vm1120, %v1040, 0.0
      %v1205 = vsel %vm1117, %v1043, 0.0
      %v1206 = vsel %vm1118, %v1045, 0.0
      %v1207 = vsel %vm1119, %v1048, 0.0
      %v1208 = vsel %vm1120, %v1050, 0.0
      %v1209 = vsel %vm1117, %v1053, 0.0
      %v1210 = vsel %vm1118, %v1055, 0.0
      %v1211 = vsel %vm1119, %v1058, 0.0
      %v1212 = vsel %vm1120, %v1060, 0.0
      %v1213 = vsel %vm1117, %v1063, 0.0
      %v1214 = vsel %vm1118, %v1065, 0.0
      %v1215 = vsel %vm1119, %v1068, 0.0
      %v1216 = vsel %vm1120, %v1070, 0.0
      %v1217 = vsel %vm1117, %v1073, 0.0
      %v1218 = vsel %vm1118, %v1075, 0.0
      %v1219 = vsel %vm1119, %v1078, 0.0
      %v1220 = vsel %vm1120, %v1080, 0.0
      %v1221 = vsel %vm1117, %v1083, 0.0
      %v1222 = vsel %vm1118, %v1085, 0.0
      %v1223 = vsel %vm1119, %v1088, 0.0
      %v1224 = vsel %vm1120, %v1090, 0.0
      %v1225 = vsel %vm1117, %v1093, 0.0
      %v1226 = vsel %vm1118, %v1095, 0.0
      %v1227 = vsel %vm1119, %v1098, 0.0
      %v1228 = vsel %vm1120, %v1100, 0.0
      %v1229 = vsel %vm1117, %v1103, 0.0
      %v1230 = vsel %vm1118, %v1105, 0.0
      %v1231 = vsel %vm1119, %v1108, 0.0
      %v1232 = vsel %vm1120, %v1110, 0.0
      %v1233 = vpack.c.bf16 %v1121, %v1121
      %v1234 = vpack.c.bf16 %v1122, %v1122
      %v1235 = vpack.c.bf16 %v1123, %v1123
      %v1236 = vpack.c.bf16 %v1124, %v1124
      %v1237 = vpack.c.bf16 %v1125, %v1125
      %v1238 = vpack.c.bf16 %v1126, %v1126
      %v1239 = vpack.c.bf16 %v1127, %v1127
      %v1240 = vpack.c.bf16 %v1128, %v1128
      %v1241 = vpack.c.bf16 %v1129, %v1129
      %v1242 = vpack.c.bf16 %v1130, %v1130
      %v1243 = vpack.c.bf16 %v1131, %v1131
      %v1244 = vpack.c.bf16 %v1132, %v1132
      %v1245 = vpack.c.bf16 %v1133, %v1133
      %v1246 = vpack.c.bf16 %v1134, %v1134
      %v1247 = vpack.c.bf16 %v1135, %v1135
      %v1248 = vpack.c.bf16 %v1136, %v1136
      %v1249 = vpack.c.bf16 %v1137, %v1137
      %v1250 = vpack.c.bf16 %v1138, %v1138
      %v1251 = vpack.c.bf16 %v1139, %v1139
      %v1252 = vpack.c.bf16 %v1140, %v1140
      %v1253 = vpack.c.bf16 %v1141, %v1141
      %v1254 = vpack.c.bf16 %v1142, %v1142
      %v1255 = vpack.c.bf16 %v1143, %v1143
      %v1256 = vpack.c.bf16 %v1144, %v1144
      %v1257 = vpack.c.bf16 %v1145, %v1145
      %v1258 = vpack.c.bf16 %v1146, %v1146
      %v1259 = vpack.c.bf16 %v1147, %v1147
      %v1260 = vpack.c.bf16 %v1148, %v1148
      %v1261 = vpack.c.bf16 %v1149, %v1149
      %v1262 = vpack.c.bf16 %v1150, %v1150
      %v1263 = vpack.c.bf16 %v1151, %v1151
      %v1264 = vpack.c.bf16 %v1152, %v1152
      %v1265 = vpack.c.bf16 %v1153, %v1153
      %v1266 = vpack.c.bf16 %v1154, %v1154
      %v1267 = vpack.c.bf16 %v1155, %v1155
      %v1268 = vpack.c.bf16 %v1156, %v1156
      %v1269 = vpack.c.bf16 %v1157, %v1157
      %v1270 = vpack.c.bf16 %v1158, %v1158
      %v1271 = vpack.c.bf16 %v1159, %v1159
      %v1272 = vpack.c.bf16 %v1160, %v1160
      %v1273 = vpack.c.bf16 %v1161, %v1161
      %v1274 = vpack.c.bf16 %v1162, %v1162
      %v1275 = vpack.c.bf16 %v1163, %v1163
      %v1276 = vpack.c.bf16 %v1164, %v1164
      %v1277 = vpack.c.bf16 %v1165, %v1165
      %v1278 = vpack.c.bf16 %v1166, %v1166
      %v1279 = vpack.c.bf16 %v1167, %v1167
      %v1280 = vpack.c.bf16 %v1168, %v1168
      %v1281 = vpack.c.bf16 %v1169, %v1169
      %v1282 = vpack.c.bf16 %v1170, %v1170
      %v1283 = vpack.c.bf16 %v1171, %v1171
      %v1284 = vpack.c.bf16 %v1172, %v1172
      %v1285 = vpack.c.bf16 %v1173, %v1173
      %v1286 = vpack.c.bf16 %v1174, %v1174
      %v1287 = vpack.c.bf16 %v1175, %v1175
      %v1288 = vpack.c.bf16 %v1176, %v1176
      %v1289 = vpack.c.bf16 %v1177, %v1177
      %v1290 = vpack.c.bf16 %v1178, %v1178
      %v1291 = vpack.c.bf16 %v1179, %v1179
      %v1292 = vpack.c.bf16 %v1180, %v1180
      %v1293 = vpack.c.bf16 %v1181, %v1181
      %v1294 = vpack.c.bf16 %v1182, %v1182
      %v1295 = vpack.c.bf16 %v1183, %v1183
      %v1296 = vpack.c.bf16 %v1184, %v1184
      %v1297 = vpack.c.bf16 %v1185, %v1185
      %v1298 = vpack.c.bf16 %v1186, %v1186
      %v1299 = vpack.c.bf16 %v1187, %v1187
      %v1300 = vpack.c.bf16 %v1188, %v1188
      %v1301 = vpack.c.bf16 %v1189, %v1189
      %v1302 = vpack.c.bf16 %v1190, %v1190
      %v1303 = vpack.c.bf16 %v1191, %v1191
      %v1304 = vpack.c.bf16 %v1192, %v1192
      %v1305 = vpack.c.bf16 %v1193, %v1193
      %v1306 = vpack.c.bf16 %v1194, %v1194
      %v1307 = vpack.c.bf16 %v1195, %v1195
      %v1308 = vpack.c.bf16 %v1196, %v1196
      %v1309 = vpack.c.bf16 %v1197, %v1197
      %v1310 = vpack.c.bf16 %v1198, %v1198
      %v1311 = vpack.c.bf16 %v1199, %v1199
      %v1312 = vpack.c.bf16 %v1200, %v1200
      %v1313 = vpack.c.bf16 %v1201, %v1201
      %v1314 = vpack.c.bf16 %v1202, %v1202
      %v1315 = vpack.c.bf16 %v1203, %v1203
      %v1316 = vpack.c.bf16 %v1204, %v1204
      %v1317 = vpack.c.bf16 %v1205, %v1205
      %v1318 = vpack.c.bf16 %v1206, %v1206
      %v1319 = vpack.c.bf16 %v1207, %v1207
      %v1320 = vpack.c.bf16 %v1208, %v1208
      %v1321 = vpack.c.bf16 %v1209, %v1209
      %v1322 = vpack.c.bf16 %v1210, %v1210
      %v1323 = vpack.c.bf16 %v1211, %v1211
      %v1324 = vpack.c.bf16 %v1212, %v1212
      %v1325 = vpack.c.bf16 %v1213, %v1213
      %v1326 = vpack.c.bf16 %v1214, %v1214
      %v1327 = vpack.c.bf16 %v1215, %v1215
      %v1328 = vpack.c.bf16 %v1216, %v1216
      %v1329 = vpack.c.bf16 %v1217, %v1217
      %v1330 = vpack.c.bf16 %v1218, %v1218
      %v1331 = vpack.c.bf16 %v1219, %v1219
      %v1332 = vpack.c.bf16 %v1220, %v1220
      %v1333 = vpack.c.bf16 %v1221, %v1221
      %v1334 = vpack.c.bf16 %v1222, %v1222
      %v1335 = vpack.c.bf16 %v1223, %v1223
      %v1336 = vpack.c.bf16 %v1224, %v1224
      %v1337 = vpack.c.bf16 %v1225, %v1225
      %v1338 = vpack.c.bf16 %v1226, %v1226
      %v1339 = vpack.c.bf16 %v1227, %v1227
      %v1340 = vpack.c.bf16 %v1228, %v1228
      %v1341 = vpack.c.bf16 %v1229, %v1229
      %v1342 = vpack.c.bf16 %v1230, %v1230
      %v1343 = vpack.c.bf16 %v1231, %v1231
      %v1344 = vpack.c.bf16 %v1232, %v1232
      %1345 = vst [vmem:[%s208] sm:$0xf] %v1233
      %1346 = vst [vmem:[%s208 + $0x4] sm:$0xf] %v1234
      %1347 = vst [vmem:[%s208 + $0x8] sm:$0xf] %v1235
      %1348 = vst [vmem:[%s208 + $0xc] sm:$0xf] %v1236
      %1349 = vst [vmem:[%s208 + $0x10] sm:$0xf] %v1237
      %1350 = vst [vmem:[%s208 + $0x14] sm:$0xf] %v1238
      %1351 = vst [vmem:[%s208 + $0x18] sm:$0xf] %v1239
      %1352 = vst [vmem:[%s208 + $0x1c] sm:$0xf] %v1240
      %1353 = vst [vmem:[%s208 + $0x20] sm:$0xf] %v1241
      %1354 = vst [vmem:[%s208 + $0x24] sm:$0xf] %v1242
      %1355 = vst [vmem:[%s208 + $0x28] sm:$0xf] %v1243
      %1356 = vst [vmem:[%s208 + $0x2c] sm:$0xf] %v1244
      %1357 = vst [vmem:[%s208 + $0x30] sm:$0xf] %v1245
      %1358 = vst [vmem:[%s208 + $0x34] sm:$0xf] %v1246
      %1359 = vst [vmem:[%s208 + $0x38] sm:$0xf] %v1247
      %1360 = vst [vmem:[%s208 + $0x3c] sm:$0xf] %v1248
      %1361 = vst [vmem:[%s208 + $0x40] sm:$0xf] %v1249
      %1362 = vst [vmem:[%s208 + $0x44] sm:$0xf] %v1250
      %1363 = vst [vmem:[%s208 + $0x48] sm:$0xf] %v1251
      %1364 = vst [vmem:[%s208 + $0x4c] sm:$0xf] %v1252
      %1365 = vst [vmem:[%s208 + $0x50] sm:$0xf] %v1253
      %1366 = vst [vmem:[%s208 + $0x54] sm:$0xf] %v1254
      %1367 = vst [vmem:[%s208 + $0x58] sm:$0xf] %v1255
      %1368 = vst [vmem:[%s208 + $0x5c] sm:$0xf] %v1256
      %1369 = vst [vmem:[%s208 + $0x60] sm:$0xf] %v1257
      %1370 = vst [vmem:[%s208 + $0x64] sm:$0xf] %v1258
      %1371 = vst [vmem:[%s208 + $0x68] sm:$0xf] %v1259
      %1372 = vst [vmem:[%s208 + $0x6c] sm:$0xf] %v1260
      %1373 = vst [vmem:[%s208 + $0x70] sm:$0xf] %v1261
      %1374 = vst [vmem:[%s208 + $0x74] sm:$0xf] %v1262
      %1375 = vst [vmem:[%s208 + $0x78] sm:$0xf] %v1263
      %1376 = vst [vmem:[%s208 + $0x7c] sm:$0xf] %v1264
      %1377 = vst [vmem:[%s208 + $0x80] sm:$0xf] %v1265
      %1378 = vst [vmem:[%s208 + $0x84] sm:$0xf] %v1266
      %1379 = vst [vmem:[%s208 + $0x88] sm:$0xf] %v1267
      %1380 = vst [vmem:[%s208 + $0x8c] sm:$0xf] %v1268
      %1381 = vst [vmem:[%s208 + $0x90] sm:$0xf] %v1269
      %1382 = vst [vmem:[%s208 + $0x94] sm:$0xf] %v1270
      %1383 = vst [vmem:[%s208 + $0x98] sm:$0xf] %v1271
      %1384 = vst [vmem:[%s208 + $0x9c] sm:$0xf] %v1272
      %1385 = vst [vmem:[%s208 + $0xa0] sm:$0xf] %v1273
      %1386 = vst [vmem:[%s208 + $0xa4] sm:$0xf] %v1274
      %1387 = vst [vmem:[%s208 + $0xa8] sm:$0xf] %v1275
      %1388 = vst [vmem:[%s208 + $0xac] sm:$0xf] %v1276
      %1389 = vst [vmem:[%s208 + $0xb0] sm:$0xf] %v1277
      %1390 = vst [vmem:[%s208 + $0xb4] sm:$0xf] %v1278
      %1391 = vst [vmem:[%s208 + $0xb8] sm:$0xf] %v1279
      %1392 = vst [vmem:[%s208 + $0xbc] sm:$0xf] %v1280
      %1393 = vst [vmem:[%s208 + $0xc0] sm:$0xf] %v1281
      %1394 = vst [vmem:[%s208 + $0xc4] sm:$0xf] %v1282
      %1395 = vst [vmem:[%s208 + $0xc8] sm:$0xf] %v1283
      %1396 = vst [vmem:[%s208 + $0xcc] sm:$0xf] %v1284
      %1397 = vst [vmem:[%s208 + $0xd0] sm:$0xf] %v1285
      %1398 = vst [vmem:[%s208 + $0xd4] sm:$0xf] %v1286
      %1399 = vst [vmem:[%s208 + $0xd8] sm:$0xf] %v1287
      %1400 = vst [vmem:[%s208 + $0xdc] sm:$0xf] %v1288
      %1401 = vst [vmem:[%s208 + $0xe0] sm:$0xf] %v1289
      %1402 = vst [vmem:[%s208 + $0xe4] sm:$0xf] %v1290
      %1403 = vst [vmem:[%s208 + $0xe8] sm:$0xf] %v1291
      %1404 = vst [vmem:[%s208 + $0xec] sm:$0xf] %v1292
      %1405 = vst [vmem:[%s208 + $0xf0] sm:$0xf] %v1293
      %1406 = vst [vmem:[%s208 + $0xf4] sm:$0xf] %v1294
      %1407 = vst [vmem:[%s208 + $0xf8] sm:$0xf] %v1295
      %1408 = vst [vmem:[%s208 + $0xfc] sm:$0xf] %v1296
      %1409 = vst [vmem:[%s208 + $0x100] sm:$0xf] %v1297
      %1410 = vst [vmem:[%s208 + $0x104] sm:$0xf] %v1298
      %1411 = vst [vmem:[%s208 + $0x108] sm:$0xf] %v1299
      %1412 = vst [vmem:[%s208 + $0x10c] sm:$0xf] %v1300
      %1413 = vst [vmem:[%s208 + $0x110] sm:$0xf] %v1301
      %1414 = vst [vmem:[%s208 + $0x114] sm:$0xf] %v1302
      %1415 = vst [vmem:[%s208 + $0x118] sm:$0xf] %v1303
      %1416 = vst [vmem:[%s208 + $0x11c] sm:$0xf] %v1304
      %1417 = vst [vmem:[%s208 + $0x120] sm:$0xf] %v1305
      %1418 = vst [vmem:[%s208 + $0x124] sm:$0xf] %v1306
      %1419 = vst [vmem:[%s208 + $0x128] sm:$0xf] %v1307
      %1420 = vst [vmem:[%s208 + $0x12c] sm:$0xf] %v1308
      %1421 = vst [vmem:[%s208 + $0x130] sm:$0xf] %v1309
      %1422 = vst [vmem:[%s208 + $0x134] sm:$0xf] %v1310
      %1423 = vst [vmem:[%s208 + $0x138] sm:$0xf] %v1311
      %1424 = vst [vmem:[%s208 + $0x13c] sm:$0xf] %v1312
      %1425 = vst [vmem:[%s208 + $0x140] sm:$0xf] %v1313
      %1426 = vst [vmem:[%s208 + $0x144] sm:$0xf] %v1314
      %1427 = vst [vmem:[%s208 + $0x148] sm:$0xf] %v1315
      %1428 = vst [vmem:[%s208 + $0x14c] sm:$0xf] %v1316
      %1429 = vst [vmem:[%s208 + $0x150] sm:$0xf] %v1317
      %1430 = vst [vmem:[%s208 + $0x154] sm:$0xf] %v1318
      %1431 = vst [vmem:[%s208 + $0x158] sm:$0xf] %v1319
      %1432 = vst [vmem:[%s208 + $0x15c] sm:$0xf] %v1320
      %1433 = vst [vmem:[%s208 + $0x160] sm:$0xf] %v1321
      %1434 = vst [vmem:[%s208 + $0x164] sm:$0xf] %v1322
      %1435 = vst [vmem:[%s208 + $0x168] sm:$0xf] %v1323
      %1436 = vst [vmem:[%s208 + $0x16c] sm:$0xf] %v1324
      %1437 = vst [vmem:[%s208 + $0x170] sm:$0xf] %v1325
      %1438 = vst [vmem:[%s208 + $0x174] sm:$0xf] %v1326
      %1439 = vst [vmem:[%s208 + $0x178] sm:$0xf] %v1327
      %1440 = vst [vmem:[%s208 + $0x17c] sm:$0xf] %v1328
      %1441 = vst [vmem:[%s208 + $0x180] sm:$0xf] %v1329
      %1442 = vst [vmem:[%s208 + $0x184] sm:$0xf] %v1330
      %1443 = vst [vmem:[%s208 + $0x188] sm:$0xf] %v1331
      %1444 = vst [vmem:[%s208 + $0x18c] sm:$0xf] %v1332
      %1445 = vst [vmem:[%s208 + $0x190] sm:$0xf] %v1333
      %1446 = vst [vmem:[%s208 + $0x194] sm:$0xf] %v1334
      %1447 = vst [vmem:[%s208 + $0x198] sm:$0xf] %v1335
      %1448 = vst [vmem:[%s208 + $0x19c] sm:$0xf] %v1336
      %1449 = vst [vmem:[%s208 + $0x1a0] sm:$0xf] %v1337
      %1450 = vst [vmem:[%s208 + $0x1a4] sm:$0xf] %v1338
      %1451 = vst [vmem:[%s208 + $0x1a8] sm:$0xf] %v1339
      %1452 = vst [vmem:[%s208 + $0x1ac] sm:$0xf] %v1340
      %1453 = vst [vmem:[%s208 + $0x1b0] sm:$0xf] %v1341
      %1454 = vst [vmem:[%s208 + $0x1b4] sm:$0xf] %v1342
      %1455 = vst [vmem:[%s208 + $0x1b8] sm:$0xf] %v1343
      %1456 = vst [vmem:[%s208 + $0x1bc] sm:$0xf] %v1344
      %v1457 = vadd.f32 %v1121, %v1122
      %v1458 = vadd.f32 %v1457, %v1123
      %v1459 = vadd.f32 %v1458, %v1124
      %v1460 = vadd.f32 %v1459, %v1125
      %v1461 = vadd.f32 %v1460, %v1126
      %v1462 = vadd.f32 %v1461, %v1127
      %v1463 = vadd.f32 %v1462, %v1128
      %v1464 = vadd.f32 %v1463, %v1129
      %v1465 = vadd.f32 %v1464, %v1130
      %v1466 = vadd.f32 %v1465, %v1131
      %v1467 = vadd.f32 %v1466, %v1132
      %v1468 = vadd.f32 %v1467, %v1133
      %v1469 = vadd.f32 %v1468, %v1134
      %v1470 = vadd.f32 %v1469, %v1135
      %v1471 = vadd.f32 %v1470, %v1136
      %v1472 = vadd.f32 %v1471, %v1137
      %v1473 = vadd.f32 %v1472, %v1138
      %v1474 = vadd.f32 %v1473, %v1139
      %v1475 = vadd.f32 %v1474, %v1140
      %v1476 = vadd.f32 %v1475, %v1141
      %v1477 = vadd.f32 %v1476, %v1142
      %v1478 = vadd.f32 %v1477, %v1143
      %v1479 = vadd.f32 %v1478, %v1144
      %v1480 = vadd.f32 %v1479, %v1145
      %v1481 = vadd.f32 %v1480, %v1146
      %v1482 = vadd.f32 %v1481, %v1147
      %v1483 = vadd.f32 %v1482, %v1148
      %v1484 = vadd.f32 %v1483, %v1149
      %v1485 = vadd.f32 %v1484, %v1150
      %v1486 = vadd.f32 %v1485, %v1151
      %v1487 = vadd.f32 %v1486, %v1152
      %v1488 = vadd.f32 %v1487, %v1153
      %v1489 = vadd.f32 %v1488, %v1154
      %v1490 = vadd.f32 %v1489, %v1155
      %v1491 = vadd.f32 %v1490, %v1156
      %v1492 = vadd.f32 %v1491, %v1157
      %v1493 = vadd.f32 %v1492, %v1158
      %v1494 = vadd.f32 %v1493, %v1159
      %v1495 = vadd.f32 %v1494, %v1160
      %v1496 = vadd.f32 %v1495, %v1161
      %v1497 = vadd.f32 %v1496, %v1162
      %v1498 = vadd.f32 %v1497, %v1163
      %v1499 = vadd.f32 %v1498, %v1164
      %v1500 = vadd.f32 %v1499, %v1165
      %v1501 = vadd.f32 %v1500, %v1166
      %v1502 = vadd.f32 %v1501, %v1167
      %v1503 = vadd.f32 %v1502, %v1168
      %v1504 = vadd.f32 %v1503, %v1169
      %v1505 = vadd.f32 %v1504, %v1170
      %v1506 = vadd.f32 %v1505, %v1171
      %v1507 = vadd.f32 %v1506, %v1172
      %v1508 = vadd.f32 %v1507, %v1173
      %v1509 = vadd.f32 %v1508, %v1174
      %v1510 = vadd.f32 %v1509, %v1175
      %v1511 = vadd.f32 %v1510, %v1176
      %v1512 = vadd.f32 %v1511, %v1177
      %v1513 = vadd.f32 %v1512, %v1178
      %v1514 = vadd.f32 %v1513, %v1179
      %v1515 = vadd.f32 %v1514, %v1180
      %v1516 = vadd.f32 %v1515, %v1181
      %v1517 = vadd.f32 %v1516, %v1182
      %v1518 = vadd.f32 %v1517, %v1183
      %v1519 = vadd.f32 %v1518, %v1184
      %v1520 = vadd.f32 %v1519, %v1185
      %v1521 = vadd.f32 %v1520, %v1186
      %v1522 = vadd.f32 %v1521, %v1187
      %v1523 = vadd.f32 %v1522, %v1188
      %v1524 = vadd.f32 %v1523, %v1189
      %v1525 = vadd.f32 %v1524, %v1190
      %v1526 = vadd.f32 %v1525, %v1191
      %v1527 = vadd.f32 %v1526, %v1192
      %v1528 = vadd.f32 %v1527, %v1193
      %v1529 = vadd.f32 %v1528, %v1194
      %v1530 = vadd.f32 %v1529, %v1195
      %v1531 = vadd.f32 %v1530, %v1196
      %v1532 = vadd.f32 %v1531, %v1197
      %v1533 = vadd.f32 %v1532, %v1198
      %v1534 = vadd.f32 %v1533, %v1199
      %v1535 = vadd.f32 %v1534, %v1200
      %v1536 = vadd.f32 %v1535, %v1201
      %v1537 = vadd.f32 %v1536, %v1202
      %v1538 = vadd.f32 %v1537, %v1203
      %v1539 = vadd.f32 %v1538, %v1204
      %v1540 = vadd.f32 %v1539, %v1205
      %v1541 = vadd.f32 %v1540, %v1206
      %v1542 = vadd.f32 %v1541, %v1207
      %v1543 = vadd.f32 %v1542, %v1208
      %v1544 = vadd.f32 %v1543, %v1209
      %v1545 = vadd.f32 %v1544, %v1210
      %v1546 = vadd.f32 %v1545, %v1211
      %v1547 = vadd.f32 %v1546, %v1212
      %v1548 = vadd.f32 %v1547, %v1213
      %v1549 = vadd.f32 %v1548, %v1214
      %v1550 = vadd.f32 %v1549, %v1215
      %v1551 = vadd.f32 %v1550, %v1216
      %v1552 = vadd.f32 %v1551, %v1217
      %v1553 = vadd.f32 %v1552, %v1218
      %v1554 = vadd.f32 %v1553, %v1219
      %v1555 = vadd.f32 %v1554, %v1220
      %v1556 = vadd.f32 %v1555, %v1221
      %v1557 = vadd.f32 %v1556, %v1222
      %v1558 = vadd.f32 %v1557, %v1223
      %v1559 = vadd.f32 %v1558, %v1224
      %v1560 = vadd.f32 %v1559, %v1225
      %v1561 = vadd.f32 %v1560, %v1226
      %v1562 = vadd.f32 %v1561, %v1227
      %v1563 = vadd.f32 %v1562, %v1228
      %v1564 = vadd.f32 %v1563, %v1229
      %v1565 = vadd.f32 %v1564, %v1230
      %v1566 = vadd.f32 %v1565, %v1231
      %v1567 = vadd.f32 %v1566, %v1232
      %v1568 = vrot.slane %v1567, 4
      %v1569 = vadd.f32 %v1567, %v1568
      %v1570 = vrot.slane %v1569, 2
      %v1571 = vadd.f32 %v1569, %v1570
      %v1572 = vrot.slane %v1571, 1
      %v1573 = vadd.f32 %v1571, %v1572
      %1574 = vst [vmem:[%s211] sm:$0x1] %v1573
      %v1575 = vmul.f32 %v1121, %v1121
      %v1576 = vmul.f32 %v1122, %v1122
      %v1577 = vmul.f32 %v1123, %v1123
      %v1578 = vmul.f32 %v1124, %v1124
      %v1579 = vmul.f32 %v1125, %v1125
      %v1580 = vmul.f32 %v1126, %v1126
      %v1581 = vmul.f32 %v1127, %v1127
      %v1582 = vmul.f32 %v1128, %v1128
      %v1583 = vmul.f32 %v1129, %v1129
      %v1584 = vmul.f32 %v1130, %v1130
      %v1585 = vmul.f32 %v1131, %v1131
      %v1586 = vmul.f32 %v1132, %v1132
      %v1587 = vmul.f32 %v1133, %v1133
      %v1588 = vmul.f32 %v1134, %v1134
      %v1589 = vmul.f32 %v1135, %v1135
      %v1590 = vmul.f32 %v1136, %v1136
      %v1591 = vmul.f32 %v1137, %v1137
      %v1592 = vmul.f32 %v1138, %v1138
      %v1593 = vmul.f32 %v1139, %v1139
      %v1594 = vmul.f32 %v1140, %v1140
      %v1595 = vmul.f32 %v1141, %v1141
      %v1596 = vmul.f32 %v1142, %v1142
      %v1597 = vmul.f32 %v1143, %v1143
      %v1598 = vmul.f32 %v1144, %v1144
      %v1599 = vmul.f32 %v1145, %v1145
      %v1600 = vmul.f32 %v1146, %v1146
      %v1601 = vmul.f32 %v1147, %v1147
      %v1602 = vmul.f32 %v1148, %v1148
      %v1603 = vmul.f32 %v1149, %v1149
      %v1604 = vmul.f32 %v1150, %v1150
      %v1605 = vmul.f32 %v1151, %v1151
      %v1606 = vmul.f32 %v1152, %v1152
      %v1607 = vmul.f32 %v1153, %v1153
      %v1608 = vmul.f32 %v1154, %v1154
      %v1609 = vmul.f32 %v1155, %v1155
      %v1610 = vmul.f32 %v1156, %v1156
      %v1611 = vmul.f32 %v1157, %v1157
      %v1612 = vmul.f32 %v1158, %v1158
      %v1613 = vmul.f32 %v1159, %v1159
      %v1614 = vmul.f32 %v1160, %v1160
      %v1615 = vmul.f32 %v1161, %v1161
      %v1616 = vmul.f32 %v1162, %v1162
      %v1617 = vmul.f32 %v1163, %v1163
      %v1618 = vmul.f32 %v1164, %v1164
      %v1619 = vmul.f32 %v1165, %v1165
      %v1620 = vmul.f32 %v1166, %v1166
      %v1621 = vmul.f32 %v1167, %v1167
      %v1622 = vmul.f32 %v1168, %v1168
      %v1623 = vmul.f32 %v1169, %v1169
      %v1624 = vmul.f32 %v1170, %v1170
      %v1625 = vmul.f32 %v1171, %v1171
      %v1626 = vmul.f32 %v1172, %v1172
      %v1627 = vmul.f32 %v1173, %v1173
      %v1628 = vmul.f32 %v1174, %v1174
      %v1629 = vmul.f32 %v1175, %v1175
      %v1630 = vmul.f32 %v1176, %v1176
      %v1631 = vmul.f32 %v1177, %v1177
      %v1632 = vmul.f32 %v1178, %v1178
      %v1633 = vmul.f32 %v1179, %v1179
      %v1634 = vmul.f32 %v1180, %v1180
      %v1635 = vmul.f32 %v1181, %v1181
      %v1636 = vmul.f32 %v1182, %v1182
      %v1637 = vmul.f32 %v1183, %v1183
      %v1638 = vmul.f32 %v1184, %v1184
      %v1639 = vmul.f32 %v1185, %v1185
      %v1640 = vmul.f32 %v1186, %v1186
      %v1641 = vmul.f32 %v1187, %v1187
      %v1642 = vmul.f32 %v1188, %v1188
      %v1643 = vmul.f32 %v1189, %v1189
      %v1644 = vmul.f32 %v1190, %v1190
      %v1645 = vmul.f32 %v1191, %v1191
      %v1646 = vmul.f32 %v1192, %v1192
      %v1647 = vmul.f32 %v1193, %v1193
      %v1648 = vmul.f32 %v1194, %v1194
      %v1649 = vmul.f32 %v1195, %v1195
      %v1650 = vmul.f32 %v1196, %v1196
      %v1651 = vmul.f32 %v1197, %v1197
      %v1652 = vmul.f32 %v1198, %v1198
      %v1653 = vmul.f32 %v1199, %v1199
      %v1654 = vmul.f32 %v1200, %v1200
      %v1655 = vmul.f32 %v1201, %v1201
      %v1656 = vmul.f32 %v1202, %v1202
      %v1657 = vmul.f32 %v1203, %v1203
      %v1658 = vmul.f32 %v1204, %v1204
      %v1659 = vmul.f32 %v1205, %v1205
      %v1660 = vmul.f32 %v1206, %v1206
      %v1661 = vmul.f32 %v1207, %v1207
      %v1662 = vmul.f32 %v1208, %v1208
      %v1663 = vmul.f32 %v1209, %v1209
      %v1664 = vmul.f32 %v1210, %v1210
      %v1665 = vmul.f32 %v1211, %v1211
      %v1666 = vmul.f32 %v1212, %v1212
      %v1667 = vmul.f32 %v1213, %v1213
      %v1668 = vmul.f32 %v1214, %v1214
      %v1669 = vmul.f32 %v1215, %v1215
      %v1670 = vmul.f32 %v1216, %v1216
      %v1671 = vmul.f32 %v1217, %v1217
      %v1672 = vmul.f32 %v1218, %v1218
      %v1673 = vmul.f32 %v1219, %v1219
      %v1674 = vmul.f32 %v1220, %v1220
      %v1675 = vmul.f32 %v1221, %v1221
      %v1676 = vmul.f32 %v1222, %v1222
      %v1677 = vmul.f32 %v1223, %v1223
      %v1678 = vmul.f32 %v1224, %v1224
      %v1679 = vmul.f32 %v1225, %v1225
      %v1680 = vmul.f32 %v1226, %v1226
      %v1681 = vmul.f32 %v1227, %v1227
      %v1682 = vmul.f32 %v1228, %v1228
      %v1683 = vmul.f32 %v1229, %v1229
      %v1684 = vmul.f32 %v1230, %v1230
      %v1685 = vmul.f32 %v1231, %v1231
      %v1686 = vmul.f32 %v1232, %v1232
      %v1687 = vadd.f32 %v1575, %v1576
      %v1688 = vadd.f32 %v1687, %v1577
      %v1689 = vadd.f32 %v1688, %v1578
      %v1690 = vadd.f32 %v1689, %v1579
      %v1691 = vadd.f32 %v1690, %v1580
      %v1692 = vadd.f32 %v1691, %v1581
      %v1693 = vadd.f32 %v1692, %v1582
      %v1694 = vadd.f32 %v1693, %v1583
      %v1695 = vadd.f32 %v1694, %v1584
      %v1696 = vadd.f32 %v1695, %v1585
      %v1697 = vadd.f32 %v1696, %v1586
      %v1698 = vadd.f32 %v1697, %v1587
      %v1699 = vadd.f32 %v1698, %v1588
      %v1700 = vadd.f32 %v1699, %v1589
      %v1701 = vadd.f32 %v1700, %v1590
      %v1702 = vadd.f32 %v1701, %v1591
      %v1703 = vadd.f32 %v1702, %v1592
      %v1704 = vadd.f32 %v1703, %v1593
      %v1705 = vadd.f32 %v1704, %v1594
      %v1706 = vadd.f32 %v1705, %v1595
      %v1707 = vadd.f32 %v1706, %v1596
      %v1708 = vadd.f32 %v1707, %v1597
      %v1709 = vadd.f32 %v1708, %v1598
      %v1710 = vadd.f32 %v1709, %v1599
      %v1711 = vadd.f32 %v1710, %v1600
      %v1712 = vadd.f32 %v1711, %v1601
      %v1713 = vadd.f32 %v1712, %v1602
      %v1714 = vadd.f32 %v1713, %v1603
      %v1715 = vadd.f32 %v1714, %v1604
      %v1716 = vadd.f32 %v1715, %v1605
      %v1717 = vadd.f32 %v1716, %v1606
      %v1718 = vadd.f32 %v1717, %v1607
      %v1719 = vadd.f32 %v1718, %v1608
      %v1720 = vadd.f32 %v1719, %v1609
      %v1721 = vadd.f32 %v1720, %v1610
      %v1722 = vadd.f32 %v1721, %v1611
      %v1723 = vadd.f32 %v1722, %v1612
      %v1724 = vadd.f32 %v1723, %v1613
      %v1725 = vadd.f32 %v1724, %v1614
      %v1726 = vadd.f32 %v1725, %v1615
      %v1727 = vadd.f32 %v1726, %v1616
      %v1728 = vadd.f32 %v1727, %v1617
      %v1729 = vadd.f32 %v1728, %v1618
      %v1730 = vadd.f32 %v1729, %v1619
      %v1731 = vadd.f32 %v1730, %v1620
      %v1732 = vadd.f32 %v1731, %v1621
      %v1733 = vadd.f32 %v1732, %v1622
      %v1734 = vadd.f32 %v1733, %v1623
      %v1735 = vadd.f32 %v1734, %v1624
      %v1736 = vadd.f32 %v1735, %v1625
      %v1737 = vadd.f32 %v1736, %v1626
      %v1738 = vadd.f32 %v1737, %v1627
      %v1739 = vadd.f32 %v1738, %v1628
      %v1740 = vadd.f32 %v1739, %v1629
      %v1741 = vadd.f32 %v1740, %v1630
      %v1742 = vadd.f32 %v1741, %v1631
      %v1743 = vadd.f32 %v1742, %v1632
      %v1744 = vadd.f32 %v1743, %v1633
      %v1745 = vadd.f32 %v1744, %v1634
      %v1746 = vadd.f32 %v1745, %v1635
      %v1747 = vadd.f32 %v1746, %v1636
      %v1748 = vadd.f32 %v1747, %v1637
      %v1749 = vadd.f32 %v1748, %v1638
      %v1750 = vadd.f32 %v1749, %v1639
      %v1751 = vadd.f32 %v1750, %v1640
      %v1752 = vadd.f32 %v1751, %v1641
      %v1753 = vadd.f32 %v1752, %v1642
      %v1754 = vadd.f32 %v1753, %v1643
      %v1755 = vadd.f32 %v1754, %v1644
      %v1756 = vadd.f32 %v1755, %v1645
      %v1757 = vadd.f32 %v1756, %v1646
      %v1758 = vadd.f32 %v1757, %v1647
      %v1759 = vadd.f32 %v1758, %v1648
      %v1760 = vadd.f32 %v1759, %v1649
      %v1761 = vadd.f32 %v1760, %v1650
      %v1762 = vadd.f32 %v1761, %v1651
      %v1763 = vadd.f32 %v1762, %v1652
      %v1764 = vadd.f32 %v1763, %v1653
      %v1765 = vadd.f32 %v1764, %v1654
      %v1766 = vadd.f32 %v1765, %v1655
      %v1767 = vadd.f32 %v1766, %v1656
      %v1768 = vadd.f32 %v1767, %v1657
      %v1769 = vadd.f32 %v1768, %v1658
      %v1770 = vadd.f32 %v1769, %v1659
      %v1771 = vadd.f32 %v1770, %v1660
      %v1772 = vadd.f32 %v1771, %v1661
      %v1773 = vadd.f32 %v1772, %v1662
      %v1774 = vadd.f32 %v1773, %v1663
      %v1775 = vadd.f32 %v1774, %v1664
      %v1776 = vadd.f32 %v1775, %v1665
      %v1777 = vadd.f32 %v1776, %v1666
      %v1778 = vadd.f32 %v1777, %v1667
      %v1779 = vadd.f32 %v1778, %v1668
      %v1780 = vadd.f32 %v1779, %v1669
      %v1781 = vadd.f32 %v1780, %v1670
      %v1782 = vadd.f32 %v1781, %v1671
      %v1783 = vadd.f32 %v1782, %v1672
      %v1784 = vadd.f32 %v1783, %v1673
      %v1785 = vadd.f32 %v1784, %v1674
      %v1786 = vadd.f32 %v1785, %v1675
      %v1787 = vadd.f32 %v1786, %v1676
      %v1788 = vadd.f32 %v1787, %v1677
      %v1789 = vadd.f32 %v1788, %v1678
      %v1790 = vadd.f32 %v1789, %v1679
      %v1791 = vadd.f32 %v1790, %v1680
      %v1792 = vadd.f32 %v1791, %v1681
      %v1793 = vadd.f32 %v1792, %v1682
      %v1794 = vadd.f32 %v1793, %v1683
      %v1795 = vadd.f32 %v1794, %v1684
      %v1796 = vadd.f32 %v1795, %v1685
      %v1797 = vadd.f32 %v1796, %v1686
      %v1798 = vrot.slane %v1797, 4
      %v1799 = vadd.f32 %v1797, %v1798
      %v1800 = vrot.slane %v1799, 2
      %v1801 = vadd.f32 %v1799, %v1800
      %v1802 = vrot.slane %v1801, 1
      %v1803 = vadd.f32 %v1801, %v1802
      %1804 = vst [vmem:[%s214] sm:$0x1] %v1803
      %p1805 = scmp.lt.s32.totalorder %s16, 1
      %s1806 = scalar_select %p1805, %s16, 1
      %s1807 = smul.addr %s1806, 112
      %s1808 = smul.addr %s1807, 4
      %s1809 = scalar_lea.vmem %s2, %s1808
      %p1810 = scmp.lt.s32.totalorder %s16, 1
      %s1811 = scalar_select %p1810, %s16, 1
      %s1812 = scalar_lea.vmem %s3, %s1811
      %p1813 = scmp.lt.s32.totalorder %s16, 1
      %s1814 = scalar_select %p1813, %s16, 1
      %s1815 = scalar_lea.vmem %s4, %s1814
      // Predicated region
      $region29: #{base_forward.4} parent=27 // pred_check
        %p1816 = pneg %p81
      $region30: #{base_forward.4} parent=27 // pred_check_branch
        %1818 = sbr.rel (%p1816) target = $region32
      $region31: #{base_forward.4} parent=27 // pred_region
        _
      $region32: #{base_forward.4} parent=27 // pred_fallthru
        _
      // Predicated region
      $region33: #{base_forward.4} parent=27 // pred_check
        %p1819 = pneg %p107
      $region34: #{base_forward.4} parent=27 // pred_check_branch
        %1821 = sbr.rel (%p1819) target = $region36
      $region35: #{base_forward.4} parent=27 // pred_region
        _
      $region36: #{base_forward.4} parent=27 // pred_fallthru
        _
      // Predicated region
      $region37: #{base_forward.4} parent=27 // pred_check
        %p1822 = pneg %p133
      $region38: #{base_forward.4} parent=27 // pred_check_branch
        %1824 = sbr.rel (%p1822) target = $region40
      $region39: #{base_forward.4} parent=27 // pred_region
        _
      $region40: #{base_forward.4} parent=27 // pred_fallthru
        _
    $region28: #{base_forward.4} parent=5 // pred_fallthru
      _
    %p1825 = scmp.le.s32.totalorder 2, %s11
    // Predicated region
    $region41: #{base_forward.4} parent=5 // pred_check
      %p1826 = pneg %p1825
    $region42: #{base_forward.4} parent=5 // pred_check_branch
      %1828 = sbr.rel (%p1826) target = $region44
    $region43: #{base_forward.4} parent=5 // pred_region
      %s1829 = ssub.s32 %s11, 2
      // Predicated region
      $region45: #{base_forward.4} parent=43 // pred_check
        %p1830 = pneg %p87
      $region46: #{base_forward.4} parent=43 // pred_check_branch
        %1832 = sbr.rel (%p1830) target = $region48
      $region47: #{base_forward.4} parent=43 // pred_region
        %p1833 = scmp.lt.s32.totalorder %s17, 1
        %s1834 = scalar_select %p1833, %s17, 1
        %s1835 = smul.addr %s1834, 112
        %s1836 = smul.addr %s1835, 4
        %s1837 = scalar_lea.vmem %s2, %s1836
      $region48: #{base_forward.4} parent=43 // pred_fallthru
        _
      // Predicated region
      $region49: #{base_forward.4} parent=43 // pred_check
        %p1838 = pneg %p113
      $region50: #{base_forward.4} parent=43 // pred_check_branch
        %1840 = sbr.rel (%p1838) target = $region52
      $region51: #{base_forward.4} parent=43 // pred_region
        %p1841 = scmp.lt.s32.totalorder %s17, 1
        %s1842 = scalar_select %p1841, %s17, 1
        %s1843 = scalar_lea.vmem %s3, %s1842
      $region52: #{base_forward.4} parent=43 // pred_fallthru
        _
      // Predicated region
      $region53: #{base_forward.4} parent=43 // pred_check
        %p1844 = pneg %p139
      $region54: #{base_forward.4} parent=43 // pred_check_branch
        %1846 = sbr.rel (%p1844) target = $region56
      $region55: #{base_forward.4} parent=43 // pred_region
        %p1847 = scmp.lt.s32.totalorder %s17, 1
        %s1848 = scalar_select %p1847, %s17, 1
        %s1849 = scalar_lea.vmem %s4, %s1848
      $region56: #{base_forward.4} parent=43 // pred_fallthru
        _
    $region44: #{base_forward.4} parent=5 // pred_fallthru
      _
  $region6: #{base_forward.4} parent=0 // loop_footer
    %s15 = sadd.s32 1, %s11
  $region7: #{base_forward.4} parent=0 // loop_footer_branch
    %10 = sbr.rel target = $region3
  $region8: #{base_forward.4} parent=0 // loop_exit
    _

// kernel: base_forward.6
$region0: #{base_forward.6}
  #allocation0 [shape = 'u32[]', space=smem, size = 0x4, offset = 0x4, fixed_abs, tag = 'smem constant byte address 0x4 - core index']
  #allocation1 [shape = 'u32[72,128]{1,0:T(1,128)}', space=vmem, size = 0x9000, scoped, tag = 'internal scratch']
  %s0 = inlined_call_operand.vmem [shape: bf16[2,26,32,128], index: 0, kind: input, shape index: {}]
  %s1 = inlined_call_operand.vmem [shape: f32[1,128], index: 1, kind: input, shape index: {}]
  %s2 = inlined_call_operand.vmem [shape: f32[1,128], index: 2, kind: input, shape index: {}]
  %s3 = inlined_call_operand.vmem [shape: bf16[1152,128], index: 3, kind: input, shape index: {}]
  %s4 = inlined_call_operand.vmem [shape: bf16[2,11,16,128], index: 4, kind: output, shape index: {0}]
  %s5 = inlined_call_operand.vmem [shape: f32[2,1,128], index: 5, kind: output, shape index: {1}]
  %s6 = inlined_call_operand.vmem [shape: f32[2,1,128], index: 6, kind: output, shape index: {2}]
  %7 = xla_tuple %s4, %s5, %s6
  %s8 = sld [smem:[#allocation0]]
  $region65: #{base_forward.6} parent=0
    _
  %s10 = ssub.s32 1, %s8
  %s11 = scalar_select 0, %s10, %s8
  loop: start=0, step=1, limit=4
  $region2: #{base_forward.6} parent=0 // loop_pre_header
    _
  $region3: #{base_forward.6} parent=0 // loop_header
    %s13 = sphi 0, %s17
    %p14 = scmp.ge.s32.totalorder %s13, 4
    %s23 = sphi 0, %s25
    %s26 = sphi 0, %s23
    %s27 = sphi 0, %s26
    %s43 = sphi 0, %s27
    %s47 = sphi 0, %s47
    %s49 = sphi 0, %s47
    %s50 = sphi 0, %s49
    %s64 = sphi 0, %s50
    %s68 = sphi 0, %s68
    %s70 = sphi 0, %s68
    %s71 = sphi 0, %s70
    %s85 = sphi 0, %s71
    %s89 = sphi 0, %s89
    %s91 = sphi 0, %s89
    %s92 = sphi 0, %s91
    %s106 = sphi 0, %s92
    %s112 = sphi 0, %s114
    %s115 = sphi 0, %s112
    %s116 = sphi 0, %s115
    %s132 = sphi 0, %s116
    %s138 = sphi 0, %s140
    %s141 = sphi 0, %s138
    %s142 = sphi 0, %s141
    %s158 = sphi 0, %s142
    %s164 = sphi 0, %s166
    %s167 = sphi 0, %s164
    %s168 = sphi 0, %s167
    %s184 = sphi 0, %s168
  $region4: #{base_forward.6} parent=0 // loop_header_branch
    %16 = sbr.rel (%p14) target = $region8
  $region5: #{base_forward.6} parent=0 // loop_body
    %s18 = ssub.s32 %s13, 1
    %s19 = ssub.s32 %s13, 2
    %s20 = sadd.s32 %s13, 1
    %s21 = ssub.s32 %s13, %s20
    %p22 = scmp.eq.s32.totalorder %s21, 0
    %s24 = sadd.s32 %s23, 1
    %s25 = scalar_select %p22, %s23, %s24
    %p28 = pneg %p22
    %p29 = scmp.eq.s32.totalorder %s13, 1
    %p30 = por %p28, %p29
    %p31 = scmp.ne.s32.totalorder %s23, %s26
    %p32 = scmp.eq.s32.totalorder %s13, 0
    %p33 = por %p31, %p32
    %p34 = scmp.ne.s32.totalorder %s23, %s26
    %p35 = scmp.eq.s32.totalorder %s18, 1
    %p36 = por %p34, %p35
    %p37 = scmp.ne.s32.totalorder %s26, %s27
    %p38 = scmp.eq.s32.totalorder %s18, 0
    %p39 = por %p37, %p38
    %p40 = scmp.ne.s32.totalorder %s26, %s27
    %p41 = scmp.eq.s32.totalorder %s19, 1
    %p42 = por %p40, %p41
    %p44 = scmp.ne.s32.totalorder %s27, %s43
    %p45 = scmp.eq.s32.totalorder %s19, 0
    %p46 = por %p44, %p45
    %s48 = sadd.s32 %s47, 1
    %p51 = scmp.eq.s32.totalorder %s13, 1
    %p52 = scmp.ne.s32.totalorder %s47, %s49
    %p53 = scmp.eq.s32.totalorder %s13, 0
    %p54 = por %p52, %p53
    %p55 = scmp.ne.s32.totalorder %s47, %s49
    %p56 = scmp.eq.s32.totalorder %s18, 1
    %p57 = por %p55, %p56
    %p58 = scmp.ne.s32.totalorder %s49, %s50
    %p59 = scmp.eq.s32.totalorder %s18, 0
    %p60 = por %p58, %p59
    %p61 = scmp.ne.s32.totalorder %s49, %s50
    %p62 = scmp.eq.s32.totalorder %s19, 1
    %p63 = por %p61, %p62
    %p65 = scmp.ne.s32.totalorder %s50, %s64
    %p66 = scmp.eq.s32.totalorder %s19, 0
    %p67 = por %p65, %p66
    %s69 = sadd.s32 %s68, 1
    %p72 = scmp.eq.s32.totalorder %s13, 1
    %p73 = scmp.ne.s32.totalorder %s68, %s70
    %p74 = scmp.eq.s32.totalorder %s13, 0
    %p75 = por %p73, %p74
    %p76 = scmp.ne.s32.totalorder %s68, %s70
    %p77 = scmp.eq.s32.totalorder %s18, 1
    %p78 = por %p76, %p77
    %p79 = scmp.ne.s32.totalorder %s70, %s71
    %p80 = scmp.eq.s32.totalorder %s18, 0
    %p81 = por %p79, %p80
    %p82 = scmp.ne.s32.totalorder %s70, %s71
    %p83 = scmp.eq.s32.totalorder %s19, 1
    %p84 = por %p82, %p83
    %p86 = scmp.ne.s32.totalorder %s71, %s85
    %p87 = scmp.eq.s32.totalorder %s19, 0
    %p88 = por %p86, %p87
    %s90 = sadd.s32 %s89, 1
    %p93 = scmp.eq.s32.totalorder %s13, 1
    %p94 = scmp.ne.s32.totalorder %s89, %s91
    %p95 = scmp.eq.s32.totalorder %s13, 0
    %p96 = por %p94, %p95
    %p97 = scmp.ne.s32.totalorder %s89, %s91
    %p98 = scmp.eq.s32.totalorder %s18, 1
    %p99 = por %p97, %p98
    %p100 = scmp.ne.s32.totalorder %s91, %s92
    %p101 = scmp.eq.s32.totalorder %s18, 0
    %p102 = por %p100, %p101
    %p103 = scmp.ne.s32.totalorder %s91, %s92
    %p104 = scmp.eq.s32.totalorder %s19, 1
    %p105 = por %p103, %p104
    %p107 = scmp.ne.s32.totalorder %s92, %s106
    %p108 = scmp.eq.s32.totalorder %s19, 0
    %p109 = por %p107, %p108
    %s110 = ssub.s32 %s13, %s20
    %p111 = scmp.eq.s32.totalorder %s110, 0
    %s113 = sadd.s32 %s112, 1
    %s114 = scalar_select %p111, %s112, %s113
    %p117 = pneg %p111
    %p118 = scmp.eq.s32.totalorder %s13, 1
    %p119 = por %p117, %p118
    %p120 = scmp.ne.s32.totalorder %s112, %s115
    %p121 = scmp.eq.s32.totalorder %s13, 0
    %p122 = por %p120, %p121
    %p123 = scmp.ne.s32.totalorder %s112, %s115
    %p124 = scmp.eq.s32.totalorder %s18, 1
    %p125 = por %p123, %p124
    %p126 = scmp.ne.s32.totalorder %s115, %s116
    %p127 = scmp.eq.s32.totalorder %s18, 0
    %p128 = por %p126, %p127
    %p129 = scmp.ne.s32.totalorder %s115, %s116
    %p130 = scmp.eq.s32.totalorder %s19, 1
    %p131 = por %p129, %p130
    %p133 = scmp.ne.s32.totalorder %s116, %s132
    %p134 = scmp.eq.s32.totalorder %s19, 0
    %p135 = por %p133, %p134
    %s136 = ssub.s32 %s13, %s20
    %p137 = scmp.eq.s32.totalorder %s136, 0
    %s139 = sadd.s32 %s138, 1
    %s140 = scalar_select %p137, %s138, %s139
    %p143 = pneg %p137
    %p144 = scmp.eq.s32.totalorder %s13, 1
    %p145 = por %p143, %p144
    %p146 = scmp.ne.s32.totalorder %s138, %s141
    %p147 = scmp.eq.s32.totalorder %s13, 0
    %p148 = por %p146, %p147
    %p149 = scmp.ne.s32.totalorder %s138, %s141
    %p150 = scmp.eq.s32.totalorder %s18, 1
    %p151 = por %p149, %p150
    %p152 = scmp.ne.s32.totalorder %s141, %s142
    %p153 = scmp.eq.s32.totalorder %s18, 0
    %p154 = por %p152, %p153
    %p155 = scmp.ne.s32.totalorder %s141, %s142
    %p156 = scmp.eq.s32.totalorder %s19, 1
    %p157 = por %p155, %p156
    %p159 = scmp.ne.s32.totalorder %s142, %s158
    %p160 = scmp.eq.s32.totalorder %s19, 0
    %p161 = por %p159, %p160
    %s162 = ssub.s32 %s13, %s20
    %p163 = scmp.eq.s32.totalorder %s162, 0
    %s165 = sadd.s32 %s164, 1
    %s166 = scalar_select %p163, %s164, %s165
    %p169 = pneg %p163
    %p170 = scmp.eq.s32.totalorder %s13, 1
    %p171 = por %p169, %p170
    %p172 = scmp.ne.s32.totalorder %s164, %s167
    %p173 = scmp.eq.s32.totalorder %s13, 0
    %p174 = por %p172, %p173
    %p175 = scmp.ne.s32.totalorder %s164, %s167
    %p176 = scmp.eq.s32.totalorder %s18, 1
    %p177 = por %p175, %p176
    %p178 = scmp.ne.s32.totalorder %s167, %s168
    %p179 = scmp.eq.s32.totalorder %s18, 0
    %p180 = por %p178, %p179
    %p181 = scmp.ne.s32.totalorder %s167, %s168
    %p182 = scmp.eq.s32.totalorder %s19, 1
    %p183 = por %p181, %p182
    %p185 = scmp.ne.s32.totalorder %s168, %s184
    %p186 = scmp.eq.s32.totalorder %s19, 0
    %p187 = por %p185, %p186
    %p188 = scmp.le.s32.totalorder 1, %s13
    %p189 = scmp.lt.s32.totalorder %s13, 3
    %p190 = pnand %p188, %p189
    %p191 = pneg %p190
    // Predicated region
    $region9: #{base_forward.6} parent=5 // pred_check
      _
    $region10: #{base_forward.6} parent=5 // pred_check_branch
      %193 = sbr.rel (%p190) target = $region12
    $region11: #{base_forward.6} parent=5 // pred_region
      %s194 = ssub.s32 %s13, 1
      // Predicated region
      $region13: #{base_forward.6} parent=11 // pred_check
        %p195 = pneg %p60
      $region14: #{base_forward.6} parent=11 // pred_check_branch
        %197 = sbr.rel (%p195) target = $region16
      $region15: #{base_forward.6} parent=11 // pred_region
        _
      $region16: #{base_forward.6} parent=11 // pred_fallthru
        _
      // Predicated region
      $region17: #{base_forward.6} parent=11 // pred_check
        %p198 = pneg %p81
      $region18: #{base_forward.6} parent=11 // pred_check_branch
        %200 = sbr.rel (%p198) target = $region20
      $region19: #{base_forward.6} parent=11 // pred_region
        _
      $region20: #{base_forward.6} parent=11 // pred_fallthru
        _
      // Predicated region
      $region21: #{base_forward.6} parent=11 // pred_check
        %p201 = pneg %p102
      $region22: #{base_forward.6} parent=11 // pred_check_branch
        %203 = sbr.rel (%p201) target = $region24
      $region23: #{base_forward.6} parent=11 // pred_region
        _
      $region24: #{base_forward.6} parent=11 // pred_fallthru
        _
    $region12: #{base_forward.6} parent=5 // pred_fallthru
      _
    %p204 = scmp.lt.s32.totalorder %s13, 2
    // Predicated region
    $region25: #{base_forward.6} parent=5 // pred_check
      %p205 = pneg %p204
    $region26: #{base_forward.6} parent=5 // pred_check_branch
      %207 = sbr.rel (%p205) target = $region28
    $region27: #{base_forward.6} parent=5 // pred_region
      // Predicated region
      $region29: #{base_forward.6} parent=27 // pred_check
        %p208 = pneg %p33
      $region30: #{base_forward.6} parent=27 // pred_check_branch
        %210 = sbr.rel (%p208) target = $region32
      $region31: #{base_forward.6} parent=27 // pred_region
        %p211 = scmp.lt.s32.totalorder %s13, 1
        %s212 = scalar_select %p211, %s13, 1
        %s213 = smul.addr %s212, 104
        %s214 = smul.addr %s213, 4
        %s215 = scalar_lea.vmem %s0, %s214
      $region32: #{base_forward.6} parent=27 // pred_fallthru
        _
    $region28: #{base_forward.6} parent=5 // pred_fallthru
      _
    %p216 = scmp.le.s32.totalorder 1, %s13
    %p217 = scmp.lt.s32.totalorder %s13, 3
    %p218 = pnand %p216, %p217
    %p219 = pneg %p218
    // Predicated region
    $region33: #{base_forward.6} parent=5 // pred_check
      _
    $region34: #{base_forward.6} parent=5 // pred_check_branch
      %221 = sbr.rel (%p218) target = $region36
    $region35: #{base_forward.6} parent=5 // pred_region
      %s222 = ssub.s32 %s13, 1
      %p223 = scmp.lt.s32.totalorder %s18, 1
      %s224 = scalar_select %p223, %s18, 1
      %s225 = smul.addr %s224, 104
      %s226 = smul.addr %s225, 4
      %s227 = scalar_lea.vmem %s0, %s226
      %p228 = pneg %p39
      %p229 = pneg %p36
      %p230 = pneg %p60
      %p231 = pneg %p57
      %p232 = pneg %p81
      %p233 = pneg %p78
      %p234 = pneg %p102
      %p235 = pneg %p99
      %p236 = pneg %p128
      %p237 = pneg %p125
      %p238 = scmp.lt.s32.totalorder %s18, 1
      %s239 = scalar_select %p238, %s18, 1
      %s240 = smul.addr %s239, 22
      %s241 = smul.addr %s240, 4
      %s242 = scalar_lea.vmem %s4, %s241
      %p243 = pneg %p154
      %p244 = pneg %p151
      %p245 = scmp.lt.s32.totalorder %s18, 1
      %s246 = scalar_select %p245, %s18, 1
      %s247 = scalar_lea.vmem %s5, %s246
      %p248 = pneg %p180
      %p249 = pneg %p177
      %p250 = scmp.lt.s32.totalorder %s18, 1
      %s251 = scalar_select %p250, %s18, 1
      %s252 = scalar_lea.vmem %s6, %s251
      %p253 = scmp.lt.s32.totalorder %s18, 1
      %s254 = scalar_select %p253, %s18, 1
      %s255 = smul.addr %s254, 104
      %s256 = smul.addr %s255, 4
      %s257 = scalar_lea.vmem %s0, %s256
      %p258 = scmp.lt.s32.totalorder %s18, 1
      %s259 = scalar_select %p258, %s18, 1
      %s260 = smul.addr %s259, 22
      %s261 = smul.addr %s260, 4
      %s262 = scalar_lea.vmem %s4, %s261
      %p263 = scmp.lt.s32.totalorder %s18, 1
      %s264 = scalar_select %p263, %s18, 1
      %s265 = scalar_lea.vmem %s5, %s264
      %p266 = scmp.lt.s32.totalorder %s18, 1
      %s267 = scalar_select %p266, %s18, 1
      %s268 = scalar_lea.vmem %s6, %s267
      %v269 = vld [vmem:[%s1] sm:$0x1]
      %v270 = vld [vmem:[%s2] sm:$0x1]
      %v271 = vld [vmem:[%s257] sm:$0xf]
      %v272 = vld [vmem:[%s257 + $0x4] sm:$0xf]
      %v273 = vld [vmem:[%s257 + $0x8] sm:$0xf]
      %v274 = vld [vmem:[%s257 + $0xc] sm:$0xf]
      %v275 = vld [vmem:[%s257 + $0x10] sm:$0xf]
      %v276 = vld [vmem:[%s257 + $0x14] sm:$0xf]
      %v277 = vld [vmem:[%s257 + $0x18] sm:$0xf]
      %v278 = vld [vmem:[%s257 + $0x1c] sm:$0xf]
      %v279 = vld [vmem:[%s257 + $0x20] sm:$0xf]
      %v280 = vld [vmem:[%s257 + $0x24] sm:$0xf]
      %v281 = vld [vmem:[%s257 + $0x28] sm:$0xf]
      %v282 = vld [vmem:[%s257 + $0x2c] sm:$0xf]
      %v283 = vld [vmem:[%s257 + $0x30] sm:$0xf]
      %v284 = vld [vmem:[%s257 + $0x34] sm:$0xf]
      %v285 = vld [vmem:[%s257 + $0x38] sm:$0xf]
      %v286 = vld [vmem:[%s257 + $0x3c] sm:$0xf]
      %v287 = vld [vmem:[%s257 + $0x40] sm:$0xf]
      %v288 = vld [vmem:[%s257 + $0x44] sm:$0xf]
      %v289 = vld [vmem:[%s257 + $0x48] sm:$0xf]
      %v290 = vld [vmem:[%s257 + $0x4c] sm:$0xf]
      %v291 = vld [vmem:[%s257 + $0x50] sm:$0xf]
      %v292 = vld [vmem:[%s257 + $0x54] sm:$0xf]
      %v293 = vld [vmem:[%s257 + $0x58] sm:$0xf]
      %v294 = vld [vmem:[%s257 + $0x5c] sm:$0xf]
      %v295 = vld [vmem:[%s257 + $0x60] sm:$0xf]
      %v296 = vld [vmem:[%s257 + $0x64] sm:$0xf]
      %v297 = vld [vmem:[%s257 + $0x68] sm:$0xf]
      %v298 = vld [vmem:[%s257 + $0x6c] sm:$0xf]
      %v299 = vld [vmem:[%s257 + $0x70] sm:$0xf]
      %v300 = vld [vmem:[%s257 + $0x74] sm:$0xf]
      %v301 = vld [vmem:[%s257 + $0x78] sm:$0xf]
      %v302 = vld [vmem:[%s257 + $0x7c] sm:$0xf]
      %v303 = vld [vmem:[%s257 + $0x80] sm:$0xf]
      %v304 = vld [vmem:[%s257 + $0x84] sm:$0xf]
      %v305 = vld [vmem:[%s257 + $0x88] sm:$0xf]
      %v306 = vld [vmem:[%s257 + $0x8c] sm:$0xf]
      %v307 = vld [vmem:[%s257 + $0x90] sm:$0xf]
      %v308 = vld [vmem:[%s257 + $0x94] sm:$0xf]
      %v309 = vld [vmem:[%s257 + $0x98] sm:$0xf]
      %v310 = vld [vmem:[%s257 + $0x9c] sm:$0xf]
      %v311 = vld [vmem:[%s257 + $0xa0] sm:$0xf]
      %v312 = vld [vmem:[%s257 + $0xa4] sm:$0xf]
      %v313 = vld [vmem:[%s257 + $0xa8] sm:$0xf]
      %v314 = vld [vmem:[%s257 + $0xac] sm:$0xf]
      %v315 = vld [vmem:[%s257 + $0xb0] sm:$0xf]
      %v316 = vld [vmem:[%s257 + $0xb4] sm:$0xf]
      %v317 = vld [vmem:[%s257 + $0xb8] sm:$0xf]
      %v318 = vld [vmem:[%s257 + $0xbc] sm:$0xf]
      %v319 = vld [vmem:[%s257 + $0xc0] sm:$0xf]
      %v320 = vld [vmem:[%s257 + $0xc4] sm:$0xf]
      %v321 = vld [vmem:[%s257 + $0xc8] sm:$0xf]
      %v322 = vld [vmem:[%s257 + $0xcc] sm:$0xf]
      %v323 = vld [vmem:[%s257 + $0xd0] sm:$0xf]
      %v324 = vld [vmem:[%s257 + $0xd4] sm:$0xf]
      %v325 = vld [vmem:[%s257 + $0xd8] sm:$0xf]
      %v326 = vld [vmem:[%s257 + $0xdc] sm:$0xf]
      %v327 = vld [vmem:[%s257 + $0xe0] sm:$0xf]
      %v328 = vld [vmem:[%s257 + $0xe4] sm:$0xf]
      %v329 = vld [vmem:[%s257 + $0xe8] sm:$0xf]
      %v330 = vld [vmem:[%s257 + $0xec] sm:$0xf]
      %v331 = vld [vmem:[%s257 + $0xf0] sm:$0xf]
      %v332 = vld [vmem:[%s257 + $0xf4] sm:$0xf]
      %v333 = vld [vmem:[%s257 + $0xf8] sm:$0xf]
      %v334 = vld [vmem:[%s257 + $0xfc] sm:$0xf]
      %v335 = vld [vmem:[%s257 + $0x100] sm:$0xf]
      %v336 = vld [vmem:[%s257 + $0x104] sm:$0xf]
      %v337 = vld [vmem:[%s257 + $0x108] sm:$0xf]
      %v338 = vld [vmem:[%s257 + $0x10c] sm:$0xf]
      %v339 = vld [vmem:[%s257 + $0x110] sm:$0xf]
      %v340 = vld [vmem:[%s257 + $0x114] sm:$0xf]
      %v341 = vld [vmem:[%s257 + $0x118] sm:$0xf]
      %v342 = vld [vmem:[%s257 + $0x11c] sm:$0xf]
      %v343 = vld [vmem:[%s257 + $0x120] sm:$0xf]
      %v344 = vld [vmem:[%s257 + $0x124] sm:$0xf]
      %v345 = vld [vmem:[%s257 + $0x128] sm:$0xf]
      %v346 = vld [vmem:[%s257 + $0x12c] sm:$0xf]
      %v347 = vld [vmem:[%s257 + $0x130] sm:$0xf]
      %v348 = vld [vmem:[%s257 + $0x134] sm:$0xf]
      %v349 = vld [vmem:[%s257 + $0x138] sm:$0xf]
      %v350 = vld [vmem:[%s257 + $0x13c] sm:$0xf]
      %v351 = vld [vmem:[%s257 + $0x140] sm:$0xf]
      %v352 = vld [vmem:[%s257 + $0x144] sm:$0xf]
      %v353 = vld [vmem:[%s257 + $0x148] sm:$0xf]
      %v354 = vld [vmem:[%s257 + $0x14c] sm:$0xf]
      %v355 = vld [vmem:[%s257 + $0x150] sm:$0xf]
      %v356 = vld [vmem:[%s257 + $0x154] sm:$0xf]
      %v357 = vld [vmem:[%s257 + $0x158] sm:$0xf]
      %v358 = vld [vmem:[%s257 + $0x15c] sm:$0xf]
      %v359 = vld [vmem:[%s257 + $0x160] sm:$0xf]
      %v360 = vld [vmem:[%s257 + $0x164] sm:$0xf]
      %v361 = vld [vmem:[%s257 + $0x168] sm:$0xf]
      %v362 = vld [vmem:[%s257 + $0x16c] sm:$0xf]
      %v363 = vld [vmem:[%s257 + $0x170] sm:$0xf]
      %v364 = vld [vmem:[%s257 + $0x174] sm:$0xf]
      %v365 = vld [vmem:[%s257 + $0x178] sm:$0xf]
      %v366 = vld [vmem:[%s257 + $0x17c] sm:$0xf]
      %v367 = vld [vmem:[%s257 + $0x180] sm:$0xf]
      %v368 = vld [vmem:[%s257 + $0x184] sm:$0xf]
      %v369 = vld [vmem:[%s257 + $0x188] sm:$0xf]
      %v370 = vld [vmem:[%s257 + $0x18c] sm:$0xf]
      %v371 = vld [vmem:[%s257 + $0x190] sm:$0xf]
      %v372 = vld [vmem:[%s257 + $0x194] sm:$0xf]
      %v373 = vld [vmem:[%s257 + $0x198] sm:$0xf]
      %v374 = vld [vmem:[%s257 + $0x19c] sm:$0xf]
      %v375 = vunpack.c.l.bf16 %v271
      %v376 = vunpack.c.l.bf16 %v272
      %v377 = vunpack.c.l.bf16 %v273
      %v378 = vunpack.c.l.bf16 %v274
      %v379 = vunpack.c.l.bf16 %v275
      %v380 = vunpack.c.l.bf16 %v276
      %v381 = vunpack.c.l.bf16 %v277
      %v382 = vunpack.c.l.bf16 %v278
      %v383 = vunpack.c.l.bf16 %v279
      %v384 = vunpack.c.l.bf16 %v280
      %v385 = vunpack.c.l.bf16 %v281
      %v386 = vunpack.c.l.bf16 %v282
      %v387 = vunpack.c.l.bf16 %v283
      %v388 = vunpack.c.l.bf16 %v284
      %v389 = vunpack.c.l.bf16 %v285
      %v390 = vunpack.c.l.bf16 %v286
      %v391 = vunpack.c.l.bf16 %v287
      %v392 = vunpack.c.l.bf16 %v288
      %v393 = vunpack.c.l.bf16 %v289
      %v394 = vunpack.c.l.bf16 %v290
      %v395 = vunpack.c.l.bf16 %v291
      %v396 = vunpack.c.l.bf16 %v292
      %v397 = vunpack.c.l.bf16 %v293
      %v398 = vunpack.c.l.bf16 %v294
      %v399 = vunpack.c.l.bf16 %v295
      %v400 = vunpack.c.l.bf16 %v296
      %v401 = vunpack.c.l.bf16 %v297
      %v402 = vunpack.c.l.bf16 %v298
      %v403 = vunpack.c.l.bf16 %v299
      %v404 = vunpack.c.l.bf16 %v300
      %v405 = vunpack.c.l.bf16 %v301
      %v406 = vunpack.c.l.bf16 %v302
      %v407 = vunpack.c.l.bf16 %v303
      %v408 = vunpack.c.l.bf16 %v304
      %v409 = vunpack.c.l.bf16 %v305
      %v410 = vunpack.c.l.bf16 %v306
      %v411 = vunpack.c.l.bf16 %v307
      %v412 = vunpack.c.l.bf16 %v308
      %v413 = vunpack.c.l.bf16 %v309
      %v414 = vunpack.c.l.bf16 %v310
      %v415 = vunpack.c.l.bf16 %v311
      %v416 = vunpack.c.l.bf16 %v312
      %v417 = vunpack.c.l.bf16 %v313
      %v418 = vunpack.c.l.bf16 %v314
      %v419 = vunpack.c.l.bf16 %v315
      %v420 = vunpack.c.l.bf16 %v316
      %v421 = vunpack.c.l.bf16 %v317
      %v422 = vunpack.c.l.bf16 %v318
      %v423 = vunpack.c.l.bf16 %v319
      %v424 = vunpack.c.l.bf16 %v320
      %v425 = vunpack.c.l.bf16 %v321
      %v426 = vunpack.c.l.bf16 %v322
      %v427 = vunpack.c.l.bf16 %v323
      %v428 = vunpack.c.l.bf16 %v324
      %v429 = vunpack.c.l.bf16 %v325
      %v430 = vunpack.c.l.bf16 %v326
      %v431 = vunpack.c.l.bf16 %v327
      %v432 = vunpack.c.l.bf16 %v328
      %v433 = vunpack.c.l.bf16 %v329
      %v434 = vunpack.c.l.bf16 %v330
      %v435 = vunpack.c.l.bf16 %v331
      %v436 = vunpack.c.l.bf16 %v332
      %v437 = vunpack.c.l.bf16 %v333
      %v438 = vunpack.c.l.bf16 %v334
      %v439 = vunpack.c.l.bf16 %v335
      %v440 = vunpack.c.l.bf16 %v336
      %v441 = vunpack.c.l.bf16 %v337
      %v442 = vunpack.c.l.bf16 %v338
      %v443 = vunpack.c.l.bf16 %v339
      %v444 = vunpack.c.l.bf16 %v340
      %v445 = vunpack.c.l.bf16 %v341
      %v446 = vunpack.c.l.bf16 %v342
      %v447 = vunpack.c.l.bf16 %v343
      %v448 = vunpack.c.l.bf16 %v344
      %v449 = vunpack.c.l.bf16 %v345
      %v450 = vunpack.c.l.bf16 %v346
      %v451 = vunpack.c.l.bf16 %v347
      %v452 = vunpack.c.l.bf16 %v348
      %v453 = vunpack.c.l.bf16 %v349
      %v454 = vunpack.c.l.bf16 %v350
      %v455 = vunpack.c.l.bf16 %v351
      %v456 = vunpack.c.l.bf16 %v352
      %v457 = vunpack.c.l.bf16 %v353
      %v458 = vunpack.c.l.bf16 %v354
      %v459 = vunpack.c.l.bf16 %v355
      %v460 = vunpack.c.l.bf16 %v356
      %v461 = vunpack.c.l.bf16 %v357
      %v462 = vunpack.c.l.bf16 %v358
      %v463 = vunpack.c.l.bf16 %v359
      %v464 = vunpack.c.l.bf16 %v360
      %v465 = vunpack.c.l.bf16 %v361
      %v466 = vunpack.c.l.bf16 %v362
      %v467 = vunpack.c.l.bf16 %v363
      %v468 = vunpack.c.l.bf16 %v364
      %v469 = vunpack.c.l.bf16 %v365
      %v470 = vunpack.c.l.bf16 %v366
      %v471 = vunpack.c.l.bf16 %v367
      %v472 = vunpack.c.l.bf16 %v368
      %v473 = vunpack.c.l.bf16 %v369
      %v474 = vunpack.c.l.bf16 %v370
      %v475 = vunpack.c.l.bf16 %v371
      %v476 = vunpack.c.l.bf16 %v372
      %v477 = vunpack.c.l.bf16 %v373
      %v478 = vunpack.c.l.bf16 %v374
      %v480 = vperm.slane %v269, 0
      %v482 = vmul.f32 %v375, %v480
      %v483 = vmul.f32 %v376, %v480
      %v484 = vmul.f32 %v377, %v480
      %v485 = vmul.f32 %v378, %v480
      %v486 = vmul.f32 %v379, %v480
      %v487 = vmul.f32 %v380, %v480
      %v488 = vmul.f32 %v381, %v480
      %v489 = vmul.f32 %v382, %v480
      %v490 = vmul.f32 %v383, %v480
      %v491 = vmul.f32 %v384, %v480
      %v492 = vmul.f32 %v385, %v480
      %v493 = vmul.f32 %v386, %v480
      %v494 = vmul.f32 %v387, %v480
      %v495 = vmul.f32 %v388, %v480
      %v496 = vmul.f32 %v389, %v480
      %v497 = vmul.f32 %v390, %v480
      %v498 = vmul.f32 %v391, %v480
      %v499 = vmul.f32 %v392, %v480
      %v500 = vmul.f32 %v393, %v480
      %v501 = vmul.f32 %v394, %v480
      %v502 = vmul.f32 %v395, %v480
      %v503 = vmul.f32 %v396, %v480
      %v504 = vmul.f32 %v397, %v480
      %v505 = vmul.f32 %v398, %v480
      %v506 = vmul.f32 %v399, %v480
      %v507 = vmul.f32 %v400, %v480
      %v508 = vmul.f32 %v401, %v480
      %v509 = vmul.f32 %v402, %v480
      %v510 = vmul.f32 %v403, %v480
      %v511 = vmul.f32 %v404, %v480
      %v512 = vmul.f32 %v405, %v480
      %v513 = vmul.f32 %v406, %v480
      %v514 = vmul.f32 %v407, %v480
      %v515 = vmul.f32 %v408, %v480
      %v516 = vmul.f32 %v409, %v480
      %v517 = vmul.f32 %v410, %v480
      %v518 = vmul.f32 %v411, %v480
      %v519 = vmul.f32 %v412, %v480
      %v520 = vmul.f32 %v413, %v480
      %v521 = vmul.f32 %v414, %v480
      %v522 = vmul.f32 %v415, %v480
      %v523 = vmul.f32 %v416, %v480
      %v524 = vmul.f32 %v417, %v480
      %v525 = vmul.f32 %v418, %v480
      %v526 = vmul.f32 %v419, %v480
      %v527 = vmul.f32 %v420, %v480
      %v528 = vmul.f32 %v421, %v480
      %v529 = vmul.f32 %v422, %v480
      %v530 = vmul.f32 %v423, %v480
      %v531 = vmul.f32 %v424, %v480
      %v532 = vmul.f32 %v425, %v480
      %v533 = vmul.f32 %v426, %v480
      %v534 = vmul.f32 %v427, %v480
      %v535 = vmul.f32 %v428, %v480
      %v536 = vmul.f32 %v429, %v480
      %v537 = vmul.f32 %v430, %v480
      %v538 = vmul.f32 %v431, %v480
      %v539 = vmul.f32 %v432, %v480
      %v540 = vmul.f32 %v433, %v480
      %v541 = vmul.f32 %v434, %v480
      %v542 = vmul.f32 %v435, %v480
      %v543 = vmul.f32 %v436, %v480
      %v544 = vmul.f32 %v437, %v480
      %v545 = vmul.f32 %v438, %v480
      %v546 = vmul.f32 %v439, %v480
      %v547 = vmul.f32 %v440, %v480
      %v548 = vmul.f32 %v441, %v480
      %v549 = vmul.f32 %v442, %v480
      %v550 = vmul.f32 %v443, %v480
      %v551 = vmul.f32 %v444, %v480
      %v552 = vmul.f32 %v445, %v480
      %v553 = vmul.f32 %v446, %v480
      %v554 = vmul.f32 %v447, %v480
      %v555 = vmul.f32 %v448, %v480
      %v556 = vmul.f32 %v449, %v480
      %v557 = vmul.f32 %v450, %v480
      %v558 = vmul.f32 %v451, %v480
      %v559 = vmul.f32 %v452, %v480
      %v560 = vmul.f32 %v453, %v480
      %v561 = vmul.f32 %v454, %v480
      %v562 = vmul.f32 %v455, %v480
      %v563 = vmul.f32 %v456, %v480
      %v564 = vmul.f32 %v457, %v480
      %v565 = vmul.f32 %v458, %v480
      %v566 = vmul.f32 %v459, %v480
      %v567 = vmul.f32 %v460, %v480
      %v568 = vmul.f32 %v461, %v480
      %v569 = vmul.f32 %v462, %v480
      %v570 = vmul.f32 %v463, %v480
      %v571 = vmul.f32 %v464, %v480
      %v572 = vmul.f32 %v465, %v480
      %v573 = vmul.f32 %v466, %v480
      %v574 = vmul.f32 %v467, %v480
      %v575 = vmul.f32 %v468, %v480
      %v576 = vmul.f32 %v469, %v480
      %v577 = vmul.f32 %v470, %v480
      %v578 = vmul.f32 %v471, %v480
      %v579 = vmul.f32 %v472, %v480
      %v580 = vmul.f32 %v473, %v480
      %v581 = vmul.f32 %v474, %v480
      %v582 = vmul.f32 %v475, %v480
      %v583 = vmul.f32 %v476, %v480
      %v584 = vmul.f32 %v477, %v480
      %v585 = vmul.f32 %v478, %v480
      %v587 = vperm.slane %v270, 0
      %v589 = vadd.f32 %v482, %v587
      %v590 = vadd.f32 %v483, %v587
      %v591 = vadd.f32 %v484, %v587
      %v592 = vadd.f32 %v485, %v587
      %v593 = vadd.f32 %v486, %v587
      %v594 = vadd.f32 %v487, %v587
      %v595 = vadd.f32 %v488, %v587
      %v596 = vadd.f32 %v489, %v587
      %v597 = vadd.f32 %v490, %v587
      %v598 = vadd.f32 %v491, %v587
      %v599 = vadd.f32 %v492, %v587
      %v600 = vadd.f32 %v493, %v587
      %v601 = vadd.f32 %v494, %v587
      %v602 = vadd.f32 %v495, %v587
      %v603 = vadd.f32 %v496, %v587
      %v604 = vadd.f32 %v497, %v587
      %v605 = vadd.f32 %v498, %v587
      %v606 = vadd.f32 %v499, %v587
      %v607 = vadd.f32 %v500, %v587
      %v608 = vadd.f32 %v501, %v587
      %v609 = vadd.f32 %v502, %v587
      %v610 = vadd.f32 %v503, %v587
      %v611 = vadd.f32 %v504, %v587
      %v612 = vadd.f32 %v505, %v587
      %v613 = vadd.f32 %v506, %v587
      %v614 = vadd.f32 %v507, %v587
      %v615 = vadd.f32 %v508, %v587
      %v616 = vadd.f32 %v509, %v587
      %v617 = vadd.f32 %v510, %v587
      %v618 = vadd.f32 %v511, %v587
      %v619 = vadd.f32 %v512, %v587
      %v620 = vadd.f32 %v513, %v587
      %v621 = vadd.f32 %v514, %v587
      %v622 = vadd.f32 %v515, %v587
      %v623 = vadd.f32 %v516, %v587
      %v624 = vadd.f32 %v517, %v587
      %v625 = vadd.f32 %v518, %v587
      %v626 = vadd.f32 %v519, %v587
      %v627 = vadd.f32 %v520, %v587
      %v628 = vadd.f32 %v521, %v587
      %v629 = vadd.f32 %v522, %v587
      %v630 = vadd.f32 %v523, %v587
      %v631 = vadd.f32 %v524, %v587
      %v632 = vadd.f32 %v525, %v587
      %v633 = vadd.f32 %v526, %v587
      %v634 = vadd.f32 %v527, %v587
      %v635 = vadd.f32 %v528, %v587
      %v636 = vadd.f32 %v529, %v587
      %v637 = vadd.f32 %v530, %v587
      %v638 = vadd.f32 %v531, %v587
      %v639 = vadd.f32 %v532, %v587
      %v640 = vadd.f32 %v533, %v587
      %v641 = vadd.f32 %v534, %v587
      %v642 = vadd.f32 %v535, %v587
      %v643 = vadd.f32 %v536, %v587
      %v644 = vadd.f32 %v537, %v587
      %v645 = vadd.f32 %v538, %v587
      %v646 = vadd.f32 %v539, %v587
      %v647 = vadd.f32 %v540, %v587
      %v648 = vadd.f32 %v541, %v587
      %v649 = vadd.f32 %v542, %v587
      %v650 = vadd.f32 %v543, %v587
      %v651 = vadd.f32 %v544, %v587
      %v652 = vadd.f32 %v545, %v587
      %v653 = vadd.f32 %v546, %v587
      %v654 = vadd.f32 %v547, %v587
      %v655 = vadd.f32 %v548, %v587
      %v656 = vadd.f32 %v549, %v587
      %v657 = vadd.f32 %v550, %v587
      %v658 = vadd.f32 %v551, %v587
      %v659 = vadd.f32 %v552, %v587
      %v660 = vadd.f32 %v553, %v587
      %v661 = vadd.f32 %v554, %v587
      %v662 = vadd.f32 %v555, %v587
      %v663 = vadd.f32 %v556, %v587
      %v664 = vadd.f32 %v557, %v587
      %v665 = vadd.f32 %v558, %v587
      %v666 = vadd.f32 %v559, %v587
      %v667 = vadd.f32 %v560, %v587
      %v668 = vadd.f32 %v561, %v587
      %v669 = vadd.f32 %v562, %v587
      %v670 = vadd.f32 %v563, %v587
      %v671 = vadd.f32 %v564, %v587
      %v672 = vadd.f32 %v565, %v587
      %v673 = vadd.f32 %v566, %v587
      %v674 = vadd.f32 %v567, %v587
      %v675 = vadd.f32 %v568, %v587
      %v676 = vadd.f32 %v569, %v587
      %v677 = vadd.f32 %v570, %v587
      %v678 = vadd.f32 %v571, %v587
      %v679 = vadd.f32 %v572, %v587
      %v680 = vadd.f32 %v573, %v587
      %v681 = vadd.f32 %v574, %v587
      %v682 = vadd.f32 %v575, %v587
      %v683 = vadd.f32 %v576, %v587
      %v684 = vadd.f32 %v577, %v587
      %v685 = vadd.f32 %v578, %v587
      %v686 = vadd.f32 %v579, %v587
      %v687 = vadd.f32 %v580, %v587
      %v688 = vadd.f32 %v581, %v587
      %v689 = vadd.f32 %v582, %v587
      %v690 = vadd.f32 %v583, %v587
      %v691 = vadd.f32 %v584, %v587
      %v692 = vadd.f32 %v585, %v587
      %v693 = vmax.f32 %v589, 0.0
      %v694 = vmax.f32 %v590, 0.0
      %v695 = vmax.f32 %v591, 0.0
      %v696 = vmax.f32 %v592, 0.0
      %v697 = vmax.f32 %v593, 0.0
      %v698 = vmax.f32 %v594, 0.0
      %v699 = vmax.f32 %v595, 0.0
      %v700 = vmax.f32 %v596, 0.0
      %v701 = vmax.f32 %v597, 0.0
      %v702 = vmax.f32 %v598, 0.0
      %v703 = vmax.f32 %v599, 0.0
      %v704 = vmax.f32 %v600, 0.0
      %v705 = vmax.f32 %v601, 0.0
      %v706 = vmax.f32 %v602, 0.0
      %v707 = vmax.f32 %v603, 0.0
      %v708 = vmax.f32 %v604, 0.0
      %v709 = vmax.f32 %v605, 0.0
      %v710 = vmax.f32 %v606, 0.0
      %v711 = vmax.f32 %v607, 0.0
      %v712 = vmax.f32 %v608, 0.0
      %v713 = vmax.f32 %v609, 0.0
      %v714 = vmax.f32 %v610, 0.0
      %v715 = vmax.f32 %v611, 0.0
      %v716 = vmax.f32 %v612, 0.0
      %v717 = vmax.f32 %v613, 0.0
      %v718 = vmax.f32 %v614, 0.0
      %v719 = vmax.f32 %v615, 0.0
      %v720 = vmax.f32 %v616, 0.0
      %v721 = vmax.f32 %v617, 0.0
      %v722 = vmax.f32 %v618, 0.0
      %v723 = vmax.f32 %v619, 0.0
      %v724 = vmax.f32 %v620, 0.0
      %v725 = vmax.f32 %v621, 0.0
      %v726 = vmax.f32 %v622, 0.0
      %v727 = vmax.f32 %v623, 0.0
      %v728 = vmax.f32 %v624, 0.0
      %v729 = vmax.f32 %v625, 0.0
      %v730 = vmax.f32 %v626, 0.0
      %v731 = vmax.f32 %v627, 0.0
      %v732 = vmax.f32 %v628, 0.0
      %v733 = vmax.f32 %v629, 0.0
      %v734 = vmax.f32 %v630, 0.0
      %v735 = vmax.f32 %v631, 0.0
      %v736 = vmax.f32 %v632, 0.0
      %v737 = vmax.f32 %v633, 0.0
      %v738 = vmax.f32 %v634, 0.0
      %v739 = vmax.f32 %v635, 0.0
      %v740 = vmax.f32 %v636, 0.0
      %v741 = vmax.f32 %v637, 0.0
      %v742 = vmax.f32 %v638, 0.0
      %v743 = vmax.f32 %v639, 0.0
      %v744 = vmax.f32 %v640, 0.0
      %v745 = vmax.f32 %v641, 0.0
      %v746 = vmax.f32 %v642, 0.0
      %v747 = vmax.f32 %v643, 0.0
      %v748 = vmax.f32 %v644, 0.0
      %v749 = vmax.f32 %v645, 0.0
      %v750 = vmax.f32 %v646, 0.0
      %v751 = vmax.f32 %v647, 0.0
      %v752 = vmax.f32 %v648, 0.0
      %v753 = vmax.f32 %v649, 0.0
      %v754 = vmax.f32 %v650, 0.0
      %v755 = vmax.f32 %v651, 0.0
      %v756 = vmax.f32 %v652, 0.0
      %v757 = vmax.f32 %v653, 0.0
      %v758 = vmax.f32 %v654, 0.0
      %v759 = vmax.f32 %v655, 0.0
      %v760 = vmax.f32 %v656, 0.0
      %v761 = vmax.f32 %v657, 0.0
      %v762 = vmax.f32 %v658, 0.0
      %v763 = vmax.f32 %v659, 0.0
      %v764 = vmax.f32 %v660, 0.0
      %v765 = vmax.f32 %v661, 0.0
      %v766 = vmax.f32 %v662, 0.0
      %v767 = vmax.f32 %v663, 0.0
      %v768 = vmax.f32 %v664, 0.0
      %v769 = vmax.f32 %v665, 0.0
      %v770 = vmax.f32 %v666, 0.0
      %v771 = vmax.f32 %v667, 0.0
      %v772 = vmax.f32 %v668, 0.0
      %v773 = vmax.f32 %v669, 0.0
      %v774 = vmax.f32 %v670, 0.0
      %v775 = vmax.f32 %v671, 0.0
      %v776 = vmax.f32 %v672, 0.0
      %v777 = vmax.f32 %v673, 0.0
      %v778 = vmax.f32 %v674, 0.0
      %v779 = vmax.f32 %v675, 0.0
      %v780 = vmax.f32 %v676, 0.0
      %v781 = vmax.f32 %v677, 0.0
      %v782 = vmax.f32 %v678, 0.0
      %v783 = vmax.f32 %v679, 0.0
      %v784 = vmax.f32 %v680, 0.0
      %v785 = vmax.f32 %v681, 0.0
      %v786 = vmax.f32 %v682, 0.0
      %v787 = vmax.f32 %v683, 0.0
      %v788 = vmax.f32 %v684, 0.0
      %v789 = vmax.f32 %v685, 0.0
      %v790 = vmax.f32 %v686, 0.0
      %v791 = vmax.f32 %v687, 0.0
      %v792 = vmax.f32 %v688, 0.0
      %v793 = vmax.f32 %v689, 0.0
      %v794 = vmax.f32 %v690, 0.0
      %v795 = vmax.f32 %v691, 0.0
      %v796 = vmax.f32 %v692, 0.0
      %v797 = vmax.f32 %v693, %v697
      %v798 = vmax.f32 %v694, %v698
      %v799 = vmax.f32 %v695, %v699
      %v800 = vmax.f32 %v696, %v700
      %v801 = vmax.f32 %v701, %v705
      %v802 = vmax.f32 %v702, %v706
      %v803 = vmax.f32 %v703, %v707
      %v804 = vmax.f32 %v704, %v708
      %v805 = vmax.f32 %v709, %v713
      %v806 = vmax.f32 %v710, %v714
      %v807 = vmax.f32 %v711, %v715
      %v808 = vmax.f32 %v712, %v716
      %v809 = vmax.f32 %v717, %v721
      %v810 = vmax.f32 %v718, %v722
      %v811 = vmax.f32 %v719, %v723
      %v812 = vmax.f32 %v720, %v724
      %v813 = vmax.f32 %v725, %v729
      %v814 = vmax.f32 %v726, %v730
      %v815 = vmax.f32 %v727, %v731
      %v816 = vmax.f32 %v728, %v732
      %v817 = vmax.f32 %v733, %v737
      %v818 = vmax.f32 %v734, %v738
      %v819 = vmax.f32 %v735, %v739
      %v820 = vmax.f32 %v736, %v740
      %v821 = vmax.f32 %v741, %v745
      %v822 = vmax.f32 %v742, %v746
      %v823 = vmax.f32 %v743, %v747
      %v824 = vmax.f32 %v744, %v748
      %v825 = vmax.f32 %v749, %v753
      %v826 = vmax.f32 %v750, %v754
      %v827 = vmax.f32 %v751, %v755
      %v828 = vmax.f32 %v752, %v756
      %v829 = vmax.f32 %v757, %v761
      %v830 = vmax.f32 %v758, %v762
      %v831 = vmax.f32 %v759, %v763
      %v832 = vmax.f32 %v760, %v764
      %v833 = vmax.f32 %v765, %v769
      %v834 = vmax.f32 %v766, %v770
      %v835 = vmax.f32 %v767, %v771
      %v836 = vmax.f32 %v768, %v772
      %v837 = vmax.f32 %v773, %v777
      %v838 = vmax.f32 %v774, %v778
      %v839 = vmax.f32 %v775, %v779
      %v840 = vmax.f32 %v776, %v780
      %v841 = vmax.f32 %v781, %v785
      %v842 = vmax.f32 %v782, %v786
      %v843 = vmax.f32 %v783, %v787
      %v844 = vmax.f32 %v784, %v788
      %v845 = vmax.f32 %v789, %v793
      %v846 = vmax.f32 %v790, %v794
      %v847 = vmax.f32 %v791, %v795
      %v848 = vmax.f32 %v792, %v796
      %v850 = vunpack.c.l.s4 1966171168
      %v851 = vunpack.c.0.s8 %v850
      %v852 = vperm.slane %v797, %v851
      %v854 = vunpack.c.l.s4 1966171168
      %v855 = vunpack.c.0.s8 %v854
      %v856 = vperm.slane %v798, %v855
      %v858 = vunpack.c.l.s4 1966171168
      %v859 = vunpack.c.0.s8 %v858
      %v860 = vperm.slane %v799, %v859
      %v862 = vunpack.c.l.s4 1966171168
      %v863 = vunpack.c.0.s8 %v862
      %v864 = vperm.slane %v800, %v863
      %v866 = vunpack.c.l.s4 1966171168
      %v867 = vunpack.c.0.s8 %v866
      %v868 = vperm.slane %v801, %v867
      %v870 = vunpack.c.l.s4 1966171168
      %v871 = vunpack.c.0.s8 %v870
      %v872 = vperm.slane %v802, %v871
      %v874 = vunpack.c.l.s4 1966171168
      %v875 = vunpack.c.0.s8 %v874
      %v876 = vperm.slane %v803, %v875
      %v878 = vunpack.c.l.s4 1966171168
      %v879 = vunpack.c.0.s8 %v878
      %v880 = vperm.slane %v804, %v879
      %v882 = vunpack.c.l.s4 1966171168
      %v883 = vunpack.c.0.s8 %v882
      %v884 = vperm.slane %v805, %v883
      %v886 = vunpack.c.l.s4 1966171168
      %v887 = vunpack.c.0.s8 %v886
      %v888 = vperm.slane %v806, %v887
      %v890 = vunpack.c.l.s4 1966171168
      %v891 = vunpack.c.0.s8 %v890
      %v892 = vperm.slane %v807, %v891
      %v894 = vunpack.c.l.s4 1966171168
      %v895 = vunpack.c.0.s8 %v894
      %v896 = vperm.slane %v808, %v895
      %v898 = vunpack.c.l.s4 1966171168
      %v899 = vunpack.c.0.s8 %v898
      %v900 = vperm.slane %v809, %v899
      %v902 = vunpack.c.l.s4 1966171168
      %v903 = vunpack.c.0.s8 %v902
      %v904 = vperm.slane %v810, %v903
      %v906 = vunpack.c.l.s4 1966171168
      %v907 = vunpack.c.0.s8 %v906
      %v908 = vperm.slane %v811, %v907
      %v910 = vunpack.c.l.s4 1966171168
      %v911 = vunpack.c.0.s8 %v910
      %v912 = vperm.slane %v812, %v911
      %v914 = vunpack.c.l.s4 1966171168
      %v915 = vunpack.c.0.s8 %v914
      %v916 = vperm.slane %v813, %v915
      %v918 = vunpack.c.l.s4 1966171168
      %v919 = vunpack.c.0.s8 %v918
      %v920 = vperm.slane %v814, %v919
      %v922 = vunpack.c.l.s4 1966171168
      %v923 = vunpack.c.0.s8 %v922
      %v924 = vperm.slane %v815, %v923
      %v926 = vunpack.c.l.s4 1966171168
      %v927 = vunpack.c.0.s8 %v926
      %v928 = vperm.slane %v816, %v927
      %v930 = vunpack.c.l.s4 1966171168
      %v931 = vunpack.c.0.s8 %v930
      %v932 = vperm.slane %v817, %v931
      %v934 = vunpack.c.l.s4 1966171168
      %v935 = vunpack.c.0.s8 %v934
      %v936 = vperm.slane %v818, %v935
      %v938 = vunpack.c.l.s4 1966171168
      %v939 = vunpack.c.0.s8 %v938
      %v940 = vperm.slane %v819, %v939
      %v942 = vunpack.c.l.s4 1966171168
      %v943 = vunpack.c.0.s8 %v942
      %v944 = vperm.slane %v820, %v943
      %v946 = vunpack.c.l.s4 1966171168
      %v947 = vunpack.c.0.s8 %v946
      %v948 = vperm.slane %v821, %v947
      %v950 = vunpack.c.l.s4 1966171168
      %v951 = vunpack.c.0.s8 %v950
      %v952 = vperm.slane %v822, %v951
      %v954 = vunpack.c.l.s4 1966171168
      %v955 = vunpack.c.0.s8 %v954
      %v956 = vperm.slane %v823, %v955
      %v958 = vunpack.c.l.s4 1966171168
      %v959 = vunpack.c.0.s8 %v958
      %v960 = vperm.slane %v824, %v959
      %v962 = vunpack.c.l.s4 1966171168
      %v963 = vunpack.c.0.s8 %v962
      %v964 = vperm.slane %v825, %v963
      %v966 = vunpack.c.l.s4 1966171168
      %v967 = vunpack.c.0.s8 %v966
      %v968 = vperm.slane %v826, %v967
      %v970 = vunpack.c.l.s4 1966171168
      %v971 = vunpack.c.0.s8 %v970
      %v972 = vperm.slane %v827, %v971
      %v974 = vunpack.c.l.s4 1966171168
      %v975 = vunpack.c.0.s8 %v974
      %v976 = vperm.slane %v828, %v975
      %v978 = vunpack.c.l.s4 1966171168
      %v979 = vunpack.c.0.s8 %v978
      %v980 = vperm.slane %v829, %v979
      %v982 = vunpack.c.l.s4 1966171168
      %v983 = vunpack.c.0.s8 %v982
      %v984 = vperm.slane %v830, %v983
      %v986 = vunpack.c.l.s4 1966171168
      %v987 = vunpack.c.0.s8 %v986
      %v988 = vperm.slane %v831, %v987
      %v990 = vunpack.c.l.s4 1966171168
      %v991 = vunpack.c.0.s8 %v990
      %v992 = vperm.slane %v832, %v991
      %v994 = vunpack.c.l.s4 1966171168
      %v995 = vunpack.c.0.s8 %v994
      %v996 = vperm.slane %v833, %v995
      %v998 = vunpack.c.l.s4 1966171168
      %v999 = vunpack.c.0.s8 %v998
      %v1000 = vperm.slane %v834, %v999
      %v1002 = vunpack.c.l.s4 1966171168
      %v1003 = vunpack.c.0.s8 %v1002
      %v1004 = vperm.slane %v835, %v1003
      %v1006 = vunpack.c.l.s4 1966171168
      %v1007 = vunpack.c.0.s8 %v1006
      %v1008 = vperm.slane %v836, %v1007
      %v1010 = vunpack.c.l.s4 1966171168
      %v1011 = vunpack.c.0.s8 %v1010
      %v1012 = vperm.slane %v837, %v1011
      %v1014 = vunpack.c.l.s4 1966171168
      %v1015 = vunpack.c.0.s8 %v1014
      %v1016 = vperm.slane %v838, %v1015
      %v1018 = vunpack.c.l.s4 1966171168
      %v1019 = vunpack.c.0.s8 %v1018
      %v1020 = vperm.slane %v839, %v1019
      %v1022 = vunpack.c.l.s4 1966171168
      %v1023 = vunpack.c.0.s8 %v1022
      %v1024 = vperm.slane %v840, %v1023
      %v1026 = vunpack.c.l.s4 1966171168
      %v1027 = vunpack.c.0.s8 %v1026
      %v1028 = vperm.slane %v841, %v1027
      %v1030 = vunpack.c.l.s4 1966171168
      %v1031 = vunpack.c.0.s8 %v1030
      %v1032 = vperm.slane %v842, %v1031
      %v1034 = vunpack.c.l.s4 1966171168
      %v1035 = vunpack.c.0.s8 %v1034
      %v1036 = vperm.slane %v843, %v1035
      %v1038 = vunpack.c.l.s4 1966171168
      %v1039 = vunpack.c.0.s8 %v1038
      %v1040 = vperm.slane %v844, %v1039
      %v1042 = vunpack.c.l.s4 1966171168
      %v1043 = vunpack.c.0.s8 %v1042
      %v1044 = vperm.slane %v845, %v1043
      %v1046 = vunpack.c.l.s4 1966171168
      %v1047 = vunpack.c.0.s8 %v1046
      %v1048 = vperm.slane %v846, %v1047
      %v1050 = vunpack.c.l.s4 1966171168
      %v1051 = vunpack.c.0.s8 %v1050
      %v1052 = vperm.slane %v847, %v1051
      %v1054 = vunpack.c.l.s4 1966171168
      %v1055 = vunpack.c.0.s8 %v1054
      %v1056 = vperm.slane %v848, %v1055
      %v1109 = vrot.slane %v852, 4
      %v1110 = vrot.slane %v856, 4
      %v1111 = vrot.slane %v860, 4
      %v1112 = vrot.slane %v864, 4
      %v1113 = vrot.slane %v868, 4
      %v1114 = vrot.slane %v872, 4
      %v1115 = vrot.slane %v876, 4
      %v1116 = vrot.slane %v880, 4
      %v1117 = vrot.slane %v884, 4
      %v1118 = vrot.slane %v888, 4
      %v1119 = vrot.slane %v892, 4
      %v1120 = vrot.slane %v896, 4
      %v1121 = vrot.slane %v900, 4
      %v1122 = vrot.slane %v904, 4
      %v1123 = vrot.slane %v908, 4
      %v1124 = vrot.slane %v912, 4
      %v1125 = vrot.slane %v916, 4
      %v1126 = vrot.slane %v920, 4
      %v1127 = vrot.slane %v924, 4
      %v1128 = vrot.slane %v928, 4
      %v1129 = vrot.slane %v932, 4
      %v1130 = vrot.slane %v936, 4
      %v1131 = vrot.slane %v940, 4
      %v1132 = vrot.slane %v944, 4
      %v1133 = vrot.slane %v948, 4
      %v1134 = vrot.slane %v952, 4
      %v1135 = vrot.slane %v956, 4
      %v1136 = vrot.slane %v960, 4
      %v1137 = vrot.slane %v964, 4
      %v1138 = vrot.slane %v968, 4
      %v1139 = vrot.slane %v972, 4
      %v1140 = vrot.slane %v976, 4
      %v1141 = vrot.slane %v980, 4
      %v1142 = vrot.slane %v984, 4
      %v1143 = vrot.slane %v988, 4
      %v1144 = vrot.slane %v992, 4
      %v1145 = vrot.slane %v996, 4
      %v1146 = vrot.slane %v1000, 4
      %v1147 = vrot.slane %v1004, 4
      %v1148 = vrot.slane %v1008, 4
      %v1149 = vrot.slane %v1012, 4
      %v1150 = vrot.slane %v1016, 4
      %v1151 = vrot.slane %v1020, 4
      %v1152 = vrot.slane %v1024, 4
      %v1153 = vrot.slane %v1028, 4
      %v1154 = vrot.slane %v1032, 4
      %v1155 = vrot.slane %v1036, 4
      %v1156 = vrot.slane %v1040, 4
      %v1157 = vrot.slane %v1044, 4
      %v1158 = vrot.slane %v1048, 4
      %v1159 = vrot.slane %v1052, 4
      %v1160 = vrot.slane %v1056, 4
      %v1213 = vmax.f32 %v852, %v1109
      %v1214 = vmax.f32 %v856, %v1110
      %v1215 = vmax.f32 %v860, %v1111
      %v1216 = vmax.f32 %v864, %v1112
      %v1217 = vmax.f32 %v868, %v1113
      %v1218 = vmax.f32 %v872, %v1114
      %v1219 = vmax.f32 %v876, %v1115
      %v1220 = vmax.f32 %v880, %v1116
      %v1221 = vmax.f32 %v884, %v1117
      %v1222 = vmax.f32 %v888, %v1118
      %v1223 = vmax.f32 %v892, %v1119
      %v1224 = vmax.f32 %v896, %v1120
      %v1225 = vmax.f32 %v900, %v1121
      %v1226 = vmax.f32 %v904, %v1122
      %v1227 = vmax.f32 %v908, %v1123
      %v1228 = vmax.f32 %v912, %v1124
      %v1229 = vmax.f32 %v916, %v1125
      %v1230 = vmax.f32 %v920, %v1126
      %v1231 = vmax.f32 %v924, %v1127
      %v1232 = vmax.f32 %v928, %v1128
      %v1233 = vmax.f32 %v932, %v1129
      %v1234 = vmax.f32 %v936, %v1130
      %v1235 = vmax.f32 %v940, %v1131
      %v1236 = vmax.f32 %v944, %v1132
      %v1237 = vmax.f32 %v948, %v1133
      %v1238 = vmax.f32 %v952, %v1134
      %v1239 = vmax.f32 %v956, %v1135
      %v1240 = vmax.f32 %v960, %v1136
      %v1241 = vmax.f32 %v964, %v1137
      %v1242 = vmax.f32 %v968, %v1138
      %v1243 = vmax.f32 %v972, %v1139
      %v1244 = vmax.f32 %v976, %v1140
      %v1245 = vmax.f32 %v980, %v1141
      %v1246 = vmax.f32 %v984, %v1142
      %v1247 = vmax.f32 %v988, %v1143
      %v1248 = vmax.f32 %v992, %v1144
      %v1249 = vmax.f32 %v996, %v1145
      %v1250 = vmax.f32 %v1000, %v1146
      %v1251 = vmax.f32 %v1004, %v1147
      %v1252 = vmax.f32 %v1008, %v1148
      %v1253 = vmax.f32 %v1012, %v1149
      %v1254 = vmax.f32 %v1016, %v1150
      %v1255 = vmax.f32 %v1020, %v1151
      %v1256 = vmax.f32 %v1024, %v1152
      %v1257 = vmax.f32 %v1028, %v1153
      %v1258 = vmax.f32 %v1032, %v1154
      %v1259 = vmax.f32 %v1036, %v1155
      %v1260 = vmax.f32 %v1040, %v1156
      %v1261 = vmax.f32 %v1044, %v1157
      %v1262 = vmax.f32 %v1048, %v1158
      %v1263 = vmax.f32 %v1052, %v1159
      %v1264 = vmax.f32 %v1056, %v1160
      %1317 = vst [vmem:[#allocation1] ss:$2 sm:$0xff] %v1213
      %s1318 = scalar_lea.vmem [#allocation1], 1
      %1319 = vst [vmem:[%s1318] ss:$2 sm:$0xff] %v1214
      %s1320 = scalar_lea.vmem [#allocation1], 16
      %1321 = vst [vmem:[%s1320] ss:$2 sm:$0xff] %v1215
      %s1322 = scalar_lea.vmem [#allocation1], 17
      %1323 = vst [vmem:[%s1322] ss:$2 sm:$0xff] %v1216
      %v1324 = vld.sshfl [vmem:[#allocation1] sm:$0xff pattern:$0x75316420]
      %v1325 = vld.sshfl [vmem:[#allocation1 + $0x10] sm:$0xff pattern:$0x75316420]
      %s1326 = scalar_lea.vmem [#allocation1], 32
      %1327 = vst [vmem:[%s1326] ss:$2 sm:$0xff] %v1217
      %s1328 = scalar_lea.vmem [#allocation1], 33
      %1329 = vst [vmem:[%s1328] ss:$2 sm:$0xff] %v1218
      %s1330 = scalar_lea.vmem [#allocation1], 48
      %1331 = vst [vmem:[%s1330] ss:$2 sm:$0xff] %v1219
      %s1332 = scalar_lea.vmem [#allocation1], 49
      %1333 = vst [vmem:[%s1332] ss:$2 sm:$0xff] %v1220
      %v1334 = vld.sshfl [vmem:[#allocation1 + $0x20] sm:$0xff pattern:$0x75316420]
      %v1335 = vld.sshfl [vmem:[#allocation1 + $0x30] sm:$0xff pattern:$0x75316420]
      %1336 = vst [vmem:[#allocation1] ss:$2 sm:$0xff] %v1221
      %1337 = vst [vmem:[%s1318] ss:$2 sm:$0xff] %v1222
      %1338 = vst [vmem:[%s1320] ss:$2 sm:$0xff] %v1223
      %1339 = vst [vmem:[%s1322] ss:$2 sm:$0xff] %v1224
      %v1340 = vld.sshfl [vmem:[#allocation1] sm:$0xff pattern:$0x75316420]
      %v1341 = vld.sshfl [vmem:[#allocation1 + $0x10] sm:$0xff pattern:$0x75316420]
      %1342 = vst [vmem:[%s1326] ss:$2 sm:$0xff] %v1225
      %1343 = vst [vmem:[%s1328] ss:$2 sm:$0xff] %v1226
      %1344 = vst [vmem:[%s1330] ss:$2 sm:$0xff] %v1227
      %1345 = vst [vmem:[%s1332] ss:$2 sm:$0xff] %v1228
      %v1346 = vld.sshfl [vmem:[#allocation1 + $0x20] sm:$0xff pattern:$0x75316420]
      %v1347 = vld.sshfl [vmem:[#allocation1 + $0x30] sm:$0xff pattern:$0x75316420]
      %1348 = vst [vmem:[#allocation1] ss:$2 sm:$0xff] %v1229
      %1349 = vst [vmem:[%s1318] ss:$2 sm:$0xff] %v1230
      %1350 = vst [vmem:[%s1320] ss:$2 sm:$0xff] %v1231
      %1351 = vst [vmem:[%s1322] ss:$2 sm:$0xff] %v1232
      %v1352 = vld.sshfl [vmem:[#allocation1] sm:$0xff pattern:$0x75316420]
      %v1353 = vld.sshfl [vmem:[#allocation1 + $0x10] sm:$0xff pattern:$0x75316420]
      %1354 = vst [vmem:[%s1326] ss:$2 sm:$0xff] %v1233
      %1355 = vst [vmem:[%s1328] ss:$2 sm:$0xff] %v1234
      %1356 = vst [vmem:[%s1330] ss:$2 sm:$0xff] %v1235
      %1357 = vst [vmem:[%s1332] ss:$2 sm:$0xff] %v1236
      %v1358 = vld.sshfl [vmem:[#allocation1 + $0x20] sm:$0xff pattern:$0x75316420]
      %v1359 = vld.sshfl [vmem:[#allocation1 + $0x30] sm:$0xff pattern:$0x75316420]
      %1360 = vst [vmem:[#allocation1] ss:$2 sm:$0xff] %v1237
      %1361 = vst [vmem:[%s1318] ss:$2 sm:$0xff] %v1238
      %1362 = vst [vmem:[%s1320] ss:$2 sm:$0xff] %v1239
      %1363 = vst [vmem:[%s1322] ss:$2 sm:$0xff] %v1240
      %v1364 = vld.sshfl [vmem:[#allocation1] sm:$0xff pattern:$0x75316420]
      %v1365 = vld.sshfl [vmem:[#allocation1 + $0x10] sm:$0xff pattern:$0x75316420]
      %1366 = vst [vmem:[%s1326] ss:$2 sm:$0xff] %v1241
      %1367 = vst [vmem:[%s1328] ss:$2 sm:$0xff] %v1242
      %1368 = vst [vmem:[%s1330] ss:$2 sm:$0xff] %v1243
      %1369 = vst [vmem:[%s1332] ss:$2 sm:$0xff] %v1244
      %v1370 = vld.sshfl [vmem:[#allocation1 + $0x20] sm:$0xff pattern:$0x75316420]
      %v1371 = vld.sshfl [vmem:[#allocation1 + $0x30] sm:$0xff pattern:$0x75316420]
      %1372 = vst [vmem:[#allocation1] ss:$2 sm:$0xff] %v1245
      %1373 = vst [vmem:[%s1318] ss:$2 sm:$0xff] %v1246
      %1374 = vst [vmem:[%s1320] ss:$2 sm:$0xff] %v1247
      %1375 = vst [vmem:[%s1322] ss:$2 sm:$0xff] %v1248
      %v1376 = vld.sshfl [vmem:[#allocation1] sm:$0xff pattern:$0x75316420]
      %v1377 = vld.sshfl [vmem:[#allocation1 + $0x10] sm:$0xff pattern:$0x75316420]
      %1378 = vst [vmem:[%s1326] ss:$2 sm:$0xff] %v1249
      %1379 = vst [vmem:[%s1328] ss:$2 sm:$0xff] %v1250
      %1380 = vst [vmem:[%s1330] ss:$2 sm:$0xff] %v1251
      %1381 = vst [vmem:[%s1332] ss:$2 sm:$0xff] %v1252
      %v1382 = vld.sshfl [vmem:[#allocation1 + $0x20] sm:$0xff pattern:$0x75316420]
      %v1383 = vld.sshfl [vmem:[#allocation1 + $0x30] sm:$0xff pattern:$0x75316420]
      %1384 = vst [vmem:[#allocation1] ss:$2 sm:$0xff] %v1253
      %1385 = vst [vmem:[%s1318] ss:$2 sm:$0xff] %v1254
      %1386 = vst [vmem:[%s1320] ss:$2 sm:$0xff] %v1255
      %1387 = vst [vmem:[%s1322] ss:$2 sm:$0xff] %v1256
      %v1388 = vld.sshfl [vmem:[#allocation1] sm:$0xff pattern:$0x75316420]
      %v1389 = vld.sshfl [vmem:[#allocation1 + $0x10] sm:$0xff pattern:$0x75316420]
      %1390 = vst [vmem:[%s1326] ss:$2 sm:$0xff] %v1257
      %1391 = vst [vmem:[%s1328] ss:$2 sm:$0xff] %v1258
      %1392 = vst [vmem:[%s1330] ss:$2 sm:$0xff] %v1259
      %1393 = vst [vmem:[%s1332] ss:$2 sm:$0xff] %v1260
      %v1394 = vld.sshfl [vmem:[#allocation1 + $0x20] sm:$0xff pattern:$0x75316420]
      %v1395 = vld.sshfl [vmem:[#allocation1 + $0x30] sm:$0xff pattern:$0x75316420]
      %1396 = vst [vmem:[#allocation1] ss:$2 sm:$0xff] %v1261
      %1397 = vst [vmem:[%s1318] ss:$2 sm:$0xff] %v1262
      %1398 = vst [vmem:[%s1320] ss:$2 sm:$0xff] %v1263
      %1399 = vst [vmem:[%s1322] ss:$2 sm:$0xff] %v1264
      %v1400 = vld.sshfl [vmem:[#allocation1] sm:$0xff pattern:$0x75316420]
      %v1401 = vld.sshfl [vmem:[#allocation1 + $0x10] sm:$0xff pattern:$0x75316420]
      %v1428 = vpack.c.bf16 %v1324, %v1324
      %v1429 = vpack.c.bf16 %v1325, %v1325
      %v1430 = vpack.c.bf16 %v1334, %v1334
      %v1431 = vpack.c.bf16 %v1335, %v1335
      %v1432 = vpack.c.bf16 %v1340, %v1340
      %v1433 = vpack.c.bf16 %v1341, %v1341
      %v1434 = vpack.c.bf16 %v1346, %v1346
      %v1435 = vpack.c.bf16 %v1347, %v1347
      %v1436 = vpack.c.bf16 %v1352, %v1352
      %v1437 = vpack.c.bf16 %v1353, %v1353
      %v1438 = vpack.c.bf16 %v1358, %v1358
      %v1439 = vpack.c.bf16 %v1359, %v1359
      %v1440 = vpack.c.bf16 %v1364, %v1364
      %v1441 = vpack.c.bf16 %v1365, %v1365
      %v1442 = vpack.c.bf16 %v1370, %v1370
      %v1443 = vpack.c.bf16 %v1371, %v1371
      %v1444 = vpack.c.bf16 %v1376, %v1376
      %v1445 = vpack.c.bf16 %v1377, %v1377
      %v1446 = vpack.c.bf16 %v1382, %v1382
      %v1447 = vpack.c.bf16 %v1383, %v1383
      %v1448 = vpack.c.bf16 %v1388, %v1388
      %v1449 = vpack.c.bf16 %v1389, %v1389
      %v1450 = vpack.c.bf16 %v1394, %v1394
      %v1451 = vpack.c.bf16 %v1395, %v1395
      %v1452 = vpack.c.bf16 %v1400, %v1400
      %v1453 = vpack.c.bf16 %v1401, %v1401
      %v1480 = vunpack.c.l.b16 %v1428
      %v1481 = vunpack.c.l.b16 %v1429
      %v1482 = vunpack.c.l.b16 %v1430
      %v1483 = vunpack.c.l.b16 %v1431
      %v1484 = vunpack.c.l.b16 %v1432
      %v1485 = vunpack.c.l.b16 %v1433
      %v1486 = vunpack.c.l.b16 %v1434
      %v1487 = vunpack.c.l.b16 %v1435
      %v1488 = vunpack.c.l.b16 %v1436
      %v1489 = vunpack.c.l.b16 %v1437
      %v1490 = vunpack.c.l.b16 %v1438
      %v1491 = vunpack.c.l.b16 %v1439
      %v1492 = vunpack.c.l.b16 %v1440
      %v1493 = vunpack.c.l.b16 %v1441
      %v1494 = vunpack.c.l.b16 %v1442
      %v1495 = vunpack.c.l.b16 %v1443
      %v1496 = vunpack.c.l.b16 %v1444
      %v1497 = vunpack.c.l.b16 %v1445
      %v1498 = vunpack.c.l.b16 %v1446
      %v1499 = vunpack.c.l.b16 %v1447
      %v1500 = vunpack.c.l.b16 %v1448
      %v1501 = vunpack.c.l.b16 %v1449
      %v1502 = vunpack.c.l.b16 %v1450
      %v1503 = vunpack.c.l.b16 %v1451
      %v1504 = vunpack.c.l.b16 %v1452
      %v1505 = vunpack.c.l.b16 %v1453
      %v1506 = vpack.c.b16 %v1481, %v1480
      %v1507 = vpack.c.b16 %v1483, %v1482
      %v1508 = vpack.c.b16 %v1485, %v1484
      %v1509 = vpack.c.b16 %v1487, %v1486
      %v1510 = vpack.c.b16 %v1489, %v1488
      %v1511 = vpack.c.b16 %v1491, %v1490
      %v1512 = vpack.c.b16 %v1493, %v1492
      %v1513 = vpack.c.b16 %v1495, %v1494
      %v1514 = vpack.c.b16 %v1497, %v1496
      %v1515 = vpack.c.b16 %v1499, %v1498
      %v1516 = vpack.c.b16 %v1501, %v1500
      %v1517 = vpack.c.b16 %v1503, %v1502
      %v1518 = vpack.c.b16 %v1505, %v1504
      %v1520 = vshrl.u32 %v1506, 16
      %v1522 = vshll.u32 %v1506, 16
      %v1524 = vrot.slane %v1522, 1
      %v1525 = vor.u32 %v1520, %v1524
      %v1527 = vshrl.u32 %v1507, 16
      %v1529 = vshll.u32 %v1507, 16
      %v1531 = vrot.slane %v1529, 1
      %v1532 = vor.u32 %v1527, %v1531
      %v1534 = vshrl.u32 %v1508, 16
      %v1536 = vshll.u32 %v1508, 16
      %v1538 = vrot.slane %v1536, 1
      %v1539 = vor.u32 %v1534, %v1538
      %v1541 = vshrl.u32 %v1509, 16
      %v1543 = vshll.u32 %v1509, 16
      %v1545 = vrot.slane %v1543, 1
      %v1546 = vor.u32 %v1541, %v1545
      %v1548 = vshrl.u32 %v1510, 16
      %v1550 = vshll.u32 %v1510, 16
      %v1552 = vrot.slane %v1550, 1
      %v1553 = vor.u32 %v1548, %v1552
      %v1555 = vshrl.u32 %v1511, 16
      %v1557 = vshll.u32 %v1511, 16
      %v1559 = vrot.slane %v1557, 1
      %v1560 = vor.u32 %v1555, %v1559
      %v1562 = vshrl.u32 %v1512, 16
      %v1564 = vshll.u32 %v1512, 16
      %v1566 = vrot.slane %v1564, 1
      %v1567 = vor.u32 %v1562, %v1566
      %v1569 = vshrl.u32 %v1513, 16
      %v1571 = vshll.u32 %v1513, 16
      %v1573 = vrot.slane %v1571, 1
      %v1574 = vor.u32 %v1569, %v1573
      %v1576 = vshrl.u32 %v1514, 16
      %v1578 = vshll.u32 %v1514, 16
      %v1580 = vrot.slane %v1578, 1
      %v1581 = vor.u32 %v1576, %v1580
      %v1583 = vshrl.u32 %v1515, 16
      %v1585 = vshll.u32 %v1515, 16
      %v1587 = vrot.slane %v1585, 1
      %v1588 = vor.u32 %v1583, %v1587
      %v1590 = vshrl.u32 %v1516, 16
      %v1592 = vshll.u32 %v1516, 16
      %v1594 = vrot.slane %v1592, 1
      %v1595 = vor.u32 %v1590, %v1594
      %v1597 = vshrl.u32 %v1517, 16
      %v1599 = vshll.u32 %v1517, 16
      %v1601 = vrot.slane %v1599, 1
      %v1602 = vor.u32 %v1597, %v1601
      %v1604 = vshrl.u32 %v1518, 16
      %v1606 = vshll.u32 %v1518, 16
      %v1608 = vrot.slane %v1606, 1
      %v1609 = vor.u32 %v1604, %v1608
      %v1623 = vpack.c.b16 %v1480, %v1480
      %v1624 = vpack.c.b16 %v1482, %v1482
      %v1625 = vpack.c.b16 %v1484, %v1484
      %v1626 = vpack.c.b16 %v1486, %v1486
      %v1627 = vpack.c.b16 %v1488, %v1488
      %v1628 = vpack.c.b16 %v1490, %v1490
      %v1629 = vpack.c.b16 %v1492, %v1492
      %v1630 = vpack.c.b16 %v1494, %v1494
      %v1631 = vpack.c.b16 %v1496, %v1496
      %v1632 = vpack.c.b16 %v1498, %v1498
      %v1633 = vpack.c.b16 %v1500, %v1500
      %v1634 = vpack.c.b16 %v1502, %v1502
      %v1635 = vpack.c.b16 %v1504, %v1504
      %v1637 = vshll.u32 %v1623, 16
      %v1639 = vrot.slane %v1637, 1
      %v1641 = vshll.u32 %v1624, 16
      %v1643 = vrot.slane %v1641, 1
      %v1645 = vshll.u32 %v1625, 16
      %v1647 = vrot.slane %v1645, 1
      %v1649 = vshll.u32 %v1626, 16
      %v1651 = vrot.slane %v1649, 1
      %v1653 = vshll.u32 %v1627, 16
      %v1655 = vrot.slane %v1653, 1
      %v1657 = vshll.u32 %v1628, 16
      %v1659 = vrot.slane %v1657, 1
      %v1661 = vshll.u32 %v1629, 16
      %v1663 = vrot.slane %v1661, 1
      %v1665 = vshll.u32 %v1630, 16
      %v1667 = vrot.slane %v1665, 1
      %v1669 = vshll.u32 %v1631, 16
      %v1671 = vrot.slane %v1669, 1
      %v1673 = vshll.u32 %v1632, 16
      %v1675 = vrot.slane %v1673, 1
      %v1677 = vshll.u32 %v1633, 16
      %v1679 = vrot.slane %v1677, 1
      %v1681 = vshll.u32 %v1634, 16
      %v1683 = vrot.slane %v1681, 1
      %v1685 = vshll.u32 %v1635, 16
      %v1687 = vrot.slane %v1685, 1
      %vm1701 = vcmask 1047552
      %vm1702 = vsmask.f32 7424
      %vm1703 = vmand %vm1701, %vm1702
      %v1704 = vsel %vm1703, %v1525, %v1639
      %v1705 = vsel %vm1703, %v1532, %v1643
      %v1706 = vsel %vm1703, %v1539, %v1647
      %v1707 = vsel %vm1703, %v1546, %v1651
      %v1708 = vsel %vm1703, %v1553, %v1655
      %v1709 = vsel %vm1703, %v1560, %v1659
      %v1710 = vsel %vm1703, %v1567, %v1663
      %v1711 = vsel %vm1703, %v1574, %v1667
      %v1712 = vsel %vm1703, %v1581, %v1671
      %v1713 = vsel %vm1703, %v1588, %v1675
      %v1714 = vsel %vm1703, %v1595, %v1679
      %v1715 = vsel %vm1703, %v1602, %v1683
      %v1716 = vsel %vm1703, %v1609, %v1687
      %v1717 = vrot.slane %v1506, 1
      %v1718 = vrot.slane %v1507, 1
      %v1719 = vrot.slane %v1508, 1
      %v1720 = vrot.slane %v1509, 1
      %v1721 = vrot.slane %v1510, 1
      %v1722 = vrot.slane %v1511, 1
      %v1723 = vrot.slane %v1512, 1
      %v1724 = vrot.slane %v1513, 1
      %v1725 = vrot.slane %v1514, 1
      %v1726 = vrot.slane %v1515, 1
      %v1727 = vrot.slane %v1516, 1
      %v1728 = vrot.slane %v1517, 1
      %v1729 = vrot.slane %v1518, 1
      %v1730 = vrot.slane %v1623, 1
      %v1731 = vrot.slane %v1624, 1
      %v1732 = vrot.slane %v1625, 1
      %v1733 = vrot.slane %v1626, 1
      %v1734 = vrot.slane %v1627, 1
      %v1735 = vrot.slane %v1628, 1
      %v1736 = vrot.slane %v1629, 1
      %v1737 = vrot.slane %v1630, 1
      %v1738 = vrot.slane %v1631, 1
      %v1739 = vrot.slane %v1632, 1
      %v1740 = vrot.slane %v1633, 1
      %v1741 = vrot.slane %v1634, 1
      %v1742 = vrot.slane %v1635, 1
      %vm1743 = vcmask 1046528
      %v1746 = vsel %vm1743, %v1717, %v1730
      %v1750 = vsel %vm1743, %v1718, %v1731
      %v1754 = vsel %vm1743, %v1719, %v1732
      %v1758 = vsel %vm1743, %v1720, %v1733
      %v1762 = vsel %vm1743, %v1721, %v1734
      %v1766 = vsel %vm1743, %v1722, %v1735
      %v1770 = vsel %vm1743, %v1723, %v1736
      %v1774 = vsel %vm1743, %v1724, %v1737
      %v1778 = vsel %vm1743, %v1725, %v1738
      %v1782 = vsel %vm1743, %v1726, %v1739
      %v1786 = vsel %vm1743, %v1727, %v1740
      %v1790 = vsel %vm1743, %v1728, %v1741
      %v1794 = vsel %vm1743, %v1729, %v1742
      %v1809 = vld [vmem:[%s3] sm:$0xf]
      %v1810 = vld [vmem:[%s3 + $0x4] sm:$0xf]
      %v1811 = vld [vmem:[%s3 + $0x8] sm:$0xf]
      %v1812 = vld [vmem:[%s3 + $0xc] sm:$0xf]
      %v1813 = vld [vmem:[%s3 + $0x10] sm:$0xf]
      %v1814 = vld [vmem:[%s3 + $0x14] sm:$0xf]
      %v1815 = vld [vmem:[%s3 + $0x18] sm:$0xf]
      %v1816 = vld [vmem:[%s3 + $0x1c] sm:$0xf]
      %v1817 = vld [vmem:[%s3 + $0x20] sm:$0xf]
      %v1818 = vld [vmem:[%s3 + $0x24] sm:$0xf]
      %v1819 = vld [vmem:[%s3 + $0x28] sm:$0xf]
      %v1820 = vld [vmem:[%s3 + $0x2c] sm:$0xf]
      %v1821 = vld [vmem:[%s3 + $0x30] sm:$0xf]
      %v1822 = vld [vmem:[%s3 + $0x34] sm:$0xf]
      %v1823 = vld [vmem:[%s3 + $0x38] sm:$0xf]
      %v1824 = vld [vmem:[%s3 + $0x3c] sm:$0xf]
      %v1825 = vld [vmem:[%s3 + $0x40] sm:$0xf]
      %v1826 = vld [vmem:[%s3 + $0x44] sm:$0xf]
      %v1827 = vld [vmem:[%s3 + $0x48] sm:$0xf]
      %v1828 = vld [vmem:[%s3 + $0x4c] sm:$0xf]
      %v1829 = vld [vmem:[%s3 + $0x50] sm:$0xf]
      %v1830 = vld [vmem:[%s3 + $0x54] sm:$0xf]
      %v1831 = vld [vmem:[%s3 + $0x58] sm:$0xf]
      %v1832 = vld [vmem:[%s3 + $0x5c] sm:$0xf]
      %v1833 = vld [vmem:[%s3 + $0x60] sm:$0xf]
      %v1834 = vld [vmem:[%s3 + $0x64] sm:$0xf]
      %v1835 = vld [vmem:[%s3 + $0x68] sm:$0xf]
      %v1836 = vld [vmem:[%s3 + $0x6c] sm:$0xf]
      %v1837 = vld [vmem:[%s3 + $0x70] sm:$0xf]
      %v1838 = vld [vmem:[%s3 + $0x74] sm:$0xf]
      %v1839 = vld [vmem:[%s3 + $0x78] sm:$0xf]
      %v1840 = vld [vmem:[%s3 + $0x7c] sm:$0xf]
      %v1841 = vld [vmem:[%s3 + $0x80] sm:$0xf]
      %v1842 = vld [vmem:[%s3 + $0x84] sm:$0xf]
      %v1843 = vld [vmem:[%s3 + $0x88] sm:$0xf]
      %v1844 = vld [vmem:[%s3 + $0x8c] sm:$0xf]
      %v1845 = vld [vmem:[%s3 + $0x90] sm:$0xf]
      %v1846 = vld [vmem:[%s3 + $0x94] sm:$0xf]
      %v1847 = vld [vmem:[%s3 + $0x98] sm:$0xf]
      %v1848 = vld [vmem:[%s3 + $0x9c] sm:$0xf]
      %v1849 = vld [vmem:[%s3 + $0xa0] sm:$0xf]
      %v1850 = vld [vmem:[%s3 + $0xa4] sm:$0xf]
      %v1851 = vld [vmem:[%s3 + $0xa8] sm:$0xf]
      %v1852 = vld [vmem:[%s3 + $0xac] sm:$0xf]
      %v1853 = vld [vmem:[%s3 + $0xb0] sm:$0xf]
      %v1854 = vld [vmem:[%s3 + $0xb4] sm:$0xf]
      %v1855 = vld [vmem:[%s3 + $0xb8] sm:$0xf]
      %v1856 = vld [vmem:[%s3 + $0xbc] sm:$0xf]
      %v1857 = vld [vmem:[%s3 + $0xc0] sm:$0xf]
      %v1858 = vld [vmem:[%s3 + $0xc4] sm:$0xf]
      %v1859 = vld [vmem:[%s3 + $0xc8] sm:$0xf]
      %v1860 = vld [vmem:[%s3 + $0xcc] sm:$0xf]
      %v1861 = vld [vmem:[%s3 + $0xd0] sm:$0xf]
      %v1862 = vld [vmem:[%s3 + $0xd4] sm:$0xf]
      %v1863 = vld [vmem:[%s3 + $0xd8] sm:$0xf]
      %v1864 = vld [vmem:[%s3 + $0xdc] sm:$0xf]
      %v1865 = vld [vmem:[%s3 + $0xe0] sm:$0xf]
      %v1866 = vld [vmem:[%s3 + $0xe4] sm:$0xf]
      %v1867 = vld [vmem:[%s3 + $0xe8] sm:$0xf]
      %v1868 = vld [vmem:[%s3 + $0xec] sm:$0xf]
      %v1869 = vld [vmem:[%s3 + $0xf0] sm:$0xf]
      %v1870 = vld [vmem:[%s3 + $0xf4] sm:$0xf]
      %v1871 = vld [vmem:[%s3 + $0xf8] sm:$0xf]
      %v1872 = vld [vmem:[%s3 + $0xfc] sm:$0xf]
      %v1873 = vld [vmem:[%s3 + $0x100] sm:$0xf]
      %v1874 = vld [vmem:[%s3 + $0x104] sm:$0xf]
      %v1875 = vld [vmem:[%s3 + $0x108] sm:$0xf]
      %v1876 = vld [vmem:[%s3 + $0x10c] sm:$0xf]
      %v1877 = vld [vmem:[%s3 + $0x110] sm:$0xf]
      %v1878 = vld [vmem:[%s3 + $0x114] sm:$0xf]
      %v1879 = vld [vmem:[%s3 + $0x118] sm:$0xf]
      %v1880 = vld [vmem:[%s3 + $0x11c] sm:$0xf]
      %v1881 = vld [vmem:[%s3 + $0x120] sm:$0xf]
      %v1882 = vld [vmem:[%s3 + $0x124] sm:$0xf]
      %v1883 = vld [vmem:[%s3 + $0x128] sm:$0xf]
      %v1884 = vld [vmem:[%s3 + $0x12c] sm:$0xf]
      %v1885 = vld [vmem:[%s3 + $0x130] sm:$0xf]
      %v1886 = vld [vmem:[%s3 + $0x134] sm:$0xf]
      %v1887 = vld [vmem:[%s3 + $0x138] sm:$0xf]
      %v1888 = vld [vmem:[%s3 + $0x13c] sm:$0xf]
      %v1889 = vld [vmem:[%s3 + $0x140] sm:$0xf]
      %v1890 = vld [vmem:[%s3 + $0x144] sm:$0xf]
      %v1891 = vld [vmem:[%s3 + $0x148] sm:$0xf]
      %v1892 = vld [vmem:[%s3 + $0x14c] sm:$0xf]
      %v1893 = vld [vmem:[%s3 + $0x150] sm:$0xf]
      %v1894 = vld [vmem:[%s3 + $0x154] sm:$0xf]
      %v1895 = vld [vmem:[%s3 + $0x158] sm:$0xf]
      %v1896 = vld [vmem:[%s3 + $0x15c] sm:$0xf]
      %v1897 = vld [vmem:[%s3 + $0x160] sm:$0xf]
      %v1898 = vld [vmem:[%s3 + $0x164] sm:$0xf]
      %v1899 = vld [vmem:[%s3 + $0x168] sm:$0xf]
      %v1900 = vld [vmem:[%s3 + $0x16c] sm:$0xf]
      %v1901 = vld [vmem:[%s3 + $0x170] sm:$0xf]
      %v1902 = vld [vmem:[%s3 + $0x174] sm:$0xf]
      %v1903 = vld [vmem:[%s3 + $0x178] sm:$0xf]
      %v1904 = vld [vmem:[%s3 + $0x17c] sm:$0xf]
      %v1905 = vld [vmem:[%s3 + $0x180] sm:$0xf]
      %v1906 = vld [vmem:[%s3 + $0x184] sm:$0xf]
      %v1907 = vld [vmem:[%s3 + $0x188] sm:$0xf]
      %v1908 = vld [vmem:[%s3 + $0x18c] sm:$0xf]
      %v1909 = vld [vmem:[%s3 + $0x190] sm:$0xf]
      %v1910 = vld [vmem:[%s3 + $0x194] sm:$0xf]
      %v1911 = vld [vmem:[%s3 + $0x198] sm:$0xf]
      %v1912 = vld [vmem:[%s3 + $0x19c] sm:$0xf]
      %v1913 = vld [vmem:[%s3 + $0x1a0] sm:$0xf]
      %v1914 = vld [vmem:[%s3 + $0x1a4] sm:$0xf]
      %v1915 = vld [vmem:[%s3 + $0x1a8] sm:$0xf]
      %v1916 = vld [vmem:[%s3 + $0x1ac] sm:$0xf]
      %v1917 = vld [vmem:[%s3 + $0x1b0] sm:$0xf]
      %v1918 = vld [vmem:[%s3 + $0x1b4] sm:$0xf]
      %v1919 = vld [vmem:[%s3 + $0x1b8] sm:$0xf]
      %v1920 = vld [vmem:[%s3 + $0x1bc] sm:$0xf]
      %v1921 = vld [vmem:[%s3 + $0x1c0] sm:$0xf]
      %v1922 = vld [vmem:[%s3 + $0x1c4] sm:$0xf]
      %v1923 = vld [vmem:[%s3 + $0x1c8] sm:$0xf]
      %v1924 = vld [vmem:[%s3 + $0x1cc] sm:$0xf]
      %v1925 = vld [vmem:[%s3 + $0x1d0] sm:$0xf]
      %v1926 = vld [vmem:[%s3 + $0x1d4] sm:$0xf]
      %v1927 = vld [vmem:[%s3 + $0x1d8] sm:$0xf]
      %v1928 = vld [vmem:[%s3 + $0x1dc] sm:$0xf]
      %v1929 = vld [vmem:[%s3 + $0x1e0] sm:$0xf]
      %v1930 = vld [vmem:[%s3 + $0x1e4] sm:$0xf]
      %v1931 = vld [vmem:[%s3 + $0x1e8] sm:$0xf]
      %v1932 = vld [vmem:[%s3 + $0x1ec] sm:$0xf]
      %v1933 = vld [vmem:[%s3 + $0x1f0] sm:$0xf]
      %v1934 = vld [vmem:[%s3 + $0x1f4] sm:$0xf]
      %v1935 = vld [vmem:[%s3 + $0x1f8] sm:$0xf]
      %v1936 = vld [vmem:[%s3 + $0x1fc] sm:$0xf]
      %v1937 = vld [vmem:[%s3 + $0x200] sm:$0xf]
      %v1938 = vld [vmem:[%s3 + $0x204] sm:$0xf]
      %v1939 = vld [vmem:[%s3 + $0x208] sm:$0xf]
      %v1940 = vld [vmem:[%s3 + $0x20c] sm:$0xf]
      %v1941 = vld [vmem:[%s3 + $0x210] sm:$0xf]
      %v1942 = vld [vmem:[%s3 + $0x214] sm:$0xf]
      %v1943 = vld [vmem:[%s3 + $0x218] sm:$0xf]
      %v1944 = vld [vmem:[%s3 + $0x21c] sm:$0xf]
      %v1945 = vld [vmem:[%s3 + $0x220] sm:$0xf]
      %v1946 = vld [vmem:[%s3 + $0x224] sm:$0xf]
      %v1947 = vld [vmem:[%s3 + $0x228] sm:$0xf]
      %v1948 = vld [vmem:[%s3 + $0x22c] sm:$0xf]
      %v1949 = vld [vmem:[%s3 + $0x230] sm:$0xf]
      %v1950 = vld [vmem:[%s3 + $0x234] sm:$0xf]
      %v1951 = vld [vmem:[%s3 + $0x238] sm:$0xf]
      %v1952 = vld [vmem:[%s3 + $0x23c] sm:$0xf]
      %v2097 = vunpack.c.l.b16 %v1809
      %v2098 = vunpack.c.l.b16 %v1810
      %v2099 = vunpack.c.l.b16 %v1811
      %v2100 = vunpack.c.l.b16 %v1812
      %v2101 = vunpack.c.l.b16 %v1813
      %v2102 = vunpack.c.l.b16 %v1814
      %v2103 = vunpack.c.l.b16 %v1815
      %v2104 = vunpack.c.l.b16 %v1816
      %v2105 = vunpack.c.l.b16 %v1817
      %v2106 = vunpack.c.l.b16 %v1818
      %v2107 = vunpack.c.l.b16 %v1819
      %v2108 = vunpack.c.l.b16 %v1820
      %v2109 = vunpack.c.l.b16 %v1821
      %v2110 = vunpack.c.l.b16 %v1822
      %v2111 = vunpack.c.l.b16 %v1823
      %v2112 = vunpack.c.l.b16 %v1824
      %v2113 = vunpack.c.l.b16 %v1825
      %v2114 = vunpack.c.l.b16 %v1826
      %v2115 = vunpack.c.l.b16 %v1827
      %v2116 = vunpack.c.l.b16 %v1828
      %v2117 = vunpack.c.l.b16 %v1829
      %v2118 = vunpack.c.l.b16 %v1830
      %v2119 = vunpack.c.l.b16 %v1831
      %v2120 = vunpack.c.l.b16 %v1832
      %v2121 = vunpack.c.l.b16 %v1833
      %v2122 = vunpack.c.l.b16 %v1834
      %v2123 = vunpack.c.l.b16 %v1835
      %v2124 = vunpack.c.l.b16 %v1836
      %v2125 = vunpack.c.l.b16 %v1837
      %v2126 = vunpack.c.l.b16 %v1838
      %v2127 = vunpack.c.l.b16 %v1839
      %v2128 = vunpack.c.l.b16 %v1840
      %v2129 = vunpack.c.l.b16 %v1841
      %v2130 = vunpack.c.l.b16 %v1842
      %v2131 = vunpack.c.l.b16 %v1843
      %v2132 = vunpack.c.l.b16 %v1844
      %v2133 = vunpack.c.l.b16 %v1845
      %v2134 = vunpack.c.l.b16 %v1846
      %v2135 = vunpack.c.l.b16 %v1847
      %v2136 = vunpack.c.l.b16 %v1848
      %v2137 = vunpack.c.l.b16 %v1849
      %v2138 = vunpack.c.l.b16 %v1850
      %v2139 = vunpack.c.l.b16 %v1851
      %v2140 = vunpack.c.l.b16 %v1852
      %v2141 = vunpack.c.l.b16 %v1853
      %v2142 = vunpack.c.l.b16 %v1854
      %v2143 = vunpack.c.l.b16 %v1855
      %v2144 = vunpack.c.l.b16 %v1856
      %v2145 = vunpack.c.l.b16 %v1857
      %v2146 = vunpack.c.l.b16 %v1858
      %v2147 = vunpack.c.l.b16 %v1859
      %v2148 = vunpack.c.l.b16 %v1860
      %v2149 = vunpack.c.l.b16 %v1861
      %v2150 = vunpack.c.l.b16 %v1862
      %v2151 = vunpack.c.l.b16 %v1863
      %v2152 = vunpack.c.l.b16 %v1864
      %v2153 = vunpack.c.l.b16 %v1865
      %v2154 = vunpack.c.l.b16 %v1866
      %v2155 = vunpack.c.l.b16 %v1867
      %v2156 = vunpack.c.l.b16 %v1868
      %v2157 = vunpack.c.l.b16 %v1869
      %v2158 = vunpack.c.l.b16 %v1870
      %v2159 = vunpack.c.l.b16 %v1871
      %v2160 = vunpack.c.l.b16 %v1872
      %v2161 = vunpack.c.l.b16 %v1873
      %v2162 = vunpack.c.l.b16 %v1874
      %v2163 = vunpack.c.l.b16 %v1875
      %v2164 = vunpack.c.l.b16 %v1876
      %v2165 = vunpack.c.l.b16 %v1877
      %v2166 = vunpack.c.l.b16 %v1878
      %v2167 = vunpack.c.l.b16 %v1879
      %v2168 = vunpack.c.l.b16 %v1880
      %v2169 = vunpack.c.l.b16 %v1881
      %v2170 = vunpack.c.l.b16 %v1882
      %v2171 = vunpack.c.l.b16 %v1883
      %v2172 = vunpack.c.l.b16 %v1884
      %v2173 = vunpack.c.l.b16 %v1885
      %v2174 = vunpack.c.l.b16 %v1886
      %v2175 = vunpack.c.l.b16 %v1887
      %v2176 = vunpack.c.l.b16 %v1888
      %v2177 = vunpack.c.l.b16 %v1889
      %v2178 = vunpack.c.l.b16 %v1890
      %v2179 = vunpack.c.l.b16 %v1891
      %v2180 = vunpack.c.l.b16 %v1892
      %v2181 = vunpack.c.l.b16 %v1893
      %v2182 = vunpack.c.l.b16 %v1894
      %v2183 = vunpack.c.l.b16 %v1895
      %v2184 = vunpack.c.l.b16 %v1896
      %v2185 = vunpack.c.l.b16 %v1897
      %v2186 = vunpack.c.l.b16 %v1898
      %v2187 = vunpack.c.l.b16 %v1899
      %v2188 = vunpack.c.l.b16 %v1900
      %v2189 = vunpack.c.l.b16 %v1901
      %v2190 = vunpack.c.l.b16 %v1902
      %v2191 = vunpack.c.l.b16 %v1903
      %v2192 = vunpack.c.l.b16 %v1904
      %v2193 = vunpack.c.l.b16 %v1905
      %v2194 = vunpack.c.l.b16 %v1906
      %v2195 = vunpack.c.l.b16 %v1907
      %v2196 = vunpack.c.l.b16 %v1908
      %v2197 = vunpack.c.l.b16 %v1909
      %v2198 = vunpack.c.l.b16 %v1910
      %v2199 = vunpack.c.l.b16 %v1911
      %v2200 = vunpack.c.l.b16 %v1912
      %v2201 = vunpack.c.l.b16 %v1913
      %v2202 = vunpack.c.l.b16 %v1914
      %v2203 = vunpack.c.l.b16 %v1915
      %v2204 = vunpack.c.l.b16 %v1916
      %v2205 = vunpack.c.l.b16 %v1917
      %v2206 = vunpack.c.l.b16 %v1918
      %v2207 = vunpack.c.l.b16 %v1919
      %v2208 = vunpack.c.l.b16 %v1920
      %v2209 = vunpack.c.l.b16 %v1921
      %v2210 = vunpack.c.l.b16 %v1922
      %v2211 = vunpack.c.l.b16 %v1923
      %v2212 = vunpack.c.l.b16 %v1924
      %v2213 = vunpack.c.l.b16 %v1925
      %v2214 = vunpack.c.l.b16 %v1926
      %v2215 = vunpack.c.l.b16 %v1927
      %v2216 = vunpack.c.l.b16 %v1928
      %v2217 = vunpack.c.l.b16 %v1929
      %v2218 = vunpack.c.l.b16 %v1930
      %v2219 = vunpack.c.l.b16 %v1931
      %v2220 = vunpack.c.l.b16 %v1932
      %v2221 = vunpack.c.l.b16 %v1933
      %v2222 = vunpack.c.l.b16 %v1934
      %v2223 = vunpack.c.l.b16 %v1935
      %v2224 = vunpack.c.l.b16 %v1936
      %v2225 = vunpack.c.l.b16 %v1937
      %v2226 = vunpack.c.l.b16 %v1938
      %v2227 = vunpack.c.l.b16 %v1939
      %v2228 = vunpack.c.l.b16 %v1940
      %v2229 = vunpack.c.l.b16 %v1941
      %v2230 = vunpack.c.l.b16 %v1942
      %v2231 = vunpack.c.l.b16 %v1943
      %v2232 = vunpack.c.l.b16 %v1944
      %v2233 = vunpack.c.l.b16 %v1945
      %v2234 = vunpack.c.l.b16 %v1946
      %v2235 = vunpack.c.l.b16 %v1947
      %v2236 = vunpack.c.l.b16 %v1948
      %v2237 = vunpack.c.l.b16 %v1949
      %v2238 = vunpack.c.l.b16 %v1950
      %v2239 = vunpack.c.l.b16 %v1951
      %v2240 = vunpack.c.l.b16 %v1952
      %v2241 = vpack.c.b16 %v2098, %v2097
      %v2242 = vpack.c.b16 %v2100, %v2099
      %v2243 = vpack.c.b16 %v2102, %v2101
      %v2244 = vpack.c.b16 %v2104, %v2103
      %v2245 = vpack.c.b16 %v2106, %v2105
      %v2246 = vpack.c.b16 %v2108, %v2107
      %v2247 = vpack.c.b16 %v2110, %v2109
      %v2248 = vpack.c.b16 %v2112, %v2111
      %v2249 = vpack.c.b16 %v2114, %v2113
      %v2250 = vpack.c.b16 %v2116, %v2115
      %v2251 = vpack.c.b16 %v2118, %v2117
      %v2252 = vpack.c.b16 %v2120, %v2119
      %v2253 = vpack.c.b16 %v2122, %v2121
      %v2254 = vpack.c.b16 %v2124, %v2123
      %v2255 = vpack.c.b16 %v2126, %v2125
      %v2256 = vpack.c.b16 %v2128, %v2127
      %v2257 = vpack.c.b16 %v2130, %v2129
      %v2258 = vpack.c.b16 %v2132, %v2131
      %v2259 = vpack.c.b16 %v2134, %v2133
      %v2260 = vpack.c.b16 %v2136, %v2135
      %v2261 = vpack.c.b16 %v2138, %v2137
      %v2262 = vpack.c.b16 %v2140, %v2139
      %v2263 = vpack.c.b16 %v2142, %v2141
      %v2264 = vpack.c.b16 %v2144, %v2143
      %v2265 = vpack.c.b16 %v2146, %v2145
      %v2266 = vpack.c.b16 %v2148, %v2147
      %v2267 = vpack.c.b16 %v2150, %v2149
      %v2268 = vpack.c.b16 %v2152, %v2151
      %v2269 = vpack.c.b16 %v2154, %v2153
      %v2270 = vpack.c.b16 %v2156, %v2155
      %v2271 = vpack.c.b16 %v2158, %v2157
      %v2272 = vpack.c.b16 %v2160, %v2159
      %v2273 = vpack.c.b16 %v2162, %v2161
      %v2274 = vpack.c.b16 %v2164, %v2163
      %v2275 = vpack.c.b16 %v2166, %v2165
      %v2276 = vpack.c.b16 %v2168, %v2167
      %v2277 = vpack.c.b16 %v2170, %v2169
      %v2278 = vpack.c.b16 %v2172, %v2171
      %v2279 = vpack.c.b16 %v2174, %v2173
      %v2280 = vpack.c.b16 %v2176, %v2175
      %v2281 = vpack.c.b16 %v2178, %v2177
      %v2282 = vpack.c.b16 %v2180, %v2179
      %v2283 = vpack.c.b16 %v2182, %v2181
      %v2284 = vpack.c.b16 %v2184, %v2183
      %v2285 = vpack.c.b16 %v2186, %v2185
      %v2286 = vpack.c.b16 %v2188, %v2187
      %v2287 = vpack.c.b16 %v2190, %v2189
      %v2288 = vpack.c.b16 %v2192, %v2191
      %v2289 = vpack.c.b16 %v2194, %v2193
      %v2290 = vpack.c.b16 %v2196, %v2195
      %v2291 = vpack.c.b16 %v2198, %v2197
      %v2292 = vpack.c.b16 %v2200, %v2199
      %v2293 = vpack.c.b16 %v2202, %v2201
      %v2294 = vpack.c.b16 %v2204, %v2203
      %v2295 = vpack.c.b16 %v2206, %v2205
      %v2296 = vpack.c.b16 %v2208, %v2207
      %v2297 = vpack.c.b16 %v2210, %v2209
      %v2298 = vpack.c.b16 %v2212, %v2211
      %v2299 = vpack.c.b16 %v2214, %v2213
      %v2300 = vpack.c.b16 %v2216, %v2215
      %v2301 = vpack.c.b16 %v2218, %v2217
      %v2302 = vpack.c.b16 %v2220, %v2219
      %v2303 = vpack.c.b16 %v2222, %v2221
      %v2304 = vpack.c.b16 %v2224, %v2223
      %v2305 = vpack.c.b16 %v2226, %v2225
      %v2306 = vpack.c.b16 %v2228, %v2227
      %v2307 = vpack.c.b16 %v2230, %v2229
      %v2308 = vpack.c.b16 %v2232, %v2231
      %v2309 = vpack.c.b16 %v2234, %v2233
      %v2310 = vpack.c.b16 %v2236, %v2235
      %v2311 = vpack.c.b16 %v2238, %v2237
      %v2312 = vpack.c.b16 %v2240, %v2239
      %2385 = vmatpush.bf16.msra.mxu0 %v2248
      %2386 = vmatpush.bf16.msra.mxu0 %v2247
      %2387 = vmatpush.bf16.msra.mxu0 %v2246
      %2388 = vmatpush.bf16.msra.mxu0 %v2245
      %2389 = vmatpush.bf16.msra.mxu0 %v2244
      %2390 = vmatpush.bf16.msra.mxu0 %v2243
      %2391 = vmatpush.bf16.msra.mxu0 %v2242
      %2392 = vmatpush.bf16.msra.mxu0 %v2241
      %2393 = vmatmul.bf16.gmra.mxu0 %v1506
      %v2394 = vpop.f32.mrf.mxu0
      %v2395 = vadd.f32 0.0, %v2394
      %v2396 = vpop.f32.mrf.mxu0
      %v2397 = vadd.f32 0.0, %v2396
      %2398 = vmatmul.bf16.gmra.mxu0 %v1507
      %v2399 = vpop.f32.mrf.mxu0
      %v2400 = vadd.f32 0.0, %v2399
      %v2401 = vpop.f32.mrf.mxu0
      %v2402 = vadd.f32 0.0, %v2401
      %2403 = vmatmul.bf16.gmra.mxu0 %v1508
      %v2404 = vpop.f32.mrf.mxu0
      %v2405 = vadd.f32 0.0, %v2404
      %v2406 = vpop.f32.mrf.mxu0
      %v2407 = vadd.f32 0.0, %v2406
      %2408 = vmatmul.bf16.gmra.mxu0 %v1509
      %v2409 = vpop.f32.mrf.mxu0
      %v2410 = vadd.f32 0.0, %v2409
      %v2411 = vpop.f32.mrf.mxu0
      %v2412 = vadd.f32 0.0, %v2411
      %2413 = vmatmul.bf16.gmra.mxu0 %v1510
      %v2414 = vpop.f32.mrf.mxu0
      %v2415 = vadd.f32 0.0, %v2414
      %v2416 = vpop.f32.mrf.mxu0
      %v2417 = vadd.f32 0.0, %v2416
      %2418 = vmatmul.bf16.gmra.mxu0 %v1511
      %v2419 = vpop.f32.mrf.mxu0
      %v2420 = vadd.f32 0.0, %v2419
      %v2421 = vpop.f32.mrf.mxu0
      %v2422 = vadd.f32 0.0, %v2421
      %2423 = vmatmul.bf16.gmra.mxu0 %v1512
      %v2424 = vpop.f32.mrf.mxu0
      %v2425 = vadd.f32 0.0, %v2424
      %v2426 = vpop.f32.mrf.mxu0
      %v2427 = vadd.f32 0.0, %v2426
      %2428 = vmatmul.bf16.gmra.mxu0 %v1513
      %v2429 = vpop.f32.mrf.mxu0
      %v2430 = vadd.f32 0.0, %v2429
      %v2431 = vpop.f32.mrf.mxu0
      %v2432 = vadd.f32 0.0, %v2431
      %2433 = vmatmul.bf16.gmra.mxu0 %v1514
      %v2434 = vpop.f32.mrf.mxu0
      %v2435 = vadd.f32 0.0, %v2434
      %v2436 = vpop.f32.mrf.mxu0
      %v2437 = vadd.f32 0.0, %v2436
      %2438 = vmatmul.bf16.gmra.mxu0 %v1515
      %v2439 = vpop.f32.mrf.mxu0
      %v2440 = vadd.f32 0.0, %v2439
      %v2441 = vpop.f32.mrf.mxu0
      %v2442 = vadd.f32 0.0, %v2441
      %2443 = vmatmul.bf16.gmra.mxu0 %v1516
      %v2444 = vpop.f32.mrf.mxu0
      %v2445 = vadd.f32 0.0, %v2444
      %v2446 = vpop.f32.mrf.mxu0
      %v2447 = vadd.f32 0.0, %v2446
      %2448 = vdwg.mxu0
      %2449 = vmatpush.bf16.msra.mxu0 %v2256
      %2450 = vmatpush.bf16.msra.mxu0 %v2255
      %2451 = vmatpush.bf16.msra.mxu0 %v2254
      %2452 = vmatpush.bf16.msra.mxu0 %v2253
      %2453 = vmatpush.bf16.msra.mxu0 %v2252
      %2454 = vmatpush.bf16.msra.mxu0 %v2251
      %2455 = vmatpush.bf16.msra.mxu0 %v2250
      %2456 = vmatpush.bf16.msra.mxu0 %v2249
      %2457 = vmatmul.bf16.gmra.mxu0 %v1704
      %v2458 = vpop.f32.mrf.mxu0
      %v2459 = vadd.f32 %v2395, %v2458
      %v2460 = vpop.f32.mrf.mxu0
      %v2461 = vadd.f32 %v2397, %v2460
      %2462 = vmatmul.bf16.gmra.mxu0 %v1705
      %v2463 = vpop.f32.mrf.mxu0
      %v2464 = vadd.f32 %v2400, %v2463
      %v2465 = vpop.f32.mrf.mxu0
      %v2466 = vadd.f32 %v2402, %v2465
      %2467 = vmatmul.bf16.gmra.mxu0 %v1706
      %v2468 = vpop.f32.mrf.mxu0
      %v2469 = vadd.f32 %v2405, %v2468
      %v2470 = vpop.f32.mrf.mxu0
      %v2471 = vadd.f32 %v2407, %v2470
      %2472 = vmatmul.bf16.gmra.mxu0 %v1707
      %v2473 = vpop.f32.mrf.mxu0
      %v2474 = vadd.f32 %v2410, %v2473
      %v2475 = vpop.f32.mrf.mxu0
      %v2476 = vadd.f32 %v2412, %v2475
      %2477 = vmatmul.bf16.gmra.mxu0 %v1708
      %v2478 = vpop.f32.mrf.mxu0
      %v2479 = vadd.f32 %v2415, %v2478
      %v2480 = vpop.f32.mrf.mxu0
      %v2481 = vadd.f32 %v2417, %v2480
      %2482 = vmatmul.bf16.gmra.mxu0 %v1709
      %v2483 = vpop.f32.mrf.mxu0
      %v2484 = vadd.f32 %v2420, %v2483
      %v2485 = vpop.f32.mrf.mxu0
      %v2486 = vadd.f32 %v2422, %v2485
      %2487 = vmatmul.bf16.gmra.mxu0 %v1710
      %v2488 = vpop.f32.mrf.mxu0
      %v2489 = vadd.f32 %v2425, %v2488
      %v2490 = vpop.f32.mrf.mxu0
      %v2491 = vadd.f32 %v2427, %v2490
      %2492 = vmatmul.bf16.gmra.mxu0 %v1711
      %v2493 = vpop.f32.mrf.mxu0
      %v2494 = vadd.f32 %v2430, %v2493
      %v2495 = vpop.f32.mrf.mxu0
      %v2496 = vadd.f32 %v2432, %v2495
      %2497 = vmatmul.bf16.gmra.mxu0 %v1712
      %v2498 = vpop.f32.mrf.mxu0
      %v2499 = vadd.f32 %v2435, %v2498
      %v2500 = vpop.f32.mrf.mxu0
      %v2501 = vadd.f32 %v2437, %v2500
      %2502 = vmatmul.bf16.gmra.mxu0 %v1713
      %v2503 = vpop.f32.mrf.mxu0
      %v2504 = vadd.f32 %v2440, %v2503
      %v2505 = vpop.f32.mrf.mxu0
      %v2506 = vadd.f32 %v2442, %v2505
      %2507 = vmatmul.bf16.gmra.mxu0 %v1714
      %v2508 = vpop.f32.mrf.mxu0
      %v2509 = vadd.f32 %v2445, %v2508
      %v2510 = vpop.f32.mrf.mxu0
      %v2511 = vadd.f32 %v2447, %v2510
      %2512 = vdwg.mxu0
      %2513 = vmatpush.bf16.msra.mxu0 %v2264
      %2514 = vmatpush.bf16.msra.mxu0 %v2263
      %2515 = vmatpush.bf16.msra.mxu0 %v2262
      %2516 = vmatpush.bf16.msra.mxu0 %v2261
      %2517 = vmatpush.bf16.msra.mxu0 %v2260
      %2518 = vmatpush.bf16.msra.mxu0 %v2259
      %2519 = vmatpush.bf16.msra.mxu0 %v2258
      %2520 = vmatpush.bf16.msra.mxu0 %v2257
      %2521 = vmatmul.bf16.gmra.mxu0 %v1746
      %v2522 = vpop.f32.mrf.mxu0
      %v2523 = vadd.f32 %v2459, %v2522
      %v2524 = vpop.f32.mrf.mxu0
      %v2525 = vadd.f32 %v2461, %v2524
      %2526 = vmatmul.bf16.gmra.mxu0 %v1750
      %v2527 = vpop.f32.mrf.mxu0
      %v2528 = vadd.f32 %v2464, %v2527
      %v2529 = vpop.f32.mrf.mxu0
      %v2530 = vadd.f32 %v2466, %v2529
      %2531 = vmatmul.bf16.gmra.mxu0 %v1754
      %v2532 = vpop.f32.mrf.mxu0
      %v2533 = vadd.f32 %v2469, %v2532
      %v2534 = vpop.f32.mrf.mxu0
      %v2535 = vadd.f32 %v2471, %v2534
      %2536 = vmatmul.bf16.gmra.mxu0 %v1758
      %v2537 = vpop.f32.mrf.mxu0
      %v2538 = vadd.f32 %v2474, %v2537
      %v2539 = vpop.f32.mrf.mxu0
      %v2540 = vadd.f32 %v2476, %v2539
      %2541 = vmatmul.bf16.gmra.mxu0 %v1762
      %v2542 = vpop.f32.mrf.mxu0
      %v2543 = vadd.f32 %v2479, %v2542
      %v2544 = vpop.f32.mrf.mxu0
      %v2545 = vadd.f32 %v2481, %v2544
      %2546 = vmatmul.bf16.gmra.mxu0 %v1766
      %v2547 = vpop.f32.mrf.mxu0
      %v2548 = vadd.f32 %v2484, %v2547
      %v2549 = vpop.f32.mrf.mxu0
      %v2550 = vadd.f32 %v2486, %v2549
      %2551 = vmatmul.bf16.gmra.mxu0 %v1770
      %v2552 = vpop.f32.mrf.mxu0
      %v2553 = vadd.f32 %v2489, %v2552
      %v2554 = vpop.f32.mrf.mxu0
      %v2555 = vadd.f32 %v2491, %v2554
      %2556 = vmatmul.bf16.gmra.mxu0 %v1774
      %v2557 = vpop.f32.mrf.mxu0
      %v2558 = vadd.f32 %v2494, %v2557
      %v2559 = vpop.f32.mrf.mxu0
      %v2560 = vadd.f32 %v2496, %v2559
      %2561 = vmatmul.bf16.gmra.mxu0 %v1778
      %v2562 = vpop.f32.mrf.mxu0
      %v2563 = vadd.f32 %v2499, %v2562
      %v2564 = vpop.f32.mrf.mxu0
      %v2565 = vadd.f32 %v2501, %v2564
      %2566 = vmatmul.bf16.gmra.mxu0 %v1782
      %v2567 = vpop.f32.mrf.mxu0
      %v2568 = vadd.f32 %v2504, %v2567
      %v2569 = vpop.f32.mrf.mxu0
      %v2570 = vadd.f32 %v2506, %v2569
      %2571 = vmatmul.bf16.gmra.mxu0 %v1786
      %v2572 = vpop.f32.mrf.mxu0
      %v2573 = vadd.f32 %v2509, %v2572
      %v2574 = vpop.f32.mrf.mxu0
      %v2575 = vadd.f32 %v2511, %v2574
      %2576 = vdwg.mxu0
      %2577 = vmatpush.bf16.msra.mxu0 %v2272
      %2578 = vmatpush.bf16.msra.mxu0 %v2271
      %2579 = vmatpush.bf16.msra.mxu0 %v2270
      %2580 = vmatpush.bf16.msra.mxu0 %v2269
      %2581 = vmatpush.bf16.msra.mxu0 %v2268
      %2582 = vmatpush.bf16.msra.mxu0 %v2267
      %2583 = vmatpush.bf16.msra.mxu0 %v2266
      %2584 = vmatpush.bf16.msra.mxu0 %v2265
      %2585 = vmatmul.bf16.gmra.mxu0 %v1507
      %v2586 = vpop.f32.mrf.mxu0
      %v2587 = vadd.f32 %v2523, %v2586
      %v2588 = vpop.f32.mrf.mxu0
      %v2589 = vadd.f32 %v2525, %v2588
      %2590 = vmatmul.bf16.gmra.mxu0 %v1508
      %v2591 = vpop.f32.mrf.mxu0
      %v2592 = vadd.f32 %v2528, %v2591
      %v2593 = vpop.f32.mrf.mxu0
      %v2594 = vadd.f32 %v2530, %v2593
      %2595 = vmatmul.bf16.gmra.mxu0 %v1509
      %v2596 = vpop.f32.mrf.mxu0
      %v2597 = vadd.f32 %v2533, %v2596
      %v2598 = vpop.f32.mrf.mxu0
      %v2599 = vadd.f32 %v2535, %v2598
      %2600 = vmatmul.bf16.gmra.mxu0 %v1510
      %v2601 = vpop.f32.mrf.mxu0
      %v2602 = vadd.f32 %v2538, %v2601
      %v2603 = vpop.f32.mrf.mxu0
      %v2604 = vadd.f32 %v2540, %v2603
      %2605 = vmatmul.bf16.gmra.mxu0 %v1511
      %v2606 = vpop.f32.mrf.mxu0
      %v2607 = vadd.f32 %v2543, %v2606
      %v2608 = vpop.f32.mrf.mxu0
      %v2609 = vadd.f32 %v2545, %v2608
      %2610 = vmatmul.bf16.gmra.mxu0 %v1512
      %v2611 = vpop.f32.mrf.mxu0
      %v2612 = vadd.f32 %v2548, %v2611
      %v2613 = vpop.f32.mrf.mxu0
      %v2614 = vadd.f32 %v2550, %v2613
      %2615 = vmatmul.bf16.gmra.mxu0 %v1513
      %v2616 = vpop.f32.mrf.mxu0
      %v2617 = vadd.f32 %v2553, %v2616
      %v2618 = vpop.f32.mrf.mxu0
      %v2619 = vadd.f32 %v2555, %v2618
      %2620 = vmatmul.bf16.gmra.mxu0 %v1514
      %v2621 = vpop.f32.mrf.mxu0
      %v2622 = vadd.f32 %v2558, %v2621
      %v2623 = vpop.f32.mrf.mxu0
      %v2624 = vadd.f32 %v2560, %v2623
      %2625 = vmatmul.bf16.gmra.mxu0 %v1515
      %v2626 = vpop.f32.mrf.mxu0
      %v2627 = vadd.f32 %v2563, %v2626
      %v2628 = vpop.f32.mrf.mxu0
      %v2629 = vadd.f32 %v2565, %v2628
      %2630 = vmatmul.bf16.gmra.mxu0 %v1516
      %v2631 = vpop.f32.mrf.mxu0
      %v2632 = vadd.f32 %v2568, %v2631
      %v2633 = vpop.f32.mrf.mxu0
      %v2634 = vadd.f32 %v2570, %v2633
      %2635 = vmatmul.bf16.gmra.mxu0 %v1517
      %v2636 = vpop.f32.mrf.mxu0
      %v2637 = vadd.f32 %v2573, %v2636
      %v2638 = vpop.f32.mrf.mxu0
      %v2639 = vadd.f32 %v2575, %v2638
      %2640 = vdwg.mxu0
      %2641 = vmatpush.bf16.msra.mxu0 %v2280
      %2642 = vmatpush.bf16.msra.mxu0 %v2279
      %2643 = vmatpush.bf16.msra.mxu0 %v2278
      %2644 = vmatpush.bf16.msra.mxu0 %v2277
      %2645 = vmatpush.bf16.msra.mxu0 %v2276
      %2646 = vmatpush.bf16.msra.mxu0 %v2275
      %2647 = vmatpush.bf16.msra.mxu0 %v2274
      %2648 = vmatpush.bf16.msra.mxu0 %v2273
      %2649 = vmatmul.bf16.gmra.mxu0 %v1705
      %v2650 = vpop.f32.mrf.mxu0
      %v2651 = vadd.f32 %v2587, %v2650
      %v2652 = vpop.f32.mrf.mxu0
      %v2653 = vadd.f32 %v2589, %v2652
      %2654 = vmatmul.bf16.gmra.mxu0 %v1706
      %v2655 = vpop.f32.mrf.mxu0
      %v2656 = vadd.f32 %v2592, %v2655
      %v2657 = vpop.f32.mrf.mxu0
      %v2658 = vadd.f32 %v2594, %v2657
      %2659 = vmatmul.bf16.gmra.mxu0 %v1707
      %v2660 = vpop.f32.mrf.mxu0
      %v2661 = vadd.f32 %v2597, %v2660
      %v2662 = vpop.f32.mrf.mxu0
      %v2663 = vadd.f32 %v2599, %v2662
      %2664 = vmatmul.bf16.gmra.mxu0 %v1708
      %v2665 = vpop.f32.mrf.mxu0
      %v2666 = vadd.f32 %v2602, %v2665
      %v2667 = vpop.f32.mrf.mxu0
      %v2668 = vadd.f32 %v2604, %v2667
      %2669 = vmatmul.bf16.gmra.mxu0 %v1709
      %v2670 = vpop.f32.mrf.mxu0
      %v2671 = vadd.f32 %v2607, %v2670
      %v2672 = vpop.f32.mrf.mxu0
      %v2673 = vadd.f32 %v2609, %v2672
      %2674 = vmatmul.bf16.gmra.mxu0 %v1710
      %v2675 = vpop.f32.mrf.mxu0
      %v2676 = vadd.f32 %v2612, %v2675
      %v2677 = vpop.f32.mrf.mxu0
      %v2678 = vadd.f32 %v2614, %v2677
      %2679 = vmatmul.bf16.gmra.mxu0 %v1711
      %v2680 = vpop.f32.mrf.mxu0
      %v2681 = vadd.f32 %v2617, %v2680
      %v2682 = vpop.f32.mrf.mxu0
      %v2683 = vadd.f32 %v2619, %v2682
      %2684 = vmatmul.bf16.gmra.mxu0 %v1712
      %v2685 = vpop.f32.mrf.mxu0
      %v2686 = vadd.f32 %v2622, %v2685
      %v2687 = vpop.f32.mrf.mxu0
      %v2688 = vadd.f32 %v2624, %v2687
      %2689 = vmatmul.bf16.gmra.mxu0 %v1713
      %v2690 = vpop.f32.mrf.mxu0
      %v2691 = vadd.f32 %v2627, %v2690
      %v2692 = vpop.f32.mrf.mxu0
      %v2693 = vadd.f32 %v2629, %v2692
      %2694 = vmatmul.bf16.gmra.mxu0 %v1714
      %v2695 = vpop.f32.mrf.mxu0
      %v2696 = vadd.f32 %v2632, %v2695
      %v2697 = vpop.f32.mrf.mxu0
      %v2698 = vadd.f32 %v2634, %v2697
      %2699 = vmatmul.bf16.gmra.mxu0 %v1715
      %v2700 = vpop.f32.mrf.mxu0
      %v2701 = vadd.f32 %v2637, %v2700
      %v2702 = vpop.f32.mrf.mxu0
      %v2703 = vadd.f32 %v2639, %v2702
      %2704 = vdwg.mxu0
      %2705 = vmatpush.bf16.msra.mxu0 %v2288
      %2706 = vmatpush.bf16.msra.mxu0 %v2287
      %2707 = vmatpush.bf16.msra.mxu0 %v2286
      %2708 = vmatpush.bf16.msra.mxu0 %v2285
      %2709 = vmatpush.bf16.msra.mxu0 %v2284
      %2710 = vmatpush.bf16.msra.mxu0 %v2283
      %2711 = vmatpush.bf16.msra.mxu0 %v2282
      %2712 = vmatpush.bf16.msra.mxu0 %v2281
      %2713 = vmatmul.bf16.gmra.mxu0 %v1750
      %v2714 = vpop.f32.mrf.mxu0
      %v2715 = vadd.f32 %v2651, %v2714
      %v2716 = vpop.f32.mrf.mxu0
      %v2717 = vadd.f32 %v2653, %v2716
      %2718 = vmatmul.bf16.gmra.mxu0 %v1754
      %v2719 = vpop.f32.mrf.mxu0
      %v2720 = vadd.f32 %v2656, %v2719
      %v2721 = vpop.f32.mrf.mxu0
      %v2722 = vadd.f32 %v2658, %v2721
      %2723 = vmatmul.bf16.gmra.mxu0 %v1758
      %v2724 = vpop.f32.mrf.mxu0
      %v2725 = vadd.f32 %v2661, %v2724
      %v2726 = vpop.f32.mrf.mxu0
      %v2727 = vadd.f32 %v2663, %v2726
      %2728 = vmatmul.bf16.gmra.mxu0 %v1762
      %v2729 = vpop.f32.mrf.mxu0
      %v2730 = vadd.f32 %v2666, %v2729
      %v2731 = vpop.f32.mrf.mxu0
      %v2732 = vadd.f32 %v2668, %v2731
      %2733 = vmatmul.bf16.gmra.mxu0 %v1766
      %v2734 = vpop.f32.mrf.mxu0
      %v2735 = vadd.f32 %v2671, %v2734
      %v2736 = vpop.f32.mrf.mxu0
      %v2737 = vadd.f32 %v2673, %v2736
      %2738 = vmatmul.bf16.gmra.mxu0 %v1770
      %v2739 = vpop.f32.mrf.mxu0
      %v2740 = vadd.f32 %v2676, %v2739
      %v2741 = vpop.f32.mrf.mxu0
      %v2742 = vadd.f32 %v2678, %v2741
      %2743 = vmatmul.bf16.gmra.mxu0 %v1774
      %v2744 = vpop.f32.mrf.mxu0
      %v2745 = vadd.f32 %v2681, %v2744
      %v2746 = vpop.f32.mrf.mxu0
      %v2747 = vadd.f32 %v2683, %v2746
      %2748 = vmatmul.bf16.gmra.mxu0 %v1778
      %v2749 = vpop.f32.mrf.mxu0
      %v2750 = vadd.f32 %v2686, %v2749
      %v2751 = vpop.f32.mrf.mxu0
      %v2752 = vadd.f32 %v2688, %v2751
      %2753 = vmatmul.bf16.gmra.mxu0 %v1782
      %v2754 = vpop.f32.mrf.mxu0
      %v2755 = vadd.f32 %v2691, %v2754
      %v2756 = vpop.f32.mrf.mxu0
      %v2757 = vadd.f32 %v2693, %v2756
      %2758 = vmatmul.bf16.gmra.mxu0 %v1786
      %v2759 = vpop.f32.mrf.mxu0
      %v2760 = vadd.f32 %v2696, %v2759
      %v2761 = vpop.f32.mrf.mxu0
      %v2762 = vadd.f32 %v2698, %v2761
      %2763 = vmatmul.bf16.gmra.mxu0 %v1790
      %v2764 = vpop.f32.mrf.mxu0
      %v2765 = vadd.f32 %v2701, %v2764
      %v2766 = vpop.f32.mrf.mxu0
      %v2767 = vadd.f32 %v2703, %v2766
      %2768 = vdwg.mxu0
      %2769 = vmatpush.bf16.msra.mxu0 %v2296
      %2770 = vmatpush.bf16.msra.mxu0 %v2295
      %2771 = vmatpush.bf16.msra.mxu0 %v2294
      %2772 = vmatpush.bf16.msra.mxu0 %v2293
      %2773 = vmatpush.bf16.msra.mxu0 %v2292
      %2774 = vmatpush.bf16.msra.mxu0 %v2291
      %2775 = vmatpush.bf16.msra.mxu0 %v2290
      %2776 = vmatpush.bf16.msra.mxu0 %v2289
      %2777 = vmatmul.bf16.gmra.mxu0 %v1508
      %v2778 = vpop.f32.mrf.mxu0
      %v2779 = vadd.f32 %v2715, %v2778
      %v2780 = vpop.f32.mrf.mxu0
      %v2781 = vadd.f32 %v2717, %v2780
      %2782 = vmatmul.bf16.gmra.mxu0 %v1509
      %v2783 = vpop.f32.mrf.mxu0
      %v2784 = vadd.f32 %v2720, %v2783
      %v2785 = vpop.f32.mrf.mxu0
      %v2786 = vadd.f32 %v2722, %v2785
      %2787 = vmatmul.bf16.gmra.mxu0 %v1510
      %v2788 = vpop.f32.mrf.mxu0
      %v2789 = vadd.f32 %v2725, %v2788
      %v2790 = vpop.f32.mrf.mxu0
      %v2791 = vadd.f32 %v2727, %v2790
      %2792 = vmatmul.bf16.gmra.mxu0 %v1511
      %v2793 = vpop.f32.mrf.mxu0
      %v2794 = vadd.f32 %v2730, %v2793
      %v2795 = vpop.f32.mrf.mxu0
      %v2796 = vadd.f32 %v2732, %v2795
      %2797 = vmatmul.bf16.gmra.mxu0 %v1512
      %v2798 = vpop.f32.mrf.mxu0
      %v2799 = vadd.f32 %v2735, %v2798
      %v2800 = vpop.f32.mrf.mxu0
      %v2801 = vadd.f32 %v2737, %v2800
      %2802 = vmatmul.bf16.gmra.mxu0 %v1513
      %v2803 = vpop.f32.mrf.mxu0
      %v2804 = vadd.f32 %v2740, %v2803
      %v2805 = vpop.f32.mrf.mxu0
      %v2806 = vadd.f32 %v2742, %v2805
      %2807 = vmatmul.bf16.gmra.mxu0 %v1514
      %v2808 = vpop.f32.mrf.mxu0
      %v2809 = vadd.f32 %v2745, %v2808
      %v2810 = vpop.f32.mrf.mxu0
      %v2811 = vadd.f32 %v2747, %v2810
      %2812 = vmatmul.bf16.gmra.mxu0 %v1515
      %v2813 = vpop.f32.mrf.mxu0
      %v2814 = vadd.f32 %v2750, %v2813
      %v2815 = vpop.f32.mrf.mxu0
      %v2816 = vadd.f32 %v2752, %v2815
      %2817 = vmatmul.bf16.gmra.mxu0 %v1516
      %v2818 = vpop.f32.mrf.mxu0
      %v2819 = vadd.f32 %v2755, %v2818
      %v2820 = vpop.f32.mrf.mxu0
      %v2821 = vadd.f32 %v2757, %v2820
      %2822 = vmatmul.bf16.gmra.mxu0 %v1517
      %v2823 = vpop.f32.mrf.mxu0
      %v2824 = vadd.f32 %v2760, %v2823
      %v2825 = vpop.f32.mrf.mxu0
      %v2826 = vadd.f32 %v2762, %v2825
      %2827 = vmatmul.bf16.gmra.mxu0 %v1518
      %v2828 = vpop.f32.mrf.mxu0
      %v2829 = vadd.f32 %v2765, %v2828
      %v2830 = vpop.f32.mrf.mxu0
      %v2831 = vadd.f32 %v2767, %v2830
      %2832 = vdwg.mxu0
      %2833 = vmatpush.bf16.msra.mxu0 %v2304
      %2834 = vmatpush.bf16.msra.mxu0 %v2303
      %2835 = vmatpush.bf16.msra.mxu0 %v2302
      %2836 = vmatpush.bf16.msra.mxu0 %v2301
      %2837 = vmatpush.bf16.msra.mxu0 %v2300
      %2838 = vmatpush.bf16.msra.mxu0 %v2299
      %2839 = vmatpush.bf16.msra.mxu0 %v2298
      %2840 = vmatpush.bf16.msra.mxu0 %v2297
      %2841 = vmatmul.bf16.gmra.mxu0 %v1706
      %v2842 = vpop.f32.mrf.mxu0
      %v2843 = vadd.f32 %v2779, %v2842
      %v2844 = vpop.f32.mrf.mxu0
      %v2845 = vadd.f32 %v2781, %v2844
      %2846 = vmatmul.bf16.gmra.mxu0 %v1707
      %v2847 = vpop.f32.mrf.mxu0
      %v2848 = vadd.f32 %v2784, %v2847
      %v2849 = vpop.f32.mrf.mxu0
      %v2850 = vadd.f32 %v2786, %v2849
      %2851 = vmatmul.bf16.gmra.mxu0 %v1708
      %v2852 = vpop.f32.mrf.mxu0
      %v2853 = vadd.f32 %v2789, %v2852
      %v2854 = vpop.f32.mrf.mxu0
      %v2855 = vadd.f32 %v2791, %v2854
      %2856 = vmatmul.bf16.gmra.mxu0 %v1709
      %v2857 = vpop.f32.mrf.mxu0
      %v2858 = vadd.f32 %v2794, %v2857
      %v2859 = vpop.f32.mrf.mxu0
      %v2860 = vadd.f32 %v2796, %v2859
      %2861 = vmatmul.bf16.gmra.mxu0 %v1710
      %v2862 = vpop.f32.mrf.mxu0
      %v2863 = vadd.f32 %v2799, %v2862
      %v2864 = vpop.f32.mrf.mxu0
      %v2865 = vadd.f32 %v2801, %v2864
      %2866 = vmatmul.bf16.gmra.mxu0 %v1711
      %v2867 = vpop.f32.mrf.mxu0
      %v2868 = vadd.f32 %v2804, %v2867
      %v2869 = vpop.f32.mrf.mxu0
      %v2870 = vadd.f32 %v2806, %v2869
      %2871 = vmatmul.bf16.gmra.mxu0 %v1712
      %v2872 = vpop.f32.mrf.mxu0
      %v2873 = vadd.f32 %v2809, %v2872
      %v2874 = vpop.f32.mrf.mxu0
      %v2875 = vadd.f32 %v2811, %v2874
      %2876 = vmatmul.bf16.gmra.mxu0 %v1713
      %v2877 = vpop.f32.mrf.mxu0
      %v2878 = vadd.f32 %v2814, %v2877
      %v2879 = vpop.f32.mrf.mxu0
      %v2880 = vadd.f32 %v2816, %v2879
      %2881 = vmatmul.bf16.gmra.mxu0 %v1714
      %v2882 = vpop.f32.mrf.mxu0
      %v2883 = vadd.f32 %v2819, %v2882
      %v2884 = vpop.f32.mrf.mxu0
      %v2885 = vadd.f32 %v2821, %v2884
      %2886 = vmatmul.bf16.gmra.mxu0 %v1715
      %v2887 = vpop.f32.mrf.mxu0
      %v2888 = vadd.f32 %v2824, %v2887
      %v2889 = vpop.f32.mrf.mxu0
      %v2890 = vadd.f32 %v2826, %v2889
      %2891 = vmatmul.bf16.gmra.mxu0 %v1716
      %v2892 = vpop.f32.mrf.mxu0
      %v2893 = vadd.f32 %v2829, %v2892
      %v2894 = vpop.f32.mrf.mxu0
      %v2895 = vadd.f32 %v2831, %v2894
      %2896 = vdwg.mxu0
      %2897 = vmatpush.bf16.msra.mxu0 %v2312
      %2898 = vmatpush.bf16.msra.mxu0 %v2311
      %2899 = vmatpush.bf16.msra.mxu0 %v2310
      %2900 = vmatpush.bf16.msra.mxu0 %v2309
      %2901 = vmatpush.bf16.msra.mxu0 %v2308
      %2902 = vmatpush.bf16.msra.mxu0 %v2307
      %2903 = vmatpush.bf16.msra.mxu0 %v2306
      %2904 = vmatpush.bf16.msra.mxu0 %v2305
      %2905 = vmatmul.bf16.gmra.mxu0 %v1754
      %v2906 = vpop.f32.mrf.mxu0
      %v2907 = vadd.f32 %v2843, %v2906
      %v2908 = vpop.f32.mrf.mxu0
      %v2909 = vadd.f32 %v2845, %v2908
      %2910 = vmatmul.bf16.gmra.mxu0 %v1758
      %v2911 = vpop.f32.mrf.mxu0
      %v2912 = vadd.f32 %v2848, %v2911
      %v2913 = vpop.f32.mrf.mxu0
      %v2914 = vadd.f32 %v2850, %v2913
      %2915 = vmatmul.bf16.gmra.mxu0 %v1762
      %v2916 = vpop.f32.mrf.mxu0
      %v2917 = vadd.f32 %v2853, %v2916
      %v2918 = vpop.f32.mrf.mxu0
      %v2919 = vadd.f32 %v2855, %v2918
      %2920 = vmatmul.bf16.gmra.mxu0 %v1766
      %v2921 = vpop.f32.mrf.mxu0
      %v2922 = vadd.f32 %v2858, %v2921
      %v2923 = vpop.f32.mrf.mxu0
      %v2924 = vadd.f32 %v2860, %v2923
      %2925 = vmatmul.bf16.gmra.mxu0 %v1770
      %v2926 = vpop.f32.mrf.mxu0
      %v2927 = vadd.f32 %v2863, %v2926
      %v2928 = vpop.f32.mrf.mxu0
      %v2929 = vadd.f32 %v2865, %v2928
      %2930 = vmatmul.bf16.gmra.mxu0 %v1774
      %v2931 = vpop.f32.mrf.mxu0
      %v2932 = vadd.f32 %v2868, %v2931
      %v2933 = vpop.f32.mrf.mxu0
      %v2934 = vadd.f32 %v2870, %v2933
      %2935 = vmatmul.bf16.gmra.mxu0 %v1778
      %v2936 = vpop.f32.mrf.mxu0
      %v2937 = vadd.f32 %v2873, %v2936
      %v2938 = vpop.f32.mrf.mxu0
      %v2939 = vadd.f32 %v2875, %v2938
      %2940 = vmatmul.bf16.gmra.mxu0 %v1782
      %v2941 = vpop.f32.mrf.mxu0
      %v2942 = vadd.f32 %v2878, %v2941
      %v2943 = vpop.f32.mrf.mxu0
      %v2944 = vadd.f32 %v2880, %v2943
      %2945 = vmatmul.bf16.gmra.mxu0 %v1786
      %v2946 = vpop.f32.mrf.mxu0
      %v2947 = vadd.f32 %v2883, %v2946
      %v2948 = vpop.f32.mrf.mxu0
      %v2949 = vadd.f32 %v2885, %v2948
      %2950 = vmatmul.bf16.gmra.mxu0 %v1790
      %v2951 = vpop.f32.mrf.mxu0
      %v2952 = vadd.f32 %v2888, %v2951
      %v2953 = vpop.f32.mrf.mxu0
      %v2954 = vadd.f32 %v2890, %v2953
      %2955 = vmatmul.bf16.gmra.mxu0 %v1794
      %v2956 = vpop.f32.mrf.mxu0
      %v2957 = vadd.f32 %v2893, %v2956
      %v2958 = vpop.f32.mrf.mxu0
      %v2959 = vadd.f32 %v2895, %v2958
      %2960 = vdwg.mxu0
      %v2961 = vlaneseq
      %v2962 = vshrl.u32 %v2961, 7
      %v2963 = vadd.s32 %v2962, 8
      %vm2964 = vcmp.lt.s32.totalorder %v2962, 11
      %vm2965 = vcmp.lt.s32.totalorder %v2963, 11
      %v2966 = vsel %vm2964, %v2907, 0.0
      %v2967 = vsel %vm2965, %v2909, 0.0
      %v2968 = vsel %vm2964, %v2912, 0.0
      %v2969 = vsel %vm2965, %v2914, 0.0
      %v2970 = vsel %vm2964, %v2917, 0.0
      %v2971 = vsel %vm2965, %v2919, 0.0
      %v2972 = vsel %vm2964, %v2922, 0.0
      %v2973 = vsel %vm2965, %v2924, 0.0
      %v2974 = vsel %vm2964, %v2927, 0.0
      %v2975 = vsel %vm2965, %v2929, 0.0
      %v2976 = vsel %vm2964, %v2932, 0.0
      %v2977 = vsel %vm2965, %v2934, 0.0
      %v2978 = vsel %vm2964, %v2937, 0.0
      %v2979 = vsel %vm2965, %v2939, 0.0
      %v2980 = vsel %vm2964, %v2942, 0.0
      %v2981 = vsel %vm2965, %v2944, 0.0
      %v2982 = vsel %vm2964, %v2947, 0.0
      %v2983 = vsel %vm2965, %v2949, 0.0
      %v2984 = vsel %vm2964, %v2952, 0.0
      %v2985 = vsel %vm2965, %v2954, 0.0
      %v2986 = vsel %vm2964, %v2957, 0.0
      %v2987 = vsel %vm2965, %v2959, 0.0
      %v2988 = vpack.c.bf16 %v2966, %v2966
      %v2989 = vpack.c.bf16 %v2967, %v2967
      %v2990 = vpack.c.bf16 %v2968, %v2968
      %v2991 = vpack.c.bf16 %v2969, %v2969
      %v2992 = vpack.c.bf16 %v2970, %v2970
      %v2993 = vpack.c.bf16 %v2971, %v2971
      %v2994 = vpack.c.bf16 %v2972, %v2972
      %v2995 = vpack.c.bf16 %v2973, %v2973
      %v2996 = vpack.c.bf16 %v2974, %v2974
      %v2997 = vpack.c.bf16 %v2975, %v2975
      %v2998 = vpack.c.bf16 %v2976, %v2976
      %v2999 = vpack.c.bf16 %v2977, %v2977
      %v3000 = vpack.c.bf16 %v2978, %v2978
      %v3001 = vpack.c.bf16 %v2979, %v2979
      %v3002 = vpack.c.bf16 %v2980, %v2980
      %v3003 = vpack.c.bf16 %v2981, %v2981
      %v3004 = vpack.c.bf16 %v2982, %v2982
      %v3005 = vpack.c.bf16 %v2983, %v2983
      %v3006 = vpack.c.bf16 %v2984, %v2984
      %v3007 = vpack.c.bf16 %v2985, %v2985
      %v3008 = vpack.c.bf16 %v2986, %v2986
      %v3009 = vpack.c.bf16 %v2987, %v2987
      %3010 = vst [vmem:[%s262] sm:$0xf] %v2988
      %3011 = vst [vmem:[%s262 + $0x4] sm:$0xf] %v2989
      %3012 = vst [vmem:[%s262 + $0x8] sm:$0xf] %v2990
      %3013 = vst [vmem:[%s262 + $0xc] sm:$0xf] %v2991
      %3014 = vst [vmem:[%s262 + $0x10] sm:$0xf] %v2992
      %3015 = vst [vmem:[%s262 + $0x14] sm:$0xf] %v2993
      %3016 = vst [vmem:[%s262 + $0x18] sm:$0xf] %v2994
      %3017 = vst [vmem:[%s262 + $0x1c] sm:$0xf] %v2995
      %3018 = vst [vmem:[%s262 + $0x20] sm:$0xf] %v2996
      %3019 = vst [vmem:[%s262 + $0x24] sm:$0xf] %v2997
      %3020 = vst [vmem:[%s262 + $0x28] sm:$0xf] %v2998
      %3021 = vst [vmem:[%s262 + $0x2c] sm:$0xf] %v2999
      %3022 = vst [vmem:[%s262 + $0x30] sm:$0xf] %v3000
      %3023 = vst [vmem:[%s262 + $0x34] sm:$0xf] %v3001
      %3024 = vst [vmem:[%s262 + $0x38] sm:$0xf] %v3002
      %3025 = vst [vmem:[%s262 + $0x3c] sm:$0xf] %v3003
      %3026 = vst [vmem:[%s262 + $0x40] sm:$0xf] %v3004
      %3027 = vst [vmem:[%s262 + $0x44] sm:$0xf] %v3005
      %3028 = vst [vmem:[%s262 + $0x48] sm:$0xf] %v3006
      %3029 = vst [vmem:[%s262 + $0x4c] sm:$0xf] %v3007
      %3030 = vst [vmem:[%s262 + $0x50] sm:$0xf] %v3008
      %3031 = vst [vmem:[%s262 + $0x54] sm:$0xf] %v3009
      %v3032 = vadd.f32 %v2966, %v2967
      %v3033 = vadd.f32 %v3032, %v2968
      %v3034 = vadd.f32 %v3033, %v2969
      %v3035 = vadd.f32 %v3034, %v2970
      %v3036 = vadd.f32 %v3035, %v2971
      %v3037 = vadd.f32 %v3036, %v2972
      %v3038 = vadd.f32 %v3037, %v2973
      %v3039 = vadd.f32 %v3038, %v2974
      %v3040 = vadd.f32 %v3039, %v2975
      %v3041 = vadd.f32 %v3040, %v2976
      %v3042 = vadd.f32 %v3041, %v2977
      %v3043 = vadd.f32 %v3042, %v2978
      %v3044 = vadd.f32 %v3043, %v2979
      %v3045 = vadd.f32 %v3044, %v2980
      %v3046 = vadd.f32 %v3045, %v2981
      %v3047 = vadd.f32 %v3046, %v2982
      %v3048 = vadd.f32 %v3047, %v2983
      %v3049 = vadd.f32 %v3048, %v2984
      %v3050 = vadd.f32 %v3049, %v2985
      %v3051 = vadd.f32 %v3050, %v2986
      %v3052 = vadd.f32 %v3051, %v2987
      %v3053 = vrot.slane %v3052, 4
      %v3054 = vadd.f32 %v3052, %v3053
      %v3055 = vrot.slane %v3054, 2
      %v3056 = vadd.f32 %v3054, %v3055
      %v3057 = vrot.slane %v3056, 1
      %v3058 = vadd.f32 %v3056, %v3057
      %3059 = vst [vmem:[%s265] sm:$0x1] %v3058
      %v3060 = vmul.f32 %v2966, %v2966
      %v3061 = vmul.f32 %v2967, %v2967
      %v3062 = vmul.f32 %v2968, %v2968
      %v3063 = vmul.f32 %v2969, %v2969
      %v3064 = vmul.f32 %v2970, %v2970
      %v3065 = vmul.f32 %v2971, %v2971
      %v3066 = vmul.f32 %v2972, %v2972
      %v3067 = vmul.f32 %v2973, %v2973
      %v3068 = vmul.f32 %v2974, %v2974
      %v3069 = vmul.f32 %v2975, %v2975
      %v3070 = vmul.f32 %v2976, %v2976
      %v3071 = vmul.f32 %v2977, %v2977
      %v3072 = vmul.f32 %v2978, %v2978
      %v3073 = vmul.f32 %v2979, %v2979
      %v3074 = vmul.f32 %v2980, %v2980
      %v3075 = vmul.f32 %v2981, %v2981
      %v3076 = vmul.f32 %v2982, %v2982
      %v3077 = vmul.f32 %v2983, %v2983
      %v3078 = vmul.f32 %v2984, %v2984
      %v3079 = vmul.f32 %v2985, %v2985
      %v3080 = vmul.f32 %v2986, %v2986
      %v3081 = vmul.f32 %v2987, %v2987
      %v3082 = vadd.f32 %v3060, %v3061
      %v3083 = vadd.f32 %v3082, %v3062
      %v3084 = vadd.f32 %v3083, %v3063
      %v3085 = vadd.f32 %v3084, %v3064
      %v3086 = vadd.f32 %v3085, %v3065
      %v3087 = vadd.f32 %v3086, %v3066
      %v3088 = vadd.f32 %v3087, %v3067
      %v3089 = vadd.f32 %v3088, %v3068
      %v3090 = vadd.f32 %v3089, %v3069
      %v3091 = vadd.f32 %v3090, %v3070
      %v3092 = vadd.f32 %v3091, %v3071
      %v3093 = vadd.f32 %v3092, %v3072
      %v3094 = vadd.f32 %v3093, %v3073
      %v3095 = vadd.f32 %v3094, %v3074
      %v3096 = vadd.f32 %v3095, %v3075
      %v3097 = vadd.f32 %v3096, %v3076
      %v3098 = vadd.f32 %v3097, %v3077
      %v3099 = vadd.f32 %v3098, %v3078
      %v3100 = vadd.f32 %v3099, %v3079
      %v3101 = vadd.f32 %v3100, %v3080
      %v3102 = vadd.f32 %v3101, %v3081
      %v3103 = vrot.slane %v3102, 4
      %v3104 = vadd.f32 %v3102, %v3103
      %v3105 = vrot.slane %v3104, 2
      %v3106 = vadd.f32 %v3104, %v3105
      %v3107 = vrot.slane %v3106, 1
      %v3108 = vadd.f32 %v3106, %v3107
      %3109 = vst [vmem:[%s268] sm:$0x1] %v3108
      %p3110 = scmp.lt.s32.totalorder %s18, 1
      %s3111 = scalar_select %p3110, %s18, 1
      %s3112 = smul.addr %s3111, 22
      %s3113 = smul.addr %s3112, 4
      %s3114 = scalar_lea.vmem %s4, %s3113
      %p3115 = scmp.lt.s32.totalorder %s18, 1
      %s3116 = scalar_select %p3115, %s18, 1
      %s3117 = scalar_lea.vmem %s5, %s3116
      %p3118 = scmp.lt.s32.totalorder %s18, 1
      %s3119 = scalar_select %p3118, %s18, 1
      %s3120 = scalar_lea.vmem %s6, %s3119
      // Predicated region
      $region37: #{base_forward.6} parent=35 // pred_check
        %p3121 = pneg %p125
      $region38: #{base_forward.6} parent=35 // pred_check_branch
        %3123 = sbr.rel (%p3121) target = $region40
      $region39: #{base_forward.6} parent=35 // pred_region
        _
      $region40: #{base_forward.6} parent=35 // pred_fallthru
        _
      // Predicated region
      $region41: #{base_forward.6} parent=35 // pred_check
        %p3124 = pneg %p151
      $region42: #{base_forward.6} parent=35 // pred_check_branch
        %3126 = sbr.rel (%p3124) target = $region44
      $region43: #{base_forward.6} parent=35 // pred_region
        _
      $region44: #{base_forward.6} parent=35 // pred_fallthru
        _
      // Predicated region
      $region45: #{base_forward.6} parent=35 // pred_check
        %p3127 = pneg %p177
      $region46: #{base_forward.6} parent=35 // pred_check_branch
        %3129 = sbr.rel (%p3127) target = $region48
      $region47: #{base_forward.6} parent=35 // pred_region
        _
      $region48: #{base_forward.6} parent=35 // pred_fallthru
        _
    $region36: #{base_forward.6} parent=5 // pred_fallthru
      _
    %p3130 = scmp.le.s32.totalorder 2, %s13
    // Predicated region
    $region49: #{base_forward.6} parent=5 // pred_check
      %p3131 = pneg %p3130
    $region50: #{base_forward.6} parent=5 // pred_check_branch
      %3133 = sbr.rel (%p3131) target = $region52
    $region51: #{base_forward.6} parent=5 // pred_region
      %s3134 = ssub.s32 %s13, 2
      // Predicated region
      $region53: #{base_forward.6} parent=51 // pred_check
        %p3135 = pneg %p131
      $region54: #{base_forward.6} parent=51 // pred_check_branch
        %3137 = sbr.rel (%p3135) target = $region56
      $region55: #{base_forward.6} parent=51 // pred_region
        %p3138 = scmp.lt.s32.totalorder %s19, 1
        %s3139 = scalar_select %p3138, %s19, 1
        %s3140 = smul.addr %s3139, 22
        %s3141 = smul.addr %s3140, 4
        %s3142 = scalar_lea.vmem %s4, %s3141
      $region56: #{base_forward.6} parent=51 // pred_fallthru
        _
      // Predicated region
      $region57: #{base_forward.6} parent=51 // pred_check
        %p3143 = pneg %p157
      $region58: #{base_forward.6} parent=51 // pred_check_branch
        %3145 = sbr.rel (%p3143) target = $region60
      $region59: #{base_forward.6} parent=51 // pred_region
        %p3146 = scmp.lt.s32.totalorder %s19, 1
        %s3147 = scalar_select %p3146, %s19, 1
        %s3148 = scalar_lea.vmem %s5, %s3147
      $region60: #{base_forward.6} parent=51 // pred_fallthru
        _
      // Predicated region
      $region61: #{base_forward.6} parent=51 // pred_check
        %p3149 = pneg %p183
      $region62: #{base_forward.6} parent=51 // pred_check_branch
        %3151 = sbr.rel (%p3149) target = $region64
      $region63: #{base_forward.6} parent=51 // pred_region
        %p3152 = scmp.lt.s32.totalorder %s19, 1
        %s3153 = scalar_select %p3152, %s19, 1
        %s3154 = scalar_lea.vmem %s6, %s3153
      $region64: #{base_forward.6} parent=51 // pred_fallthru
        _
    $region52: #{base_forward.6} parent=5 // pred_fallthru
      _
  $region6: #{base_forward.6} parent=0 // loop_footer
    %s17 = sadd.s32 1, %s13
  $region7: #{base_forward.6} parent=0 // loop_footer_branch
    %12 = sbr.rel target = $region3
  $region8: #{base_forward.6} parent=0 // loop_exit
    _

// kernel: base_forward.5
$region0: #{base_forward.5}
  #allocation0 [shape = 'u32[]', space=smem, size = 0x4, offset = 0x4, fixed_abs, tag = 'smem constant byte address 0x4 - core index']
  #allocation1 [shape = 'u32[72,128]{1,0:T(1,128)}', space=vmem, size = 0x9000, scoped, tag = 'internal scratch']
  %s0 = inlined_call_operand.vmem [shape: bf16[2,28,32,128], index: 0, kind: input, shape index: {}]
  %s1 = inlined_call_operand.vmem [shape: f32[1,128], index: 1, kind: input, shape index: {}]
  %s2 = inlined_call_operand.vmem [shape: f32[1,128], index: 2, kind: input, shape index: {}]
  %s3 = inlined_call_operand.vmem [shape: bf16[1152,128], index: 3, kind: input, shape index: {}]
  %s4 = inlined_call_operand.vmem [shape: bf16[2,26,32,128], index: 4, kind: output, shape index: {0}]
  %s5 = inlined_call_operand.vmem [shape: f32[2,1,128], index: 5, kind: output, shape index: {1}]
  %s6 = inlined_call_operand.vmem [shape: f32[2,1,128], index: 6, kind: output, shape index: {2}]
  %7 = xla_tuple %s4, %s5, %s6
  %s8 = sld [smem:[#allocation0]]
  $region65: #{base_forward.5} parent=0
    _
  %s10 = ssub.s32 1, %s8
  %s11 = scalar_select 0, %s10, %s8
  loop: start=0, step=1, limit=4
  $region2: #{base_forward.5} parent=0 // loop_pre_header
    _
  $region3: #{base_forward.5} parent=0 // loop_header
    %s13 = sphi 0, %s17
    %p14 = scmp.ge.s32.totalorder %s13, 4
    %s23 = sphi 0, %s25
    %s26 = sphi 0, %s23
    %s27 = sphi 0, %s26
    %s43 = sphi 0, %s27
    %s47 = sphi 0, %s47
    %s49 = sphi 0, %s47
    %s50 = sphi 0, %s49
    %s64 = sphi 0, %s50
    %s68 = sphi 0, %s68
    %s70 = sphi 0, %s68
    %s71 = sphi 0, %s70
    %s85 = sphi 0, %s71
    %s89 = sphi 0, %s89
    %s91 = sphi 0, %s89
    %s92 = sphi 0, %s91
    %s106 = sphi 0, %s92
    %s112 = sphi 0, %s114
    %s115 = sphi 0, %s112
    %s116 = sphi 0, %s115
    %s132 = sphi 0, %s116
    %s138 = sphi 0, %s140
    %s141 = sphi 0, %s138
    %s142 = sphi 0, %s141
    %s158 = sphi 0, %s142
    %s164 = sphi 0, %s166
    %s167 = sphi 0, %s164
    %s168 = sphi 0, %s167
    %s184 = sphi 0, %s168
  $region4: #{base_forward.5} parent=0 // loop_header_branch
    %16 = sbr.rel (%p14) target = $region8
  $region5: #{base_forward.5} parent=0 // loop_body
    %s18 = ssub.s32 %s13, 1
    %s19 = ssub.s32 %s13, 2
    %s20 = sadd.s32 %s13, 1
    %s21 = ssub.s32 %s13, %s20
    %p22 = scmp.eq.s32.totalorder %s21, 0
    %s24 = sadd.s32 %s23, 1
    %s25 = scalar_select %p22, %s23, %s24
    %p28 = pneg %p22
    %p29 = scmp.eq.s32.totalorder %s13, 1
    %p30 = por %p28, %p29
    %p31 = scmp.ne.s32.totalorder %s23, %s26
    %p32 = scmp.eq.s32.totalorder %s13, 0
    %p33 = por %p31, %p32
    %p34 = scmp.ne.s32.totalorder %s23, %s26
    %p35 = scmp.eq.s32.totalorder %s18, 1
    %p36 = por %p34, %p35
    %p37 = scmp.ne.s32.totalorder %s26, %s27
    %p38 = scmp.eq.s32.totalorder %s18, 0
    %p39 = por %p37, %p38
    %p40 = scmp.ne.s32.totalorder %s26, %s27
    %p41 = scmp.eq.s32.totalorder %s19, 1
    %p42 = por %p40, %p41
    %p44 = scmp.ne.s32.totalorder %s27, %s43
    %p45 = scmp.eq.s32.totalorder %s19, 0
    %p46 = por %p44, %p45
    %s48 = sadd.s32 %s47, 1
    %p51 = scmp.eq.s32.totalorder %s13, 1
    %p52 = scmp.ne.s32.totalorder %s47, %s49
    %p53 = scmp.eq.s32.totalorder %s13, 0
    %p54 = por %p52, %p53
    %p55 = scmp.ne.s32.totalorder %s47, %s49
    %p56 = scmp.eq.s32.totalorder %s18, 1
    %p57 = por %p55, %p56
    %p58 = scmp.ne.s32.totalorder %s49, %s50
    %p59 = scmp.eq.s32.totalorder %s18, 0
    %p60 = por %p58, %p59
    %p61 = scmp.ne.s32.totalorder %s49, %s50
    %p62 = scmp.eq.s32.totalorder %s19, 1
    %p63 = por %p61, %p62
    %p65 = scmp.ne.s32.totalorder %s50, %s64
    %p66 = scmp.eq.s32.totalorder %s19, 0
    %p67 = por %p65, %p66
    %s69 = sadd.s32 %s68, 1
    %p72 = scmp.eq.s32.totalorder %s13, 1
    %p73 = scmp.ne.s32.totalorder %s68, %s70
    %p74 = scmp.eq.s32.totalorder %s13, 0
    %p75 = por %p73, %p74
    %p76 = scmp.ne.s32.totalorder %s68, %s70
    %p77 = scmp.eq.s32.totalorder %s18, 1
    %p78 = por %p76, %p77
    %p79 = scmp.ne.s32.totalorder %s70, %s71
    %p80 = scmp.eq.s32.totalorder %s18, 0
    %p81 = por %p79, %p80
    %p82 = scmp.ne.s32.totalorder %s70, %s71
    %p83 = scmp.eq.s32.totalorder %s19, 1
    %p84 = por %p82, %p83
    %p86 = scmp.ne.s32.totalorder %s71, %s85
    %p87 = scmp.eq.s32.totalorder %s19, 0
    %p88 = por %p86, %p87
    %s90 = sadd.s32 %s89, 1
    %p93 = scmp.eq.s32.totalorder %s13, 1
    %p94 = scmp.ne.s32.totalorder %s89, %s91
    %p95 = scmp.eq.s32.totalorder %s13, 0
    %p96 = por %p94, %p95
    %p97 = scmp.ne.s32.totalorder %s89, %s91
    %p98 = scmp.eq.s32.totalorder %s18, 1
    %p99 = por %p97, %p98
    %p100 = scmp.ne.s32.totalorder %s91, %s92
    %p101 = scmp.eq.s32.totalorder %s18, 0
    %p102 = por %p100, %p101
    %p103 = scmp.ne.s32.totalorder %s91, %s92
    %p104 = scmp.eq.s32.totalorder %s19, 1
    %p105 = por %p103, %p104
    %p107 = scmp.ne.s32.totalorder %s92, %s106
    %p108 = scmp.eq.s32.totalorder %s19, 0
    %p109 = por %p107, %p108
    %s110 = ssub.s32 %s13, %s20
    %p111 = scmp.eq.s32.totalorder %s110, 0
    %s113 = sadd.s32 %s112, 1
    %s114 = scalar_select %p111, %s112, %s113
    %p117 = pneg %p111
    %p118 = scmp.eq.s32.totalorder %s13, 1
    %p119 = por %p117, %p118
    %p120 = scmp.ne.s32.totalorder %s112, %s115
    %p121 = scmp.eq.s32.totalorder %s13, 0
    %p122 = por %p120, %p121
    %p123 = scmp.ne.s32.totalorder %s112, %s115
    %p124 = scmp.eq.s32.totalorder %s18, 1
    %p125 = por %p123, %p124
    %p126 = scmp.ne.s32.totalorder %s115, %s116
    %p127 = scmp.eq.s32.totalorder %s18, 0
    %p128 = por %p126, %p127
    %p129 = scmp.ne.s32.totalorder %s115, %s116
    %p130 = scmp.eq.s32.totalorder %s19, 1
    %p131 = por %p129, %p130
    %p133 = scmp.ne.s32.totalorder %s116, %s132
    %p134 = scmp.eq.s32.totalorder %s19, 0
    %p135 = por %p133, %p134
    %s136 = ssub.s32 %s13, %s20
    %p137 = scmp.eq.s32.totalorder %s136, 0
    %s139 = sadd.s32 %s138, 1
    %s140 = scalar_select %p137, %s138, %s139
    %p143 = pneg %p137
    %p144 = scmp.eq.s32.totalorder %s13, 1
    %p145 = por %p143, %p144
    %p146 = scmp.ne.s32.totalorder %s138, %s141
    %p147 = scmp.eq.s32.totalorder %s13, 0
    %p148 = por %p146, %p147
    %p149 = scmp.ne.s32.totalorder %s138, %s141
    %p150 = scmp.eq.s32.totalorder %s18, 1
    %p151 = por %p149, %p150
    %p152 = scmp.ne.s32.totalorder %s141, %s142
    %p153 = scmp.eq.s32.totalorder %s18, 0
    %p154 = por %p152, %p153
    %p155 = scmp.ne.s32.totalorder %s141, %s142
    %p156 = scmp.eq.s32.totalorder %s19, 1
    %p157 = por %p155, %p156
    %p159 = scmp.ne.s32.totalorder %s142, %s158
    %p160 = scmp.eq.s32.totalorder %s19, 0
    %p161 = por %p159, %p160
    %s162 = ssub.s32 %s13, %s20
    %p163 = scmp.eq.s32.totalorder %s162, 0
    %s165 = sadd.s32 %s164, 1
    %s166 = scalar_select %p163, %s164, %s165
    %p169 = pneg %p163
    %p170 = scmp.eq.s32.totalorder %s13, 1
    %p171 = por %p169, %p170
    %p172 = scmp.ne.s32.totalorder %s164, %s167
    %p173 = scmp.eq.s32.totalorder %s13, 0
    %p174 = por %p172, %p173
    %p175 = scmp.ne.s32.totalorder %s164, %s167
    %p176 = scmp.eq.s32.totalorder %s18, 1
    %p177 = por %p175, %p176
    %p178 = scmp.ne.s32.totalorder %s167, %s168
    %p179 = scmp.eq.s32.totalorder %s18, 0
    %p180 = por %p178, %p179
    %p181 = scmp.ne.s32.totalorder %s167, %s168
    %p182 = scmp.eq.s32.totalorder %s19, 1
    %p183 = por %p181, %p182
    %p185 = scmp.ne.s32.totalorder %s168, %s184
    %p186 = scmp.eq.s32.totalorder %s19, 0
    %p187 = por %p185, %p186
    %p188 = scmp.le.s32.totalorder 1, %s13
    %p189 = scmp.lt.s32.totalorder %s13, 3
    %p190 = pnand %p188, %p189
    %p191 = pneg %p190
    // Predicated region
    $region9: #{base_forward.5} parent=5 // pred_check
      _
    $region10: #{base_forward.5} parent=5 // pred_check_branch
      %193 = sbr.rel (%p190) target = $region12
    $region11: #{base_forward.5} parent=5 // pred_region
      %s194 = ssub.s32 %s13, 1
      // Predicated region
      $region13: #{base_forward.5} parent=11 // pred_check
        %p195 = pneg %p60
      $region14: #{base_forward.5} parent=11 // pred_check_branch
        %197 = sbr.rel (%p195) target = $region16
      $region15: #{base_forward.5} parent=11 // pred_region
        _
      $region16: #{base_forward.5} parent=11 // pred_fallthru
        _
      // Predicated region
      $region17: #{base_forward.5} parent=11 // pred_check
        %p198 = pneg %p81
      $region18: #{base_forward.5} parent=11 // pred_check_branch
        %200 = sbr.rel (%p198) target = $region20
      $region19: #{base_forward.5} parent=11 // pred_region
        _
      $region20: #{base_forward.5} parent=11 // pred_fallthru
        _
      // Predicated region
      $region21: #{base_forward.5} parent=11 // pred_check
        %p201 = pneg %p102
      $region22: #{base_forward.5} parent=11 // pred_check_branch
        %203 = sbr.rel (%p201) target = $region24
      $region23: #{base_forward.5} parent=11 // pred_region
        _
      $region24: #{base_forward.5} parent=11 // pred_fallthru
        _
    $region12: #{base_forward.5} parent=5 // pred_fallthru
      _
    %p204 = scmp.lt.s32.totalorder %s13, 2
    // Predicated region
    $region25: #{base_forward.5} parent=5 // pred_check
      %p205 = pneg %p204
    $region26: #{base_forward.5} parent=5 // pred_check_branch
      %207 = sbr.rel (%p205) target = $region28
    $region27: #{base_forward.5} parent=5 // pred_region
      // Predicated region
      $region29: #{base_forward.5} parent=27 // pred_check
        %p208 = pneg %p33
      $region30: #{base_forward.5} parent=27 // pred_check_branch
        %210 = sbr.rel (%p208) target = $region32
      $region31: #{base_forward.5} parent=27 // pred_region
        %p211 = scmp.lt.s32.totalorder %s13, 1
        %s212 = scalar_select %p211, %s13, 1
        %s213 = smul.addr %s212, 112
        %s214 = smul.addr %s213, 4
        %s215 = scalar_lea.vmem %s0, %s214
      $region32: #{base_forward.5} parent=27 // pred_fallthru
        _
    $region28: #{base_forward.5} parent=5 // pred_fallthru
      _
    %p216 = scmp.le.s32.totalorder 1, %s13
    %p217 = scmp.lt.s32.totalorder %s13, 3
    %p218 = pnand %p216, %p217
    %p219 = pneg %p218
    // Predicated region
    $region33: #{base_forward.5} parent=5 // pred_check
      _
    $region34: #{base_forward.5} parent=5 // pred_check_branch
      %221 = sbr.rel (%p218) target = $region36
    $region35: #{base_forward.5} parent=5 // pred_region
      %s222 = ssub.s32 %s13, 1
      %p223 = scmp.lt.s32.totalorder %s18, 1
      %s224 = scalar_select %p223, %s18, 1
      %s225 = smul.addr %s224, 112
      %s226 = smul.addr %s225, 4
      %s227 = scalar_lea.vmem %s0, %s226
      %p228 = pneg %p39
      %p229 = pneg %p36
      %p230 = pneg %p60
      %p231 = pneg %p57
      %p232 = pneg %p81
      %p233 = pneg %p78
      %p234 = pneg %p102
      %p235 = pneg %p99
      %p236 = pneg %p128
      %p237 = pneg %p125
      %p238 = scmp.lt.s32.totalorder %s18, 1
      %s239 = scalar_select %p238, %s18, 1
      %s240 = smul.addr %s239, 104
      %s241 = smul.addr %s240, 4
      %s242 = scalar_lea.vmem %s4, %s241
      %p243 = pneg %p154
      %p244 = pneg %p151
      %p245 = scmp.lt.s32.totalorder %s18, 1
      %s246 = scalar_select %p245, %s18, 1
      %s247 = scalar_lea.vmem %s5, %s246
      %p248 = pneg %p180
      %p249 = pneg %p177
      %p250 = scmp.lt.s32.totalorder %s18, 1
      %s251 = scalar_select %p250, %s18, 1
      %s252 = scalar_lea.vmem %s6, %s251
      %p253 = scmp.lt.s32.totalorder %s18, 1
      %s254 = scalar_select %p253, %s18, 1
      %s255 = smul.addr %s254, 112
      %s256 = smul.addr %s255, 4
      %s257 = scalar_lea.vmem %s0, %s256
      %p258 = scmp.lt.s32.totalorder %s18, 1
      %s259 = scalar_select %p258, %s18, 1
      %s260 = smul.addr %s259, 104
      %s261 = smul.addr %s260, 4
      %s262 = scalar_lea.vmem %s4, %s261
      %p263 = scmp.lt.s32.totalorder %s18, 1
      %s264 = scalar_select %p263, %s18, 1
      %s265 = scalar_lea.vmem %s5, %s264
      %p266 = scmp.lt.s32.totalorder %s18, 1
      %s267 = scalar_select %p266, %s18, 1
      %s268 = scalar_lea.vmem %s6, %s267
      %v269 = vld [vmem:[%s1] sm:$0x1]
      %v270 = vld [vmem:[%s2] sm:$0x1]
      %v271 = vld [vmem:[%s257] sm:$0xf]
      %v272 = vld [vmem:[%s257 + $0x4] sm:$0xf]
      %v273 = vld [vmem:[%s257 + $0x8] sm:$0xf]
      %v274 = vld [vmem:[%s257 + $0xc] sm:$0xf]
      %v275 = vld [vmem:[%s257 + $0x10] sm:$0xf]
      %v276 = vld [vmem:[%s257 + $0x14] sm:$0xf]
      %v277 = vld [vmem:[%s257 + $0x18] sm:$0xf]
      %v278 = vld [vmem:[%s257 + $0x1c] sm:$0xf]
      %v279 = vld [vmem:[%s257 + $0x20] sm:$0xf]
      %v280 = vld [vmem:[%s257 + $0x24] sm:$0xf]
      %v281 = vld [vmem:[%s257 + $0x28] sm:$0xf]
      %v282 = vld [vmem:[%s257 + $0x2c] sm:$0xf]
      %v283 = vld [vmem:[%s257 + $0x30] sm:$0xf]
      %v284 = vld [vmem:[%s257 + $0x34] sm:$0xf]
      %v285 = vld [vmem:[%s257 + $0x38] sm:$0xf]
      %v286 = vld [vmem:[%s257 + $0x3c] sm:$0xf]
      %v287 = vld [vmem:[%s257 + $0x40] sm:$0xf]
      %v288 = vld [vmem:[%s257 + $0x44] sm:$0xf]
      %v289 = vld [vmem:[%s257 + $0x48] sm:$0xf]
      %v290 = vld [vmem:[%s257 + $0x4c] sm:$0xf]
      %v291 = vld [vmem:[%s257 + $0x50] sm:$0xf]
      %v292 = vld [vmem:[%s257 + $0x54] sm:$0xf]
      %v293 = vld [vmem:[%s257 + $0x58] sm:$0xf]
      %v294 = vld [vmem:[%s257 + $0x5c] sm:$0xf]
      %v295 = vld [vmem:[%s257 + $0x60] sm:$0xf]
      %v296 = vld [vmem:[%s257 + $0x64] sm:$0xf]
      %v297 = vld [vmem:[%s257 + $0x68] sm:$0xf]
      %v298 = vld [vmem:[%s257 + $0x6c] sm:$0xf]
      %v299 = vld [vmem:[%s257 + $0x70] sm:$0xf]
      %v300 = vld [vmem:[%s257 + $0x74] sm:$0xf]
      %v301 = vld [vmem:[%s257 + $0x78] sm:$0xf]
      %v302 = vld [vmem:[%s257 + $0x7c] sm:$0xf]
      %v303 = vld [vmem:[%s257 + $0x80] sm:$0xf]
      %v304 = vld [vmem:[%s257 + $0x84] sm:$0xf]
      %v305 = vld [vmem:[%s257 + $0x88] sm:$0xf]
      %v306 = vld [vmem:[%s257 + $0x8c] sm:$0xf]
      %v307 = vld [vmem:[%s257 + $0x90] sm:$0xf]
      %v308 = vld [vmem:[%s257 + $0x94] sm:$0xf]
      %v309 = vld [vmem:[%s257 + $0x98] sm:$0xf]
      %v310 = vld [vmem:[%s257 + $0x9c] sm:$0xf]
      %v311 = vld [vmem:[%s257 + $0xa0] sm:$0xf]
      %v312 = vld [vmem:[%s257 + $0xa4] sm:$0xf]
      %v313 = vld [vmem:[%s257 + $0xa8] sm:$0xf]
      %v314 = vld [vmem:[%s257 + $0xac] sm:$0xf]
      %v315 = vld [vmem:[%s257 + $0xb0] sm:$0xf]
      %v316 = vld [vmem:[%s257 + $0xb4] sm:$0xf]
      %v317 = vld [vmem:[%s257 + $0xb8] sm:$0xf]
      %v318 = vld [vmem:[%s257 + $0xbc] sm:$0xf]
      %v319 = vld [vmem:[%s257 + $0xc0] sm:$0xf]
      %v320 = vld [vmem:[%s257 + $0xc4] sm:$0xf]
      %v321 = vld [vmem:[%s257 + $0xc8] sm:$0xf]
      %v322 = vld [vmem:[%s257 + $0xcc] sm:$0xf]
      %v323 = vld [vmem:[%s257 + $0xd0] sm:$0xf]
      %v324 = vld [vmem:[%s257 + $0xd4] sm:$0xf]
      %v325 = vld [vmem:[%s257 + $0xd8] sm:$0xf]
      %v326 = vld [vmem:[%s257 + $0xdc] sm:$0xf]
      %v327 = vld [vmem:[%s257 + $0xe0] sm:$0xf]
      %v328 = vld [vmem:[%s257 + $0xe4] sm:$0xf]
      %v329 = vld [vmem:[%s257 + $0xe8] sm:$0xf]
      %v330 = vld [vmem:[%s257 + $0xec] sm:$0xf]
      %v331 = vld [vmem:[%s257 + $0xf0] sm:$0xf]
      %v332 = vld [vmem:[%s257 + $0xf4] sm:$0xf]
      %v333 = vld [vmem:[%s257 + $0xf8] sm:$0xf]
      %v334 = vld [vmem:[%s257 + $0xfc] sm:$0xf]
      %v335 = vld [vmem:[%s257 + $0x100] sm:$0xf]
      %v336 = vld [vmem:[%s257 + $0x104] sm:$0xf]
      %v337 = vld [vmem:[%s257 + $0x108] sm:$0xf]
      %v338 = vld [vmem:[%s257 + $0x10c] sm:$0xf]
      %v339 = vld [vmem:[%s257 + $0x110] sm:$0xf]
      %v340 = vld [vmem:[%s257 + $0x114] sm:$0xf]
      %v341 = vld [vmem:[%s257 + $0x118] sm:$0xf]
      %v342 = vld [vmem:[%s257 + $0x11c] sm:$0xf]
      %v343 = vld [vmem:[%s257 + $0x120] sm:$0xf]
      %v344 = vld [vmem:[%s257 + $0x124] sm:$0xf]
      %v345 = vld [vmem:[%s257 + $0x128] sm:$0xf]
      %v346 = vld [vmem:[%s257 + $0x12c] sm:$0xf]
      %v347 = vld [vmem:[%s257 + $0x130] sm:$0xf]
      %v348 = vld [vmem:[%s257 + $0x134] sm:$0xf]
      %v349 = vld [vmem:[%s257 + $0x138] sm:$0xf]
      %v350 = vld [vmem:[%s257 + $0x13c] sm:$0xf]
      %v351 = vld [vmem:[%s257 + $0x140] sm:$0xf]
      %v352 = vld [vmem:[%s257 + $0x144] sm:$0xf]
      %v353 = vld [vmem:[%s257 + $0x148] sm:$0xf]
      %v354 = vld [vmem:[%s257 + $0x14c] sm:$0xf]
      %v355 = vld [vmem:[%s257 + $0x150] sm:$0xf]
      %v356 = vld [vmem:[%s257 + $0x154] sm:$0xf]
      %v357 = vld [vmem:[%s257 + $0x158] sm:$0xf]
      %v358 = vld [vmem:[%s257 + $0x15c] sm:$0xf]
      %v359 = vld [vmem:[%s257 + $0x160] sm:$0xf]
      %v360 = vld [vmem:[%s257 + $0x164] sm:$0xf]
      %v361 = vld [vmem:[%s257 + $0x168] sm:$0xf]
      %v362 = vld [vmem:[%s257 + $0x16c] sm:$0xf]
      %v363 = vld [vmem:[%s257 + $0x170] sm:$0xf]
      %v364 = vld [vmem:[%s257 + $0x174] sm:$0xf]
      %v365 = vld [vmem:[%s257 + $0x178] sm:$0xf]
      %v366 = vld [vmem:[%s257 + $0x17c] sm:$0xf]
      %v367 = vld [vmem:[%s257 + $0x180] sm:$0xf]
      %v368 = vld [vmem:[%s257 + $0x184] sm:$0xf]
      %v369 = vld [vmem:[%s257 + $0x188] sm:$0xf]
      %v370 = vld [vmem:[%s257 + $0x18c] sm:$0xf]
      %v371 = vld [vmem:[%s257 + $0x190] sm:$0xf]
      %v372 = vld [vmem:[%s257 + $0x194] sm:$0xf]
      %v373 = vld [vmem:[%s257 + $0x198] sm:$0xf]
      %v374 = vld [vmem:[%s257 + $0x19c] sm:$0xf]
      %v375 = vld [vmem:[%s257 + $0x1a0] sm:$0xf]
      %v376 = vld [vmem:[%s257 + $0x1a4] sm:$0xf]
      %v377 = vld [vmem:[%s257 + $0x1a8] sm:$0xf]
      %v378 = vld [vmem:[%s257 + $0x1ac] sm:$0xf]
      %v379 = vld [vmem:[%s257 + $0x1b0] sm:$0xf]
      %v380 = vld [vmem:[%s257 + $0x1b4] sm:$0xf]
      %v381 = vld [vmem:[%s257 + $0x1b8] sm:$0xf]
      %v382 = vld [vmem:[%s257 + $0x1bc] sm:$0xf]
      %v383 = vunpack.c.l.bf16 %v271
      %v384 = vunpack.c.l.bf16 %v272
      %v385 = vunpack.c.l.bf16 %v273
      %v386 = vunpack.c.l.bf16 %v274
      %v387 = vunpack.c.l.bf16 %v275
      %v388 = vunpack.c.l.bf16 %v276
      %v389 = vunpack.c.l.bf16 %v277
      %v390 = vunpack.c.l.bf16 %v278
      %v391 = vunpack.c.l.bf16 %v279
      %v392 = vunpack.c.l.bf16 %v280
      %v393 = vunpack.c.l.bf16 %v281
      %v394 = vunpack.c.l.bf16 %v282
      %v395 = vunpack.c.l.bf16 %v283
      %v396 = vunpack.c.l.bf16 %v284
      %v397 = vunpack.c.l.bf16 %v285
      %v398 = vunpack.c.l.bf16 %v286
      %v399 = vunpack.c.l.bf16 %v287
      %v400 = vunpack.c.l.bf16 %v288
      %v401 = vunpack.c.l.bf16 %v289
      %v402 = vunpack.c.l.bf16 %v290
      %v403 = vunpack.c.l.bf16 %v291
      %v404 = vunpack.c.l.bf16 %v292
      %v405 = vunpack.c.l.bf16 %v293
      %v406 = vunpack.c.l.bf16 %v294
      %v407 = vunpack.c.l.bf16 %v295
      %v408 = vunpack.c.l.bf16 %v296
      %v409 = vunpack.c.l.bf16 %v297
      %v410 = vunpack.c.l.bf16 %v298
      %v411 = vunpack.c.l.bf16 %v299
      %v412 = vunpack.c.l.bf16 %v300
      %v413 = vunpack.c.l.bf16 %v301
      %v414 = vunpack.c.l.bf16 %v302
      %v415 = vunpack.c.l.bf16 %v303
      %v416 = vunpack.c.l.bf16 %v304
      %v417 = vunpack.c.l.bf16 %v305
      %v418 = vunpack.c.l.bf16 %v306
      %v419 = vunpack.c.l.bf16 %v307
      %v420 = vunpack.c.l.bf16 %v308
      %v421 = vunpack.c.l.bf16 %v309
      %v422 = vunpack.c.l.bf16 %v310
      %v423 = vunpack.c.l.bf16 %v311
      %v424 = vunpack.c.l.bf16 %v312
      %v425 = vunpack.c.l.bf16 %v313
      %v426 = vunpack.c.l.bf16 %v314
      %v427 = vunpack.c.l.bf16 %v315
      %v428 = vunpack.c.l.bf16 %v316
      %v429 = vunpack.c.l.bf16 %v317
      %v430 = vunpack.c.l.bf16 %v318
      %v431 = vunpack.c.l.bf16 %v319
      %v432 = vunpack.c.l.bf16 %v320
      %v433 = vunpack.c.l.bf16 %v321
      %v434 = vunpack.c.l.bf16 %v322
      %v435 = vunpack.c.l.bf16 %v323
      %v436 = vunpack.c.l.bf16 %v324
      %v437 = vunpack.c.l.bf16 %v325
      %v438 = vunpack.c.l.bf16 %v326
      %v439 = vunpack.c.l.bf16 %v327
      %v440 = vunpack.c.l.bf16 %v328
      %v441 = vunpack.c.l.bf16 %v329
      %v442 = vunpack.c.l.bf16 %v330
      %v443 = vunpack.c.l.bf16 %v331
      %v444 = vunpack.c.l.bf16 %v332
      %v445 = vunpack.c.l.bf16 %v333
      %v446 = vunpack.c.l.bf16 %v334
      %v447 = vunpack.c.l.bf16 %v335
      %v448 = vunpack.c.l.bf16 %v336
      %v449 = vunpack.c.l.bf16 %v337
      %v450 = vunpack.c.l.bf16 %v338
      %v451 = vunpack.c.l.bf16 %v339
      %v452 = vunpack.c.l.bf16 %v340
      %v453 = vunpack.c.l.bf16 %v341
      %v454 = vunpack.c.l.bf16 %v342
      %v455 = vunpack.c.l.bf16 %v343
      %v456 = vunpack.c.l.bf16 %v344
      %v457 = vunpack.c.l.bf16 %v345
      %v458 = vunpack.c.l.bf16 %v346
      %v459 = vunpack.c.l.bf16 %v347
      %v460 = vunpack.c.l.bf16 %v348
      %v461 = vunpack.c.l.bf16 %v349
      %v462 = vunpack.c.l.bf16 %v350
      %v463 = vunpack.c.l.bf16 %v351
      %v464 = vunpack.c.l.bf16 %v352
      %v465 = vunpack.c.l.bf16 %v353
      %v466 = vunpack.c.l.bf16 %v354
      %v467 = vunpack.c.l.bf16 %v355
      %v468 = vunpack.c.l.bf16 %v356
      %v469 = vunpack.c.l.bf16 %v357
      %v470 = vunpack.c.l.bf16 %v358
      %v471 = vunpack.c.l.bf16 %v359
      %v472 = vunpack.c.l.bf16 %v360
      %v473 = vunpack.c.l.bf16 %v361
      %v474 = vunpack.c.l.bf16 %v362
      %v475 = vunpack.c.l.bf16 %v363
      %v476 = vunpack.c.l.bf16 %v364
      %v477 = vunpack.c.l.bf16 %v365
      %v478 = vunpack.c.l.bf16 %v366
      %v479 = vunpack.c.l.bf16 %v367
      %v480 = vunpack.c.l.bf16 %v368
      %v481 = vunpack.c.l.bf16 %v369
      %v482 = vunpack.c.l.bf16 %v370
      %v483 = vunpack.c.l.bf16 %v371
      %v484 = vunpack.c.l.bf16 %v372
      %v485 = vunpack.c.l.bf16 %v373
      %v486 = vunpack.c.l.bf16 %v374
      %v487 = vunpack.c.l.bf16 %v375
      %v488 = vunpack.c.l.bf16 %v376
      %v489 = vunpack.c.l.bf16 %v377
      %v490 = vunpack.c.l.bf16 %v378
      %v491 = vunpack.c.l.bf16 %v379
      %v492 = vunpack.c.l.bf16 %v380
      %v493 = vunpack.c.l.bf16 %v381
      %v494 = vunpack.c.l.bf16 %v382
      %v496 = vperm.slane %v269, 0
      %v498 = vmul.f32 %v383, %v496
      %v499 = vmul.f32 %v384, %v496
      %v500 = vmul.f32 %v385, %v496
      %v501 = vmul.f32 %v386, %v496
      %v502 = vmul.f32 %v387, %v496
      %v503 = vmul.f32 %v388, %v496
      %v504 = vmul.f32 %v389, %v496
      %v505 = vmul.f32 %v390, %v496
      %v506 = vmul.f32 %v391, %v496
      %v507 = vmul.f32 %v392, %v496
      %v508 = vmul.f32 %v393, %v496
      %v509 = vmul.f32 %v394, %v496
      %v510 = vmul.f32 %v395, %v496
      %v511 = vmul.f32 %v396, %v496
      %v512 = vmul.f32 %v397, %v496
      %v513 = vmul.f32 %v398, %v496
      %v514 = vmul.f32 %v399, %v496
      %v515 = vmul.f32 %v400, %v496
      %v516 = vmul.f32 %v401, %v496
      %v517 = vmul.f32 %v402, %v496
      %v518 = vmul.f32 %v403, %v496
      %v519 = vmul.f32 %v404, %v496
      %v520 = vmul.f32 %v405, %v496
      %v521 = vmul.f32 %v406, %v496
      %v522 = vmul.f32 %v407, %v496
      %v523 = vmul.f32 %v408, %v496
      %v524 = vmul.f32 %v409, %v496
      %v525 = vmul.f32 %v410, %v496
      %v526 = vmul.f32 %v411, %v496
      %v527 = vmul.f32 %v412, %v496
      %v528 = vmul.f32 %v413, %v496
      %v529 = vmul.f32 %v414, %v496
      %v530 = vmul.f32 %v415, %v496
      %v531 = vmul.f32 %v416, %v496
      %v532 = vmul.f32 %v417, %v496
      %v533 = vmul.f32 %v418, %v496
      %v534 = vmul.f32 %v419, %v496
      %v535 = vmul.f32 %v420, %v496
      %v536 = vmul.f32 %v421, %v496
      %v537 = vmul.f32 %v422, %v496
      %v538 = vmul.f32 %v423, %v496
      %v539 = vmul.f32 %v424, %v496
      %v540 = vmul.f32 %v425, %v496
      %v541 = vmul.f32 %v426, %v496
      %v542 = vmul.f32 %v427, %v496
      %v543 = vmul.f32 %v428, %v496
      %v544 = vmul.f32 %v429, %v496
      %v545 = vmul.f32 %v430, %v496
      %v546 = vmul.f32 %v431, %v496
      %v547 = vmul.f32 %v432, %v496
      %v548 = vmul.f32 %v433, %v496
      %v549 = vmul.f32 %v434, %v496
      %v550 = vmul.f32 %v435, %v496
      %v551 = vmul.f32 %v436, %v496
      %v552 = vmul.f32 %v437, %v496
      %v553 = vmul.f32 %v438, %v496
      %v554 = vmul.f32 %v439, %v496
      %v555 = vmul.f32 %v440, %v496
      %v556 = vmul.f32 %v441, %v496
      %v557 = vmul.f32 %v442, %v496
      %v558 = vmul.f32 %v443, %v496
      %v559 = vmul.f32 %v444, %v496
      %v560 = vmul.f32 %v445, %v496
      %v561 = vmul.f32 %v446, %v496
      %v562 = vmul.f32 %v447, %v496
      %v563 = vmul.f32 %v448, %v496
      %v564 = vmul.f32 %v449, %v496
      %v565 = vmul.f32 %v450, %v496
      %v566 = vmul.f32 %v451, %v496
      %v567 = vmul.f32 %v452, %v496
      %v568 = vmul.f32 %v453, %v496
      %v569 = vmul.f32 %v454, %v496
      %v570 = vmul.f32 %v455, %v496
      %v571 = vmul.f32 %v456, %v496
      %v572 = vmul.f32 %v457, %v496
      %v573 = vmul.f32 %v458, %v496
      %v574 = vmul.f32 %v459, %v496
      %v575 = vmul.f32 %v460, %v496
      %v576 = vmul.f32 %v461, %v496
      %v577 = vmul.f32 %v462, %v496
      %v578 = vmul.f32 %v463, %v496
      %v579 = vmul.f32 %v464, %v496
      %v580 = vmul.f32 %v465, %v496
      %v581 = vmul.f32 %v466, %v496
      %v582 = vmul.f32 %v467, %v496
      %v583 = vmul.f32 %v468, %v496
      %v584 = vmul.f32 %v469, %v496
      %v585 = vmul.f32 %v470, %v496
      %v586 = vmul.f32 %v471, %v496
      %v587 = vmul.f32 %v472, %v496
      %v588 = vmul.f32 %v473, %v496
      %v589 = vmul.f32 %v474, %v496
      %v590 = vmul.f32 %v475, %v496
      %v591 = vmul.f32 %v476, %v496
      %v592 = vmul.f32 %v477, %v496
      %v593 = vmul.f32 %v478, %v496
      %v594 = vmul.f32 %v479, %v496
      %v595 = vmul.f32 %v480, %v496
      %v596 = vmul.f32 %v481, %v496
      %v597 = vmul.f32 %v482, %v496
      %v598 = vmul.f32 %v483, %v496
      %v599 = vmul.f32 %v484, %v496
      %v600 = vmul.f32 %v485, %v496
      %v601 = vmul.f32 %v486, %v496
      %v602 = vmul.f32 %v487, %v496
      %v603 = vmul.f32 %v488, %v496
      %v604 = vmul.f32 %v489, %v496
      %v605 = vmul.f32 %v490, %v496
      %v606 = vmul.f32 %v491, %v496
      %v607 = vmul.f32 %v492, %v496
      %v608 = vmul.f32 %v493, %v496
      %v609 = vmul.f32 %v494, %v496
      %v611 = vperm.slane %v270, 0
      %v613 = vadd.f32 %v498, %v611
      %v614 = vadd.f32 %v499, %v611
      %v615 = vadd.f32 %v500, %v611
      %v616 = vadd.f32 %v501, %v611
      %v617 = vadd.f32 %v502, %v611
      %v618 = vadd.f32 %v503, %v611
      %v619 = vadd.f32 %v504, %v611
      %v620 = vadd.f32 %v505, %v611
      %v621 = vadd.f32 %v506, %v611
      %v622 = vadd.f32 %v507, %v611
      %v623 = vadd.f32 %v508, %v611
      %v624 = vadd.f32 %v509, %v611
      %v625 = vadd.f32 %v510, %v611
      %v626 = vadd.f32 %v511, %v611
      %v627 = vadd.f32 %v512, %v611
      %v628 = vadd.f32 %v513, %v611
      %v629 = vadd.f32 %v514, %v611
      %v630 = vadd.f32 %v515, %v611
      %v631 = vadd.f32 %v516, %v611
      %v632 = vadd.f32 %v517, %v611
      %v633 = vadd.f32 %v518, %v611
      %v634 = vadd.f32 %v519, %v611
      %v635 = vadd.f32 %v520, %v611
      %v636 = vadd.f32 %v521, %v611
      %v637 = vadd.f32 %v522, %v611
      %v638 = vadd.f32 %v523, %v611
      %v639 = vadd.f32 %v524, %v611
      %v640 = vadd.f32 %v525, %v611
      %v641 = vadd.f32 %v526, %v611
      %v642 = vadd.f32 %v527, %v611
      %v643 = vadd.f32 %v528, %v611
      %v644 = vadd.f32 %v529, %v611
      %v645 = vadd.f32 %v530, %v611
      %v646 = vadd.f32 %v531, %v611
      %v647 = vadd.f32 %v532, %v611
      %v648 = vadd.f32 %v533, %v611
      %v649 = vadd.f32 %v534, %v611
      %v650 = vadd.f32 %v535, %v611
      %v651 = vadd.f32 %v536, %v611
      %v652 = vadd.f32 %v537, %v611
      %v653 = vadd.f32 %v538, %v611
      %v654 = vadd.f32 %v539, %v611
      %v655 = vadd.f32 %v540, %v611
      %v656 = vadd.f32 %v541, %v611
      %v657 = vadd.f32 %v542, %v611
      %v658 = vadd.f32 %v543, %v611
      %v659 = vadd.f32 %v544, %v611
      %v660 = vadd.f32 %v545, %v611
      %v661 = vadd.f32 %v546, %v611
      %v662 = vadd.f32 %v547, %v611
      %v663 = vadd.f32 %v548, %v611
      %v664 = vadd.f32 %v549, %v611
      %v665 = vadd.f32 %v550, %v611
      %v666 = vadd.f32 %v551, %v611
      %v667 = vadd.f32 %v552, %v611
      %v668 = vadd.f32 %v553, %v611
      %v669 = vadd.f32 %v554, %v611
      %v670 = vadd.f32 %v555, %v611
      %v671 = vadd.f32 %v556, %v611
      %v672 = vadd.f32 %v557, %v611
      %v673 = vadd.f32 %v558, %v611
      %v674 = vadd.f32 %v559, %v611
      %v675 = vadd.f32 %v560, %v611
      %v676 = vadd.f32 %v561, %v611
      %v677 = vadd.f32 %v562, %v611
      %v678 = vadd.f32 %v563, %v611
      %v679 = vadd.f32 %v564, %v611
      %v680 = vadd.f32 %v565, %v611
      %v681 = vadd.f32 %v566, %v611
      %v682 = vadd.f32 %v567, %v611
      %v683 = vadd.f32 %v568, %v611
      %v684 = vadd.f32 %v569, %v611
      %v685 = vadd.f32 %v570, %v611
      %v686 = vadd.f32 %v571, %v611
      %v687 = vadd.f32 %v572, %v611
      %v688 = vadd.f32 %v573, %v611
      %v689 = vadd.f32 %v574, %v611
      %v690 = vadd.f32 %v575, %v611
      %v691 = vadd.f32 %v576, %v611
      %v692 = vadd.f32 %v577, %v611
      %v693 = vadd.f32 %v578, %v611
      %v694 = vadd.f32 %v579, %v611
      %v695 = vadd.f32 %v580, %v611
      %v696 = vadd.f32 %v581, %v611
      %v697 = vadd.f32 %v582, %v611
      %v698 = vadd.f32 %v583, %v611
      %v699 = vadd.f32 %v584, %v611
      %v700 = vadd.f32 %v585, %v611
      %v701 = vadd.f32 %v586, %v611
      %v702 = vadd.f32 %v587, %v611
      %v703 = vadd.f32 %v588, %v611
      %v704 = vadd.f32 %v589, %v611
      %v705 = vadd.f32 %v590, %v611
      %v706 = vadd.f32 %v591, %v611
      %v707 = vadd.f32 %v592, %v611
      %v708 = vadd.f32 %v593, %v611
      %v709 = vadd.f32 %v594, %v611
      %v710 = vadd.f32 %v595, %v611
      %v711 = vadd.f32 %v596, %v611
      %v712 = vadd.f32 %v597, %v611
      %v713 = vadd.f32 %v598, %v611
      %v714 = vadd.f32 %v599, %v611
      %v715 = vadd.f32 %v600, %v611
      %v716 = vadd.f32 %v601, %v611
      %v717 = vadd.f32 %v602, %v611
      %v718 = vadd.f32 %v603, %v611
      %v719 = vadd.f32 %v604, %v611
      %v720 = vadd.f32 %v605, %v611
      %v721 = vadd.f32 %v606, %v611
      %v722 = vadd.f32 %v607, %v611
      %v723 = vadd.f32 %v608, %v611
      %v724 = vadd.f32 %v609, %v611
      %v725 = vmax.f32 %v613, 0.0
      %v726 = vmax.f32 %v614, 0.0
      %v727 = vmax.f32 %v615, 0.0
      %v728 = vmax.f32 %v616, 0.0
      %v729 = vmax.f32 %v617, 0.0
      %v730 = vmax.f32 %v618, 0.0
      %v731 = vmax.f32 %v619, 0.0
      %v732 = vmax.f32 %v620, 0.0
      %v733 = vmax.f32 %v621, 0.0
      %v734 = vmax.f32 %v622, 0.0
      %v735 = vmax.f32 %v623, 0.0
      %v736 = vmax.f32 %v624, 0.0
      %v737 = vmax.f32 %v625, 0.0
      %v738 = vmax.f32 %v626, 0.0
      %v739 = vmax.f32 %v627, 0.0
      %v740 = vmax.f32 %v628, 0.0
      %v741 = vmax.f32 %v629, 0.0
      %v742 = vmax.f32 %v630, 0.0
      %v743 = vmax.f32 %v631, 0.0
      %v744 = vmax.f32 %v632, 0.0
      %v745 = vmax.f32 %v633, 0.0
      %v746 = vmax.f32 %v634, 0.0
      %v747 = vmax.f32 %v635, 0.0
      %v748 = vmax.f32 %v636, 0.0
      %v749 = vmax.f32 %v637, 0.0
      %v750 = vmax.f32 %v638, 0.0
      %v751 = vmax.f32 %v639, 0.0
      %v752 = vmax.f32 %v640, 0.0
      %v753 = vmax.f32 %v641, 0.0
      %v754 = vmax.f32 %v642, 0.0
      %v755 = vmax.f32 %v643, 0.0
      %v756 = vmax.f32 %v644, 0.0
      %v757 = vmax.f32 %v645, 0.0
      %v758 = vmax.f32 %v646, 0.0
      %v759 = vmax.f32 %v647, 0.0
      %v760 = vmax.f32 %v648, 0.0
      %v761 = vmax.f32 %v649, 0.0
      %v762 = vmax.f32 %v650, 0.0
      %v763 = vmax.f32 %v651, 0.0
      %v764 = vmax.f32 %v652, 0.0
      %v765 = vmax.f32 %v653, 0.0
      %v766 = vmax.f32 %v654, 0.0
      %v767 = vmax.f32 %v655, 0.0
      %v768 = vmax.f32 %v656, 0.0
      %v769 = vmax.f32 %v657, 0.0
      %v770 = vmax.f32 %v658, 0.0
      %v771 = vmax.f32 %v659, 0.0
      %v772 = vmax.f32 %v660, 0.0
      %v773 = vmax.f32 %v661, 0.0
      %v774 = vmax.f32 %v662, 0.0
      %v775 = vmax.f32 %v663, 0.0
      %v776 = vmax.f32 %v664, 0.0
      %v777 = vmax.f32 %v665, 0.0
      %v778 = vmax.f32 %v666, 0.0
      %v779 = vmax.f32 %v667, 0.0
      %v780 = vmax.f32 %v668, 0.0
      %v781 = vmax.f32 %v669, 0.0
      %v782 = vmax.f32 %v670, 0.0
      %v783 = vmax.f32 %v671, 0.0
      %v784 = vmax.f32 %v672, 0.0
      %v785 = vmax.f32 %v673, 0.0
      %v786 = vmax.f32 %v674, 0.0
      %v787 = vmax.f32 %v675, 0.0
      %v788 = vmax.f32 %v676, 0.0
      %v789 = vmax.f32 %v677, 0.0
      %v790 = vmax.f32 %v678, 0.0
      %v791 = vmax.f32 %v679, 0.0
      %v792 = vmax.f32 %v680, 0.0
      %v793 = vmax.f32 %v681, 0.0
      %v794 = vmax.f32 %v682, 0.0
      %v795 = vmax.f32 %v683, 0.0
      %v796 = vmax.f32 %v684, 0.0
      %v797 = vmax.f32 %v685, 0.0
      %v798 = vmax.f32 %v686, 0.0
      %v799 = vmax.f32 %v687, 0.0
      %v800 = vmax.f32 %v688, 0.0
      %v801 = vmax.f32 %v689, 0.0
      %v802 = vmax.f32 %v690, 0.0
      %v803 = vmax.f32 %v691, 0.0
      %v804 = vmax.f32 %v692, 0.0
      %v805 = vmax.f32 %v693, 0.0
      %v806 = vmax.f32 %v694, 0.0
      %v807 = vmax.f32 %v695, 0.0
      %v808 = vmax.f32 %v696, 0.0
      %v809 = vmax.f32 %v697, 0.0
      %v810 = vmax.f32 %v698, 0.0
      %v811 = vmax.f32 %v699, 0.0
      %v812 = vmax.f32 %v700, 0.0
      %v813 = vmax.f32 %v701, 0.0
      %v814 = vmax.f32 %v702, 0.0
      %v815 = vmax.f32 %v703, 0.0
      %v816 = vmax.f32 %v704, 0.0
      %v817 = vmax.f32 %v705, 0.0
      %v818 = vmax.f32 %v706, 0.0
      %v819 = vmax.f32 %v707, 0.0
      %v820 = vmax.f32 %v708, 0.0
      %v821 = vmax.f32 %v709, 0.0
      %v822 = vmax.f32 %v710, 0.0
      %v823 = vmax.f32 %v711, 0.0
      %v824 = vmax.f32 %v712, 0.0
      %v825 = vmax.f32 %v713, 0.0
      %v826 = vmax.f32 %v714, 0.0
      %v827 = vmax.f32 %v715, 0.0
      %v828 = vmax.f32 %v716, 0.0
      %v829 = vmax.f32 %v717, 0.0
      %v830 = vmax.f32 %v718, 0.0
      %v831 = vmax.f32 %v719, 0.0
      %v832 = vmax.f32 %v720, 0.0
      %v833 = vmax.f32 %v721, 0.0
      %v834 = vmax.f32 %v722, 0.0
      %v835 = vmax.f32 %v723, 0.0
      %v836 = vmax.f32 %v724, 0.0
      %v837 = vpack.c.bf16 %v725, %v725
      %v838 = vpack.c.bf16 %v726, %v726
      %v839 = vpack.c.bf16 %v727, %v727
      %v840 = vpack.c.bf16 %v728, %v728
      %v841 = vpack.c.bf16 %v729, %v729
      %v842 = vpack.c.bf16 %v730, %v730
      %v843 = vpack.c.bf16 %v731, %v731
      %v844 = vpack.c.bf16 %v732, %v732
      %v845 = vpack.c.bf16 %v733, %v733
      %v846 = vpack.c.bf16 %v734, %v734
      %v847 = vpack.c.bf16 %v735, %v735
      %v848 = vpack.c.bf16 %v736, %v736
      %v849 = vpack.c.bf16 %v737, %v737
      %v850 = vpack.c.bf16 %v738, %v738
      %v851 = vpack.c.bf16 %v739, %v739
      %v852 = vpack.c.bf16 %v740, %v740
      %v853 = vpack.c.bf16 %v741, %v741
      %v854 = vpack.c.bf16 %v742, %v742
      %v855 = vpack.c.bf16 %v743, %v743
      %v856 = vpack.c.bf16 %v744, %v744
      %v857 = vpack.c.bf16 %v745, %v745
      %v858 = vpack.c.bf16 %v746, %v746
      %v859 = vpack.c.bf16 %v747, %v747
      %v860 = vpack.c.bf16 %v748, %v748
      %v861 = vpack.c.bf16 %v749, %v749
      %v862 = vpack.c.bf16 %v750, %v750
      %v863 = vpack.c.bf16 %v751, %v751
      %v864 = vpack.c.bf16 %v752, %v752
      %v865 = vpack.c.bf16 %v753, %v753
      %v866 = vpack.c.bf16 %v754, %v754
      %v867 = vpack.c.bf16 %v755, %v755
      %v868 = vpack.c.bf16 %v756, %v756
      %v869 = vpack.c.bf16 %v757, %v757
      %v870 = vpack.c.bf16 %v758, %v758
      %v871 = vpack.c.bf16 %v759, %v759
      %v872 = vpack.c.bf16 %v760, %v760
      %v873 = vpack.c.bf16 %v761, %v761
      %v874 = vpack.c.bf16 %v762, %v762
      %v875 = vpack.c.bf16 %v763, %v763
      %v876 = vpack.c.bf16 %v764, %v764
      %v877 = vpack.c.bf16 %v765, %v765
      %v878 = vpack.c.bf16 %v766, %v766
      %v879 = vpack.c.bf16 %v767, %v767
      %v880 = vpack.c.bf16 %v768, %v768
      %v881 = vpack.c.bf16 %v769, %v769
      %v882 = vpack.c.bf16 %v770, %v770
      %v883 = vpack.c.bf16 %v771, %v771
      %v884 = vpack.c.bf16 %v772, %v772
      %v885 = vpack.c.bf16 %v773, %v773
      %v886 = vpack.c.bf16 %v774, %v774
      %v887 = vpack.c.bf16 %v775, %v775
      %v888 = vpack.c.bf16 %v776, %v776
      %v889 = vpack.c.bf16 %v777, %v777
      %v890 = vpack.c.bf16 %v778, %v778
      %v891 = vpack.c.bf16 %v779, %v779
      %v892 = vpack.c.bf16 %v780, %v780
      %v893 = vpack.c.bf16 %v781, %v781
      %v894 = vpack.c.bf16 %v782, %v782
      %v895 = vpack.c.bf16 %v783, %v783
      %v896 = vpack.c.bf16 %v784, %v784
      %v897 = vpack.c.bf16 %v785, %v785
      %v898 = vpack.c.bf16 %v786, %v786
      %v899 = vpack.c.bf16 %v787, %v787
      %v900 = vpack.c.bf16 %v788, %v788
      %v901 = vpack.c.bf16 %v789, %v789
      %v902 = vpack.c.bf16 %v790, %v790
      %v903 = vpack.c.bf16 %v791, %v791
      %v904 = vpack.c.bf16 %v792, %v792
      %v905 = vpack.c.bf16 %v793, %v793
      %v906 = vpack.c.bf16 %v794, %v794
      %v907 = vpack.c.bf16 %v795, %v795
      %v908 = vpack.c.bf16 %v796, %v796
      %v909 = vpack.c.bf16 %v797, %v797
      %v910 = vpack.c.bf16 %v798, %v798
      %v911 = vpack.c.bf16 %v799, %v799
      %v912 = vpack.c.bf16 %v800, %v800
      %v913 = vpack.c.bf16 %v801, %v801
      %v914 = vpack.c.bf16 %v802, %v802
      %v915 = vpack.c.bf16 %v803, %v803
      %v916 = vpack.c.bf16 %v804, %v804
      %v917 = vpack.c.bf16 %v805, %v805
      %v918 = vpack.c.bf16 %v806, %v806
      %v919 = vpack.c.bf16 %v807, %v807
      %v920 = vpack.c.bf16 %v808, %v808
      %v921 = vpack.c.bf16 %v809, %v809
      %v922 = vpack.c.bf16 %v810, %v810
      %v923 = vpack.c.bf16 %v811, %v811
      %v924 = vpack.c.bf16 %v812, %v812
      %v925 = vpack.c.bf16 %v813, %v813
      %v926 = vpack.c.bf16 %v814, %v814
      %v927 = vpack.c.bf16 %v815, %v815
      %v928 = vpack.c.bf16 %v816, %v816
      %v929 = vpack.c.bf16 %v817, %v817
      %v930 = vpack.c.bf16 %v818, %v818
      %v931 = vpack.c.bf16 %v819, %v819
      %v932 = vpack.c.bf16 %v820, %v820
      %v933 = vpack.c.bf16 %v821, %v821
      %v934 = vpack.c.bf16 %v822, %v822
      %v935 = vpack.c.bf16 %v823, %v823
      %v936 = vpack.c.bf16 %v824, %v824
      %v937 = vpack.c.bf16 %v825, %v825
      %v938 = vpack.c.bf16 %v826, %v826
      %v939 = vpack.c.bf16 %v827, %v827
      %v940 = vpack.c.bf16 %v828, %v828
      %v941 = vpack.c.bf16 %v829, %v829
      %v942 = vpack.c.bf16 %v830, %v830
      %v943 = vpack.c.bf16 %v831, %v831
      %v944 = vpack.c.bf16 %v832, %v832
      %v945 = vpack.c.bf16 %v833, %v833
      %v946 = vpack.c.bf16 %v834, %v834
      %v947 = vpack.c.bf16 %v835, %v835
      %v948 = vpack.c.bf16 %v836, %v836
      %v1061 = vunpack.c.l.b16 %v837
      %v1062 = vunpack.c.l.b16 %v838
      %v1063 = vunpack.c.l.b16 %v839
      %v1064 = vunpack.c.l.b16 %v840
      %v1065 = vunpack.c.l.b16 %v841
      %v1066 = vunpack.c.l.b16 %v842
      %v1067 = vunpack.c.l.b16 %v843
      %v1068 = vunpack.c.l.b16 %v844
      %v1069 = vunpack.c.l.b16 %v845
      %v1070 = vunpack.c.l.b16 %v846
      %v1071 = vunpack.c.l.b16 %v847
      %v1072 = vunpack.c.l.b16 %v848
      %v1073 = vunpack.c.l.b16 %v849
      %v1074 = vunpack.c.l.b16 %v850
      %v1075 = vunpack.c.l.b16 %v851
      %v1076 = vunpack.c.l.b16 %v852
      %v1077 = vunpack.c.l.b16 %v853
      %v1078 = vunpack.c.l.b16 %v854
      %v1079 = vunpack.c.l.b16 %v855
      %v1080 = vunpack.c.l.b16 %v856
      %v1081 = vunpack.c.l.b16 %v857
      %v1082 = vunpack.c.l.b16 %v858
      %v1083 = vunpack.c.l.b16 %v859
      %v1084 = vunpack.c.l.b16 %v860
      %v1085 = vunpack.c.l.b16 %v861
      %v1086 = vunpack.c.l.b16 %v862
      %v1087 = vunpack.c.l.b16 %v863
      %v1088 = vunpack.c.l.b16 %v864
      %v1089 = vunpack.c.l.b16 %v865
      %v1090 = vunpack.c.l.b16 %v866
      %v1091 = vunpack.c.l.b16 %v867
      %v1092 = vunpack.c.l.b16 %v868
      %v1093 = vunpack.c.l.b16 %v869
      %v1094 = vunpack.c.l.b16 %v870
      %v1095 = vunpack.c.l.b16 %v871
      %v1096 = vunpack.c.l.b16 %v872
      %v1097 = vunpack.c.l.b16 %v873
      %v1098 = vunpack.c.l.b16 %v874
      %v1099 = vunpack.c.l.b16 %v875
      %v1100 = vunpack.c.l.b16 %v876
      %v1101 = vunpack.c.l.b16 %v877
      %v1102 = vunpack.c.l.b16 %v878
      %v1103 = vunpack.c.l.b16 %v879
      %v1104 = vunpack.c.l.b16 %v880
      %v1105 = vunpack.c.l.b16 %v881
      %v1106 = vunpack.c.l.b16 %v882
      %v1107 = vunpack.c.l.b16 %v883
      %v1108 = vunpack.c.l.b16 %v884
      %v1109 = vunpack.c.l.b16 %v885
      %v1110 = vunpack.c.l.b16 %v886
      %v1111 = vunpack.c.l.b16 %v887
      %v1112 = vunpack.c.l.b16 %v888
      %v1113 = vunpack.c.l.b16 %v889
      %v1114 = vunpack.c.l.b16 %v890
      %v1115 = vunpack.c.l.b16 %v891
      %v1116 = vunpack.c.l.b16 %v892
      %v1117 = vunpack.c.l.b16 %v893
      %v1118 = vunpack.c.l.b16 %v894
      %v1119 = vunpack.c.l.b16 %v895
      %v1120 = vunpack.c.l.b16 %v896
      %v1121 = vunpack.c.l.b16 %v897
      %v1122 = vunpack.c.l.b16 %v898
      %v1123 = vunpack.c.l.b16 %v899
      %v1124 = vunpack.c.l.b16 %v900
      %v1125 = vunpack.c.l.b16 %v901
      %v1126 = vunpack.c.l.b16 %v902
      %v1127 = vunpack.c.l.b16 %v903
      %v1128 = vunpack.c.l.b16 %v904
      %v1129 = vunpack.c.l.b16 %v905
      %v1130 = vunpack.c.l.b16 %v906
      %v1131 = vunpack.c.l.b16 %v907
      %v1132 = vunpack.c.l.b16 %v908
      %v1133 = vunpack.c.l.b16 %v909
      %v1134 = vunpack.c.l.b16 %v910
      %v1135 = vunpack.c.l.b16 %v911
      %v1136 = vunpack.c.l.b16 %v912
      %v1137 = vunpack.c.l.b16 %v913
      %v1138 = vunpack.c.l.b16 %v914
      %v1139 = vunpack.c.l.b16 %v915
      %v1140 = vunpack.c.l.b16 %v916
      %v1141 = vunpack.c.l.b16 %v917
      %v1142 = vunpack.c.l.b16 %v918
      %v1143 = vunpack.c.l.b16 %v919
      %v1144 = vunpack.c.l.b16 %v920
      %v1145 = vunpack.c.l.b16 %v921
      %v1146 = vunpack.c.l.b16 %v922
      %v1147 = vunpack.c.l.b16 %v923
      %v1148 = vunpack.c.l.b16 %v924
      %v1149 = vunpack.c.l.b16 %v925
      %v1150 = vunpack.c.l.b16 %v926
      %v1151 = vunpack.c.l.b16 %v927
      %v1152 = vunpack.c.l.b16 %v928
      %v1153 = vunpack.c.l.b16 %v929
      %v1154 = vunpack.c.l.b16 %v930
      %v1155 = vunpack.c.l.b16 %v931
      %v1156 = vunpack.c.l.b16 %v932
      %v1157 = vunpack.c.l.b16 %v933
      %v1158 = vunpack.c.l.b16 %v934
      %v1159 = vunpack.c.l.b16 %v935
      %v1160 = vunpack.c.l.b16 %v936
      %v1161 = vunpack.c.l.b16 %v937
      %v1162 = vunpack.c.l.b16 %v938
      %v1163 = vunpack.c.l.b16 %v939
      %v1164 = vunpack.c.l.b16 %v940
      %v1165 = vunpack.c.l.b16 %v941
      %v1166 = vunpack.c.l.b16 %v942
      %v1167 = vunpack.c.l.b16 %v943
      %v1168 = vunpack.c.l.b16 %v944
      %v1169 = vunpack.c.l.b16 %v945
      %v1170 = vunpack.c.l.b16 %v946
      %v1171 = vunpack.c.l.b16 %v947
      %v1172 = vunpack.c.l.b16 %v948
      %v1173 = vpack.c.b16 %v1062, %v1061
      %v1174 = vpack.c.b16 %v1064, %v1063
      %v1175 = vpack.c.b16 %v1066, %v1065
      %v1176 = vpack.c.b16 %v1068, %v1067
      %v1177 = vpack.c.b16 %v1070, %v1069
      %v1178 = vpack.c.b16 %v1072, %v1071
      %v1179 = vpack.c.b16 %v1074, %v1073
      %v1180 = vpack.c.b16 %v1076, %v1075
      %v1181 = vpack.c.b16 %v1078, %v1077
      %v1182 = vpack.c.b16 %v1080, %v1079
      %v1183 = vpack.c.b16 %v1082, %v1081
      %v1184 = vpack.c.b16 %v1084, %v1083
      %v1185 = vpack.c.b16 %v1086, %v1085
      %v1186 = vpack.c.b16 %v1088, %v1087
      %v1187 = vpack.c.b16 %v1090, %v1089
      %v1188 = vpack.c.b16 %v1092, %v1091
      %v1189 = vpack.c.b16 %v1094, %v1093
      %v1190 = vpack.c.b16 %v1096, %v1095
      %v1191 = vpack.c.b16 %v1098, %v1097
      %v1192 = vpack.c.b16 %v1100, %v1099
      %v1193 = vpack.c.b16 %v1102, %v1101
      %v1194 = vpack.c.b16 %v1104, %v1103
      %v1195 = vpack.c.b16 %v1106, %v1105
      %v1196 = vpack.c.b16 %v1108, %v1107
      %v1197 = vpack.c.b16 %v1110, %v1109
      %v1198 = vpack.c.b16 %v1112, %v1111
      %v1199 = vpack.c.b16 %v1114, %v1113
      %v1200 = vpack.c.b16 %v1116, %v1115
      %v1201 = vpack.c.b16 %v1118, %v1117
      %v1202 = vpack.c.b16 %v1120, %v1119
      %v1203 = vpack.c.b16 %v1122, %v1121
      %v1204 = vpack.c.b16 %v1124, %v1123
      %v1205 = vpack.c.b16 %v1126, %v1125
      %v1206 = vpack.c.b16 %v1128, %v1127
      %v1207 = vpack.c.b16 %v1130, %v1129
      %v1208 = vpack.c.b16 %v1132, %v1131
      %v1209 = vpack.c.b16 %v1134, %v1133
      %v1210 = vpack.c.b16 %v1136, %v1135
      %v1211 = vpack.c.b16 %v1138, %v1137
      %v1212 = vpack.c.b16 %v1140, %v1139
      %v1213 = vpack.c.b16 %v1142, %v1141
      %v1214 = vpack.c.b16 %v1144, %v1143
      %v1215 = vpack.c.b16 %v1146, %v1145
      %v1216 = vpack.c.b16 %v1148, %v1147
      %v1217 = vpack.c.b16 %v1150, %v1149
      %v1218 = vpack.c.b16 %v1152, %v1151
      %v1219 = vpack.c.b16 %v1154, %v1153
      %v1220 = vpack.c.b16 %v1156, %v1155
      %v1221 = vpack.c.b16 %v1158, %v1157
      %v1222 = vpack.c.b16 %v1160, %v1159
      %v1223 = vpack.c.b16 %v1162, %v1161
      %v1224 = vpack.c.b16 %v1164, %v1163
      %v1225 = vpack.c.b16 %v1166, %v1165
      %v1226 = vpack.c.b16 %v1168, %v1167
      %v1227 = vpack.c.b16 %v1170, %v1169
      %v1228 = vpack.c.b16 %v1172, %v1171
      %vm1229 = vsmask.f32 7424
      %v1231 = vshrl.u32 %v1173, 16
      %v1233 = vshll.u32 %v1173, 16
      %v1235 = vrot.slane %v1233, 1
      %v1236 = vor.u32 %v1231, %v1235
      %v1238 = vshll.u32 %v1174, 16
      %v1240 = vrot.slane %v1238, 1
      %v1241 = vsel %vm1229, %v1236, %v1240
      %v1242 = vshrl.u32 %v1174, 16
      %v1244 = vor.u32 %v1242, %v1240
      %v1246 = vshrl.u32 %v1175, 16
      %v1248 = vshll.u32 %v1175, 16
      %v1250 = vrot.slane %v1248, 1
      %v1251 = vor.u32 %v1246, %v1250
      %v1253 = vshll.u32 %v1176, 16
      %v1255 = vrot.slane %v1253, 1
      %v1256 = vsel %vm1229, %v1251, %v1255
      %v1257 = vshrl.u32 %v1176, 16
      %v1259 = vor.u32 %v1257, %v1255
      %v1261 = vshrl.u32 %v1177, 16
      %v1263 = vshll.u32 %v1177, 16
      %v1265 = vrot.slane %v1263, 1
      %v1266 = vor.u32 %v1261, %v1265
      %v1268 = vshll.u32 %v1178, 16
      %v1270 = vrot.slane %v1268, 1
      %v1271 = vsel %vm1229, %v1266, %v1270
      %v1272 = vshrl.u32 %v1178, 16
      %v1274 = vor.u32 %v1272, %v1270
      %v1276 = vshrl.u32 %v1179, 16
      %v1278 = vshll.u32 %v1179, 16
      %v1280 = vrot.slane %v1278, 1
      %v1281 = vor.u32 %v1276, %v1280
      %v1283 = vshll.u32 %v1180, 16
      %v1285 = vrot.slane %v1283, 1
      %v1286 = vsel %vm1229, %v1281, %v1285
      %v1287 = vshrl.u32 %v1180, 16
      %v1289 = vor.u32 %v1287, %v1285
      %v1291 = vshrl.u32 %v1181, 16
      %v1293 = vshll.u32 %v1181, 16
      %v1295 = vrot.slane %v1293, 1
      %v1296 = vor.u32 %v1291, %v1295
      %v1298 = vshll.u32 %v1182, 16
      %v1300 = vrot.slane %v1298, 1
      %v1301 = vsel %vm1229, %v1296, %v1300
      %v1302 = vshrl.u32 %v1182, 16
      %v1304 = vor.u32 %v1302, %v1300
      %v1306 = vshrl.u32 %v1183, 16
      %v1308 = vshll.u32 %v1183, 16
      %v1310 = vrot.slane %v1308, 1
      %v1311 = vor.u32 %v1306, %v1310
      %v1313 = vshll.u32 %v1184, 16
      %v1315 = vrot.slane %v1313, 1
      %v1316 = vsel %vm1229, %v1311, %v1315
      %v1317 = vshrl.u32 %v1184, 16
      %v1319 = vor.u32 %v1317, %v1315
      %v1321 = vshrl.u32 %v1185, 16
      %v1323 = vshll.u32 %v1185, 16
      %v1325 = vrot.slane %v1323, 1
      %v1326 = vor.u32 %v1321, %v1325
      %v1328 = vshll.u32 %v1186, 16
      %v1330 = vrot.slane %v1328, 1
      %v1331 = vsel %vm1229, %v1326, %v1330
      %v1332 = vshrl.u32 %v1186, 16
      %v1334 = vor.u32 %v1332, %v1330
      %v1336 = vshrl.u32 %v1187, 16
      %v1338 = vshll.u32 %v1187, 16
      %v1340 = vrot.slane %v1338, 1
      %v1341 = vor.u32 %v1336, %v1340
      %v1343 = vshll.u32 %v1188, 16
      %v1345 = vrot.slane %v1343, 1
      %v1346 = vsel %vm1229, %v1341, %v1345
      %v1347 = vshrl.u32 %v1188, 16
      %v1349 = vor.u32 %v1347, %v1345
      %v1351 = vshrl.u32 %v1189, 16
      %v1353 = vshll.u32 %v1189, 16
      %v1355 = vrot.slane %v1353, 1
      %v1356 = vor.u32 %v1351, %v1355
      %v1358 = vshll.u32 %v1190, 16
      %v1360 = vrot.slane %v1358, 1
      %v1361 = vsel %vm1229, %v1356, %v1360
      %v1362 = vshrl.u32 %v1190, 16
      %v1364 = vor.u32 %v1362, %v1360
      %v1366 = vshrl.u32 %v1191, 16
      %v1368 = vshll.u32 %v1191, 16
      %v1370 = vrot.slane %v1368, 1
      %v1371 = vor.u32 %v1366, %v1370
      %v1373 = vshll.u32 %v1192, 16
      %v1375 = vrot.slane %v1373, 1
      %v1376 = vsel %vm1229, %v1371, %v1375
      %v1377 = vshrl.u32 %v1192, 16
      %v1379 = vor.u32 %v1377, %v1375
      %v1381 = vshrl.u32 %v1193, 16
      %v1383 = vshll.u32 %v1193, 16
      %v1385 = vrot.slane %v1383, 1
      %v1386 = vor.u32 %v1381, %v1385
      %v1388 = vshll.u32 %v1194, 16
      %v1390 = vrot.slane %v1388, 1
      %v1391 = vsel %vm1229, %v1386, %v1390
      %v1392 = vshrl.u32 %v1194, 16
      %v1394 = vor.u32 %v1392, %v1390
      %v1396 = vshrl.u32 %v1195, 16
      %v1398 = vshll.u32 %v1195, 16
      %v1400 = vrot.slane %v1398, 1
      %v1401 = vor.u32 %v1396, %v1400
      %v1403 = vshll.u32 %v1196, 16
      %v1405 = vrot.slane %v1403, 1
      %v1406 = vsel %vm1229, %v1401, %v1405
      %v1407 = vshrl.u32 %v1196, 16
      %v1409 = vor.u32 %v1407, %v1405
      %v1411 = vshrl.u32 %v1197, 16
      %v1413 = vshll.u32 %v1197, 16
      %v1415 = vrot.slane %v1413, 1
      %v1416 = vor.u32 %v1411, %v1415
      %v1418 = vshll.u32 %v1198, 16
      %v1420 = vrot.slane %v1418, 1
      %v1421 = vsel %vm1229, %v1416, %v1420
      %v1422 = vshrl.u32 %v1198, 16
      %v1424 = vor.u32 %v1422, %v1420
      %v1426 = vshrl.u32 %v1199, 16
      %v1428 = vshll.u32 %v1199, 16
      %v1430 = vrot.slane %v1428, 1
      %v1431 = vor.u32 %v1426, %v1430
      %v1433 = vshll.u32 %v1200, 16
      %v1435 = vrot.slane %v1433, 1
      %v1436 = vsel %vm1229, %v1431, %v1435
      %v1437 = vshrl.u32 %v1200, 16
      %v1439 = vor.u32 %v1437, %v1435
      %v1441 = vshrl.u32 %v1201, 16
      %v1443 = vshll.u32 %v1201, 16
      %v1445 = vrot.slane %v1443, 1
      %v1446 = vor.u32 %v1441, %v1445
      %v1448 = vshll.u32 %v1202, 16
      %v1450 = vrot.slane %v1448, 1
      %v1451 = vsel %vm1229, %v1446, %v1450
      %v1452 = vshrl.u32 %v1202, 16
      %v1454 = vor.u32 %v1452, %v1450
      %v1456 = vshrl.u32 %v1203, 16
      %v1458 = vshll.u32 %v1203, 16
      %v1460 = vrot.slane %v1458, 1
      %v1461 = vor.u32 %v1456, %v1460
      %v1463 = vshll.u32 %v1204, 16
      %v1465 = vrot.slane %v1463, 1
      %v1466 = vsel %vm1229, %v1461, %v1465
      %v1467 = vshrl.u32 %v1204, 16
      %v1469 = vor.u32 %v1467, %v1465
      %v1471 = vshrl.u32 %v1205, 16
      %v1473 = vshll.u32 %v1205, 16
      %v1475 = vrot.slane %v1473, 1
      %v1476 = vor.u32 %v1471, %v1475
      %v1478 = vshll.u32 %v1206, 16
      %v1480 = vrot.slane %v1478, 1
      %v1481 = vsel %vm1229, %v1476, %v1480
      %v1482 = vshrl.u32 %v1206, 16
      %v1484 = vor.u32 %v1482, %v1480
      %v1486 = vshrl.u32 %v1207, 16
      %v1488 = vshll.u32 %v1207, 16
      %v1490 = vrot.slane %v1488, 1
      %v1491 = vor.u32 %v1486, %v1490
      %v1493 = vshll.u32 %v1208, 16
      %v1495 = vrot.slane %v1493, 1
      %v1496 = vsel %vm1229, %v1491, %v1495
      %v1497 = vshrl.u32 %v1208, 16
      %v1499 = vor.u32 %v1497, %v1495
      %v1501 = vshrl.u32 %v1209, 16
      %v1503 = vshll.u32 %v1209, 16
      %v1505 = vrot.slane %v1503, 1
      %v1506 = vor.u32 %v1501, %v1505
      %v1508 = vshll.u32 %v1210, 16
      %v1510 = vrot.slane %v1508, 1
      %v1511 = vsel %vm1229, %v1506, %v1510
      %v1512 = vshrl.u32 %v1210, 16
      %v1514 = vor.u32 %v1512, %v1510
      %v1516 = vshrl.u32 %v1211, 16
      %v1518 = vshll.u32 %v1211, 16
      %v1520 = vrot.slane %v1518, 1
      %v1521 = vor.u32 %v1516, %v1520
      %v1523 = vshll.u32 %v1212, 16
      %v1525 = vrot.slane %v1523, 1
      %v1526 = vsel %vm1229, %v1521, %v1525
      %v1527 = vshrl.u32 %v1212, 16
      %v1529 = vor.u32 %v1527, %v1525
      %v1531 = vshrl.u32 %v1213, 16
      %v1533 = vshll.u32 %v1213, 16
      %v1535 = vrot.slane %v1533, 1
      %v1536 = vor.u32 %v1531, %v1535
      %v1538 = vshll.u32 %v1214, 16
      %v1540 = vrot.slane %v1538, 1
      %v1541 = vsel %vm1229, %v1536, %v1540
      %v1542 = vshrl.u32 %v1214, 16
      %v1544 = vor.u32 %v1542, %v1540
      %v1546 = vshrl.u32 %v1215, 16
      %v1548 = vshll.u32 %v1215, 16
      %v1550 = vrot.slane %v1548, 1
      %v1551 = vor.u32 %v1546, %v1550
      %v1553 = vshll.u32 %v1216, 16
      %v1555 = vrot.slane %v1553, 1
      %v1556 = vsel %vm1229, %v1551, %v1555
      %v1557 = vshrl.u32 %v1216, 16
      %v1559 = vor.u32 %v1557, %v1555
      %v1561 = vshrl.u32 %v1217, 16
      %v1563 = vshll.u32 %v1217, 16
      %v1565 = vrot.slane %v1563, 1
      %v1566 = vor.u32 %v1561, %v1565
      %v1568 = vshll.u32 %v1218, 16
      %v1570 = vrot.slane %v1568, 1
      %v1571 = vsel %vm1229, %v1566, %v1570
      %v1572 = vshrl.u32 %v1218, 16
      %v1574 = vor.u32 %v1572, %v1570
      %v1576 = vshrl.u32 %v1219, 16
      %v1578 = vshll.u32 %v1219, 16
      %v1580 = vrot.slane %v1578, 1
      %v1581 = vor.u32 %v1576, %v1580
      %v1583 = vshll.u32 %v1220, 16
      %v1585 = vrot.slane %v1583, 1
      %v1586 = vsel %vm1229, %v1581, %v1585
      %v1587 = vshrl.u32 %v1220, 16
      %v1589 = vor.u32 %v1587, %v1585
      %v1591 = vshrl.u32 %v1221, 16
      %v1593 = vshll.u32 %v1221, 16
      %v1595 = vrot.slane %v1593, 1
      %v1596 = vor.u32 %v1591, %v1595
      %v1598 = vshll.u32 %v1222, 16
      %v1600 = vrot.slane %v1598, 1
      %v1601 = vsel %vm1229, %v1596, %v1600
      %v1602 = vshrl.u32 %v1222, 16
      %v1604 = vor.u32 %v1602, %v1600
      %v1606 = vshrl.u32 %v1223, 16
      %v1608 = vshll.u32 %v1223, 16
      %v1610 = vrot.slane %v1608, 1
      %v1611 = vor.u32 %v1606, %v1610
      %v1613 = vshll.u32 %v1224, 16
      %v1615 = vrot.slane %v1613, 1
      %v1616 = vsel %vm1229, %v1611, %v1615
      %v1617 = vshrl.u32 %v1224, 16
      %v1619 = vor.u32 %v1617, %v1615
      %v1621 = vshrl.u32 %v1225, 16
      %v1623 = vshll.u32 %v1225, 16
      %v1625 = vrot.slane %v1623, 1
      %v1626 = vor.u32 %v1621, %v1625
      %v1628 = vshll.u32 %v1226, 16
      %v1630 = vrot.slane %v1628, 1
      %v1631 = vsel %vm1229, %v1626, %v1630
      %v1632 = vshrl.u32 %v1226, 16
      %v1634 = vor.u32 %v1632, %v1630
      %v1636 = vshrl.u32 %v1227, 16
      %v1638 = vshll.u32 %v1227, 16
      %v1640 = vrot.slane %v1638, 1
      %v1641 = vor.u32 %v1636, %v1640
      %v1643 = vshll.u32 %v1228, 16
      %v1645 = vrot.slane %v1643, 1
      %v1646 = vsel %vm1229, %v1641, %v1645
      %v1647 = vshrl.u32 %v1228, 16
      %v1649 = vor.u32 %v1647, %v1645
      %v1706 = vpack.c.b16 %v1061, %v1061
      %v1707 = vpack.c.b16 %v1065, %v1065
      %v1708 = vpack.c.b16 %v1069, %v1069
      %v1709 = vpack.c.b16 %v1073, %v1073
      %v1710 = vpack.c.b16 %v1077, %v1077
      %v1711 = vpack.c.b16 %v1081, %v1081
      %v1712 = vpack.c.b16 %v1085, %v1085
      %v1713 = vpack.c.b16 %v1089, %v1089
      %v1714 = vpack.c.b16 %v1093, %v1093
      %v1715 = vpack.c.b16 %v1097, %v1097
      %v1716 = vpack.c.b16 %v1101, %v1101
      %v1717 = vpack.c.b16 %v1105, %v1105
      %v1718 = vpack.c.b16 %v1109, %v1109
      %v1719 = vpack.c.b16 %v1113, %v1113
      %v1720 = vpack.c.b16 %v1117, %v1117
      %v1721 = vpack.c.b16 %v1121, %v1121
      %v1722 = vpack.c.b16 %v1125, %v1125
      %v1723 = vpack.c.b16 %v1129, %v1129
      %v1724 = vpack.c.b16 %v1133, %v1133
      %v1725 = vpack.c.b16 %v1137, %v1137
      %v1726 = vpack.c.b16 %v1141, %v1141
      %v1727 = vpack.c.b16 %v1145, %v1145
      %v1728 = vpack.c.b16 %v1149, %v1149
      %v1729 = vpack.c.b16 %v1153, %v1153
      %v1730 = vpack.c.b16 %v1157, %v1157
      %v1731 = vpack.c.b16 %v1161, %v1161
      %v1732 = vpack.c.b16 %v1165, %v1165
      %v1733 = vpack.c.b16 %v1169, %v1169
      %v1735 = vshll.u32 %v1706, 16
      %v1737 = vrot.slane %v1735, 1
      %v1739 = vshll.u32 %v1707, 16
      %v1741 = vrot.slane %v1739, 1
      %v1743 = vshll.u32 %v1708, 16
      %v1745 = vrot.slane %v1743, 1
      %v1747 = vshll.u32 %v1709, 16
      %v1749 = vrot.slane %v1747, 1
      %v1751 = vshll.u32 %v1710, 16
      %v1753 = vrot.slane %v1751, 1
      %v1755 = vshll.u32 %v1711, 16
      %v1757 = vrot.slane %v1755, 1
      %v1759 = vshll.u32 %v1712, 16
      %v1761 = vrot.slane %v1759, 1
      %v1763 = vshll.u32 %v1713, 16
      %v1765 = vrot.slane %v1763, 1
      %v1767 = vshll.u32 %v1714, 16
      %v1769 = vrot.slane %v1767, 1
      %v1771 = vshll.u32 %v1715, 16
      %v1773 = vrot.slane %v1771, 1
      %v1775 = vshll.u32 %v1716, 16
      %v1777 = vrot.slane %v1775, 1
      %v1779 = vshll.u32 %v1717, 16
      %v1781 = vrot.slane %v1779, 1
      %v1783 = vshll.u32 %v1718, 16
      %v1785 = vrot.slane %v1783, 1
      %v1787 = vshll.u32 %v1719, 16
      %v1789 = vrot.slane %v1787, 1
      %v1791 = vshll.u32 %v1720, 16
      %v1793 = vrot.slane %v1791, 1
      %v1795 = vshll.u32 %v1721, 16
      %v1797 = vrot.slane %v1795, 1
      %v1799 = vshll.u32 %v1722, 16
      %v1801 = vrot.slane %v1799, 1
      %v1803 = vshll.u32 %v1723, 16
      %v1805 = vrot.slane %v1803, 1
      %v1807 = vshll.u32 %v1724, 16
      %v1809 = vrot.slane %v1807, 1
      %v1811 = vshll.u32 %v1725, 16
      %v1813 = vrot.slane %v1811, 1
      %v1815 = vshll.u32 %v1726, 16
      %v1817 = vrot.slane %v1815, 1
      %v1819 = vshll.u32 %v1727, 16
      %v1821 = vrot.slane %v1819, 1
      %v1823 = vshll.u32 %v1728, 16
      %v1825 = vrot.slane %v1823, 1
      %v1827 = vshll.u32 %v1729, 16
      %v1829 = vrot.slane %v1827, 1
      %v1831 = vshll.u32 %v1730, 16
      %v1833 = vrot.slane %v1831, 1
      %v1835 = vshll.u32 %v1731, 16
      %v1837 = vrot.slane %v1835, 1
      %v1839 = vshll.u32 %v1732, 16
      %v1841 = vrot.slane %v1839, 1
      %v1843 = vshll.u32 %v1733, 16
      %v1845 = vrot.slane %v1843, 1
      %vm1874 = vcmask 1047552
      %vm1875 = vmand %vm1874, %vm1229
      %v1876 = vsel %vm1875, %v1244, %v1737
      %v1877 = vsel %vm1875, %v1259, %v1741
      %v1878 = vsel %vm1875, %v1274, %v1745
      %v1879 = vsel %vm1875, %v1289, %v1749
      %v1880 = vsel %vm1875, %v1304, %v1753
      %v1881 = vsel %vm1875, %v1319, %v1757
      %v1882 = vsel %vm1875, %v1334, %v1761
      %v1883 = vsel %vm1875, %v1349, %v1765
      %v1884 = vsel %vm1875, %v1364, %v1769
      %v1885 = vsel %vm1875, %v1379, %v1773
      %v1886 = vsel %vm1875, %v1394, %v1777
      %v1887 = vsel %vm1875, %v1409, %v1781
      %v1888 = vsel %vm1875, %v1424, %v1785
      %v1889 = vsel %vm1875, %v1439, %v1789
      %v1890 = vsel %vm1875, %v1454, %v1793
      %v1891 = vsel %vm1875, %v1469, %v1797
      %v1892 = vsel %vm1875, %v1484, %v1801
      %v1893 = vsel %vm1875, %v1499, %v1805
      %v1894 = vsel %vm1875, %v1514, %v1809
      %v1895 = vsel %vm1875, %v1529, %v1813
      %v1896 = vsel %vm1875, %v1544, %v1817
      %v1897 = vsel %vm1875, %v1559, %v1821
      %v1898 = vsel %vm1875, %v1574, %v1825
      %v1899 = vsel %vm1875, %v1589, %v1829
      %v1900 = vsel %vm1875, %v1604, %v1833
      %v1901 = vsel %vm1875, %v1619, %v1837
      %v1902 = vsel %vm1875, %v1634, %v1841
      %v1903 = vsel %vm1875, %v1649, %v1845
      %vm1904 = vcmask 1046528
      %v1905 = vrot.slane %v1173, 1
      %v1906 = vrot.slane %v1174, 1
      %v1907 = vsel %vm1904, %v1905, %v1906
      %v1908 = vrot.slane %v1175, 1
      %v1909 = vrot.slane %v1176, 1
      %v1910 = vsel %vm1904, %v1908, %v1909
      %v1911 = vrot.slane %v1177, 1
      %v1912 = vrot.slane %v1178, 1
      %v1913 = vsel %vm1904, %v1911, %v1912
      %v1914 = vrot.slane %v1179, 1
      %v1915 = vrot.slane %v1180, 1
      %v1916 = vsel %vm1904, %v1914, %v1915
      %v1917 = vrot.slane %v1181, 1
      %v1918 = vrot.slane %v1182, 1
      %v1919 = vsel %vm1904, %v1917, %v1918
      %v1920 = vrot.slane %v1183, 1
      %v1921 = vrot.slane %v1184, 1
      %v1922 = vsel %vm1904, %v1920, %v1921
      %v1923 = vrot.slane %v1185, 1
      %v1924 = vrot.slane %v1186, 1
      %v1925 = vsel %vm1904, %v1923, %v1924
      %v1926 = vrot.slane %v1187, 1
      %v1927 = vrot.slane %v1188, 1
      %v1928 = vsel %vm1904, %v1926, %v1927
      %v1929 = vrot.slane %v1189, 1
      %v1930 = vrot.slane %v1190, 1
      %v1931 = vsel %vm1904, %v1929, %v1930
      %v1932 = vrot.slane %v1191, 1
      %v1933 = vrot.slane %v1192, 1
      %v1934 = vsel %vm1904, %v1932, %v1933
      %v1935 = vrot.slane %v1193, 1
      %v1936 = vrot.slane %v1194, 1
      %v1937 = vsel %vm1904, %v1935, %v1936
      %v1938 = vrot.slane %v1195, 1
      %v1939 = vrot.slane %v1196, 1
      %v1940 = vsel %vm1904, %v1938, %v1939
      %v1941 = vrot.slane %v1197, 1
      %v1942 = vrot.slane %v1198, 1
      %v1943 = vsel %vm1904, %v1941, %v1942
      %v1944 = vrot.slane %v1199, 1
      %v1945 = vrot.slane %v1200, 1
      %v1946 = vsel %vm1904, %v1944, %v1945
      %v1947 = vrot.slane %v1201, 1
      %v1948 = vrot.slane %v1202, 1
      %v1949 = vsel %vm1904, %v1947, %v1948
      %v1950 = vrot.slane %v1203, 1
      %v1951 = vrot.slane %v1204, 1
      %v1952 = vsel %vm1904, %v1950, %v1951
      %v1953 = vrot.slane %v1205, 1
      %v1954 = vrot.slane %v1206, 1
      %v1955 = vsel %vm1904, %v1953, %v1954
      %v1956 = vrot.slane %v1207, 1
      %v1957 = vrot.slane %v1208, 1
      %v1958 = vsel %vm1904, %v1956, %v1957
      %v1959 = vrot.slane %v1209, 1
      %v1960 = vrot.slane %v1210, 1
      %v1961 = vsel %vm1904, %v1959, %v1960
      %v1962 = vrot.slane %v1211, 1
      %v1963 = vrot.slane %v1212, 1
      %v1964 = vsel %vm1904, %v1962, %v1963
      %v1965 = vrot.slane %v1213, 1
      %v1966 = vrot.slane %v1214, 1
      %v1967 = vsel %vm1904, %v1965, %v1966
      %v1968 = vrot.slane %v1215, 1
      %v1969 = vrot.slane %v1216, 1
      %v1970 = vsel %vm1904, %v1968, %v1969
      %v1971 = vrot.slane %v1217, 1
      %v1972 = vrot.slane %v1218, 1
      %v1973 = vsel %vm1904, %v1971, %v1972
      %v1974 = vrot.slane %v1219, 1
      %v1975 = vrot.slane %v1220, 1
      %v1976 = vsel %vm1904, %v1974, %v1975
      %v1977 = vrot.slane %v1221, 1
      %v1978 = vrot.slane %v1222, 1
      %v1979 = vsel %vm1904, %v1977, %v1978
      %v1980 = vrot.slane %v1223, 1
      %v1981 = vrot.slane %v1224, 1
      %v1982 = vsel %vm1904, %v1980, %v1981
      %v1983 = vrot.slane %v1225, 1
      %v1984 = vrot.slane %v1226, 1
      %v1985 = vsel %vm1904, %v1983, %v1984
      %v1986 = vrot.slane %v1227, 1
      %v1987 = vrot.slane %v1228, 1
      %v1988 = vsel %vm1904, %v1986, %v1987
      %v2017 = vrot.slane %v1706, 1
      %v2018 = vrot.slane %v1707, 1
      %v2019 = vrot.slane %v1708, 1
      %v2020 = vrot.slane %v1709, 1
      %v2021 = vrot.slane %v1710, 1
      %v2022 = vrot.slane %v1711, 1
      %v2023 = vrot.slane %v1712, 1
      %v2024 = vrot.slane %v1713, 1
      %v2025 = vrot.slane %v1714, 1
      %v2026 = vrot.slane %v1715, 1
      %v2027 = vrot.slane %v1716, 1
      %v2028 = vrot.slane %v1717, 1
      %v2029 = vrot.slane %v1718, 1
      %v2030 = vrot.slane %v1719, 1
      %v2031 = vrot.slane %v1720, 1
      %v2032 = vrot.slane %v1721, 1
      %v2033 = vrot.slane %v1722, 1
      %v2034 = vrot.slane %v1723, 1
      %v2035 = vrot.slane %v1724, 1
      %v2036 = vrot.slane %v1725, 1
      %v2037 = vrot.slane %v1726, 1
      %v2038 = vrot.slane %v1727, 1
      %v2039 = vrot.slane %v1728, 1
      %v2040 = vrot.slane %v1729, 1
      %v2041 = vrot.slane %v1730, 1
      %v2042 = vrot.slane %v1731, 1
      %v2043 = vrot.slane %v1732, 1
      %v2044 = vrot.slane %v1733, 1
      %vm2045 = vcmask 1046528
      %v2048 = vsel %vm2045, %v1906, %v2017
      %v2052 = vsel %vm2045, %v1909, %v2018
      %v2056 = vsel %vm2045, %v1912, %v2019
      %v2060 = vsel %vm2045, %v1915, %v2020
      %v2064 = vsel %vm2045, %v1918, %v2021
      %v2068 = vsel %vm2045, %v1921, %v2022
      %v2072 = vsel %vm2045, %v1924, %v2023
      %v2076 = vsel %vm2045, %v1927, %v2024
      %v2080 = vsel %vm2045, %v1930, %v2025
      %v2084 = vsel %vm2045, %v1933, %v2026
      %v2088 = vsel %vm2045, %v1936, %v2027
      %v2092 = vsel %vm2045, %v1939, %v2028
      %v2096 = vsel %vm2045, %v1942, %v2029
      %v2100 = vsel %vm2045, %v1945, %v2030
      %v2104 = vsel %vm2045, %v1948, %v2031
      %v2108 = vsel %vm2045, %v1951, %v2032
      %v2112 = vsel %vm2045, %v1954, %v2033
      %v2116 = vsel %vm2045, %v1957, %v2034
      %v2120 = vsel %vm2045, %v1960, %v2035
      %v2124 = vsel %vm2045, %v1963, %v2036
      %v2128 = vsel %vm2045, %v1966, %v2037
      %v2132 = vsel %vm2045, %v1969, %v2038
      %v2136 = vsel %vm2045, %v1972, %v2039
      %v2140 = vsel %vm2045, %v1975, %v2040
      %v2144 = vsel %vm2045, %v1978, %v2041
      %v2148 = vsel %vm2045, %v1981, %v2042
      %v2152 = vsel %vm2045, %v1984, %v2043
      %v2156 = vsel %vm2045, %v1987, %v2044
      %v2214 = vld [vmem:[%s3] sm:$0xf]
      %v2215 = vld [vmem:[%s3 + $0x4] sm:$0xf]
      %v2216 = vld [vmem:[%s3 + $0x8] sm:$0xf]
      %v2217 = vld [vmem:[%s3 + $0xc] sm:$0xf]
      %v2218 = vld [vmem:[%s3 + $0x10] sm:$0xf]
      %v2219 = vld [vmem:[%s3 + $0x14] sm:$0xf]
      %v2220 = vld [vmem:[%s3 + $0x18] sm:$0xf]
      %v2221 = vld [vmem:[%s3 + $0x1c] sm:$0xf]
      %v2222 = vld [vmem:[%s3 + $0x20] sm:$0xf]
      %v2223 = vld [vmem:[%s3 + $0x24] sm:$0xf]
      %v2224 = vld [vmem:[%s3 + $0x28] sm:$0xf]
      %v2225 = vld [vmem:[%s3 + $0x2c] sm:$0xf]
      %v2226 = vld [vmem:[%s3 + $0x30] sm:$0xf]
      %v2227 = vld [vmem:[%s3 + $0x34] sm:$0xf]
      %v2228 = vld [vmem:[%s3 + $0x38] sm:$0xf]
      %v2229 = vld [vmem:[%s3 + $0x3c] sm:$0xf]
      %v2230 = vld [vmem:[%s3 + $0x40] sm:$0xf]
      %v2231 = vld [vmem:[%s3 + $0x44] sm:$0xf]
      %v2232 = vld [vmem:[%s3 + $0x48] sm:$0xf]
      %v2233 = vld [vmem:[%s3 + $0x4c] sm:$0xf]
      %v2234 = vld [vmem:[%s3 + $0x50] sm:$0xf]
      %v2235 = vld [vmem:[%s3 + $0x54] sm:$0xf]
      %v2236 = vld [vmem:[%s3 + $0x58] sm:$0xf]
      %v2237 = vld [vmem:[%s3 + $0x5c] sm:$0xf]
      %v2238 = vld [vmem:[%s3 + $0x60] sm:$0xf]
      %v2239 = vld [vmem:[%s3 + $0x64] sm:$0xf]
      %v2240 = vld [vmem:[%s3 + $0x68] sm:$0xf]
      %v2241 = vld [vmem:[%s3 + $0x6c] sm:$0xf]
      %v2242 = vld [vmem:[%s3 + $0x70] sm:$0xf]
      %v2243 = vld [vmem:[%s3 + $0x74] sm:$0xf]
      %v2244 = vld [vmem:[%s3 + $0x78] sm:$0xf]
      %v2245 = vld [vmem:[%s3 + $0x7c] sm:$0xf]
      %v2246 = vld [vmem:[%s3 + $0x80] sm:$0xf]
      %v2247 = vld [vmem:[%s3 + $0x84] sm:$0xf]
      %v2248 = vld [vmem:[%s3 + $0x88] sm:$0xf]
      %v2249 = vld [vmem:[%s3 + $0x8c] sm:$0xf]
      %v2250 = vld [vmem:[%s3 + $0x90] sm:$0xf]
      %v2251 = vld [vmem:[%s3 + $0x94] sm:$0xf]
      %v2252 = vld [vmem:[%s3 + $0x98] sm:$0xf]
      %v2253 = vld [vmem:[%s3 + $0x9c] sm:$0xf]
      %v2254 = vld [vmem:[%s3 + $0xa0] sm:$0xf]
      %v2255 = vld [vmem:[%s3 + $0xa4] sm:$0xf]
      %v2256 = vld [vmem:[%s3 + $0xa8] sm:$0xf]
      %v2257 = vld [vmem:[%s3 + $0xac] sm:$0xf]
      %v2258 = vld [vmem:[%s3 + $0xb0] sm:$0xf]
      %v2259 = vld [vmem:[%s3 + $0xb4] sm:$0xf]
      %v2260 = vld [vmem:[%s3 + $0xb8] sm:$0xf]
      %v2261 = vld [vmem:[%s3 + $0xbc] sm:$0xf]
      %v2262 = vld [vmem:[%s3 + $0xc0] sm:$0xf]
      %v2263 = vld [vmem:[%s3 + $0xc4] sm:$0xf]
      %v2264 = vld [vmem:[%s3 + $0xc8] sm:$0xf]
      %v2265 = vld [vmem:[%s3 + $0xcc] sm:$0xf]
      %v2266 = vld [vmem:[%s3 + $0xd0] sm:$0xf]
      %v2267 = vld [vmem:[%s3 + $0xd4] sm:$0xf]
      %v2268 = vld [vmem:[%s3 + $0xd8] sm:$0xf]
      %v2269 = vld [vmem:[%s3 + $0xdc] sm:$0xf]
      %v2270 = vld [vmem:[%s3 + $0xe0] sm:$0xf]
      %v2271 = vld [vmem:[%s3 + $0xe4] sm:$0xf]
      %v2272 = vld [vmem:[%s3 + $0xe8] sm:$0xf]
      %v2273 = vld [vmem:[%s3 + $0xec] sm:$0xf]
      %v2274 = vld [vmem:[%s3 + $0xf0] sm:$0xf]
      %v2275 = vld [vmem:[%s3 + $0xf4] sm:$0xf]
      %v2276 = vld [vmem:[%s3 + $0xf8] sm:$0xf]
      %v2277 = vld [vmem:[%s3 + $0xfc] sm:$0xf]
      %v2278 = vld [vmem:[%s3 + $0x100] sm:$0xf]
      %v2279 = vld [vmem:[%s3 + $0x104] sm:$0xf]
      %v2280 = vld [vmem:[%s3 + $0x108] sm:$0xf]
      %v2281 = vld [vmem:[%s3 + $0x10c] sm:$0xf]
      %v2282 = vld [vmem:[%s3 + $0x110] sm:$0xf]
      %v2283 = vld [vmem:[%s3 + $0x114] sm:$0xf]
      %v2284 = vld [vmem:[%s3 + $0x118] sm:$0xf]
      %v2285 = vld [vmem:[%s3 + $0x11c] sm:$0xf]
      %v2286 = vld [vmem:[%s3 + $0x120] sm:$0xf]
      %v2287 = vld [vmem:[%s3 + $0x124] sm:$0xf]
      %v2288 = vld [vmem:[%s3 + $0x128] sm:$0xf]
      %v2289 = vld [vmem:[%s3 + $0x12c] sm:$0xf]
      %v2290 = vld [vmem:[%s3 + $0x130] sm:$0xf]
      %v2291 = vld [vmem:[%s3 + $0x134] sm:$0xf]
      %v2292 = vld [vmem:[%s3 + $0x138] sm:$0xf]
      %v2293 = vld [vmem:[%s3 + $0x13c] sm:$0xf]
      %v2294 = vld [vmem:[%s3 + $0x140] sm:$0xf]
      %v2295 = vld [vmem:[%s3 + $0x144] sm:$0xf]
      %v2296 = vld [vmem:[%s3 + $0x148] sm:$0xf]
      %v2297 = vld [vmem:[%s3 + $0x14c] sm:$0xf]
      %v2298 = vld [vmem:[%s3 + $0x150] sm:$0xf]
      %v2299 = vld [vmem:[%s3 + $0x154] sm:$0xf]
      %v2300 = vld [vmem:[%s3 + $0x158] sm:$0xf]
      %v2301 = vld [vmem:[%s3 + $0x15c] sm:$0xf]
      %v2302 = vld [vmem:[%s3 + $0x160] sm:$0xf]
      %v2303 = vld [vmem:[%s3 + $0x164] sm:$0xf]
      %v2304 = vld [vmem:[%s3 + $0x168] sm:$0xf]
      %v2305 = vld [vmem:[%s3 + $0x16c] sm:$0xf]
      %v2306 = vld [vmem:[%s3 + $0x170] sm:$0xf]
      %v2307 = vld [vmem:[%s3 + $0x174] sm:$0xf]
      %v2308 = vld [vmem:[%s3 + $0x178] sm:$0xf]
      %v2309 = vld [vmem:[%s3 + $0x17c] sm:$0xf]
      %v2310 = vld [vmem:[%s3 + $0x180] sm:$0xf]
      %v2311 = vld [vmem:[%s3 + $0x184] sm:$0xf]
      %v2312 = vld [vmem:[%s3 + $0x188] sm:$0xf]
      %v2313 = vld [vmem:[%s3 + $0x18c] sm:$0xf]
      %v2314 = vld [vmem:[%s3 + $0x190] sm:$0xf]
      %v2315 = vld [vmem:[%s3 + $0x194] sm:$0xf]
      %v2316 = vld [vmem:[%s3 + $0x198] sm:$0xf]
      %v2317 = vld [vmem:[%s3 + $0x19c] sm:$0xf]
      %v2318 = vld [vmem:[%s3 + $0x1a0] sm:$0xf]
      %v2319 = vld [vmem:[%s3 + $0x1a4] sm:$0xf]
      %v2320 = vld [vmem:[%s3 + $0x1a8] sm:$0xf]
      %v2321 = vld [vmem:[%s3 + $0x1ac] sm:$0xf]
      %v2322 = vld [vmem:[%s3 + $0x1b0] sm:$0xf]
      %v2323 = vld [vmem:[%s3 + $0x1b4] sm:$0xf]
      %v2324 = vld [vmem:[%s3 + $0x1b8] sm:$0xf]
      %v2325 = vld [vmem:[%s3 + $0x1bc] sm:$0xf]
      %v2326 = vld [vmem:[%s3 + $0x1c0] sm:$0xf]
      %v2327 = vld [vmem:[%s3 + $0x1c4] sm:$0xf]
      %v2328 = vld [vmem:[%s3 + $0x1c8] sm:$0xf]
      %v2329 = vld [vmem:[%s3 + $0x1cc] sm:$0xf]
      %v2330 = vld [vmem:[%s3 + $0x1d0] sm:$0xf]
      %v2331 = vld [vmem:[%s3 + $0x1d4] sm:$0xf]
      %v2332 = vld [vmem:[%s3 + $0x1d8] sm:$0xf]
      %v2333 = vld [vmem:[%s3 + $0x1dc] sm:$0xf]
      %v2334 = vld [vmem:[%s3 + $0x1e0] sm:$0xf]
      %v2335 = vld [vmem:[%s3 + $0x1e4] sm:$0xf]
      %v2336 = vld [vmem:[%s3 + $0x1e8] sm:$0xf]
      %v2337 = vld [vmem:[%s3 + $0x1ec] sm:$0xf]
      %v2338 = vld [vmem:[%s3 + $0x1f0] sm:$0xf]
      %v2339 = vld [vmem:[%s3 + $0x1f4] sm:$0xf]
      %v2340 = vld [vmem:[%s3 + $0x1f8] sm:$0xf]
      %v2341 = vld [vmem:[%s3 + $0x1fc] sm:$0xf]
      %v2342 = vld [vmem:[%s3 + $0x200] sm:$0xf]
      %v2343 = vld [vmem:[%s3 + $0x204] sm:$0xf]
      %v2344 = vld [vmem:[%s3 + $0x208] sm:$0xf]
      %v2345 = vld [vmem:[%s3 + $0x20c] sm:$0xf]
      %v2346 = vld [vmem:[%s3 + $0x210] sm:$0xf]
      %v2347 = vld [vmem:[%s3 + $0x214] sm:$0xf]
      %v2348 = vld [vmem:[%s3 + $0x218] sm:$0xf]
      %v2349 = vld [vmem:[%s3 + $0x21c] sm:$0xf]
      %v2350 = vld [vmem:[%s3 + $0x220] sm:$0xf]
      %v2351 = vld [vmem:[%s3 + $0x224] sm:$0xf]
      %v2352 = vld [vmem:[%s3 + $0x228] sm:$0xf]
      %v2353 = vld [vmem:[%s3 + $0x22c] sm:$0xf]
      %v2354 = vld [vmem:[%s3 + $0x230] sm:$0xf]
      %v2355 = vld [vmem:[%s3 + $0x234] sm:$0xf]
      %v2356 = vld [vmem:[%s3 + $0x238] sm:$0xf]
      %v2357 = vld [vmem:[%s3 + $0x23c] sm:$0xf]
      %v2502 = vunpack.c.l.b16 %v2214
      %v2503 = vunpack.c.l.b16 %v2215
      %v2504 = vunpack.c.l.b16 %v2216
      %v2505 = vunpack.c.l.b16 %v2217
      %v2506 = vunpack.c.l.b16 %v2218
      %v2507 = vunpack.c.l.b16 %v2219
      %v2508 = vunpack.c.l.b16 %v2220
      %v2509 = vunpack.c.l.b16 %v2221
      %v2510 = vunpack.c.l.b16 %v2222
      %v2511 = vunpack.c.l.b16 %v2223
      %v2512 = vunpack.c.l.b16 %v2224
      %v2513 = vunpack.c.l.b16 %v2225
      %v2514 = vunpack.c.l.b16 %v2226
      %v2515 = vunpack.c.l.b16 %v2227
      %v2516 = vunpack.c.l.b16 %v2228
      %v2517 = vunpack.c.l.b16 %v2229
      %v2518 = vunpack.c.l.b16 %v2230
      %v2519 = vunpack.c.l.b16 %v2231
      %v2520 = vunpack.c.l.b16 %v2232
      %v2521 = vunpack.c.l.b16 %v2233
      %v2522 = vunpack.c.l.b16 %v2234
      %v2523 = vunpack.c.l.b16 %v2235
      %v2524 = vunpack.c.l.b16 %v2236
      %v2525 = vunpack.c.l.b16 %v2237
      %v2526 = vunpack.c.l.b16 %v2238
      %v2527 = vunpack.c.l.b16 %v2239
      %v2528 = vunpack.c.l.b16 %v2240
      %v2529 = vunpack.c.l.b16 %v2241
      %v2530 = vunpack.c.l.b16 %v2242
      %v2531 = vunpack.c.l.b16 %v2243
      %v2532 = vunpack.c.l.b16 %v2244
      %v2533 = vunpack.c.l.b16 %v2245
      %v2534 = vunpack.c.l.b16 %v2246
      %v2535 = vunpack.c.l.b16 %v2247
      %v2536 = vunpack.c.l.b16 %v2248
      %v2537 = vunpack.c.l.b16 %v2249
      %v2538 = vunpack.c.l.b16 %v2250
      %v2539 = vunpack.c.l.b16 %v2251
      %v2540 = vunpack.c.l.b16 %v2252
      %v2541 = vunpack.c.l.b16 %v2253
      %v2542 = vunpack.c.l.b16 %v2254
      %v2543 = vunpack.c.l.b16 %v2255
      %v2544 = vunpack.c.l.b16 %v2256
      %v2545 = vunpack.c.l.b16 %v2257
      %v2546 = vunpack.c.l.b16 %v2258
      %v2547 = vunpack.c.l.b16 %v2259
      %v2548 = vunpack.c.l.b16 %v2260
      %v2549 = vunpack.c.l.b16 %v2261
      %v2550 = vunpack.c.l.b16 %v2262
      %v2551 = vunpack.c.l.b16 %v2263
      %v2552 = vunpack.c.l.b16 %v2264
      %v2553 = vunpack.c.l.b16 %v2265
      %v2554 = vunpack.c.l.b16 %v2266
      %v2555 = vunpack.c.l.b16 %v2267
      %v2556 = vunpack.c.l.b16 %v2268
      %v2557 = vunpack.c.l.b16 %v2269
      %v2558 = vunpack.c.l.b16 %v2270
      %v2559 = vunpack.c.l.b16 %v2271
      %v2560 = vunpack.c.l.b16 %v2272
      %v2561 = vunpack.c.l.b16 %v2273
      %v2562 = vunpack.c.l.b16 %v2274
      %v2563 = vunpack.c.l.b16 %v2275
      %v2564 = vunpack.c.l.b16 %v2276
      %v2565 = vunpack.c.l.b16 %v2277
      %v2566 = vunpack.c.l.b16 %v2278
      %v2567 = vunpack.c.l.b16 %v2279
      %v2568 = vunpack.c.l.b16 %v2280
      %v2569 = vunpack.c.l.b16 %v2281
      %v2570 = vunpack.c.l.b16 %v2282
      %v2571 = vunpack.c.l.b16 %v2283
      %v2572 = vunpack.c.l.b16 %v2284
      %v2573 = vunpack.c.l.b16 %v2285
      %v2574 = vunpack.c.l.b16 %v2286
      %v2575 = vunpack.c.l.b16 %v2287
      %v2576 = vunpack.c.l.b16 %v2288
      %v2577 = vunpack.c.l.b16 %v2289
      %v2578 = vunpack.c.l.b16 %v2290
      %v2579 = vunpack.c.l.b16 %v2291
      %v2580 = vunpack.c.l.b16 %v2292
      %v2581 = vunpack.c.l.b16 %v2293
      %v2582 = vunpack.c.l.b16 %v2294
      %v2583 = vunpack.c.l.b16 %v2295
      %v2584 = vunpack.c.l.b16 %v2296
      %v2585 = vunpack.c.l.b16 %v2297
      %v2586 = vunpack.c.l.b16 %v2298
      %v2587 = vunpack.c.l.b16 %v2299
      %v2588 = vunpack.c.l.b16 %v2300
      %v2589 = vunpack.c.l.b16 %v2301
      %v2590 = vunpack.c.l.b16 %v2302
      %v2591 = vunpack.c.l.b16 %v2303
      %v2592 = vunpack.c.l.b16 %v2304
      %v2593 = vunpack.c.l.b16 %v2305
      %v2594 = vunpack.c.l.b16 %v2306
      %v2595 = vunpack.c.l.b16 %v2307
      %v2596 = vunpack.c.l.b16 %v2308
      %v2597 = vunpack.c.l.b16 %v2309
      %v2598 = vunpack.c.l.b16 %v2310
      %v2599 = vunpack.c.l.b16 %v2311
      %v2600 = vunpack.c.l.b16 %v2312
      %v2601 = vunpack.c.l.b16 %v2313
      %v2602 = vunpack.c.l.b16 %v2314
      %v2603 = vunpack.c.l.b16 %v2315
      %v2604 = vunpack.c.l.b16 %v2316
      %v2605 = vunpack.c.l.b16 %v2317
      %v2606 = vunpack.c.l.b16 %v2318
      %v2607 = vunpack.c.l.b16 %v2319
      %v2608 = vunpack.c.l.b16 %v2320
      %v2609 = vunpack.c.l.b16 %v2321
      %v2610 = vunpack.c.l.b16 %v2322
      %v2611 = vunpack.c.l.b16 %v2323
      %v2612 = vunpack.c.l.b16 %v2324
      %v2613 = vunpack.c.l.b16 %v2325
      %v2614 = vunpack.c.l.b16 %v2326
      %v2615 = vunpack.c.l.b16 %v2327
      %v2616 = vunpack.c.l.b16 %v2328
      %v2617 = vunpack.c.l.b16 %v2329
      %v2618 = vunpack.c.l.b16 %v2330
      %v2619 = vunpack.c.l.b16 %v2331
      %v2620 = vunpack.c.l.b16 %v2332
      %v2621 = vunpack.c.l.b16 %v2333
      %v2622 = vunpack.c.l.b16 %v2334
      %v2623 = vunpack.c.l.b16 %v2335
      %v2624 = vunpack.c.l.b16 %v2336
      %v2625 = vunpack.c.l.b16 %v2337
      %v2626 = vunpack.c.l.b16 %v2338
      %v2627 = vunpack.c.l.b16 %v2339
      %v2628 = vunpack.c.l.b16 %v2340
      %v2629 = vunpack.c.l.b16 %v2341
      %v2630 = vunpack.c.l.b16 %v2342
      %v2631 = vunpack.c.l.b16 %v2343
      %v2632 = vunpack.c.l.b16 %v2344
      %v2633 = vunpack.c.l.b16 %v2345
      %v2634 = vunpack.c.l.b16 %v2346
      %v2635 = vunpack.c.l.b16 %v2347
      %v2636 = vunpack.c.l.b16 %v2348
      %v2637 = vunpack.c.l.b16 %v2349
      %v2638 = vunpack.c.l.b16 %v2350
      %v2639 = vunpack.c.l.b16 %v2351
      %v2640 = vunpack.c.l.b16 %v2352
      %v2641 = vunpack.c.l.b16 %v2353
      %v2642 = vunpack.c.l.b16 %v2354
      %v2643 = vunpack.c.l.b16 %v2355
      %v2644 = vunpack.c.l.b16 %v2356
      %v2645 = vunpack.c.l.b16 %v2357
      %v2646 = vpack.c.b16 %v2503, %v2502
      %v2647 = vpack.c.b16 %v2505, %v2504
      %v2648 = vpack.c.b16 %v2507, %v2506
      %v2649 = vpack.c.b16 %v2509, %v2508
      %v2650 = vpack.c.b16 %v2511, %v2510
      %v2651 = vpack.c.b16 %v2513, %v2512
      %v2652 = vpack.c.b16 %v2515, %v2514
      %v2653 = vpack.c.b16 %v2517, %v2516
      %v2654 = vpack.c.b16 %v2519, %v2518
      %v2655 = vpack.c.b16 %v2521, %v2520
      %v2656 = vpack.c.b16 %v2523, %v2522
      %v2657 = vpack.c.b16 %v2525, %v2524
      %v2658 = vpack.c.b16 %v2527, %v2526
      %v2659 = vpack.c.b16 %v2529, %v2528
      %v2660 = vpack.c.b16 %v2531, %v2530
      %v2661 = vpack.c.b16 %v2533, %v2532
      %v2662 = vpack.c.b16 %v2535, %v2534
      %v2663 = vpack.c.b16 %v2537, %v2536
      %v2664 = vpack.c.b16 %v2539, %v2538
      %v2665 = vpack.c.b16 %v2541, %v2540
      %v2666 = vpack.c.b16 %v2543, %v2542
      %v2667 = vpack.c.b16 %v2545, %v2544
      %v2668 = vpack.c.b16 %v2547, %v2546
      %v2669 = vpack.c.b16 %v2549, %v2548
      %v2670 = vpack.c.b16 %v2551, %v2550
      %v2671 = vpack.c.b16 %v2553, %v2552
      %v2672 = vpack.c.b16 %v2555, %v2554
      %v2673 = vpack.c.b16 %v2557, %v2556
      %v2674 = vpack.c.b16 %v2559, %v2558
      %v2675 = vpack.c.b16 %v2561, %v2560
      %v2676 = vpack.c.b16 %v2563, %v2562
      %v2677 = vpack.c.b16 %v2565, %v2564
      %v2678 = vpack.c.b16 %v2567, %v2566
      %v2679 = vpack.c.b16 %v2569, %v2568
      %v2680 = vpack.c.b16 %v2571, %v2570
      %v2681 = vpack.c.b16 %v2573, %v2572
      %v2682 = vpack.c.b16 %v2575, %v2574
      %v2683 = vpack.c.b16 %v2577, %v2576
      %v2684 = vpack.c.b16 %v2579, %v2578
      %v2685 = vpack.c.b16 %v2581, %v2580
      %v2686 = vpack.c.b16 %v2583, %v2582
      %v2687 = vpack.c.b16 %v2585, %v2584
      %v2688 = vpack.c.b16 %v2587, %v2586
      %v2689 = vpack.c.b16 %v2589, %v2588
      %v2690 = vpack.c.b16 %v2591, %v2590
      %v2691 = vpack.c.b16 %v2593, %v2592
      %v2692 = vpack.c.b16 %v2595, %v2594
      %v2693 = vpack.c.b16 %v2597, %v2596
      %v2694 = vpack.c.b16 %v2599, %v2598
      %v2695 = vpack.c.b16 %v2601, %v2600
      %v2696 = vpack.c.b16 %v2603, %v2602
      %v2697 = vpack.c.b16 %v2605, %v2604
      %v2698 = vpack.c.b16 %v2607, %v2606
      %v2699 = vpack.c.b16 %v2609, %v2608
      %v2700 = vpack.c.b16 %v2611, %v2610
      %v2701 = vpack.c.b16 %v2613, %v2612
      %v2702 = vpack.c.b16 %v2615, %v2614
      %v2703 = vpack.c.b16 %v2617, %v2616
      %v2704 = vpack.c.b16 %v2619, %v2618
      %v2705 = vpack.c.b16 %v2621, %v2620
      %v2706 = vpack.c.b16 %v2623, %v2622
      %v2707 = vpack.c.b16 %v2625, %v2624
      %v2708 = vpack.c.b16 %v2627, %v2626
      %v2709 = vpack.c.b16 %v2629, %v2628
      %v2710 = vpack.c.b16 %v2631, %v2630
      %v2711 = vpack.c.b16 %v2633, %v2632
      %v2712 = vpack.c.b16 %v2635, %v2634
      %v2713 = vpack.c.b16 %v2637, %v2636
      %v2714 = vpack.c.b16 %v2639, %v2638
      %v2715 = vpack.c.b16 %v2641, %v2640
      %v2716 = vpack.c.b16 %v2643, %v2642
      %v2717 = vpack.c.b16 %v2645, %v2644
      %2790 = vmatpush.bf16.msra.mxu0 %v2653
      %2791 = vmatpush.bf16.msra.mxu0 %v2652
      %2792 = vmatpush.bf16.msra.mxu0 %v2651
      %2793 = vmatpush.bf16.msra.mxu0 %v2650
      %2794 = vmatpush.bf16.msra.mxu0 %v2649
      %2795 = vmatpush.bf16.msra.mxu0 %v2648
      %2796 = vmatpush.bf16.msra.mxu0 %v2647
      %2797 = vmatpush.bf16.msra.mxu0 %v2646
      %2798 = vmatmul.bf16.gmra.mxu0 %v1173
      %v2799 = vpop.f32.mrf.mxu0
      %v2800 = vadd.f32 0.0, %v2799
      %v2801 = vpop.f32.mrf.mxu0
      %v2802 = vadd.f32 0.0, %v2801
      %2803 = vmatmul.bf16.gmra.mxu0 %v1174
      %v2804 = vpop.f32.mrf.mxu0
      %v2805 = vadd.f32 0.0, %v2804
      %v2806 = vpop.f32.mrf.mxu0
      %v2807 = vadd.f32 0.0, %v2806
      %2808 = vmatmul.bf16.gmra.mxu0 %v1175
      %v2809 = vpop.f32.mrf.mxu0
      %v2810 = vadd.f32 0.0, %v2809
      %v2811 = vpop.f32.mrf.mxu0
      %v2812 = vadd.f32 0.0, %v2811
      %2813 = vmatmul.bf16.gmra.mxu0 %v1176
      %v2814 = vpop.f32.mrf.mxu0
      %v2815 = vadd.f32 0.0, %v2814
      %v2816 = vpop.f32.mrf.mxu0
      %v2817 = vadd.f32 0.0, %v2816
      %2818 = vmatmul.bf16.gmra.mxu0 %v1177
      %v2819 = vpop.f32.mrf.mxu0
      %v2820 = vadd.f32 0.0, %v2819
      %v2821 = vpop.f32.mrf.mxu0
      %v2822 = vadd.f32 0.0, %v2821
      %2823 = vmatmul.bf16.gmra.mxu0 %v1178
      %v2824 = vpop.f32.mrf.mxu0
      %v2825 = vadd.f32 0.0, %v2824
      %v2826 = vpop.f32.mrf.mxu0
      %v2827 = vadd.f32 0.0, %v2826
      %2828 = vmatmul.bf16.gmra.mxu0 %v1179
      %v2829 = vpop.f32.mrf.mxu0
      %v2830 = vadd.f32 0.0, %v2829
      %v2831 = vpop.f32.mrf.mxu0
      %v2832 = vadd.f32 0.0, %v2831
      %2833 = vmatmul.bf16.gmra.mxu0 %v1180
      %v2834 = vpop.f32.mrf.mxu0
      %v2835 = vadd.f32 0.0, %v2834
      %v2836 = vpop.f32.mrf.mxu0
      %v2837 = vadd.f32 0.0, %v2836
      %2838 = vmatmul.bf16.gmra.mxu0 %v1181
      %v2839 = vpop.f32.mrf.mxu0
      %v2840 = vadd.f32 0.0, %v2839
      %v2841 = vpop.f32.mrf.mxu0
      %v2842 = vadd.f32 0.0, %v2841
      %2843 = vmatmul.bf16.gmra.mxu0 %v1182
      %v2844 = vpop.f32.mrf.mxu0
      %v2845 = vadd.f32 0.0, %v2844
      %v2846 = vpop.f32.mrf.mxu0
      %v2847 = vadd.f32 0.0, %v2846
      %2848 = vmatmul.bf16.gmra.mxu0 %v1183
      %v2849 = vpop.f32.mrf.mxu0
      %v2850 = vadd.f32 0.0, %v2849
      %v2851 = vpop.f32.mrf.mxu0
      %v2852 = vadd.f32 0.0, %v2851
      %2853 = vmatmul.bf16.gmra.mxu0 %v1184
      %v2854 = vpop.f32.mrf.mxu0
      %v2855 = vadd.f32 0.0, %v2854
      %v2856 = vpop.f32.mrf.mxu0
      %v2857 = vadd.f32 0.0, %v2856
      %2858 = vmatmul.bf16.gmra.mxu0 %v1185
      %v2859 = vpop.f32.mrf.mxu0
      %v2860 = vadd.f32 0.0, %v2859
      %v2861 = vpop.f32.mrf.mxu0
      %v2862 = vadd.f32 0.0, %v2861
      %2863 = vmatmul.bf16.gmra.mxu0 %v1186
      %v2864 = vpop.f32.mrf.mxu0
      %v2865 = vadd.f32 0.0, %v2864
      %v2866 = vpop.f32.mrf.mxu0
      %v2867 = vadd.f32 0.0, %v2866
      %2868 = vmatmul.bf16.gmra.mxu0 %v1187
      %v2869 = vpop.f32.mrf.mxu0
      %v2870 = vadd.f32 0.0, %v2869
      %v2871 = vpop.f32.mrf.mxu0
      %v2872 = vadd.f32 0.0, %v2871
      %2873 = vmatmul.bf16.gmra.mxu0 %v1188
      %v2874 = vpop.f32.mrf.mxu0
      %v2875 = vadd.f32 0.0, %v2874
      %v2876 = vpop.f32.mrf.mxu0
      %v2877 = vadd.f32 0.0, %v2876
      %2878 = vmatmul.bf16.gmra.mxu0 %v1189
      %v2879 = vpop.f32.mrf.mxu0
      %v2880 = vadd.f32 0.0, %v2879
      %v2881 = vpop.f32.mrf.mxu0
      %v2882 = vadd.f32 0.0, %v2881
      %2883 = vmatmul.bf16.gmra.mxu0 %v1190
      %v2884 = vpop.f32.mrf.mxu0
      %v2885 = vadd.f32 0.0, %v2884
      %v2886 = vpop.f32.mrf.mxu0
      %v2887 = vadd.f32 0.0, %v2886
      %2888 = vmatmul.bf16.gmra.mxu0 %v1191
      %v2889 = vpop.f32.mrf.mxu0
      %v2890 = vadd.f32 0.0, %v2889
      %v2891 = vpop.f32.mrf.mxu0
      %v2892 = vadd.f32 0.0, %v2891
      %2893 = vmatmul.bf16.gmra.mxu0 %v1192
      %v2894 = vpop.f32.mrf.mxu0
      %v2895 = vadd.f32 0.0, %v2894
      %v2896 = vpop.f32.mrf.mxu0
      %v2897 = vadd.f32 0.0, %v2896
      %2898 = vmatmul.bf16.gmra.mxu0 %v1193
      %v2899 = vpop.f32.mrf.mxu0
      %v2900 = vadd.f32 0.0, %v2899
      %v2901 = vpop.f32.mrf.mxu0
      %v2902 = vadd.f32 0.0, %v2901
      %2903 = vmatmul.bf16.gmra.mxu0 %v1194
      %v2904 = vpop.f32.mrf.mxu0
      %v2905 = vadd.f32 0.0, %v2904
      %v2906 = vpop.f32.mrf.mxu0
      %v2907 = vadd.f32 0.0, %v2906
      %2908 = vmatmul.bf16.gmra.mxu0 %v1195
      %v2909 = vpop.f32.mrf.mxu0
      %v2910 = vadd.f32 0.0, %v2909
      %v2911 = vpop.f32.mrf.mxu0
      %v2912 = vadd.f32 0.0, %v2911
      %2913 = vmatmul.bf16.gmra.mxu0 %v1196
      %v2914 = vpop.f32.mrf.mxu0
      %v2915 = vadd.f32 0.0, %v2914
      %v2916 = vpop.f32.mrf.mxu0
      %v2917 = vadd.f32 0.0, %v2916
      %2918 = vmatmul.bf16.gmra.mxu0 %v1197
      %v2919 = vpop.f32.mrf.mxu0
      %v2920 = vadd.f32 0.0, %v2919
      %v2921 = vpop.f32.mrf.mxu0
      %v2922 = vadd.f32 0.0, %v2921
      %2923 = vmatmul.bf16.gmra.mxu0 %v1198
      %v2924 = vpop.f32.mrf.mxu0
      %v2925 = vadd.f32 0.0, %v2924
      %v2926 = vpop.f32.mrf.mxu0
      %v2927 = vadd.f32 0.0, %v2926
      %2928 = vmatmul.bf16.gmra.mxu0 %v1199
      %v2929 = vpop.f32.mrf.mxu0
      %v2930 = vadd.f32 0.0, %v2929
      %v2931 = vpop.f32.mrf.mxu0
      %v2932 = vadd.f32 0.0, %v2931
      %2933 = vmatmul.bf16.gmra.mxu0 %v1200
      %v2934 = vpop.f32.mrf.mxu0
      %v2935 = vadd.f32 0.0, %v2934
      %v2936 = vpop.f32.mrf.mxu0
      %v2937 = vadd.f32 0.0, %v2936
      %2938 = vmatmul.bf16.gmra.mxu0 %v1201
      %v2939 = vpop.f32.mrf.mxu0
      %v2940 = vadd.f32 0.0, %v2939
      %v2941 = vpop.f32.mrf.mxu0
      %v2942 = vadd.f32 0.0, %v2941
      %2943 = vmatmul.bf16.gmra.mxu0 %v1202
      %v2944 = vpop.f32.mrf.mxu0
      %v2945 = vadd.f32 0.0, %v2944
      %v2946 = vpop.f32.mrf.mxu0
      %v2947 = vadd.f32 0.0, %v2946
      %2948 = vmatmul.bf16.gmra.mxu0 %v1203
      %v2949 = vpop.f32.mrf.mxu0
      %v2950 = vadd.f32 0.0, %v2949
      %v2951 = vpop.f32.mrf.mxu0
      %v2952 = vadd.f32 0.0, %v2951
      %2953 = vmatmul.bf16.gmra.mxu0 %v1204
      %v2954 = vpop.f32.mrf.mxu0
      %v2955 = vadd.f32 0.0, %v2954
      %v2956 = vpop.f32.mrf.mxu0
      %v2957 = vadd.f32 0.0, %v2956
      %2958 = vmatmul.bf16.gmra.mxu0 %v1205
      %v2959 = vpop.f32.mrf.mxu0
      %v2960 = vadd.f32 0.0, %v2959
      %v2961 = vpop.f32.mrf.mxu0
      %v2962 = vadd.f32 0.0, %v2961
      %2963 = vmatmul.bf16.gmra.mxu0 %v1206
      %v2964 = vpop.f32.mrf.mxu0
      %v2965 = vadd.f32 0.0, %v2964
      %v2966 = vpop.f32.mrf.mxu0
      %v2967 = vadd.f32 0.0, %v2966
      %2968 = vmatmul.bf16.gmra.mxu0 %v1207
      %v2969 = vpop.f32.mrf.mxu0
      %v2970 = vadd.f32 0.0, %v2969
      %v2971 = vpop.f32.mrf.mxu0
      %v2972 = vadd.f32 0.0, %v2971
      %2973 = vmatmul.bf16.gmra.mxu0 %v1208
      %v2974 = vpop.f32.mrf.mxu0
      %v2975 = vadd.f32 0.0, %v2974
      %v2976 = vpop.f32.mrf.mxu0
      %v2977 = vadd.f32 0.0, %v2976
      %2978 = vmatmul.bf16.gmra.mxu0 %v1209
      %v2979 = vpop.f32.mrf.mxu0
      %v2980 = vadd.f32 0.0, %v2979
      %v2981 = vpop.f32.mrf.mxu0
      %v2982 = vadd.f32 0.0, %v2981
      %2983 = vmatmul.bf16.gmra.mxu0 %v1210
      %v2984 = vpop.f32.mrf.mxu0
      %v2985 = vadd.f32 0.0, %v2984
      %v2986 = vpop.f32.mrf.mxu0
      %v2987 = vadd.f32 0.0, %v2986
      %2988 = vmatmul.bf16.gmra.mxu0 %v1211
      %v2989 = vpop.f32.mrf.mxu0
      %v2990 = vadd.f32 0.0, %v2989
      %v2991 = vpop.f32.mrf.mxu0
      %v2992 = vadd.f32 0.0, %v2991
      %2993 = vmatmul.bf16.gmra.mxu0 %v1212
      %v2994 = vpop.f32.mrf.mxu0
      %v2995 = vadd.f32 0.0, %v2994
      %v2996 = vpop.f32.mrf.mxu0
      %v2997 = vadd.f32 0.0, %v2996
      %2998 = vmatmul.bf16.gmra.mxu0 %v1213
      %v2999 = vpop.f32.mrf.mxu0
      %v3000 = vadd.f32 0.0, %v2999
      %v3001 = vpop.f32.mrf.mxu0
      %v3002 = vadd.f32 0.0, %v3001
      %3003 = vmatmul.bf16.gmra.mxu0 %v1214
      %v3004 = vpop.f32.mrf.mxu0
      %v3005 = vadd.f32 0.0, %v3004
      %v3006 = vpop.f32.mrf.mxu0
      %v3007 = vadd.f32 0.0, %v3006
      %3008 = vmatmul.bf16.gmra.mxu0 %v1215
      %v3009 = vpop.f32.mrf.mxu0
      %v3010 = vadd.f32 0.0, %v3009
      %v3011 = vpop.f32.mrf.mxu0
      %v3012 = vadd.f32 0.0, %v3011
      %3013 = vmatmul.bf16.gmra.mxu0 %v1216
      %v3014 = vpop.f32.mrf.mxu0
      %v3015 = vadd.f32 0.0, %v3014
      %v3016 = vpop.f32.mrf.mxu0
      %v3017 = vadd.f32 0.0, %v3016
      %3018 = vmatmul.bf16.gmra.mxu0 %v1217
      %v3019 = vpop.f32.mrf.mxu0
      %v3020 = vadd.f32 0.0, %v3019
      %v3021 = vpop.f32.mrf.mxu0
      %v3022 = vadd.f32 0.0, %v3021
      %3023 = vmatmul.bf16.gmra.mxu0 %v1218
      %v3024 = vpop.f32.mrf.mxu0
      %v3025 = vadd.f32 0.0, %v3024
      %v3026 = vpop.f32.mrf.mxu0
      %v3027 = vadd.f32 0.0, %v3026
      %3028 = vmatmul.bf16.gmra.mxu0 %v1219
      %v3029 = vpop.f32.mrf.mxu0
      %v3030 = vadd.f32 0.0, %v3029
      %v3031 = vpop.f32.mrf.mxu0
      %v3032 = vadd.f32 0.0, %v3031
      %3033 = vmatmul.bf16.gmra.mxu0 %v1220
      %v3034 = vpop.f32.mrf.mxu0
      %v3035 = vadd.f32 0.0, %v3034
      %v3036 = vpop.f32.mrf.mxu0
      %v3037 = vadd.f32 0.0, %v3036
      %3038 = vmatmul.bf16.gmra.mxu0 %v1221
      %v3039 = vpop.f32.mrf.mxu0
      %v3040 = vadd.f32 0.0, %v3039
      %v3041 = vpop.f32.mrf.mxu0
      %v3042 = vadd.f32 0.0, %v3041
      %3043 = vmatmul.bf16.gmra.mxu0 %v1222
      %v3044 = vpop.f32.mrf.mxu0
      %v3045 = vadd.f32 0.0, %v3044
      %v3046 = vpop.f32.mrf.mxu0
      %v3047 = vadd.f32 0.0, %v3046
      %3048 = vmatmul.bf16.gmra.mxu0 %v1223
      %v3049 = vpop.f32.mrf.mxu0
      %v3050 = vadd.f32 0.0, %v3049
      %v3051 = vpop.f32.mrf.mxu0
      %v3052 = vadd.f32 0.0, %v3051
      %3053 = vmatmul.bf16.gmra.mxu0 %v1224
      %v3054 = vpop.f32.mrf.mxu0
      %v3055 = vadd.f32 0.0, %v3054
      %v3056 = vpop.f32.mrf.mxu0
      %v3057 = vadd.f32 0.0, %v3056
      %3058 = vdwg.mxu0
      %3059 = vmatpush.bf16.msra.mxu0 %v2661
      %3060 = vmatpush.bf16.msra.mxu0 %v2660
      %3061 = vmatpush.bf16.msra.mxu0 %v2659
      %3062 = vmatpush.bf16.msra.mxu0 %v2658
      %3063 = vmatpush.bf16.msra.mxu0 %v2657
      %3064 = vmatpush.bf16.msra.mxu0 %v2656
      %3065 = vmatpush.bf16.msra.mxu0 %v2655
      %3066 = vmatpush.bf16.msra.mxu0 %v2654
      %3067 = vmatmul.bf16.gmra.mxu0 %v1241
      %v3068 = vpop.f32.mrf.mxu0
      %v3069 = vadd.f32 %v2800, %v3068
      %v3070 = vpop.f32.mrf.mxu0
      %v3071 = vadd.f32 %v2802, %v3070
      %3072 = vmatmul.bf16.gmra.mxu0 %v1876
      %v3073 = vpop.f32.mrf.mxu0
      %v3074 = vadd.f32 %v2805, %v3073
      %v3075 = vpop.f32.mrf.mxu0
      %v3076 = vadd.f32 %v2807, %v3075
      %3077 = vmatmul.bf16.gmra.mxu0 %v1256
      %v3078 = vpop.f32.mrf.mxu0
      %v3079 = vadd.f32 %v2810, %v3078
      %v3080 = vpop.f32.mrf.mxu0
      %v3081 = vadd.f32 %v2812, %v3080
      %3082 = vmatmul.bf16.gmra.mxu0 %v1877
      %v3083 = vpop.f32.mrf.mxu0
      %v3084 = vadd.f32 %v2815, %v3083
      %v3085 = vpop.f32.mrf.mxu0
      %v3086 = vadd.f32 %v2817, %v3085
      %3087 = vmatmul.bf16.gmra.mxu0 %v1271
      %v3088 = vpop.f32.mrf.mxu0
      %v3089 = vadd.f32 %v2820, %v3088
      %v3090 = vpop.f32.mrf.mxu0
      %v3091 = vadd.f32 %v2822, %v3090
      %3092 = vmatmul.bf16.gmra.mxu0 %v1878
      %v3093 = vpop.f32.mrf.mxu0
      %v3094 = vadd.f32 %v2825, %v3093
      %v3095 = vpop.f32.mrf.mxu0
      %v3096 = vadd.f32 %v2827, %v3095
      %3097 = vmatmul.bf16.gmra.mxu0 %v1286
      %v3098 = vpop.f32.mrf.mxu0
      %v3099 = vadd.f32 %v2830, %v3098
      %v3100 = vpop.f32.mrf.mxu0
      %v3101 = vadd.f32 %v2832, %v3100
      %3102 = vmatmul.bf16.gmra.mxu0 %v1879
      %v3103 = vpop.f32.mrf.mxu0
      %v3104 = vadd.f32 %v2835, %v3103
      %v3105 = vpop.f32.mrf.mxu0
      %v3106 = vadd.f32 %v2837, %v3105
      %3107 = vmatmul.bf16.gmra.mxu0 %v1301
      %v3108 = vpop.f32.mrf.mxu0
      %v3109 = vadd.f32 %v2840, %v3108
      %v3110 = vpop.f32.mrf.mxu0
      %v3111 = vadd.f32 %v2842, %v3110
      %3112 = vmatmul.bf16.gmra.mxu0 %v1880
      %v3113 = vpop.f32.mrf.mxu0
      %v3114 = vadd.f32 %v2845, %v3113
      %v3115 = vpop.f32.mrf.mxu0
      %v3116 = vadd.f32 %v2847, %v3115
      %3117 = vmatmul.bf16.gmra.mxu0 %v1316
      %v3118 = vpop.f32.mrf.mxu0
      %v3119 = vadd.f32 %v2850, %v3118
      %v3120 = vpop.f32.mrf.mxu0
      %v3121 = vadd.f32 %v2852, %v3120
      %3122 = vmatmul.bf16.gmra.mxu0 %v1881
      %v3123 = vpop.f32.mrf.mxu0
      %v3124 = vadd.f32 %v2855, %v3123
      %v3125 = vpop.f32.mrf.mxu0
      %v3126 = vadd.f32 %v2857, %v3125
      %3127 = vmatmul.bf16.gmra.mxu0 %v1331
      %v3128 = vpop.f32.mrf.mxu0
      %v3129 = vadd.f32 %v2860, %v3128
      %v3130 = vpop.f32.mrf.mxu0
      %v3131 = vadd.f32 %v2862, %v3130
      %3132 = vmatmul.bf16.gmra.mxu0 %v1882
      %v3133 = vpop.f32.mrf.mxu0
      %v3134 = vadd.f32 %v2865, %v3133
      %v3135 = vpop.f32.mrf.mxu0
      %v3136 = vadd.f32 %v2867, %v3135
      %3137 = vmatmul.bf16.gmra.mxu0 %v1346
      %v3138 = vpop.f32.mrf.mxu0
      %v3139 = vadd.f32 %v2870, %v3138
      %v3140 = vpop.f32.mrf.mxu0
      %v3141 = vadd.f32 %v2872, %v3140
      %3142 = vmatmul.bf16.gmra.mxu0 %v1883
      %v3143 = vpop.f32.mrf.mxu0
      %v3144 = vadd.f32 %v2875, %v3143
      %v3145 = vpop.f32.mrf.mxu0
      %v3146 = vadd.f32 %v2877, %v3145
      %3147 = vmatmul.bf16.gmra.mxu0 %v1361
      %v3148 = vpop.f32.mrf.mxu0
      %v3149 = vadd.f32 %v2880, %v3148
      %v3150 = vpop.f32.mrf.mxu0
      %v3151 = vadd.f32 %v2882, %v3150
      %3152 = vmatmul.bf16.gmra.mxu0 %v1884
      %v3153 = vpop.f32.mrf.mxu0
      %v3154 = vadd.f32 %v2885, %v3153
      %v3155 = vpop.f32.mrf.mxu0
      %v3156 = vadd.f32 %v2887, %v3155
      %3157 = vmatmul.bf16.gmra.mxu0 %v1376
      %v3158 = vpop.f32.mrf.mxu0
      %v3159 = vadd.f32 %v2890, %v3158
      %v3160 = vpop.f32.mrf.mxu0
      %v3161 = vadd.f32 %v2892, %v3160
      %3162 = vmatmul.bf16.gmra.mxu0 %v1885
      %v3163 = vpop.f32.mrf.mxu0
      %v3164 = vadd.f32 %v2895, %v3163
      %v3165 = vpop.f32.mrf.mxu0
      %v3166 = vadd.f32 %v2897, %v3165
      %3167 = vmatmul.bf16.gmra.mxu0 %v1391
      %v3168 = vpop.f32.mrf.mxu0
      %v3169 = vadd.f32 %v2900, %v3168
      %v3170 = vpop.f32.mrf.mxu0
      %v3171 = vadd.f32 %v2902, %v3170
      %3172 = vmatmul.bf16.gmra.mxu0 %v1886
      %v3173 = vpop.f32.mrf.mxu0
      %v3174 = vadd.f32 %v2905, %v3173
      %v3175 = vpop.f32.mrf.mxu0
      %v3176 = vadd.f32 %v2907, %v3175
      %3177 = vmatmul.bf16.gmra.mxu0 %v1406
      %v3178 = vpop.f32.mrf.mxu0
      %v3179 = vadd.f32 %v2910, %v3178
      %v3180 = vpop.f32.mrf.mxu0
      %v3181 = vadd.f32 %v2912, %v3180
      %3182 = vmatmul.bf16.gmra.mxu0 %v1887
      %v3183 = vpop.f32.mrf.mxu0
      %v3184 = vadd.f32 %v2915, %v3183
      %v3185 = vpop.f32.mrf.mxu0
      %v3186 = vadd.f32 %v2917, %v3185
      %3187 = vmatmul.bf16.gmra.mxu0 %v1421
      %v3188 = vpop.f32.mrf.mxu0
      %v3189 = vadd.f32 %v2920, %v3188
      %v3190 = vpop.f32.mrf.mxu0
      %v3191 = vadd.f32 %v2922, %v3190
      %3192 = vmatmul.bf16.gmra.mxu0 %v1888
      %v3193 = vpop.f32.mrf.mxu0
      %v3194 = vadd.f32 %v2925, %v3193
      %v3195 = vpop.f32.mrf.mxu0
      %v3196 = vadd.f32 %v2927, %v3195
      %3197 = vmatmul.bf16.gmra.mxu0 %v1436
      %v3198 = vpop.f32.mrf.mxu0
      %v3199 = vadd.f32 %v2930, %v3198
      %v3200 = vpop.f32.mrf.mxu0
      %v3201 = vadd.f32 %v2932, %v3200
      %3202 = vmatmul.bf16.gmra.mxu0 %v1889
      %v3203 = vpop.f32.mrf.mxu0
      %v3204 = vadd.f32 %v2935, %v3203
      %v3205 = vpop.f32.mrf.mxu0
      %v3206 = vadd.f32 %v2937, %v3205
      %3207 = vmatmul.bf16.gmra.mxu0 %v1451
      %v3208 = vpop.f32.mrf.mxu0
      %v3209 = vadd.f32 %v2940, %v3208
      %v3210 = vpop.f32.mrf.mxu0
      %v3211 = vadd.f32 %v2942, %v3210
      %3212 = vmatmul.bf16.gmra.mxu0 %v1890
      %v3213 = vpop.f32.mrf.mxu0
      %v3214 = vadd.f32 %v2945, %v3213
      %v3215 = vpop.f32.mrf.mxu0
      %v3216 = vadd.f32 %v2947, %v3215
      %3217 = vmatmul.bf16.gmra.mxu0 %v1466
      %v3218 = vpop.f32.mrf.mxu0
      %v3219 = vadd.f32 %v2950, %v3218
      %v3220 = vpop.f32.mrf.mxu0
      %v3221 = vadd.f32 %v2952, %v3220
      %3222 = vmatmul.bf16.gmra.mxu0 %v1891
      %v3223 = vpop.f32.mrf.mxu0
      %v3224 = vadd.f32 %v2955, %v3223
      %v3225 = vpop.f32.mrf.mxu0
      %v3226 = vadd.f32 %v2957, %v3225
      %3227 = vmatmul.bf16.gmra.mxu0 %v1481
      %v3228 = vpop.f32.mrf.mxu0
      %v3229 = vadd.f32 %v2960, %v3228
      %v3230 = vpop.f32.mrf.mxu0
      %v3231 = vadd.f32 %v2962, %v3230
      %3232 = vmatmul.bf16.gmra.mxu0 %v1892
      %v3233 = vpop.f32.mrf.mxu0
      %v3234 = vadd.f32 %v2965, %v3233
      %v3235 = vpop.f32.mrf.mxu0
      %v3236 = vadd.f32 %v2967, %v3235
      %3237 = vmatmul.bf16.gmra.mxu0 %v1496
      %v3238 = vpop.f32.mrf.mxu0
      %v3239 = vadd.f32 %v2970, %v3238
      %v3240 = vpop.f32.mrf.mxu0
      %v3241 = vadd.f32 %v2972, %v3240
      %3242 = vmatmul.bf16.gmra.mxu0 %v1893
      %v3243 = vpop.f32.mrf.mxu0
      %v3244 = vadd.f32 %v2975, %v3243
      %v3245 = vpop.f32.mrf.mxu0
      %v3246 = vadd.f32 %v2977, %v3245
      %3247 = vmatmul.bf16.gmra.mxu0 %v1511
      %v3248 = vpop.f32.mrf.mxu0
      %v3249 = vadd.f32 %v2980, %v3248
      %v3250 = vpop.f32.mrf.mxu0
      %v3251 = vadd.f32 %v2982, %v3250
      %3252 = vmatmul.bf16.gmra.mxu0 %v1894
      %v3253 = vpop.f32.mrf.mxu0
      %v3254 = vadd.f32 %v2985, %v3253
      %v3255 = vpop.f32.mrf.mxu0
      %v3256 = vadd.f32 %v2987, %v3255
      %3257 = vmatmul.bf16.gmra.mxu0 %v1526
      %v3258 = vpop.f32.mrf.mxu0
      %v3259 = vadd.f32 %v2990, %v3258
      %v3260 = vpop.f32.mrf.mxu0
      %v3261 = vadd.f32 %v2992, %v3260
      %3262 = vmatmul.bf16.gmra.mxu0 %v1895
      %v3263 = vpop.f32.mrf.mxu0
      %v3264 = vadd.f32 %v2995, %v3263
      %v3265 = vpop.f32.mrf.mxu0
      %v3266 = vadd.f32 %v2997, %v3265
      %3267 = vmatmul.bf16.gmra.mxu0 %v1541
      %v3268 = vpop.f32.mrf.mxu0
      %v3269 = vadd.f32 %v3000, %v3268
      %v3270 = vpop.f32.mrf.mxu0
      %v3271 = vadd.f32 %v3002, %v3270
      %3272 = vmatmul.bf16.gmra.mxu0 %v1896
      %v3273 = vpop.f32.mrf.mxu0
      %v3274 = vadd.f32 %v3005, %v3273
      %v3275 = vpop.f32.mrf.mxu0
      %v3276 = vadd.f32 %v3007, %v3275
      %3277 = vmatmul.bf16.gmra.mxu0 %v1556
      %v3278 = vpop.f32.mrf.mxu0
      %v3279 = vadd.f32 %v3010, %v3278
      %v3280 = vpop.f32.mrf.mxu0
      %v3281 = vadd.f32 %v3012, %v3280
      %3282 = vmatmul.bf16.gmra.mxu0 %v1897
      %v3283 = vpop.f32.mrf.mxu0
      %v3284 = vadd.f32 %v3015, %v3283
      %v3285 = vpop.f32.mrf.mxu0
      %v3286 = vadd.f32 %v3017, %v3285
      %3287 = vmatmul.bf16.gmra.mxu0 %v1571
      %v3288 = vpop.f32.mrf.mxu0
      %v3289 = vadd.f32 %v3020, %v3288
      %v3290 = vpop.f32.mrf.mxu0
      %v3291 = vadd.f32 %v3022, %v3290
      %3292 = vmatmul.bf16.gmra.mxu0 %v1898
      %v3293 = vpop.f32.mrf.mxu0
      %v3294 = vadd.f32 %v3025, %v3293
      %v3295 = vpop.f32.mrf.mxu0
      %v3296 = vadd.f32 %v3027, %v3295
      %3297 = vmatmul.bf16.gmra.mxu0 %v1586
      %v3298 = vpop.f32.mrf.mxu0
      %v3299 = vadd.f32 %v3030, %v3298
      %v3300 = vpop.f32.mrf.mxu0
      %v3301 = vadd.f32 %v3032, %v3300
      %3302 = vmatmul.bf16.gmra.mxu0 %v1899
      %v3303 = vpop.f32.mrf.mxu0
      %v3304 = vadd.f32 %v3035, %v3303
      %v3305 = vpop.f32.mrf.mxu0
      %v3306 = vadd.f32 %v3037, %v3305
      %3307 = vmatmul.bf16.gmra.mxu0 %v1601
      %v3308 = vpop.f32.mrf.mxu0
      %v3309 = vadd.f32 %v3040, %v3308
      %v3310 = vpop.f32.mrf.mxu0
      %v3311 = vadd.f32 %v3042, %v3310
      %3312 = vmatmul.bf16.gmra.mxu0 %v1900
      %v3313 = vpop.f32.mrf.mxu0
      %v3314 = vadd.f32 %v3045, %v3313
      %v3315 = vpop.f32.mrf.mxu0
      %v3316 = vadd.f32 %v3047, %v3315
      %3317 = vmatmul.bf16.gmra.mxu0 %v1616
      %v3318 = vpop.f32.mrf.mxu0
      %v3319 = vadd.f32 %v3050, %v3318
      %v3320 = vpop.f32.mrf.mxu0
      %v3321 = vadd.f32 %v3052, %v3320
      %3322 = vmatmul.bf16.gmra.mxu0 %v1901
      %v3323 = vpop.f32.mrf.mxu0
      %v3324 = vadd.f32 %v3055, %v3323
      %v3325 = vpop.f32.mrf.mxu0
      %v3326 = vadd.f32 %v3057, %v3325
      %3327 = vdwg.mxu0
      %3328 = vmatpush.bf16.msra.mxu0 %v2669
      %3329 = vmatpush.bf16.msra.mxu0 %v2668
      %3330 = vmatpush.bf16.msra.mxu0 %v2667
      %3331 = vmatpush.bf16.msra.mxu0 %v2666
      %3332 = vmatpush.bf16.msra.mxu0 %v2665
      %3333 = vmatpush.bf16.msra.mxu0 %v2664
      %3334 = vmatpush.bf16.msra.mxu0 %v2663
      %3335 = vmatpush.bf16.msra.mxu0 %v2662
      %3336 = vmatmul.bf16.gmra.mxu0 %v1907
      %v3337 = vpop.f32.mrf.mxu0
      %v3338 = vadd.f32 %v3069, %v3337
      %v3339 = vpop.f32.mrf.mxu0
      %v3340 = vadd.f32 %v3071, %v3339
      %3341 = vmatmul.bf16.gmra.mxu0 %v2048
      %v3342 = vpop.f32.mrf.mxu0
      %v3343 = vadd.f32 %v3074, %v3342
      %v3344 = vpop.f32.mrf.mxu0
      %v3345 = vadd.f32 %v3076, %v3344
      %3346 = vmatmul.bf16.gmra.mxu0 %v1910
      %v3347 = vpop.f32.mrf.mxu0
      %v3348 = vadd.f32 %v3079, %v3347
      %v3349 = vpop.f32.mrf.mxu0
      %v3350 = vadd.f32 %v3081, %v3349
      %3351 = vmatmul.bf16.gmra.mxu0 %v2052
      %v3352 = vpop.f32.mrf.mxu0
      %v3353 = vadd.f32 %v3084, %v3352
      %v3354 = vpop.f32.mrf.mxu0
      %v3355 = vadd.f32 %v3086, %v3354
      %3356 = vmatmul.bf16.gmra.mxu0 %v1913
      %v3357 = vpop.f32.mrf.mxu0
      %v3358 = vadd.f32 %v3089, %v3357
      %v3359 = vpop.f32.mrf.mxu0
      %v3360 = vadd.f32 %v3091, %v3359
      %3361 = vmatmul.bf16.gmra.mxu0 %v2056
      %v3362 = vpop.f32.mrf.mxu0
      %v3363 = vadd.f32 %v3094, %v3362
      %v3364 = vpop.f32.mrf.mxu0
      %v3365 = vadd.f32 %v3096, %v3364
      %3366 = vmatmul.bf16.gmra.mxu0 %v1916
      %v3367 = vpop.f32.mrf.mxu0
      %v3368 = vadd.f32 %v3099, %v3367
      %v3369 = vpop.f32.mrf.mxu0
      %v3370 = vadd.f32 %v3101, %v3369
      %3371 = vmatmul.bf16.gmra.mxu0 %v2060
      %v3372 = vpop.f32.mrf.mxu0
      %v3373 = vadd.f32 %v3104, %v3372
      %v3374 = vpop.f32.mrf.mxu0
      %v3375 = vadd.f32 %v3106, %v3374
      %3376 = vmatmul.bf16.gmra.mxu0 %v1919
      %v3377 = vpop.f32.mrf.mxu0
      %v3378 = vadd.f32 %v3109, %v3377
      %v3379 = vpop.f32.mrf.mxu0
      %v3380 = vadd.f32 %v3111, %v3379
      %3381 = vmatmul.bf16.gmra.mxu0 %v2064
      %v3382 = vpop.f32.mrf.mxu0
      %v3383 = vadd.f32 %v3114, %v3382
      %v3384 = vpop.f32.mrf.mxu0
      %v3385 = vadd.f32 %v3116, %v3384
      %3386 = vmatmul.bf16.gmra.mxu0 %v1922
      %v3387 = vpop.f32.mrf.mxu0
      %v3388 = vadd.f32 %v3119, %v3387
      %v3389 = vpop.f32.mrf.mxu0
      %v3390 = vadd.f32 %v3121, %v3389
      %3391 = vmatmul.bf16.gmra.mxu0 %v2068
      %v3392 = vpop.f32.mrf.mxu0
      %v3393 = vadd.f32 %v3124, %v3392
      %v3394 = vpop.f32.mrf.mxu0
      %v3395 = vadd.f32 %v3126, %v3394
      %3396 = vmatmul.bf16.gmra.mxu0 %v1925
      %v3397 = vpop.f32.mrf.mxu0
      %v3398 = vadd.f32 %v3129, %v3397
      %v3399 = vpop.f32.mrf.mxu0
      %v3400 = vadd.f32 %v3131, %v3399
      %3401 = vmatmul.bf16.gmra.mxu0 %v2072
      %v3402 = vpop.f32.mrf.mxu0
      %v3403 = vadd.f32 %v3134, %v3402
      %v3404 = vpop.f32.mrf.mxu0
      %v3405 = vadd.f32 %v3136, %v3404
      %3406 = vmatmul.bf16.gmra.mxu0 %v1928
      %v3407 = vpop.f32.mrf.mxu0
      %v3408 = vadd.f32 %v3139, %v3407
      %v3409 = vpop.f32.mrf.mxu0
      %v3410 = vadd.f32 %v3141, %v3409
      %3411 = vmatmul.bf16.gmra.mxu0 %v2076
      %v3412 = vpop.f32.mrf.mxu0
      %v3413 = vadd.f32 %v3144, %v3412
      %v3414 = vpop.f32.mrf.mxu0
      %v3415 = vadd.f32 %v3146, %v3414
      %3416 = vmatmul.bf16.gmra.mxu0 %v1931
      %v3417 = vpop.f32.mrf.mxu0
      %v3418 = vadd.f32 %v3149, %v3417
      %v3419 = vpop.f32.mrf.mxu0
      %v3420 = vadd.f32 %v3151, %v3419
      %3421 = vmatmul.bf16.gmra.mxu0 %v2080
      %v3422 = vpop.f32.mrf.mxu0
      %v3423 = vadd.f32 %v3154, %v3422
      %v3424 = vpop.f32.mrf.mxu0
      %v3425 = vadd.f32 %v3156, %v3424
      %3426 = vmatmul.bf16.gmra.mxu0 %v1934
      %v3427 = vpop.f32.mrf.mxu0
      %v3428 = vadd.f32 %v3159, %v3427
      %v3429 = vpop.f32.mrf.mxu0
      %v3430 = vadd.f32 %v3161, %v3429
      %3431 = vmatmul.bf16.gmra.mxu0 %v2084
      %v3432 = vpop.f32.mrf.mxu0
      %v3433 = vadd.f32 %v3164, %v3432
      %v3434 = vpop.f32.mrf.mxu0
      %v3435 = vadd.f32 %v3166, %v3434
      %3436 = vmatmul.bf16.gmra.mxu0 %v1937
      %v3437 = vpop.f32.mrf.mxu0
      %v3438 = vadd.f32 %v3169, %v3437
      %v3439 = vpop.f32.mrf.mxu0
      %v3440 = vadd.f32 %v3171, %v3439
      %3441 = vmatmul.bf16.gmra.mxu0 %v2088
      %v3442 = vpop.f32.mrf.mxu0
      %v3443 = vadd.f32 %v3174, %v3442
      %v3444 = vpop.f32.mrf.mxu0
      %v3445 = vadd.f32 %v3176, %v3444
      %3446 = vmatmul.bf16.gmra.mxu0 %v1940
      %v3447 = vpop.f32.mrf.mxu0
      %v3448 = vadd.f32 %v3179, %v3447
      %v3449 = vpop.f32.mrf.mxu0
      %v3450 = vadd.f32 %v3181, %v3449
      %3451 = vmatmul.bf16.gmra.mxu0 %v2092
      %v3452 = vpop.f32.mrf.mxu0
      %v3453 = vadd.f32 %v3184, %v3452
      %v3454 = vpop.f32.mrf.mxu0
      %v3455 = vadd.f32 %v3186, %v3454
      %3456 = vmatmul.bf16.gmra.mxu0 %v1943
      %v3457 = vpop.f32.mrf.mxu0
      %v3458 = vadd.f32 %v3189, %v3457
      %v3459 = vpop.f32.mrf.mxu0
      %v3460 = vadd.f32 %v3191, %v3459
      %3461 = vmatmul.bf16.gmra.mxu0 %v2096
      %v3462 = vpop.f32.mrf.mxu0
      %v3463 = vadd.f32 %v3194, %v3462
      %v3464 = vpop.f32.mrf.mxu0
      %v3465 = vadd.f32 %v3196, %v3464
      %3466 = vmatmul.bf16.gmra.mxu0 %v1946
      %v3467 = vpop.f32.mrf.mxu0
      %v3468 = vadd.f32 %v3199, %v3467
      %v3469 = vpop.f32.mrf.mxu0
      %v3470 = vadd.f32 %v3201, %v3469
      %3471 = vmatmul.bf16.gmra.mxu0 %v2100
      %v3472 = vpop.f32.mrf.mxu0
      %v3473 = vadd.f32 %v3204, %v3472
      %v3474 = vpop.f32.mrf.mxu0
      %v3475 = vadd.f32 %v3206, %v3474
      %3476 = vmatmul.bf16.gmra.mxu0 %v1949
      %v3477 = vpop.f32.mrf.mxu0
      %v3478 = vadd.f32 %v3209, %v3477
      %v3479 = vpop.f32.mrf.mxu0
      %v3480 = vadd.f32 %v3211, %v3479
      %3481 = vmatmul.bf16.gmra.mxu0 %v2104
      %v3482 = vpop.f32.mrf.mxu0
      %v3483 = vadd.f32 %v3214, %v3482
      %v3484 = vpop.f32.mrf.mxu0
      %v3485 = vadd.f32 %v3216, %v3484
      %3486 = vmatmul.bf16.gmra.mxu0 %v1952
      %v3487 = vpop.f32.mrf.mxu0
      %v3488 = vadd.f32 %v3219, %v3487
      %v3489 = vpop.f32.mrf.mxu0
      %v3490 = vadd.f32 %v3221, %v3489
      %3491 = vmatmul.bf16.gmra.mxu0 %v2108
      %v3492 = vpop.f32.mrf.mxu0
      %v3493 = vadd.f32 %v3224, %v3492
      %v3494 = vpop.f32.mrf.mxu0
      %v3495 = vadd.f32 %v3226, %v3494
      %3496 = vmatmul.bf16.gmra.mxu0 %v1955
      %v3497 = vpop.f32.mrf.mxu0
      %v3498 = vadd.f32 %v3229, %v3497
      %v3499 = vpop.f32.mrf.mxu0
      %v3500 = vadd.f32 %v3231, %v3499
      %3501 = vmatmul.bf16.gmra.mxu0 %v2112
      %v3502 = vpop.f32.mrf.mxu0
      %v3503 = vadd.f32 %v3234, %v3502
      %v3504 = vpop.f32.mrf.mxu0
      %v3505 = vadd.f32 %v3236, %v3504
      %3506 = vmatmul.bf16.gmra.mxu0 %v1958
      %v3507 = vpop.f32.mrf.mxu0
      %v3508 = vadd.f32 %v3239, %v3507
      %v3509 = vpop.f32.mrf.mxu0
      %v3510 = vadd.f32 %v3241, %v3509
      %3511 = vmatmul.bf16.gmra.mxu0 %v2116
      %v3512 = vpop.f32.mrf.mxu0
      %v3513 = vadd.f32 %v3244, %v3512
      %v3514 = vpop.f32.mrf.mxu0
      %v3515 = vadd.f32 %v3246, %v3514
      %3516 = vmatmul.bf16.gmra.mxu0 %v1961
      %v3517 = vpop.f32.mrf.mxu0
      %v3518 = vadd.f32 %v3249, %v3517
      %v3519 = vpop.f32.mrf.mxu0
      %v3520 = vadd.f32 %v3251, %v3519
      %3521 = vmatmul.bf16.gmra.mxu0 %v2120
      %v3522 = vpop.f32.mrf.mxu0
      %v3523 = vadd.f32 %v3254, %v3522
      %v3524 = vpop.f32.mrf.mxu0
      %v3525 = vadd.f32 %v3256, %v3524
      %3526 = vmatmul.bf16.gmra.mxu0 %v1964
      %v3527 = vpop.f32.mrf.mxu0
      %v3528 = vadd.f32 %v3259, %v3527
      %v3529 = vpop.f32.mrf.mxu0
      %v3530 = vadd.f32 %v3261, %v3529
      %3531 = vmatmul.bf16.gmra.mxu0 %v2124
      %v3532 = vpop.f32.mrf.mxu0
      %v3533 = vadd.f32 %v3264, %v3532
      %v3534 = vpop.f32.mrf.mxu0
      %v3535 = vadd.f32 %v3266, %v3534
      %3536 = vmatmul.bf16.gmra.mxu0 %v1967
      %v3537 = vpop.f32.mrf.mxu0
      %v3538 = vadd.f32 %v3269, %v3537
      %v3539 = vpop.f32.mrf.mxu0
      %v3540 = vadd.f32 %v3271, %v3539
      %3541 = vmatmul.bf16.gmra.mxu0 %v2128
      %v3542 = vpop.f32.mrf.mxu0
      %v3543 = vadd.f32 %v3274, %v3542
      %v3544 = vpop.f32.mrf.mxu0
      %v3545 = vadd.f32 %v3276, %v3544
      %3546 = vmatmul.bf16.gmra.mxu0 %v1970
      %v3547 = vpop.f32.mrf.mxu0
      %v3548 = vadd.f32 %v3279, %v3547
      %v3549 = vpop.f32.mrf.mxu0
      %v3550 = vadd.f32 %v3281, %v3549
      %3551 = vmatmul.bf16.gmra.mxu0 %v2132
      %v3552 = vpop.f32.mrf.mxu0
      %v3553 = vadd.f32 %v3284, %v3552
      %v3554 = vpop.f32.mrf.mxu0
      %v3555 = vadd.f32 %v3286, %v3554
      %3556 = vmatmul.bf16.gmra.mxu0 %v1973
      %v3557 = vpop.f32.mrf.mxu0
      %v3558 = vadd.f32 %v3289, %v3557
      %v3559 = vpop.f32.mrf.mxu0
      %v3560 = vadd.f32 %v3291, %v3559
      %3561 = vmatmul.bf16.gmra.mxu0 %v2136
      %v3562 = vpop.f32.mrf.mxu0
      %v3563 = vadd.f32 %v3294, %v3562
      %v3564 = vpop.f32.mrf.mxu0
      %v3565 = vadd.f32 %v3296, %v3564
      %3566 = vmatmul.bf16.gmra.mxu0 %v1976
      %v3567 = vpop.f32.mrf.mxu0
      %v3568 = vadd.f32 %v3299, %v3567
      %v3569 = vpop.f32.mrf.mxu0
      %v3570 = vadd.f32 %v3301, %v3569
      %3571 = vmatmul.bf16.gmra.mxu0 %v2140
      %v3572 = vpop.f32.mrf.mxu0
      %v3573 = vadd.f32 %v3304, %v3572
      %v3574 = vpop.f32.mrf.mxu0
      %v3575 = vadd.f32 %v3306, %v3574
      %3576 = vmatmul.bf16.gmra.mxu0 %v1979
      %v3577 = vpop.f32.mrf.mxu0
      %v3578 = vadd.f32 %v3309, %v3577
      %v3579 = vpop.f32.mrf.mxu0
      %v3580 = vadd.f32 %v3311, %v3579
      %3581 = vmatmul.bf16.gmra.mxu0 %v2144
      %v3582 = vpop.f32.mrf.mxu0
      %v3583 = vadd.f32 %v3314, %v3582
      %v3584 = vpop.f32.mrf.mxu0
      %v3585 = vadd.f32 %v3316, %v3584
      %3586 = vmatmul.bf16.gmra.mxu0 %v1982
      %v3587 = vpop.f32.mrf.mxu0
      %v3588 = vadd.f32 %v3319, %v3587
      %v3589 = vpop.f32.mrf.mxu0
      %v3590 = vadd.f32 %v3321, %v3589
      %3591 = vmatmul.bf16.gmra.mxu0 %v2148
      %v3592 = vpop.f32.mrf.mxu0
      %v3593 = vadd.f32 %v3324, %v3592
      %v3594 = vpop.f32.mrf.mxu0
      %v3595 = vadd.f32 %v3326, %v3594
      %3596 = vdwg.mxu0
      %3597 = vmatpush.bf16.msra.mxu0 %v2677
      %3598 = vmatpush.bf16.msra.mxu0 %v2676
      %3599 = vmatpush.bf16.msra.mxu0 %v2675
      %3600 = vmatpush.bf16.msra.mxu0 %v2674
      %3601 = vmatpush.bf16.msra.mxu0 %v2673
      %3602 = vmatpush.bf16.msra.mxu0 %v2672
      %3603 = vmatpush.bf16.msra.mxu0 %v2671
      %3604 = vmatpush.bf16.msra.mxu0 %v2670
      %3605 = vmatmul.bf16.gmra.mxu0 %v1175
      %v3606 = vpop.f32.mrf.mxu0
      %v3607 = vadd.f32 %v3338, %v3606
      %v3608 = vpop.f32.mrf.mxu0
      %v3609 = vadd.f32 %v3340, %v3608
      %3610 = vmatmul.bf16.gmra.mxu0 %v1176
      %v3611 = vpop.f32.mrf.mxu0
      %v3612 = vadd.f32 %v3343, %v3611
      %v3613 = vpop.f32.mrf.mxu0
      %v3614 = vadd.f32 %v3345, %v3613
      %3615 = vmatmul.bf16.gmra.mxu0 %v1177
      %v3616 = vpop.f32.mrf.mxu0
      %v3617 = vadd.f32 %v3348, %v3616
      %v3618 = vpop.f32.mrf.mxu0
      %v3619 = vadd.f32 %v3350, %v3618
      %3620 = vmatmul.bf16.gmra.mxu0 %v1178
      %v3621 = vpop.f32.mrf.mxu0
      %v3622 = vadd.f32 %v3353, %v3621
      %v3623 = vpop.f32.mrf.mxu0
      %v3624 = vadd.f32 %v3355, %v3623
      %3625 = vmatmul.bf16.gmra.mxu0 %v1179
      %v3626 = vpop.f32.mrf.mxu0
      %v3627 = vadd.f32 %v3358, %v3626
      %v3628 = vpop.f32.mrf.mxu0
      %v3629 = vadd.f32 %v3360, %v3628
      %3630 = vmatmul.bf16.gmra.mxu0 %v1180
      %v3631 = vpop.f32.mrf.mxu0
      %v3632 = vadd.f32 %v3363, %v3631
      %v3633 = vpop.f32.mrf.mxu0
      %v3634 = vadd.f32 %v3365, %v3633
      %3635 = vmatmul.bf16.gmra.mxu0 %v1181
      %v3636 = vpop.f32.mrf.mxu0
      %v3637 = vadd.f32 %v3368, %v3636
      %v3638 = vpop.f32.mrf.mxu0
      %v3639 = vadd.f32 %v3370, %v3638
      %3640 = vmatmul.bf16.gmra.mxu0 %v1182
      %v3641 = vpop.f32.mrf.mxu0
      %v3642 = vadd.f32 %v3373, %v3641
      %v3643 = vpop.f32.mrf.mxu0
      %v3644 = vadd.f32 %v3375, %v3643
      %3645 = vmatmul.bf16.gmra.mxu0 %v1183
      %v3646 = vpop.f32.mrf.mxu0
      %v3647 = vadd.f32 %v3378, %v3646
      %v3648 = vpop.f32.mrf.mxu0
      %v3649 = vadd.f32 %v3380, %v3648
      %3650 = vmatmul.bf16.gmra.mxu0 %v1184
      %v3651 = vpop.f32.mrf.mxu0
      %v3652 = vadd.f32 %v3383, %v3651
      %v3653 = vpop.f32.mrf.mxu0
      %v3654 = vadd.f32 %v3385, %v3653
      %3655 = vmatmul.bf16.gmra.mxu0 %v1185
      %v3656 = vpop.f32.mrf.mxu0
      %v3657 = vadd.f32 %v3388, %v3656
      %v3658 = vpop.f32.mrf.mxu0
      %v3659 = vadd.f32 %v3390, %v3658
      %3660 = vmatmul.bf16.gmra.mxu0 %v1186
      %v3661 = vpop.f32.mrf.mxu0
      %v3662 = vadd.f32 %v3393, %v3661
      %v3663 = vpop.f32.mrf.mxu0
      %v3664 = vadd.f32 %v3395, %v3663
      %3665 = vmatmul.bf16.gmra.mxu0 %v1187
      %v3666 = vpop.f32.mrf.mxu0
      %v3667 = vadd.f32 %v3398, %v3666
      %v3668 = vpop.f32.mrf.mxu0
      %v3669 = vadd.f32 %v3400, %v3668
      %3670 = vmatmul.bf16.gmra.mxu0 %v1188
      %v3671 = vpop.f32.mrf.mxu0
      %v3672 = vadd.f32 %v3403, %v3671
      %v3673 = vpop.f32.mrf.mxu0
      %v3674 = vadd.f32 %v3405, %v3673
      %3675 = vmatmul.bf16.gmra.mxu0 %v1189
      %v3676 = vpop.f32.mrf.mxu0
      %v3677 = vadd.f32 %v3408, %v3676
      %v3678 = vpop.f32.mrf.mxu0
      %v3679 = vadd.f32 %v3410, %v3678
      %3680 = vmatmul.bf16.gmra.mxu0 %v1190
      %v3681 = vpop.f32.mrf.mxu0
      %v3682 = vadd.f32 %v3413, %v3681
      %v3683 = vpop.f32.mrf.mxu0
      %v3684 = vadd.f32 %v3415, %v3683
      %3685 = vmatmul.bf16.gmra.mxu0 %v1191
      %v3686 = vpop.f32.mrf.mxu0
      %v3687 = vadd.f32 %v3418, %v3686
      %v3688 = vpop.f32.mrf.mxu0
      %v3689 = vadd.f32 %v3420, %v3688
      %3690 = vmatmul.bf16.gmra.mxu0 %v1192
      %v3691 = vpop.f32.mrf.mxu0
      %v3692 = vadd.f32 %v3423, %v3691
      %v3693 = vpop.f32.mrf.mxu0
      %v3694 = vadd.f32 %v3425, %v3693
      %3695 = vmatmul.bf16.gmra.mxu0 %v1193
      %v3696 = vpop.f32.mrf.mxu0
      %v3697 = vadd.f32 %v3428, %v3696
      %v3698 = vpop.f32.mrf.mxu0
      %v3699 = vadd.f32 %v3430, %v3698
      %3700 = vmatmul.bf16.gmra.mxu0 %v1194
      %v3701 = vpop.f32.mrf.mxu0
      %v3702 = vadd.f32 %v3433, %v3701
      %v3703 = vpop.f32.mrf.mxu0
      %v3704 = vadd.f32 %v3435, %v3703
      %3705 = vmatmul.bf16.gmra.mxu0 %v1195
      %v3706 = vpop.f32.mrf.mxu0
      %v3707 = vadd.f32 %v3438, %v3706
      %v3708 = vpop.f32.mrf.mxu0
      %v3709 = vadd.f32 %v3440, %v3708
      %3710 = vmatmul.bf16.gmra.mxu0 %v1196
      %v3711 = vpop.f32.mrf.mxu0
      %v3712 = vadd.f32 %v3443, %v3711
      %v3713 = vpop.f32.mrf.mxu0
      %v3714 = vadd.f32 %v3445, %v3713
      %3715 = vmatmul.bf16.gmra.mxu0 %v1197
      %v3716 = vpop.f32.mrf.mxu0
      %v3717 = vadd.f32 %v3448, %v3716
      %v3718 = vpop.f32.mrf.mxu0
      %v3719 = vadd.f32 %v3450, %v3718
      %3720 = vmatmul.bf16.gmra.mxu0 %v1198
      %v3721 = vpop.f32.mrf.mxu0
      %v3722 = vadd.f32 %v3453, %v3721
      %v3723 = vpop.f32.mrf.mxu0
      %v3724 = vadd.f32 %v3455, %v3723
      %3725 = vmatmul.bf16.gmra.mxu0 %v1199
      %v3726 = vpop.f32.mrf.mxu0
      %v3727 = vadd.f32 %v3458, %v3726
      %v3728 = vpop.f32.mrf.mxu0
      %v3729 = vadd.f32 %v3460, %v3728
      %3730 = vmatmul.bf16.gmra.mxu0 %v1200
      %v3731 = vpop.f32.mrf.mxu0
      %v3732 = vadd.f32 %v3463, %v3731
      %v3733 = vpop.f32.mrf.mxu0
      %v3734 = vadd.f32 %v3465, %v3733
      %3735 = vmatmul.bf16.gmra.mxu0 %v1201
      %v3736 = vpop.f32.mrf.mxu0
      %v3737 = vadd.f32 %v3468, %v3736
      %v3738 = vpop.f32.mrf.mxu0
      %v3739 = vadd.f32 %v3470, %v3738
      %3740 = vmatmul.bf16.gmra.mxu0 %v1202
      %v3741 = vpop.f32.mrf.mxu0
      %v3742 = vadd.f32 %v3473, %v3741
      %v3743 = vpop.f32.mrf.mxu0
      %v3744 = vadd.f32 %v3475, %v3743
      %3745 = vmatmul.bf16.gmra.mxu0 %v1203
      %v3746 = vpop.f32.mrf.mxu0
      %v3747 = vadd.f32 %v3478, %v3746
      %v3748 = vpop.f32.mrf.mxu0
      %v3749 = vadd.f32 %v3480, %v3748
      %3750 = vmatmul.bf16.gmra.mxu0 %v1204
      %v3751 = vpop.f32.mrf.mxu0
      %v3752 = vadd.f32 %v3483, %v3751
      %v3753 = vpop.f32.mrf.mxu0
      %v3754 = vadd.f32 %v3485, %v3753
      %3755 = vmatmul.bf16.gmra.mxu0 %v1205
      %v3756 = vpop.f32.mrf.mxu0
      %v3757 = vadd.f32 %v3488, %v3756
      %v3758 = vpop.f32.mrf.mxu0
      %v3759 = vadd.f32 %v3490, %v3758
      %3760 = vmatmul.bf16.gmra.mxu0 %v1206
      %v3761 = vpop.f32.mrf.mxu0
      %v3762 = vadd.f32 %v3493, %v3761
      %v3763 = vpop.f32.mrf.mxu0
      %v3764 = vadd.f32 %v3495, %v3763
      %3765 = vmatmul.bf16.gmra.mxu0 %v1207
      %v3766 = vpop.f32.mrf.mxu0
      %v3767 = vadd.f32 %v3498, %v3766
      %v3768 = vpop.f32.mrf.mxu0
      %v3769 = vadd.f32 %v3500, %v3768
      %3770 = vmatmul.bf16.gmra.mxu0 %v1208
      %v3771 = vpop.f32.mrf.mxu0
      %v3772 = vadd.f32 %v3503, %v3771
      %v3773 = vpop.f32.mrf.mxu0
      %v3774 = vadd.f32 %v3505, %v3773
      %3775 = vmatmul.bf16.gmra.mxu0 %v1209
      %v3776 = vpop.f32.mrf.mxu0
      %v3777 = vadd.f32 %v3508, %v3776
      %v3778 = vpop.f32.mrf.mxu0
      %v3779 = vadd.f32 %v3510, %v3778
      %3780 = vmatmul.bf16.gmra.mxu0 %v1210
      %v3781 = vpop.f32.mrf.mxu0
      %v3782 = vadd.f32 %v3513, %v3781
      %v3783 = vpop.f32.mrf.mxu0
      %v3784 = vadd.f32 %v3515, %v3783
      %3785 = vmatmul.bf16.gmra.mxu0 %v1211
      %v3786 = vpop.f32.mrf.mxu0
      %v3787 = vadd.f32 %v3518, %v3786
      %v3788 = vpop.f32.mrf.mxu0
      %v3789 = vadd.f32 %v3520, %v3788
      %3790 = vmatmul.bf16.gmra.mxu0 %v1212
      %v3791 = vpop.f32.mrf.mxu0
      %v3792 = vadd.f32 %v3523, %v3791
      %v3793 = vpop.f32.mrf.mxu0
      %v3794 = vadd.f32 %v3525, %v3793
      %3795 = vmatmul.bf16.gmra.mxu0 %v1213
      %v3796 = vpop.f32.mrf.mxu0
      %v3797 = vadd.f32 %v3528, %v3796
      %v3798 = vpop.f32.mrf.mxu0
      %v3799 = vadd.f32 %v3530, %v3798
      %3800 = vmatmul.bf16.gmra.mxu0 %v1214
      %v3801 = vpop.f32.mrf.mxu0
      %v3802 = vadd.f32 %v3533, %v3801
      %v3803 = vpop.f32.mrf.mxu0
      %v3804 = vadd.f32 %v3535, %v3803
      %3805 = vmatmul.bf16.gmra.mxu0 %v1215
      %v3806 = vpop.f32.mrf.mxu0
      %v3807 = vadd.f32 %v3538, %v3806
      %v3808 = vpop.f32.mrf.mxu0
      %v3809 = vadd.f32 %v3540, %v3808
      %3810 = vmatmul.bf16.gmra.mxu0 %v1216
      %v3811 = vpop.f32.mrf.mxu0
      %v3812 = vadd.f32 %v3543, %v3811
      %v3813 = vpop.f32.mrf.mxu0
      %v3814 = vadd.f32 %v3545, %v3813
      %3815 = vmatmul.bf16.gmra.mxu0 %v1217
      %v3816 = vpop.f32.mrf.mxu0
      %v3817 = vadd.f32 %v3548, %v3816
      %v3818 = vpop.f32.mrf.mxu0
      %v3819 = vadd.f32 %v3550, %v3818
      %3820 = vmatmul.bf16.gmra.mxu0 %v1218
      %v3821 = vpop.f32.mrf.mxu0
      %v3822 = vadd.f32 %v3553, %v3821
      %v3823 = vpop.f32.mrf.mxu0
      %v3824 = vadd.f32 %v3555, %v3823
      %3825 = vmatmul.bf16.gmra.mxu0 %v1219
      %v3826 = vpop.f32.mrf.mxu0
      %v3827 = vadd.f32 %v3558, %v3826
      %v3828 = vpop.f32.mrf.mxu0
      %v3829 = vadd.f32 %v3560, %v3828
      %3830 = vmatmul.bf16.gmra.mxu0 %v1220
      %v3831 = vpop.f32.mrf.mxu0
      %v3832 = vadd.f32 %v3563, %v3831
      %v3833 = vpop.f32.mrf.mxu0
      %v3834 = vadd.f32 %v3565, %v3833
      %3835 = vmatmul.bf16.gmra.mxu0 %v1221
      %v3836 = vpop.f32.mrf.mxu0
      %v3837 = vadd.f32 %v3568, %v3836
      %v3838 = vpop.f32.mrf.mxu0
      %v3839 = vadd.f32 %v3570, %v3838
      %3840 = vmatmul.bf16.gmra.mxu0 %v1222
      %v3841 = vpop.f32.mrf.mxu0
      %v3842 = vadd.f32 %v3573, %v3841
      %v3843 = vpop.f32.mrf.mxu0
      %v3844 = vadd.f32 %v3575, %v3843
      %3845 = vmatmul.bf16.gmra.mxu0 %v1223
      %v3846 = vpop.f32.mrf.mxu0
      %v3847 = vadd.f32 %v3578, %v3846
      %v3848 = vpop.f32.mrf.mxu0
      %v3849 = vadd.f32 %v3580, %v3848
      %3850 = vmatmul.bf16.gmra.mxu0 %v1224
      %v3851 = vpop.f32.mrf.mxu0
      %v3852 = vadd.f32 %v3583, %v3851
      %v3853 = vpop.f32.mrf.mxu0
      %v3854 = vadd.f32 %v3585, %v3853
      %3855 = vmatmul.bf16.gmra.mxu0 %v1225
      %v3856 = vpop.f32.mrf.mxu0
      %v3857 = vadd.f32 %v3588, %v3856
      %v3858 = vpop.f32.mrf.mxu0
      %v3859 = vadd.f32 %v3590, %v3858
      %3860 = vmatmul.bf16.gmra.mxu0 %v1226
      %v3861 = vpop.f32.mrf.mxu0
      %v3862 = vadd.f32 %v3593, %v3861
      %v3863 = vpop.f32.mrf.mxu0
      %v3864 = vadd.f32 %v3595, %v3863
      %3865 = vdwg.mxu0
      %3866 = vmatpush.bf16.msra.mxu0 %v2685
      %3867 = vmatpush.bf16.msra.mxu0 %v2684
      %3868 = vmatpush.bf16.msra.mxu0 %v2683
      %3869 = vmatpush.bf16.msra.mxu0 %v2682
      %3870 = vmatpush.bf16.msra.mxu0 %v2681
      %3871 = vmatpush.bf16.msra.mxu0 %v2680
      %3872 = vmatpush.bf16.msra.mxu0 %v2679
      %3873 = vmatpush.bf16.msra.mxu0 %v2678
      %3874 = vmatmul.bf16.gmra.mxu0 %v1256
      %v3875 = vpop.f32.mrf.mxu0
      %v3876 = vadd.f32 %v3607, %v3875
      %v3877 = vpop.f32.mrf.mxu0
      %v3878 = vadd.f32 %v3609, %v3877
      %3879 = vmatmul.bf16.gmra.mxu0 %v1877
      %v3880 = vpop.f32.mrf.mxu0
      %v3881 = vadd.f32 %v3612, %v3880
      %v3882 = vpop.f32.mrf.mxu0
      %v3883 = vadd.f32 %v3614, %v3882
      %3884 = vmatmul.bf16.gmra.mxu0 %v1271
      %v3885 = vpop.f32.mrf.mxu0
      %v3886 = vadd.f32 %v3617, %v3885
      %v3887 = vpop.f32.mrf.mxu0
      %v3888 = vadd.f32 %v3619, %v3887
      %3889 = vmatmul.bf16.gmra.mxu0 %v1878
      %v3890 = vpop.f32.mrf.mxu0
      %v3891 = vadd.f32 %v3622, %v3890
      %v3892 = vpop.f32.mrf.mxu0
      %v3893 = vadd.f32 %v3624, %v3892
      %3894 = vmatmul.bf16.gmra.mxu0 %v1286
      %v3895 = vpop.f32.mrf.mxu0
      %v3896 = vadd.f32 %v3627, %v3895
      %v3897 = vpop.f32.mrf.mxu0
      %v3898 = vadd.f32 %v3629, %v3897
      %3899 = vmatmul.bf16.gmra.mxu0 %v1879
      %v3900 = vpop.f32.mrf.mxu0
      %v3901 = vadd.f32 %v3632, %v3900
      %v3902 = vpop.f32.mrf.mxu0
      %v3903 = vadd.f32 %v3634, %v3902
      %3904 = vmatmul.bf16.gmra.mxu0 %v1301
      %v3905 = vpop.f32.mrf.mxu0
      %v3906 = vadd.f32 %v3637, %v3905
      %v3907 = vpop.f32.mrf.mxu0
      %v3908 = vadd.f32 %v3639, %v3907
      %3909 = vmatmul.bf16.gmra.mxu0 %v1880
      %v3910 = vpop.f32.mrf.mxu0
      %v3911 = vadd.f32 %v3642, %v3910
      %v3912 = vpop.f32.mrf.mxu0
      %v3913 = vadd.f32 %v3644, %v3912
      %3914 = vmatmul.bf16.gmra.mxu0 %v1316
      %v3915 = vpop.f32.mrf.mxu0
      %v3916 = vadd.f32 %v3647, %v3915
      %v3917 = vpop.f32.mrf.mxu0
      %v3918 = vadd.f32 %v3649, %v3917
      %3919 = vmatmul.bf16.gmra.mxu0 %v1881
      %v3920 = vpop.f32.mrf.mxu0
      %v3921 = vadd.f32 %v3652, %v3920
      %v3922 = vpop.f32.mrf.mxu0
      %v3923 = vadd.f32 %v3654, %v3922
      %3924 = vmatmul.bf16.gmra.mxu0 %v1331
      %v3925 = vpop.f32.mrf.mxu0
      %v3926 = vadd.f32 %v3657, %v3925
      %v3927 = vpop.f32.mrf.mxu0
      %v3928 = vadd.f32 %v3659, %v3927
      %3929 = vmatmul.bf16.gmra.mxu0 %v1882
      %v3930 = vpop.f32.mrf.mxu0
      %v3931 = vadd.f32 %v3662, %v3930
      %v3932 = vpop.f32.mrf.mxu0
      %v3933 = vadd.f32 %v3664, %v3932
      %3934 = vmatmul.bf16.gmra.mxu0 %v1346
      %v3935 = vpop.f32.mrf.mxu0
      %v3936 = vadd.f32 %v3667, %v3935
      %v3937 = vpop.f32.mrf.mxu0
      %v3938 = vadd.f32 %v3669, %v3937
      %3939 = vmatmul.bf16.gmra.mxu0 %v1883
      %v3940 = vpop.f32.mrf.mxu0
      %v3941 = vadd.f32 %v3672, %v3940
      %v3942 = vpop.f32.mrf.mxu0
      %v3943 = vadd.f32 %v3674, %v3942
      %3944 = vmatmul.bf16.gmra.mxu0 %v1361
      %v3945 = vpop.f32.mrf.mxu0
      %v3946 = vadd.f32 %v3677, %v3945
      %v3947 = vpop.f32.mrf.mxu0
      %v3948 = vadd.f32 %v3679, %v3947
      %3949 = vmatmul.bf16.gmra.mxu0 %v1884
      %v3950 = vpop.f32.mrf.mxu0
      %v3951 = vadd.f32 %v3682, %v3950
      %v3952 = vpop.f32.mrf.mxu0
      %v3953 = vadd.f32 %v3684, %v3952
      %3954 = vmatmul.bf16.gmra.mxu0 %v1376
      %v3955 = vpop.f32.mrf.mxu0
      %v3956 = vadd.f32 %v3687, %v3955
      %v3957 = vpop.f32.mrf.mxu0
      %v3958 = vadd.f32 %v3689, %v3957
      %3959 = vmatmul.bf16.gmra.mxu0 %v1885
      %v3960 = vpop.f32.mrf.mxu0
      %v3961 = vadd.f32 %v3692, %v3960
      %v3962 = vpop.f32.mrf.mxu0
      %v3963 = vadd.f32 %v3694, %v3962
      %3964 = vmatmul.bf16.gmra.mxu0 %v1391
      %v3965 = vpop.f32.mrf.mxu0
      %v3966 = vadd.f32 %v3697, %v3965
      %v3967 = vpop.f32.mrf.mxu0
      %v3968 = vadd.f32 %v3699, %v3967
      %3969 = vmatmul.bf16.gmra.mxu0 %v1886
      %v3970 = vpop.f32.mrf.mxu0
      %v3971 = vadd.f32 %v3702, %v3970
      %v3972 = vpop.f32.mrf.mxu0
      %v3973 = vadd.f32 %v3704, %v3972
      %3974 = vmatmul.bf16.gmra.mxu0 %v1406
      %v3975 = vpop.f32.mrf.mxu0
      %v3976 = vadd.f32 %v3707, %v3975
      %v3977 = vpop.f32.mrf.mxu0
      %v3978 = vadd.f32 %v3709, %v3977
      %3979 = vmatmul.bf16.gmra.mxu0 %v1887
      %v3980 = vpop.f32.mrf.mxu0
      %v3981 = vadd.f32 %v3712, %v3980
      %v3982 = vpop.f32.mrf.mxu0
      %v3983 = vadd.f32 %v3714, %v3982
      %3984 = vmatmul.bf16.gmra.mxu0 %v1421
      %v3985 = vpop.f32.mrf.mxu0
      %v3986 = vadd.f32 %v3717, %v3985
      %v3987 = vpop.f32.mrf.mxu0
      %v3988 = vadd.f32 %v3719, %v3987
      %3989 = vmatmul.bf16.gmra.mxu0 %v1888
      %v3990 = vpop.f32.mrf.mxu0
      %v3991 = vadd.f32 %v3722, %v3990
      %v3992 = vpop.f32.mrf.mxu0
      %v3993 = vadd.f32 %v3724, %v3992
      %3994 = vmatmul.bf16.gmra.mxu0 %v1436
      %v3995 = vpop.f32.mrf.mxu0
      %v3996 = vadd.f32 %v3727, %v3995
      %v3997 = vpop.f32.mrf.mxu0
      %v3998 = vadd.f32 %v3729, %v3997
      %3999 = vmatmul.bf16.gmra.mxu0 %v1889
      %v4000 = vpop.f32.mrf.mxu0
      %v4001 = vadd.f32 %v3732, %v4000
      %v4002 = vpop.f32.mrf.mxu0
      %v4003 = vadd.f32 %v3734, %v4002
      %4004 = vmatmul.bf16.gmra.mxu0 %v1451
      %v4005 = vpop.f32.mrf.mxu0
      %v4006 = vadd.f32 %v3737, %v4005
      %v4007 = vpop.f32.mrf.mxu0
      %v4008 = vadd.f32 %v3739, %v4007
      %4009 = vmatmul.bf16.gmra.mxu0 %v1890
      %v4010 = vpop.f32.mrf.mxu0
      %v4011 = vadd.f32 %v3742, %v4010
      %v4012 = vpop.f32.mrf.mxu0
      %v4013 = vadd.f32 %v3744, %v4012
      %4014 = vmatmul.bf16.gmra.mxu0 %v1466
      %v4015 = vpop.f32.mrf.mxu0
      %v4016 = vadd.f32 %v3747, %v4015
      %v4017 = vpop.f32.mrf.mxu0
      %v4018 = vadd.f32 %v3749, %v4017
      %4019 = vmatmul.bf16.gmra.mxu0 %v1891
      %v4020 = vpop.f32.mrf.mxu0
      %v4021 = vadd.f32 %v3752, %v4020
      %v4022 = vpop.f32.mrf.mxu0
      %v4023 = vadd.f32 %v3754, %v4022
      %4024 = vmatmul.bf16.gmra.mxu0 %v1481
      %v4025 = vpop.f32.mrf.mxu0
      %v4026 = vadd.f32 %v3757, %v4025
      %v4027 = vpop.f32.mrf.mxu0
      %v4028 = vadd.f32 %v3759, %v4027
      %4029 = vmatmul.bf16.gmra.mxu0 %v1892
      %v4030 = vpop.f32.mrf.mxu0
      %v4031 = vadd.f32 %v3762, %v4030
      %v4032 = vpop.f32.mrf.mxu0
      %v4033 = vadd.f32 %v3764, %v4032
      %4034 = vmatmul.bf16.gmra.mxu0 %v1496
      %v4035 = vpop.f32.mrf.mxu0
      %v4036 = vadd.f32 %v3767, %v4035
      %v4037 = vpop.f32.mrf.mxu0
      %v4038 = vadd.f32 %v3769, %v4037
      %4039 = vmatmul.bf16.gmra.mxu0 %v1893
      %v4040 = vpop.f32.mrf.mxu0
      %v4041 = vadd.f32 %v3772, %v4040
      %v4042 = vpop.f32.mrf.mxu0
      %v4043 = vadd.f32 %v3774, %v4042
      %4044 = vmatmul.bf16.gmra.mxu0 %v1511
      %v4045 = vpop.f32.mrf.mxu0
      %v4046 = vadd.f32 %v3777, %v4045
      %v4047 = vpop.f32.mrf.mxu0
      %v4048 = vadd.f32 %v3779, %v4047
      %4049 = vmatmul.bf16.gmra.mxu0 %v1894
      %v4050 = vpop.f32.mrf.mxu0
      %v4051 = vadd.f32 %v3782, %v4050
      %v4052 = vpop.f32.mrf.mxu0
      %v4053 = vadd.f32 %v3784, %v4052
      %4054 = vmatmul.bf16.gmra.mxu0 %v1526
      %v4055 = vpop.f32.mrf.mxu0
      %v4056 = vadd.f32 %v3787, %v4055
      %v4057 = vpop.f32.mrf.mxu0
      %v4058 = vadd.f32 %v3789, %v4057
      %4059 = vmatmul.bf16.gmra.mxu0 %v1895
      %v4060 = vpop.f32.mrf.mxu0
      %v4061 = vadd.f32 %v3792, %v4060
      %v4062 = vpop.f32.mrf.mxu0
      %v4063 = vadd.f32 %v3794, %v4062
      %4064 = vmatmul.bf16.gmra.mxu0 %v1541
      %v4065 = vpop.f32.mrf.mxu0
      %v4066 = vadd.f32 %v3797, %v4065
      %v4067 = vpop.f32.mrf.mxu0
      %v4068 = vadd.f32 %v3799, %v4067
      %4069 = vmatmul.bf16.gmra.mxu0 %v1896
      %v4070 = vpop.f32.mrf.mxu0
      %v4071 = vadd.f32 %v3802, %v4070
      %v4072 = vpop.f32.mrf.mxu0
      %v4073 = vadd.f32 %v3804, %v4072
      %4074 = vmatmul.bf16.gmra.mxu0 %v1556
      %v4075 = vpop.f32.mrf.mxu0
      %v4076 = vadd.f32 %v3807, %v4075
      %v4077 = vpop.f32.mrf.mxu0
      %v4078 = vadd.f32 %v3809, %v4077
      %4079 = vmatmul.bf16.gmra.mxu0 %v1897
      %v4080 = vpop.f32.mrf.mxu0
      %v4081 = vadd.f32 %v3812, %v4080
      %v4082 = vpop.f32.mrf.mxu0
      %v4083 = vadd.f32 %v3814, %v4082
      %4084 = vmatmul.bf16.gmra.mxu0 %v1571
      %v4085 = vpop.f32.mrf.mxu0
      %v4086 = vadd.f32 %v3817, %v4085
      %v4087 = vpop.f32.mrf.mxu0
      %v4088 = vadd.f32 %v3819, %v4087
      %4089 = vmatmul.bf16.gmra.mxu0 %v1898
      %v4090 = vpop.f32.mrf.mxu0
      %v4091 = vadd.f32 %v3822, %v4090
      %v4092 = vpop.f32.mrf.mxu0
      %v4093 = vadd.f32 %v3824, %v4092
      %4094 = vmatmul.bf16.gmra.mxu0 %v1586
      %v4095 = vpop.f32.mrf.mxu0
      %v4096 = vadd.f32 %v3827, %v4095
      %v4097 = vpop.f32.mrf.mxu0
      %v4098 = vadd.f32 %v3829, %v4097
      %4099 = vmatmul.bf16.gmra.mxu0 %v1899
      %v4100 = vpop.f32.mrf.mxu0
      %v4101 = vadd.f32 %v3832, %v4100
      %v4102 = vpop.f32.mrf.mxu0
      %v4103 = vadd.f32 %v3834, %v4102
      %4104 = vmatmul.bf16.gmra.mxu0 %v1601
      %v4105 = vpop.f32.mrf.mxu0
      %v4106 = vadd.f32 %v3837, %v4105
      %v4107 = vpop.f32.mrf.mxu0
      %v4108 = vadd.f32 %v3839, %v4107
      %4109 = vmatmul.bf16.gmra.mxu0 %v1900
      %v4110 = vpop.f32.mrf.mxu0
      %v4111 = vadd.f32 %v3842, %v4110
      %v4112 = vpop.f32.mrf.mxu0
      %v4113 = vadd.f32 %v3844, %v4112
      %4114 = vmatmul.bf16.gmra.mxu0 %v1616
      %v4115 = vpop.f32.mrf.mxu0
      %v4116 = vadd.f32 %v3847, %v4115
      %v4117 = vpop.f32.mrf.mxu0
      %v4118 = vadd.f32 %v3849, %v4117
      %4119 = vmatmul.bf16.gmra.mxu0 %v1901
      %v4120 = vpop.f32.mrf.mxu0
      %v4121 = vadd.f32 %v3852, %v4120
      %v4122 = vpop.f32.mrf.mxu0
      %v4123 = vadd.f32 %v3854, %v4122
      %4124 = vmatmul.bf16.gmra.mxu0 %v1631
      %v4125 = vpop.f32.mrf.mxu0
      %v4126 = vadd.f32 %v3857, %v4125
      %v4127 = vpop.f32.mrf.mxu0
      %v4128 = vadd.f32 %v3859, %v4127
      %4129 = vmatmul.bf16.gmra.mxu0 %v1902
      %v4130 = vpop.f32.mrf.mxu0
      %v4131 = vadd.f32 %v3862, %v4130
      %v4132 = vpop.f32.mrf.mxu0
      %v4133 = vadd.f32 %v3864, %v4132
      %4134 = vdwg.mxu0
      %4135 = vmatpush.bf16.msra.mxu0 %v2693
      %4136 = vmatpush.bf16.msra.mxu0 %v2692
      %4137 = vmatpush.bf16.msra.mxu0 %v2691
      %4138 = vmatpush.bf16.msra.mxu0 %v2690
      %4139 = vmatpush.bf16.msra.mxu0 %v2689
      %4140 = vmatpush.bf16.msra.mxu0 %v2688
      %4141 = vmatpush.bf16.msra.mxu0 %v2687
      %4142 = vmatpush.bf16.msra.mxu0 %v2686
      %4143 = vmatmul.bf16.gmra.mxu0 %v1910
      %v4144 = vpop.f32.mrf.mxu0
      %v4145 = vadd.f32 %v3876, %v4144
      %v4146 = vpop.f32.mrf.mxu0
      %v4147 = vadd.f32 %v3878, %v4146
      %4148 = vmatmul.bf16.gmra.mxu0 %v2052
      %v4149 = vpop.f32.mrf.mxu0
      %v4150 = vadd.f32 %v3881, %v4149
      %v4151 = vpop.f32.mrf.mxu0
      %v4152 = vadd.f32 %v3883, %v4151
      %4153 = vmatmul.bf16.gmra.mxu0 %v1913
      %v4154 = vpop.f32.mrf.mxu0
      %v4155 = vadd.f32 %v3886, %v4154
      %v4156 = vpop.f32.mrf.mxu0
      %v4157 = vadd.f32 %v3888, %v4156
      %4158 = vmatmul.bf16.gmra.mxu0 %v2056
      %v4159 = vpop.f32.mrf.mxu0
      %v4160 = vadd.f32 %v3891, %v4159
      %v4161 = vpop.f32.mrf.mxu0
      %v4162 = vadd.f32 %v3893, %v4161
      %4163 = vmatmul.bf16.gmra.mxu0 %v1916
      %v4164 = vpop.f32.mrf.mxu0
      %v4165 = vadd.f32 %v3896, %v4164
      %v4166 = vpop.f32.mrf.mxu0
      %v4167 = vadd.f32 %v3898, %v4166
      %4168 = vmatmul.bf16.gmra.mxu0 %v2060
      %v4169 = vpop.f32.mrf.mxu0
      %v4170 = vadd.f32 %v3901, %v4169
      %v4171 = vpop.f32.mrf.mxu0
      %v4172 = vadd.f32 %v3903, %v4171
      %4173 = vmatmul.bf16.gmra.mxu0 %v1919
      %v4174 = vpop.f32.mrf.mxu0
      %v4175 = vadd.f32 %v3906, %v4174
      %v4176 = vpop.f32.mrf.mxu0
      %v4177 = vadd.f32 %v3908, %v4176
      %4178 = vmatmul.bf16.gmra.mxu0 %v2064
      %v4179 = vpop.f32.mrf.mxu0
      %v4180 = vadd.f32 %v3911, %v4179
      %v4181 = vpop.f32.mrf.mxu0
      %v4182 = vadd.f32 %v3913, %v4181
      %4183 = vmatmul.bf16.gmra.mxu0 %v1922
      %v4184 = vpop.f32.mrf.mxu0
      %v4185 = vadd.f32 %v3916, %v4184
      %v4186 = vpop.f32.mrf.mxu0
      %v4187 = vadd.f32 %v3918, %v4186
      %4188 = vmatmul.bf16.gmra.mxu0 %v2068
      %v4189 = vpop.f32.mrf.mxu0
      %v4190 = vadd.f32 %v3921, %v4189
      %v4191 = vpop.f32.mrf.mxu0
      %v4192 = vadd.f32 %v3923, %v4191
      %4193 = vmatmul.bf16.gmra.mxu0 %v1925
      %v4194 = vpop.f32.mrf.mxu0
      %v4195 = vadd.f32 %v3926, %v4194
      %v4196 = vpop.f32.mrf.mxu0
      %v4197 = vadd.f32 %v3928, %v4196
      %4198 = vmatmul.bf16.gmra.mxu0 %v2072
      %v4199 = vpop.f32.mrf.mxu0
      %v4200 = vadd.f32 %v3931, %v4199
      %v4201 = vpop.f32.mrf.mxu0
      %v4202 = vadd.f32 %v3933, %v4201
      %4203 = vmatmul.bf16.gmra.mxu0 %v1928
      %v4204 = vpop.f32.mrf.mxu0
      %v4205 = vadd.f32 %v3936, %v4204
      %v4206 = vpop.f32.mrf.mxu0
      %v4207 = vadd.f32 %v3938, %v4206
      %4208 = vmatmul.bf16.gmra.mxu0 %v2076
      %v4209 = vpop.f32.mrf.mxu0
      %v4210 = vadd.f32 %v3941, %v4209
      %v4211 = vpop.f32.mrf.mxu0
      %v4212 = vadd.f32 %v3943, %v4211
      %4213 = vmatmul.bf16.gmra.mxu0 %v1931
      %v4214 = vpop.f32.mrf.mxu0
      %v4215 = vadd.f32 %v3946, %v4214
      %v4216 = vpop.f32.mrf.mxu0
      %v4217 = vadd.f32 %v3948, %v4216
      %4218 = vmatmul.bf16.gmra.mxu0 %v2080
      %v4219 = vpop.f32.mrf.mxu0
      %v4220 = vadd.f32 %v3951, %v4219
      %v4221 = vpop.f32.mrf.mxu0
      %v4222 = vadd.f32 %v3953, %v4221
      %4223 = vmatmul.bf16.gmra.mxu0 %v1934
      %v4224 = vpop.f32.mrf.mxu0
      %v4225 = vadd.f32 %v3956, %v4224
      %v4226 = vpop.f32.mrf.mxu0
      %v4227 = vadd.f32 %v3958, %v4226
      %4228 = vmatmul.bf16.gmra.mxu0 %v2084
      %v4229 = vpop.f32.mrf.mxu0
      %v4230 = vadd.f32 %v3961, %v4229
      %v4231 = vpop.f32.mrf.mxu0
      %v4232 = vadd.f32 %v3963, %v4231
      %4233 = vmatmul.bf16.gmra.mxu0 %v1937
      %v4234 = vpop.f32.mrf.mxu0
      %v4235 = vadd.f32 %v3966, %v4234
      %v4236 = vpop.f32.mrf.mxu0
      %v4237 = vadd.f32 %v3968, %v4236
      %4238 = vmatmul.bf16.gmra.mxu0 %v2088
      %v4239 = vpop.f32.mrf.mxu0
      %v4240 = vadd.f32 %v3971, %v4239
      %v4241 = vpop.f32.mrf.mxu0
      %v4242 = vadd.f32 %v3973, %v4241
      %4243 = vmatmul.bf16.gmra.mxu0 %v1940
      %v4244 = vpop.f32.mrf.mxu0
      %v4245 = vadd.f32 %v3976, %v4244
      %v4246 = vpop.f32.mrf.mxu0
      %v4247 = vadd.f32 %v3978, %v4246
      %4248 = vmatmul.bf16.gmra.mxu0 %v2092
      %v4249 = vpop.f32.mrf.mxu0
      %v4250 = vadd.f32 %v3981, %v4249
      %v4251 = vpop.f32.mrf.mxu0
      %v4252 = vadd.f32 %v3983, %v4251
      %4253 = vmatmul.bf16.gmra.mxu0 %v1943
      %v4254 = vpop.f32.mrf.mxu0
      %v4255 = vadd.f32 %v3986, %v4254
      %v4256 = vpop.f32.mrf.mxu0
      %v4257 = vadd.f32 %v3988, %v4256
      %4258 = vmatmul.bf16.gmra.mxu0 %v2096
      %v4259 = vpop.f32.mrf.mxu0
      %v4260 = vadd.f32 %v3991, %v4259
      %v4261 = vpop.f32.mrf.mxu0
      %v4262 = vadd.f32 %v3993, %v4261
      %4263 = vmatmul.bf16.gmra.mxu0 %v1946
      %v4264 = vpop.f32.mrf.mxu0
      %v4265 = vadd.f32 %v3996, %v4264
      %v4266 = vpop.f32.mrf.mxu0
      %v4267 = vadd.f32 %v3998, %v4266
      %4268 = vmatmul.bf16.gmra.mxu0 %v2100
      %v4269 = vpop.f32.mrf.mxu0
      %v4270 = vadd.f32 %v4001, %v4269
      %v4271 = vpop.f32.mrf.mxu0
      %v4272 = vadd.f32 %v4003, %v4271
      %4273 = vmatmul.bf16.gmra.mxu0 %v1949
      %v4274 = vpop.f32.mrf.mxu0
      %v4275 = vadd.f32 %v4006, %v4274
      %v4276 = vpop.f32.mrf.mxu0
      %v4277 = vadd.f32 %v4008, %v4276
      %4278 = vmatmul.bf16.gmra.mxu0 %v2104
      %v4279 = vpop.f32.mrf.mxu0
      %v4280 = vadd.f32 %v4011, %v4279
      %v4281 = vpop.f32.mrf.mxu0
      %v4282 = vadd.f32 %v4013, %v4281
      %4283 = vmatmul.bf16.gmra.mxu0 %v1952
      %v4284 = vpop.f32.mrf.mxu0
      %v4285 = vadd.f32 %v4016, %v4284
      %v4286 = vpop.f32.mrf.mxu0
      %v4287 = vadd.f32 %v4018, %v4286
      %4288 = vmatmul.bf16.gmra.mxu0 %v2108
      %v4289 = vpop.f32.mrf.mxu0
      %v4290 = vadd.f32 %v4021, %v4289
      %v4291 = vpop.f32.mrf.mxu0
      %v4292 = vadd.f32 %v4023, %v4291
      %4293 = vmatmul.bf16.gmra.mxu0 %v1955
      %v4294 = vpop.f32.mrf.mxu0
      %v4295 = vadd.f32 %v4026, %v4294
      %v4296 = vpop.f32.mrf.mxu0
      %v4297 = vadd.f32 %v4028, %v4296
      %4298 = vmatmul.bf16.gmra.mxu0 %v2112
      %v4299 = vpop.f32.mrf.mxu0
      %v4300 = vadd.f32 %v4031, %v4299
      %v4301 = vpop.f32.mrf.mxu0
      %v4302 = vadd.f32 %v4033, %v4301
      %4303 = vmatmul.bf16.gmra.mxu0 %v1958
      %v4304 = vpop.f32.mrf.mxu0
      %v4305 = vadd.f32 %v4036, %v4304
      %v4306 = vpop.f32.mrf.mxu0
      %v4307 = vadd.f32 %v4038, %v4306
      %4308 = vmatmul.bf16.gmra.mxu0 %v2116
      %v4309 = vpop.f32.mrf.mxu0
      %v4310 = vadd.f32 %v4041, %v4309
      %v4311 = vpop.f32.mrf.mxu0
      %v4312 = vadd.f32 %v4043, %v4311
      %4313 = vmatmul.bf16.gmra.mxu0 %v1961
      %v4314 = vpop.f32.mrf.mxu0
      %v4315 = vadd.f32 %v4046, %v4314
      %v4316 = vpop.f32.mrf.mxu0
      %v4317 = vadd.f32 %v4048, %v4316
      %4318 = vmatmul.bf16.gmra.mxu0 %v2120
      %v4319 = vpop.f32.mrf.mxu0
      %v4320 = vadd.f32 %v4051, %v4319
      %v4321 = vpop.f32.mrf.mxu0
      %v4322 = vadd.f32 %v4053, %v4321
      %4323 = vmatmul.bf16.gmra.mxu0 %v1964
      %v4324 = vpop.f32.mrf.mxu0
      %v4325 = vadd.f32 %v4056, %v4324
      %v4326 = vpop.f32.mrf.mxu0
      %v4327 = vadd.f32 %v4058, %v4326
      %4328 = vmatmul.bf16.gmra.mxu0 %v2124
      %v4329 = vpop.f32.mrf.mxu0
      %v4330 = vadd.f32 %v4061, %v4329
      %v4331 = vpop.f32.mrf.mxu0
      %v4332 = vadd.f32 %v4063, %v4331
      %4333 = vmatmul.bf16.gmra.mxu0 %v1967
      %v4334 = vpop.f32.mrf.mxu0
      %v4335 = vadd.f32 %v4066, %v4334
      %v4336 = vpop.f32.mrf.mxu0
      %v4337 = vadd.f32 %v4068, %v4336
      %4338 = vmatmul.bf16.gmra.mxu0 %v2128
      %v4339 = vpop.f32.mrf.mxu0
      %v4340 = vadd.f32 %v4071, %v4339
      %v4341 = vpop.f32.mrf.mxu0
      %v4342 = vadd.f32 %v4073, %v4341
      %4343 = vmatmul.bf16.gmra.mxu0 %v1970
      %v4344 = vpop.f32.mrf.mxu0
      %v4345 = vadd.f32 %v4076, %v4344
      %v4346 = vpop.f32.mrf.mxu0
      %v4347 = vadd.f32 %v4078, %v4346
      %4348 = vmatmul.bf16.gmra.mxu0 %v2132
      %v4349 = vpop.f32.mrf.mxu0
      %v4350 = vadd.f32 %v4081, %v4349
      %v4351 = vpop.f32.mrf.mxu0
      %v4352 = vadd.f32 %v4083, %v4351
      %4353 = vmatmul.bf16.gmra.mxu0 %v1973
      %v4354 = vpop.f32.mrf.mxu0
      %v4355 = vadd.f32 %v4086, %v4354
      %v4356 = vpop.f32.mrf.mxu0
      %v4357 = vadd.f32 %v4088, %v4356
      %4358 = vmatmul.bf16.gmra.mxu0 %v2136
      %v4359 = vpop.f32.mrf.mxu0
      %v4360 = vadd.f32 %v4091, %v4359
      %v4361 = vpop.f32.mrf.mxu0
      %v4362 = vadd.f32 %v4093, %v4361
      %4363 = vmatmul.bf16.gmra.mxu0 %v1976
      %v4364 = vpop.f32.mrf.mxu0
      %v4365 = vadd.f32 %v4096, %v4364
      %v4366 = vpop.f32.mrf.mxu0
      %v4367 = vadd.f32 %v4098, %v4366
      %4368 = vmatmul.bf16.gmra.mxu0 %v2140
      %v4369 = vpop.f32.mrf.mxu0
      %v4370 = vadd.f32 %v4101, %v4369
      %v4371 = vpop.f32.mrf.mxu0
      %v4372 = vadd.f32 %v4103, %v4371
      %4373 = vmatmul.bf16.gmra.mxu0 %v1979
      %v4374 = vpop.f32.mrf.mxu0
      %v4375 = vadd.f32 %v4106, %v4374
      %v4376 = vpop.f32.mrf.mxu0
      %v4377 = vadd.f32 %v4108, %v4376
      %4378 = vmatmul.bf16.gmra.mxu0 %v2144
      %v4379 = vpop.f32.mrf.mxu0
      %v4380 = vadd.f32 %v4111, %v4379
      %v4381 = vpop.f32.mrf.mxu0
      %v4382 = vadd.f32 %v4113, %v4381
      %4383 = vmatmul.bf16.gmra.mxu0 %v1982
      %v4384 = vpop.f32.mrf.mxu0
      %v4385 = vadd.f32 %v4116, %v4384
      %v4386 = vpop.f32.mrf.mxu0
      %v4387 = vadd.f32 %v4118, %v4386
      %4388 = vmatmul.bf16.gmra.mxu0 %v2148
      %v4389 = vpop.f32.mrf.mxu0
      %v4390 = vadd.f32 %v4121, %v4389
      %v4391 = vpop.f32.mrf.mxu0
      %v4392 = vadd.f32 %v4123, %v4391
      %4393 = vmatmul.bf16.gmra.mxu0 %v1985
      %v4394 = vpop.f32.mrf.mxu0
      %v4395 = vadd.f32 %v4126, %v4394
      %v4396 = vpop.f32.mrf.mxu0
      %v4397 = vadd.f32 %v4128, %v4396
      %4398 = vmatmul.bf16.gmra.mxu0 %v2152
      %v4399 = vpop.f32.mrf.mxu0
      %v4400 = vadd.f32 %v4131, %v4399
      %v4401 = vpop.f32.mrf.mxu0
      %v4402 = vadd.f32 %v4133, %v4401
      %4403 = vdwg.mxu0
      %4404 = vmatpush.bf16.msra.mxu0 %v2701
      %4405 = vmatpush.bf16.msra.mxu0 %v2700
      %4406 = vmatpush.bf16.msra.mxu0 %v2699
      %4407 = vmatpush.bf16.msra.mxu0 %v2698
      %4408 = vmatpush.bf16.msra.mxu0 %v2697
      %4409 = vmatpush.bf16.msra.mxu0 %v2696
      %4410 = vmatpush.bf16.msra.mxu0 %v2695
      %4411 = vmatpush.bf16.msra.mxu0 %v2694
      %4412 = vmatmul.bf16.gmra.mxu0 %v1177
      %v4413 = vpop.f32.mrf.mxu0
      %v4414 = vadd.f32 %v4145, %v4413
      %v4415 = vpop.f32.mrf.mxu0
      %v4416 = vadd.f32 %v4147, %v4415
      %4417 = vmatmul.bf16.gmra.mxu0 %v1178
      %v4418 = vpop.f32.mrf.mxu0
      %v4419 = vadd.f32 %v4150, %v4418
      %v4420 = vpop.f32.mrf.mxu0
      %v4421 = vadd.f32 %v4152, %v4420
      %4422 = vmatmul.bf16.gmra.mxu0 %v1179
      %v4423 = vpop.f32.mrf.mxu0
      %v4424 = vadd.f32 %v4155, %v4423
      %v4425 = vpop.f32.mrf.mxu0
      %v4426 = vadd.f32 %v4157, %v4425
      %4427 = vmatmul.bf16.gmra.mxu0 %v1180
      %v4428 = vpop.f32.mrf.mxu0
      %v4429 = vadd.f32 %v4160, %v4428
      %v4430 = vpop.f32.mrf.mxu0
      %v4431 = vadd.f32 %v4162, %v4430
      %4432 = vmatmul.bf16.gmra.mxu0 %v1181
      %v4433 = vpop.f32.mrf.mxu0
      %v4434 = vadd.f32 %v4165, %v4433
      %v4435 = vpop.f32.mrf.mxu0
      %v4436 = vadd.f32 %v4167, %v4435
      %4437 = vmatmul.bf16.gmra.mxu0 %v1182
      %v4438 = vpop.f32.mrf.mxu0
      %v4439 = vadd.f32 %v4170, %v4438
      %v4440 = vpop.f32.mrf.mxu0
      %v4441 = vadd.f32 %v4172, %v4440
      %4442 = vmatmul.bf16.gmra.mxu0 %v1183
      %v4443 = vpop.f32.mrf.mxu0
      %v4444 = vadd.f32 %v4175, %v4443
      %v4445 = vpop.f32.mrf.mxu0
      %v4446 = vadd.f32 %v4177, %v4445
      %4447 = vmatmul.bf16.gmra.mxu0 %v1184
      %v4448 = vpop.f32.mrf.mxu0
      %v4449 = vadd.f32 %v4180, %v4448
      %v4450 = vpop.f32.mrf.mxu0
      %v4451 = vadd.f32 %v4182, %v4450
      %4452 = vmatmul.bf16.gmra.mxu0 %v1185
      %v4453 = vpop.f32.mrf.mxu0
      %v4454 = vadd.f32 %v4185, %v4453
      %v4455 = vpop.f32.mrf.mxu0
      %v4456 = vadd.f32 %v4187, %v4455
      %4457 = vmatmul.bf16.gmra.mxu0 %v1186
      %v4458 = vpop.f32.mrf.mxu0
      %v4459 = vadd.f32 %v4190, %v4458
      %v4460 = vpop.f32.mrf.mxu0
      %v4461 = vadd.f32 %v4192, %v4460
      %4462 = vmatmul.bf16.gmra.mxu0 %v1187
      %v4463 = vpop.f32.mrf.mxu0
      %v4464 = vadd.f32 %v4195, %v4463
      %v4465 = vpop.f32.mrf.mxu0
      %v4466 = vadd.f32 %v4197, %v4465
      %4467 = vmatmul.bf16.gmra.mxu0 %v1188
      %v4468 = vpop.f32.mrf.mxu0
      %v4469 = vadd.f32 %v4200, %v4468
      %v4470 = vpop.f32.mrf.mxu0
      %v4471 = vadd.f32 %v4202, %v4470
      %4472 = vmatmul.bf16.gmra.mxu0 %v1189
      %v4473 = vpop.f32.mrf.mxu0
      %v4474 = vadd.f32 %v4205, %v4473
      %v4475 = vpop.f32.mrf.mxu0
      %v4476 = vadd.f32 %v4207, %v4475
      %4477 = vmatmul.bf16.gmra.mxu0 %v1190
      %v4478 = vpop.f32.mrf.mxu0
      %v4479 = vadd.f32 %v4210, %v4478
      %v4480 = vpop.f32.mrf.mxu0
      %v4481 = vadd.f32 %v4212, %v4480
      %4482 = vmatmul.bf16.gmra.mxu0 %v1191
      %v4483 = vpop.f32.mrf.mxu0
      %v4484 = vadd.f32 %v4215, %v4483
      %v4485 = vpop.f32.mrf.mxu0
      %v4486 = vadd.f32 %v4217, %v4485
      %4487 = vmatmul.bf16.gmra.mxu0 %v1192
      %v4488 = vpop.f32.mrf.mxu0
      %v4489 = vadd.f32 %v4220, %v4488
      %v4490 = vpop.f32.mrf.mxu0
      %v4491 = vadd.f32 %v4222, %v4490
      %4492 = vmatmul.bf16.gmra.mxu0 %v1193
      %v4493 = vpop.f32.mrf.mxu0
      %v4494 = vadd.f32 %v4225, %v4493
      %v4495 = vpop.f32.mrf.mxu0
      %v4496 = vadd.f32 %v4227, %v4495
      %4497 = vmatmul.bf16.gmra.mxu0 %v1194
      %v4498 = vpop.f32.mrf.mxu0
      %v4499 = vadd.f32 %v4230, %v4498
      %v4500 = vpop.f32.mrf.mxu0
      %v4501 = vadd.f32 %v4232, %v4500
      %4502 = vmatmul.bf16.gmra.mxu0 %v1195
      %v4503 = vpop.f32.mrf.mxu0
      %v4504 = vadd.f32 %v4235, %v4503
      %v4505 = vpop.f32.mrf.mxu0
      %v4506 = vadd.f32 %v4237, %v4505
      %4507 = vmatmul.bf16.gmra.mxu0 %v1196
      %v4508 = vpop.f32.mrf.mxu0
      %v4509 = vadd.f32 %v4240, %v4508
      %v4510 = vpop.f32.mrf.mxu0
      %v4511 = vadd.f32 %v4242, %v4510
      %4512 = vmatmul.bf16.gmra.mxu0 %v1197
      %v4513 = vpop.f32.mrf.mxu0
      %v4514 = vadd.f32 %v4245, %v4513
      %v4515 = vpop.f32.mrf.mxu0
      %v4516 = vadd.f32 %v4247, %v4515
      %4517 = vmatmul.bf16.gmra.mxu0 %v1198
      %v4518 = vpop.f32.mrf.mxu0
      %v4519 = vadd.f32 %v4250, %v4518
      %v4520 = vpop.f32.mrf.mxu0
      %v4521 = vadd.f32 %v4252, %v4520
      %4522 = vmatmul.bf16.gmra.mxu0 %v1199
      %v4523 = vpop.f32.mrf.mxu0
      %v4524 = vadd.f32 %v4255, %v4523
      %v4525 = vpop.f32.mrf.mxu0
      %v4526 = vadd.f32 %v4257, %v4525
      %4527 = vmatmul.bf16.gmra.mxu0 %v1200
      %v4528 = vpop.f32.mrf.mxu0
      %v4529 = vadd.f32 %v4260, %v4528
      %v4530 = vpop.f32.mrf.mxu0
      %v4531 = vadd.f32 %v4262, %v4530
      %4532 = vmatmul.bf16.gmra.mxu0 %v1201
      %v4533 = vpop.f32.mrf.mxu0
      %v4534 = vadd.f32 %v4265, %v4533
      %v4535 = vpop.f32.mrf.mxu0
      %v4536 = vadd.f32 %v4267, %v4535
      %4537 = vmatmul.bf16.gmra.mxu0 %v1202
      %v4538 = vpop.f32.mrf.mxu0
      %v4539 = vadd.f32 %v4270, %v4538
      %v4540 = vpop.f32.mrf.mxu0
      %v4541 = vadd.f32 %v4272, %v4540
      %4542 = vmatmul.bf16.gmra.mxu0 %v1203
      %v4543 = vpop.f32.mrf.mxu0
      %v4544 = vadd.f32 %v4275, %v4543
      %v4545 = vpop.f32.mrf.mxu0
      %v4546 = vadd.f32 %v4277, %v4545
      %4547 = vmatmul.bf16.gmra.mxu0 %v1204
      %v4548 = vpop.f32.mrf.mxu0
      %v4549 = vadd.f32 %v4280, %v4548
      %v4550 = vpop.f32.mrf.mxu0
      %v4551 = vadd.f32 %v4282, %v4550
      %4552 = vmatmul.bf16.gmra.mxu0 %v1205
      %v4553 = vpop.f32.mrf.mxu0
      %v4554 = vadd.f32 %v4285, %v4553
      %v4555 = vpop.f32.mrf.mxu0
      %v4556 = vadd.f32 %v4287, %v4555
      %4557 = vmatmul.bf16.gmra.mxu0 %v1206
      %v4558 = vpop.f32.mrf.mxu0
      %v4559 = vadd.f32 %v4290, %v4558
      %v4560 = vpop.f32.mrf.mxu0
      %v4561 = vadd.f32 %v4292, %v4560
      %4562 = vmatmul.bf16.gmra.mxu0 %v1207
      %v4563 = vpop.f32.mrf.mxu0
      %v4564 = vadd.f32 %v4295, %v4563
      %v4565 = vpop.f32.mrf.mxu0
      %v4566 = vadd.f32 %v4297, %v4565
      %4567 = vmatmul.bf16.gmra.mxu0 %v1208
      %v4568 = vpop.f32.mrf.mxu0
      %v4569 = vadd.f32 %v4300, %v4568
      %v4570 = vpop.f32.mrf.mxu0
      %v4571 = vadd.f32 %v4302, %v4570
      %4572 = vmatmul.bf16.gmra.mxu0 %v1209
      %v4573 = vpop.f32.mrf.mxu0
      %v4574 = vadd.f32 %v4305, %v4573
      %v4575 = vpop.f32.mrf.mxu0
      %v4576 = vadd.f32 %v4307, %v4575
      %4577 = vmatmul.bf16.gmra.mxu0 %v1210
      %v4578 = vpop.f32.mrf.mxu0
      %v4579 = vadd.f32 %v4310, %v4578
      %v4580 = vpop.f32.mrf.mxu0
      %v4581 = vadd.f32 %v4312, %v4580
      %4582 = vmatmul.bf16.gmra.mxu0 %v1211
      %v4583 = vpop.f32.mrf.mxu0
      %v4584 = vadd.f32 %v4315, %v4583
      %v4585 = vpop.f32.mrf.mxu0
      %v4586 = vadd.f32 %v4317, %v4585
      %4587 = vmatmul.bf16.gmra.mxu0 %v1212
      %v4588 = vpop.f32.mrf.mxu0
      %v4589 = vadd.f32 %v4320, %v4588
      %v4590 = vpop.f32.mrf.mxu0
      %v4591 = vadd.f32 %v4322, %v4590
      %4592 = vmatmul.bf16.gmra.mxu0 %v1213
      %v4593 = vpop.f32.mrf.mxu0
      %v4594 = vadd.f32 %v4325, %v4593
      %v4595 = vpop.f32.mrf.mxu0
      %v4596 = vadd.f32 %v4327, %v4595
      %4597 = vmatmul.bf16.gmra.mxu0 %v1214
      %v4598 = vpop.f32.mrf.mxu0
      %v4599 = vadd.f32 %v4330, %v4598
      %v4600 = vpop.f32.mrf.mxu0
      %v4601 = vadd.f32 %v4332, %v4600
      %4602 = vmatmul.bf16.gmra.mxu0 %v1215
      %v4603 = vpop.f32.mrf.mxu0
      %v4604 = vadd.f32 %v4335, %v4603
      %v4605 = vpop.f32.mrf.mxu0
      %v4606 = vadd.f32 %v4337, %v4605
      %4607 = vmatmul.bf16.gmra.mxu0 %v1216
      %v4608 = vpop.f32.mrf.mxu0
      %v4609 = vadd.f32 %v4340, %v4608
      %v4610 = vpop.f32.mrf.mxu0
      %v4611 = vadd.f32 %v4342, %v4610
      %4612 = vmatmul.bf16.gmra.mxu0 %v1217
      %v4613 = vpop.f32.mrf.mxu0
      %v4614 = vadd.f32 %v4345, %v4613
      %v4615 = vpop.f32.mrf.mxu0
      %v4616 = vadd.f32 %v4347, %v4615
      %4617 = vmatmul.bf16.gmra.mxu0 %v1218
      %v4618 = vpop.f32.mrf.mxu0
      %v4619 = vadd.f32 %v4350, %v4618
      %v4620 = vpop.f32.mrf.mxu0
      %v4621 = vadd.f32 %v4352, %v4620
      %4622 = vmatmul.bf16.gmra.mxu0 %v1219
      %v4623 = vpop.f32.mrf.mxu0
      %v4624 = vadd.f32 %v4355, %v4623
      %v4625 = vpop.f32.mrf.mxu0
      %v4626 = vadd.f32 %v4357, %v4625
      %4627 = vmatmul.bf16.gmra.mxu0 %v1220
      %v4628 = vpop.f32.mrf.mxu0
      %v4629 = vadd.f32 %v4360, %v4628
      %v4630 = vpop.f32.mrf.mxu0
      %v4631 = vadd.f32 %v4362, %v4630
      %4632 = vmatmul.bf16.gmra.mxu0 %v1221
      %v4633 = vpop.f32.mrf.mxu0
      %v4634 = vadd.f32 %v4365, %v4633
      %v4635 = vpop.f32.mrf.mxu0
      %v4636 = vadd.f32 %v4367, %v4635
      %4637 = vmatmul.bf16.gmra.mxu0 %v1222
      %v4638 = vpop.f32.mrf.mxu0
      %v4639 = vadd.f32 %v4370, %v4638
      %v4640 = vpop.f32.mrf.mxu0
      %v4641 = vadd.f32 %v4372, %v4640
      %4642 = vmatmul.bf16.gmra.mxu0 %v1223
      %v4643 = vpop.f32.mrf.mxu0
      %v4644 = vadd.f32 %v4375, %v4643
      %v4645 = vpop.f32.mrf.mxu0
      %v4646 = vadd.f32 %v4377, %v4645
      %4647 = vmatmul.bf16.gmra.mxu0 %v1224
      %v4648 = vpop.f32.mrf.mxu0
      %v4649 = vadd.f32 %v4380, %v4648
      %v4650 = vpop.f32.mrf.mxu0
      %v4651 = vadd.f32 %v4382, %v4650
      %4652 = vmatmul.bf16.gmra.mxu0 %v1225
      %v4653 = vpop.f32.mrf.mxu0
      %v4654 = vadd.f32 %v4385, %v4653
      %v4655 = vpop.f32.mrf.mxu0
      %v4656 = vadd.f32 %v4387, %v4655
      %4657 = vmatmul.bf16.gmra.mxu0 %v1226
      %v4658 = vpop.f32.mrf.mxu0
      %v4659 = vadd.f32 %v4390, %v4658
      %v4660 = vpop.f32.mrf.mxu0
      %v4661 = vadd.f32 %v4392, %v4660
      %4662 = vmatmul.bf16.gmra.mxu0 %v1227
      %v4663 = vpop.f32.mrf.mxu0
      %v4664 = vadd.f32 %v4395, %v4663
      %v4665 = vpop.f32.mrf.mxu0
      %v4666 = vadd.f32 %v4397, %v4665
      %4667 = vmatmul.bf16.gmra.mxu0 %v1228
      %v4668 = vpop.f32.mrf.mxu0
      %v4669 = vadd.f32 %v4400, %v4668
      %v4670 = vpop.f32.mrf.mxu0
      %v4671 = vadd.f32 %v4402, %v4670
      %4672 = vdwg.mxu0
      %4673 = vmatpush.bf16.msra.mxu0 %v2709
      %4674 = vmatpush.bf16.msra.mxu0 %v2708
      %4675 = vmatpush.bf16.msra.mxu0 %v2707
      %4676 = vmatpush.bf16.msra.mxu0 %v2706
      %4677 = vmatpush.bf16.msra.mxu0 %v2705
      %4678 = vmatpush.bf16.msra.mxu0 %v2704
      %4679 = vmatpush.bf16.msra.mxu0 %v2703
      %4680 = vmatpush.bf16.msra.mxu0 %v2702
      %4681 = vmatmul.bf16.gmra.mxu0 %v1271
      %v4682 = vpop.f32.mrf.mxu0
      %v4683 = vadd.f32 %v4414, %v4682
      %v4684 = vpop.f32.mrf.mxu0
      %v4685 = vadd.f32 %v4416, %v4684
      %4686 = vmatmul.bf16.gmra.mxu0 %v1878
      %v4687 = vpop.f32.mrf.mxu0
      %v4688 = vadd.f32 %v4419, %v4687
      %v4689 = vpop.f32.mrf.mxu0
      %v4690 = vadd.f32 %v4421, %v4689
      %4691 = vmatmul.bf16.gmra.mxu0 %v1286
      %v4692 = vpop.f32.mrf.mxu0
      %v4693 = vadd.f32 %v4424, %v4692
      %v4694 = vpop.f32.mrf.mxu0
      %v4695 = vadd.f32 %v4426, %v4694
      %4696 = vmatmul.bf16.gmra.mxu0 %v1879
      %v4697 = vpop.f32.mrf.mxu0
      %v4698 = vadd.f32 %v4429, %v4697
      %v4699 = vpop.f32.mrf.mxu0
      %v4700 = vadd.f32 %v4431, %v4699
      %4701 = vmatmul.bf16.gmra.mxu0 %v1301
      %v4702 = vpop.f32.mrf.mxu0
      %v4703 = vadd.f32 %v4434, %v4702
      %v4704 = vpop.f32.mrf.mxu0
      %v4705 = vadd.f32 %v4436, %v4704
      %4706 = vmatmul.bf16.gmra.mxu0 %v1880
      %v4707 = vpop.f32.mrf.mxu0
      %v4708 = vadd.f32 %v4439, %v4707
      %v4709 = vpop.f32.mrf.mxu0
      %v4710 = vadd.f32 %v4441, %v4709
      %4711 = vmatmul.bf16.gmra.mxu0 %v1316
      %v4712 = vpop.f32.mrf.mxu0
      %v4713 = vadd.f32 %v4444, %v4712
      %v4714 = vpop.f32.mrf.mxu0
      %v4715 = vadd.f32 %v4446, %v4714
      %4716 = vmatmul.bf16.gmra.mxu0 %v1881
      %v4717 = vpop.f32.mrf.mxu0
      %v4718 = vadd.f32 %v4449, %v4717
      %v4719 = vpop.f32.mrf.mxu0
      %v4720 = vadd.f32 %v4451, %v4719
      %4721 = vmatmul.bf16.gmra.mxu0 %v1331
      %v4722 = vpop.f32.mrf.mxu0
      %v4723 = vadd.f32 %v4454, %v4722
      %v4724 = vpop.f32.mrf.mxu0
      %v4725 = vadd.f32 %v4456, %v4724
      %4726 = vmatmul.bf16.gmra.mxu0 %v1882
      %v4727 = vpop.f32.mrf.mxu0
      %v4728 = vadd.f32 %v4459, %v4727
      %v4729 = vpop.f32.mrf.mxu0
      %v4730 = vadd.f32 %v4461, %v4729
      %4731 = vmatmul.bf16.gmra.mxu0 %v1346
      %v4732 = vpop.f32.mrf.mxu0
      %v4733 = vadd.f32 %v4464, %v4732
      %v4734 = vpop.f32.mrf.mxu0
      %v4735 = vadd.f32 %v4466, %v4734
      %4736 = vmatmul.bf16.gmra.mxu0 %v1883
      %v4737 = vpop.f32.mrf.mxu0
      %v4738 = vadd.f32 %v4469, %v4737
      %v4739 = vpop.f32.mrf.mxu0
      %v4740 = vadd.f32 %v4471, %v4739
      %4741 = vmatmul.bf16.gmra.mxu0 %v1361
      %v4742 = vpop.f32.mrf.mxu0
      %v4743 = vadd.f32 %v4474, %v4742
      %v4744 = vpop.f32.mrf.mxu0
      %v4745 = vadd.f32 %v4476, %v4744
      %4746 = vmatmul.bf16.gmra.mxu0 %v1884
      %v4747 = vpop.f32.mrf.mxu0
      %v4748 = vadd.f32 %v4479, %v4747
      %v4749 = vpop.f32.mrf.mxu0
      %v4750 = vadd.f32 %v4481, %v4749
      %4751 = vmatmul.bf16.gmra.mxu0 %v1376
      %v4752 = vpop.f32.mrf.mxu0
      %v4753 = vadd.f32 %v4484, %v4752
      %v4754 = vpop.f32.mrf.mxu0
      %v4755 = vadd.f32 %v4486, %v4754
      %4756 = vmatmul.bf16.gmra.mxu0 %v1885
      %v4757 = vpop.f32.mrf.mxu0
      %v4758 = vadd.f32 %v4489, %v4757
      %v4759 = vpop.f32.mrf.mxu0
      %v4760 = vadd.f32 %v4491, %v4759
      %4761 = vmatmul.bf16.gmra.mxu0 %v1391
      %v4762 = vpop.f32.mrf.mxu0
      %v4763 = vadd.f32 %v4494, %v4762
      %v4764 = vpop.f32.mrf.mxu0
      %v4765 = vadd.f32 %v4496, %v4764
      %4766 = vmatmul.bf16.gmra.mxu0 %v1886
      %v4767 = vpop.f32.mrf.mxu0
      %v4768 = vadd.f32 %v4499, %v4767
      %v4769 = vpop.f32.mrf.mxu0
      %v4770 = vadd.f32 %v4501, %v4769
      %4771 = vmatmul.bf16.gmra.mxu0 %v1406
      %v4772 = vpop.f32.mrf.mxu0
      %v4773 = vadd.f32 %v4504, %v4772
      %v4774 = vpop.f32.mrf.mxu0
      %v4775 = vadd.f32 %v4506, %v4774
      %4776 = vmatmul.bf16.gmra.mxu0 %v1887
      %v4777 = vpop.f32.mrf.mxu0
      %v4778 = vadd.f32 %v4509, %v4777
      %v4779 = vpop.f32.mrf.mxu0
      %v4780 = vadd.f32 %v4511, %v4779
      %4781 = vmatmul.bf16.gmra.mxu0 %v1421
      %v4782 = vpop.f32.mrf.mxu0
      %v4783 = vadd.f32 %v4514, %v4782
      %v4784 = vpop.f32.mrf.mxu0
      %v4785 = vadd.f32 %v4516, %v4784
      %4786 = vmatmul.bf16.gmra.mxu0 %v1888
      %v4787 = vpop.f32.mrf.mxu0
      %v4788 = vadd.f32 %v4519, %v4787
      %v4789 = vpop.f32.mrf.mxu0
      %v4790 = vadd.f32 %v4521, %v4789
      %4791 = vmatmul.bf16.gmra.mxu0 %v1436
      %v4792 = vpop.f32.mrf.mxu0
      %v4793 = vadd.f32 %v4524, %v4792
      %v4794 = vpop.f32.mrf.mxu0
      %v4795 = vadd.f32 %v4526, %v4794
      %4796 = vmatmul.bf16.gmra.mxu0 %v1889
      %v4797 = vpop.f32.mrf.mxu0
      %v4798 = vadd.f32 %v4529, %v4797
      %v4799 = vpop.f32.mrf.mxu0
      %v4800 = vadd.f32 %v4531, %v4799
      %4801 = vmatmul.bf16.gmra.mxu0 %v1451
      %v4802 = vpop.f32.mrf.mxu0
      %v4803 = vadd.f32 %v4534, %v4802
      %v4804 = vpop.f32.mrf.mxu0
      %v4805 = vadd.f32 %v4536, %v4804
      %4806 = vmatmul.bf16.gmra.mxu0 %v1890
      %v4807 = vpop.f32.mrf.mxu0
      %v4808 = vadd.f32 %v4539, %v4807
      %v4809 = vpop.f32.mrf.mxu0
      %v4810 = vadd.f32 %v4541, %v4809
      %4811 = vmatmul.bf16.gmra.mxu0 %v1466
      %v4812 = vpop.f32.mrf.mxu0
      %v4813 = vadd.f32 %v4544, %v4812
      %v4814 = vpop.f32.mrf.mxu0
      %v4815 = vadd.f32 %v4546, %v4814
      %4816 = vmatmul.bf16.gmra.mxu0 %v1891
      %v4817 = vpop.f32.mrf.mxu0
      %v4818 = vadd.f32 %v4549, %v4817
      %v4819 = vpop.f32.mrf.mxu0
      %v4820 = vadd.f32 %v4551, %v4819
      %4821 = vmatmul.bf16.gmra.mxu0 %v1481
      %v4822 = vpop.f32.mrf.mxu0
      %v4823 = vadd.f32 %v4554, %v4822
      %v4824 = vpop.f32.mrf.mxu0
      %v4825 = vadd.f32 %v4556, %v4824
      %4826 = vmatmul.bf16.gmra.mxu0 %v1892
      %v4827 = vpop.f32.mrf.mxu0
      %v4828 = vadd.f32 %v4559, %v4827
      %v4829 = vpop.f32.mrf.mxu0
      %v4830 = vadd.f32 %v4561, %v4829
      %4831 = vmatmul.bf16.gmra.mxu0 %v1496
      %v4832 = vpop.f32.mrf.mxu0
      %v4833 = vadd.f32 %v4564, %v4832
      %v4834 = vpop.f32.mrf.mxu0
      %v4835 = vadd.f32 %v4566, %v4834
      %4836 = vmatmul.bf16.gmra.mxu0 %v1893
      %v4837 = vpop.f32.mrf.mxu0
      %v4838 = vadd.f32 %v4569, %v4837
      %v4839 = vpop.f32.mrf.mxu0
      %v4840 = vadd.f32 %v4571, %v4839
      %4841 = vmatmul.bf16.gmra.mxu0 %v1511
      %v4842 = vpop.f32.mrf.mxu0
      %v4843 = vadd.f32 %v4574, %v4842
      %v4844 = vpop.f32.mrf.mxu0
      %v4845 = vadd.f32 %v4576, %v4844
      %4846 = vmatmul.bf16.gmra.mxu0 %v1894
      %v4847 = vpop.f32.mrf.mxu0
      %v4848 = vadd.f32 %v4579, %v4847
      %v4849 = vpop.f32.mrf.mxu0
      %v4850 = vadd.f32 %v4581, %v4849
      %4851 = vmatmul.bf16.gmra.mxu0 %v1526
      %v4852 = vpop.f32.mrf.mxu0
      %v4853 = vadd.f32 %v4584, %v4852
      %v4854 = vpop.f32.mrf.mxu0
      %v4855 = vadd.f32 %v4586, %v4854
      %4856 = vmatmul.bf16.gmra.mxu0 %v1895
      %v4857 = vpop.f32.mrf.mxu0
      %v4858 = vadd.f32 %v4589, %v4857
      %v4859 = vpop.f32.mrf.mxu0
      %v4860 = vadd.f32 %v4591, %v4859
      %4861 = vmatmul.bf16.gmra.mxu0 %v1541
      %v4862 = vpop.f32.mrf.mxu0
      %v4863 = vadd.f32 %v4594, %v4862
      %v4864 = vpop.f32.mrf.mxu0
      %v4865 = vadd.f32 %v4596, %v4864
      %4866 = vmatmul.bf16.gmra.mxu0 %v1896
      %v4867 = vpop.f32.mrf.mxu0
      %v4868 = vadd.f32 %v4599, %v4867
      %v4869 = vpop.f32.mrf.mxu0
      %v4870 = vadd.f32 %v4601, %v4869
      %4871 = vmatmul.bf16.gmra.mxu0 %v1556
      %v4872 = vpop.f32.mrf.mxu0
      %v4873 = vadd.f32 %v4604, %v4872
      %v4874 = vpop.f32.mrf.mxu0
      %v4875 = vadd.f32 %v4606, %v4874
      %4876 = vmatmul.bf16.gmra.mxu0 %v1897
      %v4877 = vpop.f32.mrf.mxu0
      %v4878 = vadd.f32 %v4609, %v4877
      %v4879 = vpop.f32.mrf.mxu0
      %v4880 = vadd.f32 %v4611, %v4879
      %4881 = vmatmul.bf16.gmra.mxu0 %v1571
      %v4882 = vpop.f32.mrf.mxu0
      %v4883 = vadd.f32 %v4614, %v4882
      %v4884 = vpop.f32.mrf.mxu0
      %v4885 = vadd.f32 %v4616, %v4884
      %4886 = vmatmul.bf16.gmra.mxu0 %v1898
      %v4887 = vpop.f32.mrf.mxu0
      %v4888 = vadd.f32 %v4619, %v4887
      %v4889 = vpop.f32.mrf.mxu0
      %v4890 = vadd.f32 %v4621, %v4889
      %4891 = vmatmul.bf16.gmra.mxu0 %v1586
      %v4892 = vpop.f32.mrf.mxu0
      %v4893 = vadd.f32 %v4624, %v4892
      %v4894 = vpop.f32.mrf.mxu0
      %v4895 = vadd.f32 %v4626, %v4894
      %4896 = vmatmul.bf16.gmra.mxu0 %v1899
      %v4897 = vpop.f32.mrf.mxu0
      %v4898 = vadd.f32 %v4629, %v4897
      %v4899 = vpop.f32.mrf.mxu0
      %v4900 = vadd.f32 %v4631, %v4899
      %4901 = vmatmul.bf16.gmra.mxu0 %v1601
      %v4902 = vpop.f32.mrf.mxu0
      %v4903 = vadd.f32 %v4634, %v4902
      %v4904 = vpop.f32.mrf.mxu0
      %v4905 = vadd.f32 %v4636, %v4904
      %4906 = vmatmul.bf16.gmra.mxu0 %v1900
      %v4907 = vpop.f32.mrf.mxu0
      %v4908 = vadd.f32 %v4639, %v4907
      %v4909 = vpop.f32.mrf.mxu0
      %v4910 = vadd.f32 %v4641, %v4909
      %4911 = vmatmul.bf16.gmra.mxu0 %v1616
      %v4912 = vpop.f32.mrf.mxu0
      %v4913 = vadd.f32 %v4644, %v4912
      %v4914 = vpop.f32.mrf.mxu0
      %v4915 = vadd.f32 %v4646, %v4914
      %4916 = vmatmul.bf16.gmra.mxu0 %v1901
      %v4917 = vpop.f32.mrf.mxu0
      %v4918 = vadd.f32 %v4649, %v4917
      %v4919 = vpop.f32.mrf.mxu0
      %v4920 = vadd.f32 %v4651, %v4919
      %4921 = vmatmul.bf16.gmra.mxu0 %v1631
      %v4922 = vpop.f32.mrf.mxu0
      %v4923 = vadd.f32 %v4654, %v4922
      %v4924 = vpop.f32.mrf.mxu0
      %v4925 = vadd.f32 %v4656, %v4924
      %4926 = vmatmul.bf16.gmra.mxu0 %v1902
      %v4927 = vpop.f32.mrf.mxu0
      %v4928 = vadd.f32 %v4659, %v4927
      %v4929 = vpop.f32.mrf.mxu0
      %v4930 = vadd.f32 %v4661, %v4929
      %4931 = vmatmul.bf16.gmra.mxu0 %v1646
      %v4932 = vpop.f32.mrf.mxu0
      %v4933 = vadd.f32 %v4664, %v4932
      %v4934 = vpop.f32.mrf.mxu0
      %v4935 = vadd.f32 %v4666, %v4934
      %4936 = vmatmul.bf16.gmra.mxu0 %v1903
      %v4937 = vpop.f32.mrf.mxu0
      %v4938 = vadd.f32 %v4669, %v4937
      %v4939 = vpop.f32.mrf.mxu0
      %v4940 = vadd.f32 %v4671, %v4939
      %4941 = vdwg.mxu0
      %4942 = vmatpush.bf16.msra.mxu0 %v2717
      %4943 = vmatpush.bf16.msra.mxu0 %v2716
      %4944 = vmatpush.bf16.msra.mxu0 %v2715
      %4945 = vmatpush.bf16.msra.mxu0 %v2714
      %4946 = vmatpush.bf16.msra.mxu0 %v2713
      %4947 = vmatpush.bf16.msra.mxu0 %v2712
      %4948 = vmatpush.bf16.msra.mxu0 %v2711
      %4949 = vmatpush.bf16.msra.mxu0 %v2710
      %4950 = vmatmul.bf16.gmra.mxu0 %v1913
      %v4951 = vpop.f32.mrf.mxu0
      %v4952 = vadd.f32 %v4683, %v4951
      %v4953 = vpop.f32.mrf.mxu0
      %v4954 = vadd.f32 %v4685, %v4953
      %4955 = vmatmul.bf16.gmra.mxu0 %v2056
      %v4956 = vpop.f32.mrf.mxu0
      %v4957 = vadd.f32 %v4688, %v4956
      %v4958 = vpop.f32.mrf.mxu0
      %v4959 = vadd.f32 %v4690, %v4958
      %4960 = vmatmul.bf16.gmra.mxu0 %v1916
      %v4961 = vpop.f32.mrf.mxu0
      %v4962 = vadd.f32 %v4693, %v4961
      %v4963 = vpop.f32.mrf.mxu0
      %v4964 = vadd.f32 %v4695, %v4963
      %4965 = vmatmul.bf16.gmra.mxu0 %v2060
      %v4966 = vpop.f32.mrf.mxu0
      %v4967 = vadd.f32 %v4698, %v4966
      %v4968 = vpop.f32.mrf.mxu0
      %v4969 = vadd.f32 %v4700, %v4968
      %4970 = vmatmul.bf16.gmra.mxu0 %v1919
      %v4971 = vpop.f32.mrf.mxu0
      %v4972 = vadd.f32 %v4703, %v4971
      %v4973 = vpop.f32.mrf.mxu0
      %v4974 = vadd.f32 %v4705, %v4973
      %4975 = vmatmul.bf16.gmra.mxu0 %v2064
      %v4976 = vpop.f32.mrf.mxu0
      %v4977 = vadd.f32 %v4708, %v4976
      %v4978 = vpop.f32.mrf.mxu0
      %v4979 = vadd.f32 %v4710, %v4978
      %4980 = vmatmul.bf16.gmra.mxu0 %v1922
      %v4981 = vpop.f32.mrf.mxu0
      %v4982 = vadd.f32 %v4713, %v4981
      %v4983 = vpop.f32.mrf.mxu0
      %v4984 = vadd.f32 %v4715, %v4983
      %4985 = vmatmul.bf16.gmra.mxu0 %v2068
      %v4986 = vpop.f32.mrf.mxu0
      %v4987 = vadd.f32 %v4718, %v4986
      %v4988 = vpop.f32.mrf.mxu0
      %v4989 = vadd.f32 %v4720, %v4988
      %4990 = vmatmul.bf16.gmra.mxu0 %v1925
      %v4991 = vpop.f32.mrf.mxu0
      %v4992 = vadd.f32 %v4723, %v4991
      %v4993 = vpop.f32.mrf.mxu0
      %v4994 = vadd.f32 %v4725, %v4993
      %4995 = vmatmul.bf16.gmra.mxu0 %v2072
      %v4996 = vpop.f32.mrf.mxu0
      %v4997 = vadd.f32 %v4728, %v4996
      %v4998 = vpop.f32.mrf.mxu0
      %v4999 = vadd.f32 %v4730, %v4998
      %5000 = vmatmul.bf16.gmra.mxu0 %v1928
      %v5001 = vpop.f32.mrf.mxu0
      %v5002 = vadd.f32 %v4733, %v5001
      %v5003 = vpop.f32.mrf.mxu0
      %v5004 = vadd.f32 %v4735, %v5003
      %5005 = vmatmul.bf16.gmra.mxu0 %v2076
      %v5006 = vpop.f32.mrf.mxu0
      %v5007 = vadd.f32 %v4738, %v5006
      %v5008 = vpop.f32.mrf.mxu0
      %v5009 = vadd.f32 %v4740, %v5008
      %5010 = vmatmul.bf16.gmra.mxu0 %v1931
      %v5011 = vpop.f32.mrf.mxu0
      %v5012 = vadd.f32 %v4743, %v5011
      %v5013 = vpop.f32.mrf.mxu0
      %v5014 = vadd.f32 %v4745, %v5013
      %5015 = vmatmul.bf16.gmra.mxu0 %v2080
      %v5016 = vpop.f32.mrf.mxu0
      %v5017 = vadd.f32 %v4748, %v5016
      %v5018 = vpop.f32.mrf.mxu0
      %v5019 = vadd.f32 %v4750, %v5018
      %5020 = vmatmul.bf16.gmra.mxu0 %v1934
      %v5021 = vpop.f32.mrf.mxu0
      %v5022 = vadd.f32 %v4753, %v5021
      %v5023 = vpop.f32.mrf.mxu0
      %v5024 = vadd.f32 %v4755, %v5023
      %5025 = vmatmul.bf16.gmra.mxu0 %v2084
      %v5026 = vpop.f32.mrf.mxu0
      %v5027 = vadd.f32 %v4758, %v5026
      %v5028 = vpop.f32.mrf.mxu0
      %v5029 = vadd.f32 %v4760, %v5028
      %5030 = vmatmul.bf16.gmra.mxu0 %v1937
      %v5031 = vpop.f32.mrf.mxu0
      %v5032 = vadd.f32 %v4763, %v5031
      %v5033 = vpop.f32.mrf.mxu0
      %v5034 = vadd.f32 %v4765, %v5033
      %5035 = vmatmul.bf16.gmra.mxu0 %v2088
      %v5036 = vpop.f32.mrf.mxu0
      %v5037 = vadd.f32 %v4768, %v5036
      %v5038 = vpop.f32.mrf.mxu0
      %v5039 = vadd.f32 %v4770, %v5038
      %5040 = vmatmul.bf16.gmra.mxu0 %v1940
      %v5041 = vpop.f32.mrf.mxu0
      %v5042 = vadd.f32 %v4773, %v5041
      %v5043 = vpop.f32.mrf.mxu0
      %v5044 = vadd.f32 %v4775, %v5043
      %5045 = vmatmul.bf16.gmra.mxu0 %v2092
      %v5046 = vpop.f32.mrf.mxu0
      %v5047 = vadd.f32 %v4778, %v5046
      %v5048 = vpop.f32.mrf.mxu0
      %v5049 = vadd.f32 %v4780, %v5048
      %5050 = vmatmul.bf16.gmra.mxu0 %v1943
      %v5051 = vpop.f32.mrf.mxu0
      %v5052 = vadd.f32 %v4783, %v5051
      %v5053 = vpop.f32.mrf.mxu0
      %v5054 = vadd.f32 %v4785, %v5053
      %5055 = vmatmul.bf16.gmra.mxu0 %v2096
      %v5056 = vpop.f32.mrf.mxu0
      %v5057 = vadd.f32 %v4788, %v5056
      %v5058 = vpop.f32.mrf.mxu0
      %v5059 = vadd.f32 %v4790, %v5058
      %5060 = vmatmul.bf16.gmra.mxu0 %v1946
      %v5061 = vpop.f32.mrf.mxu0
      %v5062 = vadd.f32 %v4793, %v5061
      %v5063 = vpop.f32.mrf.mxu0
      %v5064 = vadd.f32 %v4795, %v5063
      %5065 = vmatmul.bf16.gmra.mxu0 %v2100
      %v5066 = vpop.f32.mrf.mxu0
      %v5067 = vadd.f32 %v4798, %v5066
      %v5068 = vpop.f32.mrf.mxu0
      %v5069 = vadd.f32 %v4800, %v5068
      %5070 = vmatmul.bf16.gmra.mxu0 %v1949
      %v5071 = vpop.f32.mrf.mxu0
      %v5072 = vadd.f32 %v4803, %v5071
      %v5073 = vpop.f32.mrf.mxu0
      %v5074 = vadd.f32 %v4805, %v5073
      %5075 = vmatmul.bf16.gmra.mxu0 %v2104
      %v5076 = vpop.f32.mrf.mxu0
      %v5077 = vadd.f32 %v4808, %v5076
      %v5078 = vpop.f32.mrf.mxu0
      %v5079 = vadd.f32 %v4810, %v5078
      %5080 = vmatmul.bf16.gmra.mxu0 %v1952
      %v5081 = vpop.f32.mrf.mxu0
      %v5082 = vadd.f32 %v4813, %v5081
      %v5083 = vpop.f32.mrf.mxu0
      %v5084 = vadd.f32 %v4815, %v5083
      %5085 = vmatmul.bf16.gmra.mxu0 %v2108
      %v5086 = vpop.f32.mrf.mxu0
      %v5087 = vadd.f32 %v4818, %v5086
      %v5088 = vpop.f32.mrf.mxu0
      %v5089 = vadd.f32 %v4820, %v5088
      %5090 = vmatmul.bf16.gmra.mxu0 %v1955
      %v5091 = vpop.f32.mrf.mxu0
      %v5092 = vadd.f32 %v4823, %v5091
      %v5093 = vpop.f32.mrf.mxu0
      %v5094 = vadd.f32 %v4825, %v5093
      %5095 = vmatmul.bf16.gmra.mxu0 %v2112
      %v5096 = vpop.f32.mrf.mxu0
      %v5097 = vadd.f32 %v4828, %v5096
      %v5098 = vpop.f32.mrf.mxu0
      %v5099 = vadd.f32 %v4830, %v5098
      %5100 = vmatmul.bf16.gmra.mxu0 %v1958
      %v5101 = vpop.f32.mrf.mxu0
      %v5102 = vadd.f32 %v4833, %v5101
      %v5103 = vpop.f32.mrf.mxu0
      %v5104 = vadd.f32 %v4835, %v5103
      %5105 = vmatmul.bf16.gmra.mxu0 %v2116
      %v5106 = vpop.f32.mrf.mxu0
      %v5107 = vadd.f32 %v4838, %v5106
      %v5108 = vpop.f32.mrf.mxu0
      %v5109 = vadd.f32 %v4840, %v5108
      %5110 = vmatmul.bf16.gmra.mxu0 %v1961
      %v5111 = vpop.f32.mrf.mxu0
      %v5112 = vadd.f32 %v4843, %v5111
      %v5113 = vpop.f32.mrf.mxu0
      %v5114 = vadd.f32 %v4845, %v5113
      %5115 = vmatmul.bf16.gmra.mxu0 %v2120
      %v5116 = vpop.f32.mrf.mxu0
      %v5117 = vadd.f32 %v4848, %v5116
      %v5118 = vpop.f32.mrf.mxu0
      %v5119 = vadd.f32 %v4850, %v5118
      %5120 = vmatmul.bf16.gmra.mxu0 %v1964
      %v5121 = vpop.f32.mrf.mxu0
      %v5122 = vadd.f32 %v4853, %v5121
      %v5123 = vpop.f32.mrf.mxu0
      %v5124 = vadd.f32 %v4855, %v5123
      %5125 = vmatmul.bf16.gmra.mxu0 %v2124
      %v5126 = vpop.f32.mrf.mxu0
      %v5127 = vadd.f32 %v4858, %v5126
      %v5128 = vpop.f32.mrf.mxu0
      %v5129 = vadd.f32 %v4860, %v5128
      %5130 = vmatmul.bf16.gmra.mxu0 %v1967
      %v5131 = vpop.f32.mrf.mxu0
      %v5132 = vadd.f32 %v4863, %v5131
      %v5133 = vpop.f32.mrf.mxu0
      %v5134 = vadd.f32 %v4865, %v5133
      %5135 = vmatmul.bf16.gmra.mxu0 %v2128
      %v5136 = vpop.f32.mrf.mxu0
      %v5137 = vadd.f32 %v4868, %v5136
      %v5138 = vpop.f32.mrf.mxu0
      %v5139 = vadd.f32 %v4870, %v5138
      %5140 = vmatmul.bf16.gmra.mxu0 %v1970
      %v5141 = vpop.f32.mrf.mxu0
      %v5142 = vadd.f32 %v4873, %v5141
      %v5143 = vpop.f32.mrf.mxu0
      %v5144 = vadd.f32 %v4875, %v5143
      %5145 = vmatmul.bf16.gmra.mxu0 %v2132
      %v5146 = vpop.f32.mrf.mxu0
      %v5147 = vadd.f32 %v4878, %v5146
      %v5148 = vpop.f32.mrf.mxu0
      %v5149 = vadd.f32 %v4880, %v5148
      %5150 = vmatmul.bf16.gmra.mxu0 %v1973
      %v5151 = vpop.f32.mrf.mxu0
      %v5152 = vadd.f32 %v4883, %v5151
      %v5153 = vpop.f32.mrf.mxu0
      %v5154 = vadd.f32 %v4885, %v5153
      %5155 = vmatmul.bf16.gmra.mxu0 %v2136
      %v5156 = vpop.f32.mrf.mxu0
      %v5157 = vadd.f32 %v4888, %v5156
      %v5158 = vpop.f32.mrf.mxu0
      %v5159 = vadd.f32 %v4890, %v5158
      %5160 = vmatmul.bf16.gmra.mxu0 %v1976
      %v5161 = vpop.f32.mrf.mxu0
      %v5162 = vadd.f32 %v4893, %v5161
      %v5163 = vpop.f32.mrf.mxu0
      %v5164 = vadd.f32 %v4895, %v5163
      %5165 = vmatmul.bf16.gmra.mxu0 %v2140
      %v5166 = vpop.f32.mrf.mxu0
      %v5167 = vadd.f32 %v4898, %v5166
      %v5168 = vpop.f32.mrf.mxu0
      %v5169 = vadd.f32 %v4900, %v5168
      %5170 = vmatmul.bf16.gmra.mxu0 %v1979
      %v5171 = vpop.f32.mrf.mxu0
      %v5172 = vadd.f32 %v4903, %v5171
      %v5173 = vpop.f32.mrf.mxu0
      %v5174 = vadd.f32 %v4905, %v5173
      %5175 = vmatmul.bf16.gmra.mxu0 %v2144
      %v5176 = vpop.f32.mrf.mxu0
      %v5177 = vadd.f32 %v4908, %v5176
      %v5178 = vpop.f32.mrf.mxu0
      %v5179 = vadd.f32 %v4910, %v5178
      %5180 = vmatmul.bf16.gmra.mxu0 %v1982
      %v5181 = vpop.f32.mrf.mxu0
      %v5182 = vadd.f32 %v4913, %v5181
      %v5183 = vpop.f32.mrf.mxu0
      %v5184 = vadd.f32 %v4915, %v5183
      %5185 = vmatmul.bf16.gmra.mxu0 %v2148
      %v5186 = vpop.f32.mrf.mxu0
      %v5187 = vadd.f32 %v4918, %v5186
      %v5188 = vpop.f32.mrf.mxu0
      %v5189 = vadd.f32 %v4920, %v5188
      %5190 = vmatmul.bf16.gmra.mxu0 %v1985
      %v5191 = vpop.f32.mrf.mxu0
      %v5192 = vadd.f32 %v4923, %v5191
      %v5193 = vpop.f32.mrf.mxu0
      %v5194 = vadd.f32 %v4925, %v5193
      %5195 = vmatmul.bf16.gmra.mxu0 %v2152
      %v5196 = vpop.f32.mrf.mxu0
      %v5197 = vadd.f32 %v4928, %v5196
      %v5198 = vpop.f32.mrf.mxu0
      %v5199 = vadd.f32 %v4930, %v5198
      %5200 = vmatmul.bf16.gmra.mxu0 %v1988
      %v5201 = vpop.f32.mrf.mxu0
      %v5202 = vadd.f32 %v4933, %v5201
      %v5203 = vpop.f32.mrf.mxu0
      %v5204 = vadd.f32 %v4935, %v5203
      %5205 = vmatmul.bf16.gmra.mxu0 %v2156
      %v5206 = vpop.f32.mrf.mxu0
      %v5207 = vadd.f32 %v4938, %v5206
      %v5208 = vpop.f32.mrf.mxu0
      %v5209 = vadd.f32 %v4940, %v5208
      %5210 = vdwg.mxu0
      %v5211 = vlaneseq
      %v5212 = vshrl.u32 %v5211, 7
      %v5213 = vadd.s32 %v5212, 8
      %v5214 = vadd.s32 %v5212, 16
      %v5215 = vadd.s32 %v5212, 24
      %vm5216 = vcmp.lt.s32.totalorder %v5212, 26
      %vm5217 = vcmp.lt.s32.totalorder %v5213, 26
      %vm5218 = vcmp.lt.s32.totalorder %v5214, 26
      %vm5219 = vcmp.lt.s32.totalorder %v5215, 26
      %v5220 = vsel %vm5216, %v4952, 0.0
      %v5221 = vsel %vm5217, %v4954, 0.0
      %v5222 = vsel %vm5218, %v4957, 0.0
      %v5223 = vsel %vm5219, %v4959, 0.0
      %v5224 = vsel %vm5216, %v4962, 0.0
      %v5225 = vsel %vm5217, %v4964, 0.0
      %v5226 = vsel %vm5218, %v4967, 0.0
      %v5227 = vsel %vm5219, %v4969, 0.0
      %v5228 = vsel %vm5216, %v4972, 0.0
      %v5229 = vsel %vm5217, %v4974, 0.0
      %v5230 = vsel %vm5218, %v4977, 0.0
      %v5231 = vsel %vm5219, %v4979, 0.0
      %v5232 = vsel %vm5216, %v4982, 0.0
      %v5233 = vsel %vm5217, %v4984, 0.0
      %v5234 = vsel %vm5218, %v4987, 0.0
      %v5235 = vsel %vm5219, %v4989, 0.0
      %v5236 = vsel %vm5216, %v4992, 0.0
      %v5237 = vsel %vm5217, %v4994, 0.0
      %v5238 = vsel %vm5218, %v4997, 0.0
      %v5239 = vsel %vm5219, %v4999, 0.0
      %v5240 = vsel %vm5216, %v5002, 0.0
      %v5241 = vsel %vm5217, %v5004, 0.0
      %v5242 = vsel %vm5218, %v5007, 0.0
      %v5243 = vsel %vm5219, %v5009, 0.0
      %v5244 = vsel %vm5216, %v5012, 0.0
      %v5245 = vsel %vm5217, %v5014, 0.0
      %v5246 = vsel %vm5218, %v5017, 0.0
      %v5247 = vsel %vm5219, %v5019, 0.0
      %v5248 = vsel %vm5216, %v5022, 0.0
      %v5249 = vsel %vm5217, %v5024, 0.0
      %v5250 = vsel %vm5218, %v5027, 0.0
      %v5251 = vsel %vm5219, %v5029, 0.0
      %v5252 = vsel %vm5216, %v5032, 0.0
      %v5253 = vsel %vm5217, %v5034, 0.0
      %v5254 = vsel %vm5218, %v5037, 0.0
      %v5255 = vsel %vm5219, %v5039, 0.0
      %v5256 = vsel %vm5216, %v5042, 0.0
      %v5257 = vsel %vm5217, %v5044, 0.0
      %v5258 = vsel %vm5218, %v5047, 0.0
      %v5259 = vsel %vm5219, %v5049, 0.0
      %v5260 = vsel %vm5216, %v5052, 0.0
      %v5261 = vsel %vm5217, %v5054, 0.0
      %v5262 = vsel %vm5218, %v5057, 0.0
      %v5263 = vsel %vm5219, %v5059, 0.0
      %v5264 = vsel %vm5216, %v5062, 0.0
      %v5265 = vsel %vm5217, %v5064, 0.0
      %v5266 = vsel %vm5218, %v5067, 0.0
      %v5267 = vsel %vm5219, %v5069, 0.0
      %v5268 = vsel %vm5216, %v5072, 0.0
      %v5269 = vsel %vm5217, %v5074, 0.0
      %v5270 = vsel %vm5218, %v5077, 0.0
      %v5271 = vsel %vm5219, %v5079, 0.0
      %v5272 = vsel %vm5216, %v5082, 0.0
      %v5273 = vsel %vm5217, %v5084, 0.0
      %v5274 = vsel %vm5218, %v5087, 0.0
      %v5275 = vsel %vm5219, %v5089, 0.0
      %v5276 = vsel %vm5216, %v5092, 0.0
      %v5277 = vsel %vm5217, %v5094, 0.0
      %v5278 = vsel %vm5218, %v5097, 0.0
      %v5279 = vsel %vm5219, %v5099, 0.0
      %v5280 = vsel %vm5216, %v5102, 0.0
      %v5281 = vsel %vm5217, %v5104, 0.0
      %v5282 = vsel %vm5218, %v5107, 0.0
      %v5283 = vsel %vm5219, %v5109, 0.0
      %v5284 = vsel %vm5216, %v5112, 0.0
      %v5285 = vsel %vm5217, %v5114, 0.0
      %v5286 = vsel %vm5218, %v5117, 0.0
      %v5287 = vsel %vm5219, %v5119, 0.0
      %v5288 = vsel %vm5216, %v5122, 0.0
      %v5289 = vsel %vm5217, %v5124, 0.0
      %v5290 = vsel %vm5218, %v5127, 0.0
      %v5291 = vsel %vm5219, %v5129, 0.0
      %v5292 = vsel %vm5216, %v5132, 0.0
      %v5293 = vsel %vm5217, %v5134, 0.0
      %v5294 = vsel %vm5218, %v5137, 0.0
      %v5295 = vsel %vm5219, %v5139, 0.0
      %v5296 = vsel %vm5216, %v5142, 0.0
      %v5297 = vsel %vm5217, %v5144, 0.0
      %v5298 = vsel %vm5218, %v5147, 0.0
      %v5299 = vsel %vm5219, %v5149, 0.0
      %v5300 = vsel %vm5216, %v5152, 0.0
      %v5301 = vsel %vm5217, %v5154, 0.0
      %v5302 = vsel %vm5218, %v5157, 0.0
      %v5303 = vsel %vm5219, %v5159, 0.0
      %v5304 = vsel %vm5216, %v5162, 0.0
      %v5305 = vsel %vm5217, %v5164, 0.0
      %v5306 = vsel %vm5218, %v5167, 0.0
      %v5307 = vsel %vm5219, %v5169, 0.0
      %v5308 = vsel %vm5216, %v5172, 0.0
      %v5309 = vsel %vm5217, %v5174, 0.0
      %v5310 = vsel %vm5218, %v5177, 0.0
      %v5311 = vsel %vm5219, %v5179, 0.0
      %v5312 = vsel %vm5216, %v5182, 0.0
      %v5313 = vsel %vm5217, %v5184, 0.0
      %v5314 = vsel %vm5218, %v5187, 0.0
      %v5315 = vsel %vm5219, %v5189, 0.0
      %v5316 = vsel %vm5216, %v5192, 0.0
      %v5317 = vsel %vm5217, %v5194, 0.0
      %v5318 = vsel %vm5218, %v5197, 0.0
      %v5319 = vsel %vm5219, %v5199, 0.0
      %v5320 = vsel %vm5216, %v5202, 0.0
      %v5321 = vsel %vm5217, %v5204, 0.0
      %v5322 = vsel %vm5218, %v5207, 0.0
      %v5323 = vsel %vm5219, %v5209, 0.0
      %v5324 = vpack.c.bf16 %v5220, %v5220
      %v5325 = vpack.c.bf16 %v5221, %v5221
      %v5326 = vpack.c.bf16 %v5222, %v5222
      %v5327 = vpack.c.bf16 %v5223, %v5223
      %v5328 = vpack.c.bf16 %v5224, %v5224
      %v5329 = vpack.c.bf16 %v5225, %v5225
      %v5330 = vpack.c.bf16 %v5226, %v5226
      %v5331 = vpack.c.bf16 %v5227, %v5227
      %v5332 = vpack.c.bf16 %v5228, %v5228
      %v5333 = vpack.c.bf16 %v5229, %v5229
      %v5334 = vpack.c.bf16 %v5230, %v5230
      %v5335 = vpack.c.bf16 %v5231, %v5231
      %v5336 = vpack.c.bf16 %v5232, %v5232
      %v5337 = vpack.c.bf16 %v5233, %v5233
      %v5338 = vpack.c.bf16 %v5234, %v5234
      %v5339 = vpack.c.bf16 %v5235, %v5235
      %v5340 = vpack.c.bf16 %v5236, %v5236
      %v5341 = vpack.c.bf16 %v5237, %v5237
      %v5342 = vpack.c.bf16 %v5238, %v5238
      %v5343 = vpack.c.bf16 %v5239, %v5239
      %v5344 = vpack.c.bf16 %v5240, %v5240
      %v5345 = vpack.c.bf16 %v5241, %v5241
      %v5346 = vpack.c.bf16 %v5242, %v5242
      %v5347 = vpack.c.bf16 %v5243, %v5243
      %v5348 = vpack.c.bf16 %v5244, %v5244
      %v5349 = vpack.c.bf16 %v5245, %v5245
      %v5350 = vpack.c.bf16 %v5246, %v5246
      %v5351 = vpack.c.bf16 %v5247, %v5247
      %v5352 = vpack.c.bf16 %v5248, %v5248
      %v5353 = vpack.c.bf16 %v5249, %v5249
      %v5354 = vpack.c.bf16 %v5250, %v5250
      %v5355 = vpack.c.bf16 %v5251, %v5251
      %v5356 = vpack.c.bf16 %v5252, %v5252
      %v5357 = vpack.c.bf16 %v5253, %v5253
      %v5358 = vpack.c.bf16 %v5254, %v5254
      %v5359 = vpack.c.bf16 %v5255, %v5255
      %v5360 = vpack.c.bf16 %v5256, %v5256
      %v5361 = vpack.c.bf16 %v5257, %v5257
      %v5362 = vpack.c.bf16 %v5258, %v5258
      %v5363 = vpack.c.bf16 %v5259, %v5259
      %v5364 = vpack.c.bf16 %v5260, %v5260
      %v5365 = vpack.c.bf16 %v5261, %v5261
      %v5366 = vpack.c.bf16 %v5262, %v5262
      %v5367 = vpack.c.bf16 %v5263, %v5263
      %v5368 = vpack.c.bf16 %v5264, %v5264
      %v5369 = vpack.c.bf16 %v5265, %v5265
      %v5370 = vpack.c.bf16 %v5266, %v5266
      %v5371 = vpack.c.bf16 %v5267, %v5267
      %v5372 = vpack.c.bf16 %v5268, %v5268
      %v5373 = vpack.c.bf16 %v5269, %v5269
      %v5374 = vpack.c.bf16 %v5270, %v5270
      %v5375 = vpack.c.bf16 %v5271, %v5271
      %v5376 = vpack.c.bf16 %v5272, %v5272
      %v5377 = vpack.c.bf16 %v5273, %v5273
      %v5378 = vpack.c.bf16 %v5274, %v5274
      %v5379 = vpack.c.bf16 %v5275, %v5275
      %v5380 = vpack.c.bf16 %v5276, %v5276
      %v5381 = vpack.c.bf16 %v5277, %v5277
      %v5382 = vpack.c.bf16 %v5278, %v5278
      %v5383 = vpack.c.bf16 %v5279, %v5279
      %v5384 = vpack.c.bf16 %v5280, %v5280
      %v5385 = vpack.c.bf16 %v5281, %v5281
      %v5386 = vpack.c.bf16 %v5282, %v5282
      %v5387 = vpack.c.bf16 %v5283, %v5283
      %v5388 = vpack.c.bf16 %v5284, %v5284
      %v5389 = vpack.c.bf16 %v5285, %v5285
      %v5390 = vpack.c.bf16 %v5286, %v5286
      %v5391 = vpack.c.bf16 %v5287, %v5287
      %v5392 = vpack.c.bf16 %v5288, %v5288
      %v5393 = vpack.c.bf16 %v5289, %v5289
      %v5394 = vpack.c.bf16 %v5290, %v5290
      %v5395 = vpack.c.bf16 %v5291, %v5291
      %v5396 = vpack.c.bf16 %v5292, %v5292
      %v5397 = vpack.c.bf16 %v5293, %v5293
      %v5398 = vpack.c.bf16 %v5294, %v5294
      %v5399 = vpack.c.bf16 %v5295, %v5295
      %v5400 = vpack.c.bf16 %v5296, %v5296
      %v5401 = vpack.c.bf16 %v5297, %v5297
      %v5402 = vpack.c.bf16 %v5298, %v5298
      %v5403 = vpack.c.bf16 %v5299, %v5299
      %v5404 = vpack.c.bf16 %v5300, %v5300
      %v5405 = vpack.c.bf16 %v5301, %v5301
      %v5406 = vpack.c.bf16 %v5302, %v5302
      %v5407 = vpack.c.bf16 %v5303, %v5303
      %v5408 = vpack.c.bf16 %v5304, %v5304
      %v5409 = vpack.c.bf16 %v5305, %v5305
      %v5410 = vpack.c.bf16 %v5306, %v5306
      %v5411 = vpack.c.bf16 %v5307, %v5307
      %v5412 = vpack.c.bf16 %v5308, %v5308
      %v5413 = vpack.c.bf16 %v5309, %v5309
      %v5414 = vpack.c.bf16 %v5310, %v5310
      %v5415 = vpack.c.bf16 %v5311, %v5311
      %v5416 = vpack.c.bf16 %v5312, %v5312
      %v5417 = vpack.c.bf16 %v5313, %v5313
      %v5418 = vpack.c.bf16 %v5314, %v5314
      %v5419 = vpack.c.bf16 %v5315, %v5315
      %v5420 = vpack.c.bf16 %v5316, %v5316
      %v5421 = vpack.c.bf16 %v5317, %v5317
      %v5422 = vpack.c.bf16 %v5318, %v5318
      %v5423 = vpack.c.bf16 %v5319, %v5319
      %v5424 = vpack.c.bf16 %v5320, %v5320
      %v5425 = vpack.c.bf16 %v5321, %v5321
      %v5426 = vpack.c.bf16 %v5322, %v5322
      %v5427 = vpack.c.bf16 %v5323, %v5323
      %5428 = vst [vmem:[%s262] sm:$0xf] %v5324
      %5429 = vst [vmem:[%s262 + $0x4] sm:$0xf] %v5325
      %5430 = vst [vmem:[%s262 + $0x8] sm:$0xf] %v5326
      %5431 = vst [vmem:[%s262 + $0xc] sm:$0xf] %v5327
      %5432 = vst [vmem:[%s262 + $0x10] sm:$0xf] %v5328
      %5433 = vst [vmem:[%s262 + $0x14] sm:$0xf] %v5329
      %5434 = vst [vmem:[%s262 + $0x18] sm:$0xf] %v5330
      %5435 = vst [vmem:[%s262 + $0x1c] sm:$0xf] %v5331
      %5436 = vst [vmem:[%s262 + $0x20] sm:$0xf] %v5332
      %5437 = vst [vmem:[%s262 + $0x24] sm:$0xf] %v5333
      %5438 = vst [vmem:[%s262 + $0x28] sm:$0xf] %v5334
      %5439 = vst [vmem:[%s262 + $0x2c] sm:$0xf] %v5335
      %5440 = vst [vmem:[%s262 + $0x30] sm:$0xf] %v5336
      %5441 = vst [vmem:[%s262 + $0x34] sm:$0xf] %v5337
      %5442 = vst [vmem:[%s262 + $0x38] sm:$0xf] %v5338
      %5443 = vst [vmem:[%s262 + $0x3c] sm:$0xf] %v5339
      %5444 = vst [vmem:[%s262 + $0x40] sm:$0xf] %v5340
      %5445 = vst [vmem:[%s262 + $0x44] sm:$0xf] %v5341
      %5446 = vst [vmem:[%s262 + $0x48] sm:$0xf] %v5342
      %5447 = vst [vmem:[%s262 + $0x4c] sm:$0xf] %v5343
      %5448 = vst [vmem:[%s262 + $0x50] sm:$0xf] %v5344
      %5449 = vst [vmem:[%s262 + $0x54] sm:$0xf] %v5345
      %5450 = vst [vmem:[%s262 + $0x58] sm:$0xf] %v5346
      %5451 = vst [vmem:[%s262 + $0x5c] sm:$0xf] %v5347
      %5452 = vst [vmem:[%s262 + $0x60] sm:$0xf] %v5348
      %5453 = vst [vmem:[%s262 + $0x64] sm:$0xf] %v5349
      %5454 = vst [vmem:[%s262 + $0x68] sm:$0xf] %v5350
      %5455 = vst [vmem:[%s262 + $0x6c] sm:$0xf] %v5351
      %5456 = vst [vmem:[%s262 + $0x70] sm:$0xf] %v5352
      %5457 = vst [vmem:[%s262 + $0x74] sm:$0xf] %v5353
      %5458 = vst [vmem:[%s262 + $0x78] sm:$0xf] %v5354
      %5459 = vst [vmem:[%s262 + $0x7c] sm:$0xf] %v5355
      %5460 = vst [vmem:[%s262 + $0x80] sm:$0xf] %v5356
      %5461 = vst [vmem:[%s262 + $0x84] sm:$0xf] %v5357
      %5462 = vst [vmem:[%s262 + $0x88] sm:$0xf] %v5358
      %5463 = vst [vmem:[%s262 + $0x8c] sm:$0xf] %v5359
      %5464 = vst [vmem:[%s262 + $0x90] sm:$0xf] %v5360
      %5465 = vst [vmem:[%s262 + $0x94] sm:$0xf] %v5361
      %5466 = vst [vmem:[%s262 + $0x98] sm:$0xf] %v5362
      %5467 = vst [vmem:[%s262 + $0x9c] sm:$0xf] %v5363
      %5468 = vst [vmem:[%s262 + $0xa0] sm:$0xf] %v5364
      %5469 = vst [vmem:[%s262 + $0xa4] sm:$0xf] %v5365
      %5470 = vst [vmem:[%s262 + $0xa8] sm:$0xf] %v5366
      %5471 = vst [vmem:[%s262 + $0xac] sm:$0xf] %v5367
      %5472 = vst [vmem:[%s262 + $0xb0] sm:$0xf] %v5368
      %5473 = vst [vmem:[%s262 + $0xb4] sm:$0xf] %v5369
      %5474 = vst [vmem:[%s262 + $0xb8] sm:$0xf] %v5370
      %5475 = vst [vmem:[%s262 + $0xbc] sm:$0xf] %v5371
      %5476 = vst [vmem:[%s262 + $0xc0] sm:$0xf] %v5372
      %5477 = vst [vmem:[%s262 + $0xc4] sm:$0xf] %v5373
      %5478 = vst [vmem:[%s262 + $0xc8] sm:$0xf] %v5374
      %5479 = vst [vmem:[%s262 + $0xcc] sm:$0xf] %v5375
      %5480 = vst [vmem:[%s262 + $0xd0] sm:$0xf] %v5376
      %5481 = vst [vmem:[%s262 + $0xd4] sm:$0xf] %v5377
      %5482 = vst [vmem:[%s262 + $0xd8] sm:$0xf] %v5378
      %5483 = vst [vmem:[%s262 + $0xdc] sm:$0xf] %v5379
      %5484 = vst [vmem:[%s262 + $0xe0] sm:$0xf] %v5380
      %5485 = vst [vmem:[%s262 + $0xe4] sm:$0xf] %v5381
      %5486 = vst [vmem:[%s262 + $0xe8] sm:$0xf] %v5382
      %5487 = vst [vmem:[%s262 + $0xec] sm:$0xf] %v5383
      %5488 = vst [vmem:[%s262 + $0xf0] sm:$0xf] %v5384
      %5489 = vst [vmem:[%s262 + $0xf4] sm:$0xf] %v5385
      %5490 = vst [vmem:[%s262 + $0xf8] sm:$0xf] %v5386
      %5491 = vst [vmem:[%s262 + $0xfc] sm:$0xf] %v5387
      %5492 = vst [vmem:[%s262 + $0x100] sm:$0xf] %v5388
      %5493 = vst [vmem:[%s262 + $0x104] sm:$0xf] %v5389
      %5494 = vst [vmem:[%s262 + $0x108] sm:$0xf] %v5390
      %5495 = vst [vmem:[%s262 + $0x10c] sm:$0xf] %v5391
      %5496 = vst [vmem:[%s262 + $0x110] sm:$0xf] %v5392
      %5497 = vst [vmem:[%s262 + $0x114] sm:$0xf] %v5393
      %5498 = vst [vmem:[%s262 + $0x118] sm:$0xf] %v5394
      %5499 = vst [vmem:[%s262 + $0x11c] sm:$0xf] %v5395
      %5500 = vst [vmem:[%s262 + $0x120] sm:$0xf] %v5396
      %5501 = vst [vmem:[%s262 + $0x124] sm:$0xf] %v5397
      %5502 = vst [vmem:[%s262 + $0x128] sm:$0xf] %v5398
      %5503 = vst [vmem:[%s262 + $0x12c] sm:$0xf] %v5399
      %5504 = vst [vmem:[%s262 + $0x130] sm:$0xf] %v5400
      %5505 = vst [vmem:[%s262 + $0x134] sm:$0xf] %v5401
      %5506 = vst [vmem:[%s262 + $0x138] sm:$0xf] %v5402
      %5507 = vst [vmem:[%s262 + $0x13c] sm:$0xf] %v5403
      %5508 = vst [vmem:[%s262 + $0x140] sm:$0xf] %v5404
      %5509 = vst [vmem:[%s262 + $0x144] sm:$0xf] %v5405
      %5510 = vst [vmem:[%s262 + $0x148] sm:$0xf] %v5406
      %5511 = vst [vmem:[%s262 + $0x14c] sm:$0xf] %v5407
      %5512 = vst [vmem:[%s262 + $0x150] sm:$0xf] %v5408
      %5513 = vst [vmem:[%s262 + $0x154] sm:$0xf] %v5409
      %5514 = vst [vmem:[%s262 + $0x158] sm:$0xf] %v5410
      %5515 = vst [vmem:[%s262 + $0x15c] sm:$0xf] %v5411
      %5516 = vst [vmem:[%s262 + $0x160] sm:$0xf] %v5412
      %5517 = vst [vmem:[%s262 + $0x164] sm:$0xf] %v5413
      %5518 = vst [vmem:[%s262 + $0x168] sm:$0xf] %v5414
      %5519 = vst [vmem:[%s262 + $0x16c] sm:$0xf] %v5415
      %5520 = vst [vmem:[%s262 + $0x170] sm:$0xf] %v5416
      %5521 = vst [vmem:[%s262 + $0x174] sm:$0xf] %v5417
      %5522 = vst [vmem:[%s262 + $0x178] sm:$0xf] %v5418
      %5523 = vst [vmem:[%s262 + $0x17c] sm:$0xf] %v5419
      %5524 = vst [vmem:[%s262 + $0x180] sm:$0xf] %v5420
      %5525 = vst [vmem:[%s262 + $0x184] sm:$0xf] %v5421
      %5526 = vst [vmem:[%s262 + $0x188] sm:$0xf] %v5422
      %5527 = vst [vmem:[%s262 + $0x18c] sm:$0xf] %v5423
      %5528 = vst [vmem:[%s262 + $0x190] sm:$0xf] %v5424
      %5529 = vst [vmem:[%s262 + $0x194] sm:$0xf] %v5425
      %5530 = vst [vmem:[%s262 + $0x198] sm:$0xf] %v5426
      %5531 = vst [vmem:[%s262 + $0x19c] sm:$0xf] %v5427
      %v5532 = vadd.f32 %v5220, %v5221
      %v5533 = vadd.f32 %v5532, %v5222
      %v5534 = vadd.f32 %v5533, %v5223
      %v5535 = vadd.f32 %v5534, %v5224
      %v5536 = vadd.f32 %v5535, %v5225
      %v5537 = vadd.f32 %v5536, %v5226
      %v5538 = vadd.f32 %v5537, %v5227
      %v5539 = vadd.f32 %v5538, %v5228
      %v5540 = vadd.f32 %v5539, %v5229
      %v5541 = vadd.f32 %v5540, %v5230
      %v5542 = vadd.f32 %v5541, %v5231
      %v5543 = vadd.f32 %v5542, %v5232
      %v5544 = vadd.f32 %v5543, %v5233
      %v5545 = vadd.f32 %v5544, %v5234
      %v5546 = vadd.f32 %v5545, %v5235
      %v5547 = vadd.f32 %v5546, %v5236
      %v5548 = vadd.f32 %v5547, %v5237
      %v5549 = vadd.f32 %v5548, %v5238
      %v5550 = vadd.f32 %v5549, %v5239
      %v5551 = vadd.f32 %v5550, %v5240
      %v5552 = vadd.f32 %v5551, %v5241
      %v5553 = vadd.f32 %v5552, %v5242
      %v5554 = vadd.f32 %v5553, %v5243
      %v5555 = vadd.f32 %v5554, %v5244
      %v5556 = vadd.f32 %v5555, %v5245
      %v5557 = vadd.f32 %v5556, %v5246
      %v5558 = vadd.f32 %v5557, %v5247
      %v5559 = vadd.f32 %v5558, %v5248
      %v5560 = vadd.f32 %v5559, %v5249
      %v5561 = vadd.f32 %v5560, %v5250
      %v5562 = vadd.f32 %v5561, %v5251
      %v5563 = vadd.f32 %v5562, %v5252
      %v5564 = vadd.f32 %v5563, %v5253
      %v5565 = vadd.f32 %v5564, %v5254
      %v5566 = vadd.f32 %v5565, %v5255
      %v5567 = vadd.f32 %v5566, %v5256
      %v5568 = vadd.f32 %v5567, %v5257
      %v5569 = vadd.f32 %v5568, %v5258
      %v5570 = vadd.f32 %v5569, %v5259
      %v5571 = vadd.f32 %v5570, %v5260
      %v5572 = vadd.f32 %v5571, %v5261
      %v5573 = vadd.f32 %v5572, %v5262
      %v5574 = vadd.f32 %v5573, %v5263
      %v5575 = vadd.f32 %v5574, %v5264
      %v5576 = vadd.f32 %v5575, %v5265
      %v5577 = vadd.f32 %v5576, %v5266
      %v5578 = vadd.f32 %v5577, %v5267
      %v5579 = vadd.f32 %v5578, %v5268
      %v5580 = vadd.f32 %v5579, %v5269
      %v5581 = vadd.f32 %v5580, %v5270
      %v5582 = vadd.f32 %v5581, %v5271
      %v5583 = vadd.f32 %v5582, %v5272
      %v5584 = vadd.f32 %v5583, %v5273
      %v5585 = vadd.f32 %v5584, %v5274
      %v5586 = vadd.f32 %v5585, %v5275
      %v5587 = vadd.f32 %v5586, %v5276
      %v5588 = vadd.f32 %v5587, %v5277
      %v5589 = vadd.f32 %v5588, %v5278
      %v5590 = vadd.f32 %v5589, %v5279
      %v5591 = vadd.f32 %v5590, %v5280
      %v5592 = vadd.f32 %v5591, %v5281
      %v5593 = vadd.f32 %v5592, %v5282
      %v5594 = vadd.f32 %v5593, %v5283
      %v5595 = vadd.f32 %v5594, %v5284
      %v5596 = vadd.f32 %v5595, %v5285
      %v5597 = vadd.f32 %v5596, %v5286
      %v5598 = vadd.f32 %v5597, %v5287
      %v5599 = vadd.f32 %v5598, %v5288
      %v5600 = vadd.f32 %v5599, %v5289
      %v5601 = vadd.f32 %v5600, %v5290
      %v5602 = vadd.f32 %v5601, %v5291
      %v5603 = vadd.f32 %v5602, %v5292
      %v5604 = vadd.f32 %v5603, %v5293
      %v5605 = vadd.f32 %v5604, %v5294
      %v5606 = vadd.f32 %v5605, %v5295
      %v5607 = vadd.f32 %v5606, %v5296
      %v5608 = vadd.f32 %v5607, %v5297
      %v5609 = vadd.f32 %v5608, %v5298
      %v5610 = vadd.f32 %v5609, %v5299
      %v5611 = vadd.f32 %v5610, %v5300
      %v5612 = vadd.f32 %v5611, %v5301
      %v5613 = vadd.f32 %v5612, %v5302
      %v5614 = vadd.f32 %v5613, %v5303
      %v5615 = vadd.f32 %v5614, %v5304
      %v5616 = vadd.f32 %v5615, %v5305
      %v5617 = vadd.f32 %v5616, %v5306
      %v5618 = vadd.f32 %v5617, %v5307
      %v5619 = vadd.f32 %v5618, %v5308
      %v5620 = vadd.f32 %v5619, %v5309
      %v5621 = vadd.f32 %v5620, %v5310
      %v5622 = vadd.f32 %v5621, %v5311
      %v5623 = vadd.f32 %v5622, %v5312
      %v5624 = vadd.f32 %v5623, %v5313
      %v5625 = vadd.f32 %v5624, %v5314
      %v5626 = vadd.f32 %v5625, %v5315
      %v5627 = vadd.f32 %v5626, %v5316
      %v5628 = vadd.f32 %v5627, %v5317
      %v5629 = vadd.f32 %v5628, %v5318
      %v5630 = vadd.f32 %v5629, %v5319
      %v5631 = vadd.f32 %v5630, %v5320
      %v5632 = vadd.f32 %v5631, %v5321
      %v5633 = vadd.f32 %v5632, %v5322
      %v5634 = vadd.f32 %v5633, %v5323
      %v5635 = vrot.slane %v5634, 4
      %v5636 = vadd.f32 %v5634, %v5635
      %v5637 = vrot.slane %v5636, 2
      %v5638 = vadd.f32 %v5636, %v5637
      %v5639 = vrot.slane %v5638, 1
      %v5640 = vadd.f32 %v5638, %v5639
      %5641 = vst [vmem:[%s265] sm:$0x1] %v5640
      %v5642 = vmul.f32 %v5220, %v5220
      %v5643 = vmul.f32 %v5221, %v5221
      %v5644 = vmul.f32 %v5222, %v5222
      %v5645 = vmul.f32 %v5223, %v5223
      %v5646 = vmul.f32 %v5224, %v5224
      %v5647 = vmul.f32 %v5225, %v5225
      %v5648 = vmul.f32 %v5226, %v5226
      %v5649 = vmul.f32 %v5227, %v5227
      %v5650 = vmul.f32 %v5228, %v5228
      %v5651 = vmul.f32 %v5229, %v5229
      %v5652 = vmul.f32 %v5230, %v5230
      %v5653 = vmul.f32 %v5231, %v5231
      %v5654 = vmul.f32 %v5232, %v5232
      %v5655 = vmul.f32 %v5233, %v5233
      %v5656 = vmul.f32 %v5234, %v5234
      %v5657 = vmul.f32 %v5235, %v5235
      %v5658 = vmul.f32 %v5236, %v5236
      %v5659 = vmul.f32 %v5237, %v5237
      %v5660 = vmul.f32 %v5238, %v5238
      %v5661 = vmul.f32 %v5239, %v5239
      %v5662 = vmul.f32 %v5240, %v5240
      %v5663 = vmul.f32 %v5241, %v5241
      %v5664 = vmul.f32 %v5242, %v5242
      %v5665 = vmul.f32 %v5243, %v5243
      %v5666 = vmul.f32 %v5244, %v5244
      %v5667 = vmul.f32 %v5245, %v5245
      %v5668 = vmul.f32 %v5246, %v5246
      %v5669 = vmul.f32 %v5247, %v5247
      %v5670 = vmul.f32 %v5248, %v5248
      %v5671 = vmul.f32 %v5249, %v5249
      %v5672 = vmul.f32 %v5250, %v5250
      %v5673 = vmul.f32 %v5251, %v5251
      %v5674 = vmul.f32 %v5252, %v5252
      %v5675 = vmul.f32 %v5253, %v5253
      %v5676 = vmul.f32 %v5254, %v5254
      %v5677 = vmul.f32 %v5255, %v5255
      %v5678 = vmul.f32 %v5256, %v5256
      %v5679 = vmul.f32 %v5257, %v5257
      %v5680 = vmul.f32 %v5258, %v5258
      %v5681 = vmul.f32 %v5259, %v5259
      %v5682 = vmul.f32 %v5260, %v5260
      %v5683 = vmul.f32 %v5261, %v5261
      %v5684 = vmul.f32 %v5262, %v5262
      %v5685 = vmul.f32 %v5263, %v5263
      %v5686 = vmul.f32 %v5264, %v5264
      %v5687 = vmul.f32 %v5265, %v5265
      %v5688 = vmul.f32 %v5266, %v5266
      %v5689 = vmul.f32 %v5267, %v5267
      %v5690 = vmul.f32 %v5268, %v5268
      %v5691 = vmul.f32 %v5269, %v5269
      %v5692 = vmul.f32 %v5270, %v5270
      %v5693 = vmul.f32 %v5271, %v5271
      %v5694 = vmul.f32 %v5272, %v5272
      %v5695 = vmul.f32 %v5273, %v5273
      %v5696 = vmul.f32 %v5274, %v5274
      %v5697 = vmul.f32 %v5275, %v5275
      %v5698 = vmul.f32 %v5276, %v5276
      %v5699 = vmul.f32 %v5277, %v5277
      %v5700 = vmul.f32 %v5278, %v5278
      %v5701 = vmul.f32 %v5279, %v5279
      %v5702 = vmul.f32 %v5280, %v5280
      %v5703 = vmul.f32 %v5281, %v5281
      %v5704 = vmul.f32 %v5282, %v5282
      %v5705 = vmul.f32 %v5283, %v5283
      %v5706 = vmul.f32 %v5284, %v5284
      %v5707 = vmul.f32 %v5285, %v5285
      %v5708 = vmul.f32 %v5286, %v5286
      %v5709 = vmul.f32 %v5287, %v5287
      %v5710 = vmul.f32 %v5288, %v5288
      %v5711 = vmul.f32 %v5289, %v5289
      %v5712 = vmul.f32 %v5290, %v5290
      %v5713 = vmul.f32 %v5291, %v5291
      %v5714 = vmul.f32 %v5292, %v5292
      %v5715 = vmul.f32 %v5293, %v5293
      %v5716 = vmul.f32 %v5294, %v5294
      %v5717 = vmul.f32 %v5295, %v5295
      %v5718 = vmul.f32 %v5296, %v5296
      %v5719 = vmul.f32 %v5297, %v5297
      %v5720 = vmul.f32 %v5298, %v5298
      %v5721 = vmul.f32 %v5299, %v5299
      %v5722 = vmul.f32 %v5300, %v5300
      %v5723 = vmul.f32 %v5301, %v5301
      %v5724 = vmul.f32 %v5302, %v5302
      %v5725 = vmul.f32 %v5303, %v5303
      %v5726 = vmul.f32 %v5304, %v5304
      %v5727 = vmul.f32 %v5305, %v5305
      %v5728 = vmul.f32 %v5306, %v5306
      %v5729 = vmul.f32 %v5307, %v5307
      %v5730 = vmul.f32 %v5308, %v5308
      %v5731 = vmul.f32 %v5309, %v5309
      %v5732 = vmul.f32 %v5310, %v5310
      %v5733 = vmul.f32 %v5311, %v5311
      %v5734 = vmul.f32 %v5312, %v5312
      %v5735 = vmul.f32 %v5313, %v5313
      %v5736 = vmul.f32 %v5314, %v5314
      %v5737 = vmul.f32 %v5315, %v5315
      %v5738 = vmul.f32 %v5316, %v5316
      %v5739 = vmul.f32 %v5317, %v5317
      %v5740 = vmul.f32 %v5318, %v5318
      %v5741 = vmul.f32 %v5319, %v5319
      %v5742 = vmul.f32 %v5320, %v5320
      %v5743 = vmul.f32 %v5321, %v5321
      %v5744 = vmul.f32 %v5322, %v5322
      %v5745 = vmul.f32 %v5323, %v5323
      %v5746 = vadd.f32 %v5642, %v5643
      %v5747 = vadd.f32 %v5746, %v5644
      %v5748 = vadd.f32 %v5747, %v5645
      %v5749 = vadd.f32 %v5748, %v5646
      %v5750 = vadd.f32 %v5749, %v5647
      %v5751 = vadd.f32 %v5750, %v5648
      %v5752 = vadd.f32 %v5751, %v5649
      %v5753 = vadd.f32 %v5752, %v5650
      %v5754 = vadd.f32 %v5753, %v5651
      %v5755 = vadd.f32 %v5754, %v5652
      %v5756 = vadd.f32 %v5755, %v5653
      %v5757 = vadd.f32 %v5756, %v5654
      %v5758 = vadd.f32 %v5757, %v5655
      %v5759 = vadd.f32 %v5758, %v5656
      %v5760 = vadd.f32 %v5759, %v5657
      %v5761 = vadd.f32 %v5760, %v5658
      %v5762 = vadd.f32 %v5761, %v5659
      %v5763 = vadd.f32 %v5762, %v5660
      %v5764 = vadd.f32 %v5763, %v5661
      %v5765 = vadd.f32 %v5764, %v5662
      %v5766 = vadd.f32 %v5765, %v5663
      %v5767 = vadd.f32 %v5766, %v5664
      %v5768 = vadd.f32 %v5767, %v5665
      %v5769 = vadd.f32 %v5768, %v5666
      %v5770 = vadd.f32 %v5769, %v5667
      %v5771 = vadd.f32 %v5770, %v5668
      %v5772 = vadd.f32 %v5771, %v5669
      %v5773 = vadd.f32 %v5772, %v5670
      %v5774 = vadd.f32 %v5773, %v5671
      %v5775 = vadd.f32 %v5774, %v5672
      %v5776 = vadd.f32 %v5775, %v5673
      %v5777 = vadd.f32 %v5776, %v5674
      %v5778 = vadd.f32 %v5777, %v5675
      %v5779 = vadd.f32 %v5778, %v5676
      %v5780 = vadd.f32 %v5779, %v5677
      %v5781 = vadd.f32 %v5780, %v5678
      %v5782 = vadd.f32 %v5781, %v5679
      %v5783 = vadd.f32 %v5782, %v5680
      %v5784 = vadd.f32 %v5783, %v5681
      %v5785 = vadd.f32 %v5784, %v5682
      %v5786 = vadd.f32 %v5785, %v5683
      %v5787 = vadd.f32 %v5786, %v5684
      %v5788 = vadd.f32 %v5787, %v5685
      %v5789 = vadd.f32 %v5788, %v5686
      %v5790 = vadd.f32 %v5789, %v5687
      %v5791 = vadd.f32 %v5790, %v5688
      %v5792 = vadd.f32 %v5791, %v5689
      %v5793 = vadd.f32 %v5792, %v5690
      %v5794 = vadd.f32 %v5793, %v5691
      %v5795 = vadd.f32 %v5794, %v5692
      %v5796 = vadd.f32 %v5795, %v5693
      %v5797 = vadd.f32 %v5796, %v5694
      %v5798 = vadd.f32 %v5797, %v5695
      %v5799 = vadd.f32 %v5798, %v5696
      %v5800 = vadd.f32 %v5799, %v5697
      %v5801 = vadd.f32 %v5800, %v5698
      %v5802 = vadd.f32 %v5801, %v5699
      %v5803 = vadd.f32 %v5802, %v5700
      %v5804 = vadd.f32 %v5803, %v5701
      %v5805 = vadd.f32 %v5804, %v5702
      %v5806 = vadd.f32 %v5805, %v5703
      %v5807 = vadd.f32 %v5806, %v5704
      %v5808 = vadd.f32 %v5807, %v5705
      %v5809 = vadd.f32 %v5808, %v5706
      %v5810 = vadd.f32 %v5809, %v5707
      %v5811 = vadd.f32 %v5810, %v5708
      %v5812 = vadd.f32 %v5811, %v5709
      %v5813 = vadd.f32 %v5812, %v5710
      %v5814 = vadd.f32 %v5813, %v5711
      %v5815 = vadd.f32 %v5814, %v5712
      %v5816 = vadd.f32 %v5815, %v5713
      %v5817 = vadd.f32 %v5816, %v5714
      %v5818 = vadd.f32 %v5817, %v5715
      %v5819 = vadd.f32 %v5818, %v5716
      %v5820 = vadd.f32 %v5819, %v5717
      %v5821 = vadd.f32 %v5820, %v5718
      %v5822 = vadd.f32 %v5821, %v5719
      %v5823 = vadd.f32 %v5822, %v5720
      %v5824 = vadd.f32 %v5823, %v5721
      %v5825 = vadd.f32 %v5824, %v5722
      %v5826 = vadd.f32 %v5825, %v5723
      %v5827 = vadd.f32 %v5826, %v5724
      %v5828 = vadd.f32 %v5827, %v5725
      %v5829 = vadd.f32 %v5828, %v5726
      %v5830 = vadd.f32 %v5829, %v5727
      %v5831 = vadd.f32 %v5830, %v5728
      %v5832 = vadd.f32 %v5831, %v5729
      %v5833 = vadd.f32 %v5832, %v5730
      %v5834 = vadd.f32 %v5833, %v5731
      %v5835 = vadd.f32 %v5834, %v5732
      %v5836 = vadd.f32 %v5835, %v5733
      %v5837 = vadd.f32 %v5836, %v5734
      %v5838 = vadd.f32 %v5837, %v5735
      %v5839 = vadd.f32 %v5838, %v5736
      %v5840 = vadd.f32 %v5839, %v5737
      %v5841 = vadd.f32 %v5840, %v5738
      %v5842 = vadd.f32 %v5841, %v5739
      %v5843 = vadd.f32 %v5842, %v5740
      %v5844 = vadd.f32 %v5843, %v5741
      %v5845 = vadd.f32 %v5844, %v5742
      %v5846 = vadd.f32 %v5845, %v5743
      %v5847 = vadd.f32 %v5846, %v5744
      %v5848 = vadd.f32 %v5847, %v5745
      %v5849 = vrot.slane %v5848, 4
      %v5850 = vadd.f32 %v5848, %v5849
      %v5851 = vrot.slane %v5850, 2
      %v5852 = vadd.f32 %v5850, %v5851
      %v5853 = vrot.slane %v5852, 1
      %v5854 = vadd.f32 %v5852, %v5853
      %5855 = vst [vmem:[%s268] sm:$0x1] %v5854
      %p5856 = scmp.lt.s32.totalorder %s18, 1
      %s5857 = scalar_select %p5856, %s18, 1
      %s5858 = smul.addr %s5857, 104
      %s5859 = smul.addr %s5858, 4
      %s5860 = scalar_lea.vmem %s4, %s5859
      %p5861 = scmp.lt.s32.totalorder %s18, 1
      %s5862 = scalar_select %p5861, %s18, 1
      %s5863 = scalar_lea.vmem %s5, %s5862
      %p5864 = scmp.lt.s32.totalorder %s18, 1
      %s5865 = scalar_select %p5864, %s18, 1
      %s5866 = scalar_lea.vmem %s6, %s5865
      // Predicated region
      $region37: #{base_forward.5} parent=35 // pred_check
        %p5867 = pneg %p125
      $region38: #{base_forward.5} parent=35 // pred_check_branch
        %5869 = sbr.rel (%p5867) target = $region40
      $region39: #{base_forward.5} parent=35 // pred_region
        _
      $region40: #{base_forward.5} parent=35 // pred_fallthru
        _
      // Predicated region
      $region41: #{base_forward.5} parent=35 // pred_check
        %p5870 = pneg %p151
      $region42: #{base_forward.5} parent=35 // pred_check_branch
        %5872 = sbr.rel (%p5870) target = $region44
      $region43: #{base_forward.5} parent=35 // pred_region
        _
      $region44: #{base_forward.5} parent=35 // pred_fallthru
        _
      // Predicated region
      $region45: #{base_forward.5} parent=35 // pred_check
        %p5873 = pneg %p177
      $region46: #{base_forward.5} parent=35 // pred_check_branch
        %5875 = sbr.rel (%p5873) target = $region48
      $region47: #{base_forward.5} parent=35 // pred_region
        _
      $region48: #{base_forward.5} parent=35 // pred_fallthru
        _
    $region36: #{base_forward.5} parent=5 // pred_fallthru
      _
    %p5876 = scmp.le.s32.totalorder 2, %s13
    // Predicated region
    $region49: #{base_forward.5} parent=5 // pred_check
      %p5877 = pneg %p5876
    $region50: #{base_forward.5} parent=5 // pred_check_branch
      %5879 = sbr.rel (%p5877) target = $region52
    $region51: #{base_forward.5} parent=5 // pred_region
      %s5880 = ssub.s32 %s13, 2
      // Predicated region
      $region53: #{base_forward.5} parent=51 // pred_check
        %p5881 = pneg %p131
      $region54: #{base_forward.5} parent=51 // pred_check_branch
        %5883 = sbr.rel (%p5881) target = $region56
      $region55: #{base_forward.5} parent=51 // pred_region
        %p5884 = scmp.lt.s32.totalorder %s19, 1
        %s5885 = scalar_select %p5884, %s19, 1
        %s5886 = smul.addr %s5885, 104
        %s5887 = smul.addr %s5886, 4
        %s5888 = scalar_lea.vmem %s4, %s5887
      $region56: #{base_forward.5} parent=51 // pred_fallthru
        _
      // Predicated region
      $region57: #{base_forward.5} parent=51 // pred_check
        %p5889 = pneg %p157
      $region58: #{base_forward.5} parent=51 // pred_check_branch
        %5891 = sbr.rel (%p5889) target = $region60
      $region59: #{base_forward.5} parent=51 // pred_region
        %p5892 = scmp.lt.s32.totalorder %s19, 1
        %s5893 = scalar_select %p5892, %s19, 1
        %s5894 = scalar_lea.vmem %s5, %s5893
      $region60: #{base_forward.5} parent=51 // pred_fallthru
        _
      // Predicated region
      $region61: #{base_forward.5} parent=51 // pred_check
        %p5895 = pneg %p183
      $region62: #{base_forward.5} parent=51 // pred_check_branch
        %5897 = sbr.rel (%p5895) target = $region64
      $region63: #{base_forward.5} parent=51 // pred_region
        %p5898 = scmp.lt.s32.totalorder %s19, 1
        %s5899 = scalar_select %p5898, %s19, 1
        %s5900 = scalar_lea.vmem %s6, %s5899
      $region64: #{base_forward.5} parent=51 // pred_fallthru
        _
    $region52: #{base_forward.5} parent=5 // pred_fallthru
      _
  $region6: #{base_forward.5} parent=0 // loop_footer
    %s17 = sadd.s32 1, %s13
  $region7: #{base_forward.5} parent=0 // loop_footer_branch
    %12 = sbr.rel target = $region3
  $region8: #{base_forward.5} parent=0 // loop_exit
    _

// kernel: base_forward.7
$region0: #{base_forward.7}
  #allocation0 [shape = 'u32[]', space=smem, size = 0x4, offset = 0x4, fixed_abs, tag = 'smem constant byte address 0x4 - core index']
  #allocation1 [shape = 'u32[72,128]{1,0:T(1,128)}', space=vmem, size = 0x9000, scoped, tag = 'internal scratch']
  %s0 = inlined_call_operand.vmem [shape: bf16[2,11,16,128], index: 0, kind: input, shape index: {}]
  %s1 = inlined_call_operand.vmem [shape: f32[1,128], index: 1, kind: input, shape index: {}]
  %s2 = inlined_call_operand.vmem [shape: f32[1,128], index: 2, kind: input, shape index: {}]
  %s3 = inlined_call_operand.vmem [shape: bf16[1152,128], index: 3, kind: input, shape index: {}]
  %s4 = inlined_call_operand.vmem [shape: bf16[2,9,16,128], index: 4, kind: output, shape index: {0}]
  %s5 = inlined_call_operand.vmem [shape: f32[2,1,128], index: 5, kind: output, shape index: {1}]
  %s6 = inlined_call_operand.vmem [shape: f32[2,1,128], index: 6, kind: output, shape index: {2}]
  %7 = xla_tuple %s4, %s5, %s6
  %s8 = sld [smem:[#allocation0]]
  $region65: #{base_forward.7} parent=0
    _
  %s10 = ssub.s32 1, %s8
  %s11 = scalar_select 0, %s10, %s8
  loop: start=0, step=1, limit=4
  $region2: #{base_forward.7} parent=0 // loop_pre_header
    _
  $region3: #{base_forward.7} parent=0 // loop_header
    %s13 = sphi 0, %s17
    %p14 = scmp.ge.s32.totalorder %s13, 4
    %s23 = sphi 0, %s25
    %s26 = sphi 0, %s23
    %s27 = sphi 0, %s26
    %s43 = sphi 0, %s27
    %s47 = sphi 0, %s47
    %s49 = sphi 0, %s47
    %s50 = sphi 0, %s49
    %s64 = sphi 0, %s50
    %s68 = sphi 0, %s68
    %s70 = sphi 0, %s68
    %s71 = sphi 0, %s70
    %s85 = sphi 0, %s71
    %s89 = sphi 0, %s89
    %s91 = sphi 0, %s89
    %s92 = sphi 0, %s91
    %s106 = sphi 0, %s92
    %s112 = sphi 0, %s114
    %s115 = sphi 0, %s112
    %s116 = sphi 0, %s115
    %s132 = sphi 0, %s116
    %s138 = sphi 0, %s140
    %s141 = sphi 0, %s138
    %s142 = sphi 0, %s141
    %s158 = sphi 0, %s142
    %s164 = sphi 0, %s166
    %s167 = sphi 0, %s164
    %s168 = sphi 0, %s167
    %s184 = sphi 0, %s168
  $region4: #{base_forward.7} parent=0 // loop_header_branch
    %16 = sbr.rel (%p14) target = $region8
  $region5: #{base_forward.7} parent=0 // loop_body
    %s18 = ssub.s32 %s13, 1
    %s19 = ssub.s32 %s13, 2
    %s20 = sadd.s32 %s13, 1
    %s21 = ssub.s32 %s13, %s20
    %p22 = scmp.eq.s32.totalorder %s21, 0
    %s24 = sadd.s32 %s23, 1
    %s25 = scalar_select %p22, %s23, %s24
    %p28 = pneg %p22
    %p29 = scmp.eq.s32.totalorder %s13, 1
    %p30 = por %p28, %p29
    %p31 = scmp.ne.s32.totalorder %s23, %s26
    %p32 = scmp.eq.s32.totalorder %s13, 0
    %p33 = por %p31, %p32
    %p34 = scmp.ne.s32.totalorder %s23, %s26
    %p35 = scmp.eq.s32.totalorder %s18, 1
    %p36 = por %p34, %p35
    %p37 = scmp.ne.s32.totalorder %s26, %s27
    %p38 = scmp.eq.s32.totalorder %s18, 0
    %p39 = por %p37, %p38
    %p40 = scmp.ne.s32.totalorder %s26, %s27
    %p41 = scmp.eq.s32.totalorder %s19, 1
    %p42 = por %p40, %p41
    %p44 = scmp.ne.s32.totalorder %s27, %s43
    %p45 = scmp.eq.s32.totalorder %s19, 0
    %p46 = por %p44, %p45
    %s48 = sadd.s32 %s47, 1
    %p51 = scmp.eq.s32.totalorder %s13, 1
    %p52 = scmp.ne.s32.totalorder %s47, %s49
    %p53 = scmp.eq.s32.totalorder %s13, 0
    %p54 = por %p52, %p53
    %p55 = scmp.ne.s32.totalorder %s47, %s49
    %p56 = scmp.eq.s32.totalorder %s18, 1
    %p57 = por %p55, %p56
    %p58 = scmp.ne.s32.totalorder %s49, %s50
    %p59 = scmp.eq.s32.totalorder %s18, 0
    %p60 = por %p58, %p59
    %p61 = scmp.ne.s32.totalorder %s49, %s50
    %p62 = scmp.eq.s32.totalorder %s19, 1
    %p63 = por %p61, %p62
    %p65 = scmp.ne.s32.totalorder %s50, %s64
    %p66 = scmp.eq.s32.totalorder %s19, 0
    %p67 = por %p65, %p66
    %s69 = sadd.s32 %s68, 1
    %p72 = scmp.eq.s32.totalorder %s13, 1
    %p73 = scmp.ne.s32.totalorder %s68, %s70
    %p74 = scmp.eq.s32.totalorder %s13, 0
    %p75 = por %p73, %p74
    %p76 = scmp.ne.s32.totalorder %s68, %s70
    %p77 = scmp.eq.s32.totalorder %s18, 1
    %p78 = por %p76, %p77
    %p79 = scmp.ne.s32.totalorder %s70, %s71
    %p80 = scmp.eq.s32.totalorder %s18, 0
    %p81 = por %p79, %p80
    %p82 = scmp.ne.s32.totalorder %s70, %s71
    %p83 = scmp.eq.s32.totalorder %s19, 1
    %p84 = por %p82, %p83
    %p86 = scmp.ne.s32.totalorder %s71, %s85
    %p87 = scmp.eq.s32.totalorder %s19, 0
    %p88 = por %p86, %p87
    %s90 = sadd.s32 %s89, 1
    %p93 = scmp.eq.s32.totalorder %s13, 1
    %p94 = scmp.ne.s32.totalorder %s89, %s91
    %p95 = scmp.eq.s32.totalorder %s13, 0
    %p96 = por %p94, %p95
    %p97 = scmp.ne.s32.totalorder %s89, %s91
    %p98 = scmp.eq.s32.totalorder %s18, 1
    %p99 = por %p97, %p98
    %p100 = scmp.ne.s32.totalorder %s91, %s92
    %p101 = scmp.eq.s32.totalorder %s18, 0
    %p102 = por %p100, %p101
    %p103 = scmp.ne.s32.totalorder %s91, %s92
    %p104 = scmp.eq.s32.totalorder %s19, 1
    %p105 = por %p103, %p104
    %p107 = scmp.ne.s32.totalorder %s92, %s106
    %p108 = scmp.eq.s32.totalorder %s19, 0
    %p109 = por %p107, %p108
    %s110 = ssub.s32 %s13, %s20
    %p111 = scmp.eq.s32.totalorder %s110, 0
    %s113 = sadd.s32 %s112, 1
    %s114 = scalar_select %p111, %s112, %s113
    %p117 = pneg %p111
    %p118 = scmp.eq.s32.totalorder %s13, 1
    %p119 = por %p117, %p118
    %p120 = scmp.ne.s32.totalorder %s112, %s115
    %p121 = scmp.eq.s32.totalorder %s13, 0
    %p122 = por %p120, %p121
    %p123 = scmp.ne.s32.totalorder %s112, %s115
    %p124 = scmp.eq.s32.totalorder %s18, 1
    %p125 = por %p123, %p124
    %p126 = scmp.ne.s32.totalorder %s115, %s116
    %p127 = scmp.eq.s32.totalorder %s18, 0
    %p128 = por %p126, %p127
    %p129 = scmp.ne.s32.totalorder %s115, %s116
    %p130 = scmp.eq.s32.totalorder %s19, 1
    %p131 = por %p129, %p130
    %p133 = scmp.ne.s32.totalorder %s116, %s132
    %p134 = scmp.eq.s32.totalorder %s19, 0
    %p135 = por %p133, %p134
    %s136 = ssub.s32 %s13, %s20
    %p137 = scmp.eq.s32.totalorder %s136, 0
    %s139 = sadd.s32 %s138, 1
    %s140 = scalar_select %p137, %s138, %s139
    %p143 = pneg %p137
    %p144 = scmp.eq.s32.totalorder %s13, 1
    %p145 = por %p143, %p144
    %p146 = scmp.ne.s32.totalorder %s138, %s141
    %p147 = scmp.eq.s32.totalorder %s13, 0
    %p148 = por %p146, %p147
    %p149 = scmp.ne.s32.totalorder %s138, %s141
    %p150 = scmp.eq.s32.totalorder %s18, 1
    %p151 = por %p149, %p150
    %p152 = scmp.ne.s32.totalorder %s141, %s142
    %p153 = scmp.eq.s32.totalorder %s18, 0
    %p154 = por %p152, %p153
    %p155 = scmp.ne.s32.totalorder %s141, %s142
    %p156 = scmp.eq.s32.totalorder %s19, 1
    %p157 = por %p155, %p156
    %p159 = scmp.ne.s32.totalorder %s142, %s158
    %p160 = scmp.eq.s32.totalorder %s19, 0
    %p161 = por %p159, %p160
    %s162 = ssub.s32 %s13, %s20
    %p163 = scmp.eq.s32.totalorder %s162, 0
    %s165 = sadd.s32 %s164, 1
    %s166 = scalar_select %p163, %s164, %s165
    %p169 = pneg %p163
    %p170 = scmp.eq.s32.totalorder %s13, 1
    %p171 = por %p169, %p170
    %p172 = scmp.ne.s32.totalorder %s164, %s167
    %p173 = scmp.eq.s32.totalorder %s13, 0
    %p174 = por %p172, %p173
    %p175 = scmp.ne.s32.totalorder %s164, %s167
    %p176 = scmp.eq.s32.totalorder %s18, 1
    %p177 = por %p175, %p176
    %p178 = scmp.ne.s32.totalorder %s167, %s168
    %p179 = scmp.eq.s32.totalorder %s18, 0
    %p180 = por %p178, %p179
    %p181 = scmp.ne.s32.totalorder %s167, %s168
    %p182 = scmp.eq.s32.totalorder %s19, 1
    %p183 = por %p181, %p182
    %p185 = scmp.ne.s32.totalorder %s168, %s184
    %p186 = scmp.eq.s32.totalorder %s19, 0
    %p187 = por %p185, %p186
    %p188 = scmp.le.s32.totalorder 1, %s13
    %p189 = scmp.lt.s32.totalorder %s13, 3
    %p190 = pnand %p188, %p189
    %p191 = pneg %p190
    // Predicated region
    $region9: #{base_forward.7} parent=5 // pred_check
      _
    $region10: #{base_forward.7} parent=5 // pred_check_branch
      %193 = sbr.rel (%p190) target = $region12
    $region11: #{base_forward.7} parent=5 // pred_region
      %s194 = ssub.s32 %s13, 1
      // Predicated region
      $region13: #{base_forward.7} parent=11 // pred_check
        %p195 = pneg %p60
      $region14: #{base_forward.7} parent=11 // pred_check_branch
        %197 = sbr.rel (%p195) target = $region16
      $region15: #{base_forward.7} parent=11 // pred_region
        _
      $region16: #{base_forward.7} parent=11 // pred_fallthru
        _
      // Predicated region
      $region17: #{base_forward.7} parent=11 // pred_check
        %p198 = pneg %p81
      $region18: #{base_forward.7} parent=11 // pred_check_branch
        %200 = sbr.rel (%p198) target = $region20
      $region19: #{base_forward.7} parent=11 // pred_region
        _
      $region20: #{base_forward.7} parent=11 // pred_fallthru
        _
      // Predicated region
      $region21: #{base_forward.7} parent=11 // pred_check
        %p201 = pneg %p102
      $region22: #{base_forward.7} parent=11 // pred_check_branch
        %203 = sbr.rel (%p201) target = $region24
      $region23: #{base_forward.7} parent=11 // pred_region
        _
      $region24: #{base_forward.7} parent=11 // pred_fallthru
        _
    $region12: #{base_forward.7} parent=5 // pred_fallthru
      _
    %p204 = scmp.lt.s32.totalorder %s13, 2
    // Predicated region
    $region25: #{base_forward.7} parent=5 // pred_check
      %p205 = pneg %p204
    $region26: #{base_forward.7} parent=5 // pred_check_branch
      %207 = sbr.rel (%p205) target = $region28
    $region27: #{base_forward.7} parent=5 // pred_region
      // Predicated region
      $region29: #{base_forward.7} parent=27 // pred_check
        %p208 = pneg %p33
      $region30: #{base_forward.7} parent=27 // pred_check_branch
        %210 = sbr.rel (%p208) target = $region32
      $region31: #{base_forward.7} parent=27 // pred_region
        %p211 = scmp.lt.s32.totalorder %s13, 1
        %s212 = scalar_select %p211, %s13, 1
        %s213 = smul.addr %s212, 22
        %s214 = smul.addr %s213, 4
        %s215 = scalar_lea.vmem %s0, %s214
      $region32: #{base_forward.7} parent=27 // pred_fallthru
        _
    $region28: #{base_forward.7} parent=5 // pred_fallthru
      _
    %p216 = scmp.le.s32.totalorder 1, %s13
    %p217 = scmp.lt.s32.totalorder %s13, 3
    %p218 = pnand %p216, %p217
    %p219 = pneg %p218
    // Predicated region
    $region33: #{base_forward.7} parent=5 // pred_check
      _
    $region34: #{base_forward.7} parent=5 // pred_check_branch
      %221 = sbr.rel (%p218) target = $region36
    $region35: #{base_forward.7} parent=5 // pred_region
      %s222 = ssub.s32 %s13, 1
      %p223 = scmp.lt.s32.totalorder %s18, 1
      %s224 = scalar_select %p223, %s18, 1
      %s225 = smul.addr %s224, 22
      %s226 = smul.addr %s225, 4
      %s227 = scalar_lea.vmem %s0, %s226
      %p228 = pneg %p39
      %p229 = pneg %p36
      %p230 = pneg %p60
      %p231 = pneg %p57
      %p232 = pneg %p81
      %p233 = pneg %p78
      %p234 = pneg %p102
      %p235 = pneg %p99
      %p236 = pneg %p128
      %p237 = pneg %p125
      %p238 = scmp.lt.s32.totalorder %s18, 1
      %s239 = scalar_select %p238, %s18, 1
      %s240 = smul.addr %s239, 18
      %s241 = smul.addr %s240, 4
      %s242 = scalar_lea.vmem %s4, %s241
      %p243 = pneg %p154
      %p244 = pneg %p151
      %p245 = scmp.lt.s32.totalorder %s18, 1
      %s246 = scalar_select %p245, %s18, 1
      %s247 = scalar_lea.vmem %s5, %s246
      %p248 = pneg %p180
      %p249 = pneg %p177
      %p250 = scmp.lt.s32.totalorder %s18, 1
      %s251 = scalar_select %p250, %s18, 1
      %s252 = scalar_lea.vmem %s6, %s251
      %p253 = scmp.lt.s32.totalorder %s18, 1
      %s254 = scalar_select %p253, %s18, 1
      %s255 = smul.addr %s254, 22
      %s256 = smul.addr %s255, 4
      %s257 = scalar_lea.vmem %s0, %s256
      %p258 = scmp.lt.s32.totalorder %s18, 1
      %s259 = scalar_select %p258, %s18, 1
      %s260 = smul.addr %s259, 18
      %s261 = smul.addr %s260, 4
      %s262 = scalar_lea.vmem %s4, %s261
      %p263 = scmp.lt.s32.totalorder %s18, 1
      %s264 = scalar_select %p263, %s18, 1
      %s265 = scalar_lea.vmem %s5, %s264
      %p266 = scmp.lt.s32.totalorder %s18, 1
      %s267 = scalar_select %p266, %s18, 1
      %s268 = scalar_lea.vmem %s6, %s267
      %v269 = vld [vmem:[%s1] sm:$0x1]
      %v270 = vld [vmem:[%s2] sm:$0x1]
      %v271 = vld [vmem:[%s257] sm:$0xf]
      %v272 = vld [vmem:[%s257 + $0x4] sm:$0xf]
      %v273 = vld [vmem:[%s257 + $0x8] sm:$0xf]
      %v274 = vld [vmem:[%s257 + $0xc] sm:$0xf]
      %v275 = vld [vmem:[%s257 + $0x10] sm:$0xf]
      %v276 = vld [vmem:[%s257 + $0x14] sm:$0xf]
      %v277 = vld [vmem:[%s257 + $0x18] sm:$0xf]
      %v278 = vld [vmem:[%s257 + $0x1c] sm:$0xf]
      %v279 = vld [vmem:[%s257 + $0x20] sm:$0xf]
      %v280 = vld [vmem:[%s257 + $0x24] sm:$0xf]
      %v281 = vld [vmem:[%s257 + $0x28] sm:$0xf]
      %v282 = vld [vmem:[%s257 + $0x2c] sm:$0xf]
      %v283 = vld [vmem:[%s257 + $0x30] sm:$0xf]
      %v284 = vld [vmem:[%s257 + $0x34] sm:$0xf]
      %v285 = vld [vmem:[%s257 + $0x38] sm:$0xf]
      %v286 = vld [vmem:[%s257 + $0x3c] sm:$0xf]
      %v287 = vld [vmem:[%s257 + $0x40] sm:$0xf]
      %v288 = vld [vmem:[%s257 + $0x44] sm:$0xf]
      %v289 = vld [vmem:[%s257 + $0x48] sm:$0xf]
      %v290 = vld [vmem:[%s257 + $0x4c] sm:$0xf]
      %v291 = vld [vmem:[%s257 + $0x50] sm:$0xf]
      %v292 = vld [vmem:[%s257 + $0x54] sm:$0xf]
      %v293 = vunpack.c.l.bf16 %v271
      %v294 = vunpack.c.l.bf16 %v272
      %v295 = vunpack.c.l.bf16 %v273
      %v296 = vunpack.c.l.bf16 %v274
      %v297 = vunpack.c.l.bf16 %v275
      %v298 = vunpack.c.l.bf16 %v276
      %v299 = vunpack.c.l.bf16 %v277
      %v300 = vunpack.c.l.bf16 %v278
      %v301 = vunpack.c.l.bf16 %v279
      %v302 = vunpack.c.l.bf16 %v280
      %v303 = vunpack.c.l.bf16 %v281
      %v304 = vunpack.c.l.bf16 %v282
      %v305 = vunpack.c.l.bf16 %v283
      %v306 = vunpack.c.l.bf16 %v284
      %v307 = vunpack.c.l.bf16 %v285
      %v308 = vunpack.c.l.bf16 %v286
      %v309 = vunpack.c.l.bf16 %v287
      %v310 = vunpack.c.l.bf16 %v288
      %v311 = vunpack.c.l.bf16 %v289
      %v312 = vunpack.c.l.bf16 %v290
      %v313 = vunpack.c.l.bf16 %v291
      %v314 = vunpack.c.l.bf16 %v292
      %v316 = vperm.slane %v269, 0
      %v318 = vmul.f32 %v293, %v316
      %v319 = vmul.f32 %v294, %v316
      %v320 = vmul.f32 %v295, %v316
      %v321 = vmul.f32 %v296, %v316
      %v322 = vmul.f32 %v297, %v316
      %v323 = vmul.f32 %v298, %v316
      %v324 = vmul.f32 %v299, %v316
      %v325 = vmul.f32 %v300, %v316
      %v326 = vmul.f32 %v301, %v316
      %v327 = vmul.f32 %v302, %v316
      %v328 = vmul.f32 %v303, %v316
      %v329 = vmul.f32 %v304, %v316
      %v330 = vmul.f32 %v305, %v316
      %v331 = vmul.f32 %v306, %v316
      %v332 = vmul.f32 %v307, %v316
      %v333 = vmul.f32 %v308, %v316
      %v334 = vmul.f32 %v309, %v316
      %v335 = vmul.f32 %v310, %v316
      %v336 = vmul.f32 %v311, %v316
      %v337 = vmul.f32 %v312, %v316
      %v338 = vmul.f32 %v313, %v316
      %v339 = vmul.f32 %v314, %v316
      %v341 = vperm.slane %v270, 0
      %v343 = vadd.f32 %v318, %v341
      %v344 = vadd.f32 %v319, %v341
      %v345 = vadd.f32 %v320, %v341
      %v346 = vadd.f32 %v321, %v341
      %v347 = vadd.f32 %v322, %v341
      %v348 = vadd.f32 %v323, %v341
      %v349 = vadd.f32 %v324, %v341
      %v350 = vadd.f32 %v325, %v341
      %v351 = vadd.f32 %v326, %v341
      %v352 = vadd.f32 %v327, %v341
      %v353 = vadd.f32 %v328, %v341
      %v354 = vadd.f32 %v329, %v341
      %v355 = vadd.f32 %v330, %v341
      %v356 = vadd.f32 %v331, %v341
      %v357 = vadd.f32 %v332, %v341
      %v358 = vadd.f32 %v333, %v341
      %v359 = vadd.f32 %v334, %v341
      %v360 = vadd.f32 %v335, %v341
      %v361 = vadd.f32 %v336, %v341
      %v362 = vadd.f32 %v337, %v341
      %v363 = vadd.f32 %v338, %v341
      %v364 = vadd.f32 %v339, %v341
      %v365 = vmax.f32 %v343, 0.0
      %v366 = vmax.f32 %v344, 0.0
      %v367 = vmax.f32 %v345, 0.0
      %v368 = vmax.f32 %v346, 0.0
      %v369 = vmax.f32 %v347, 0.0
      %v370 = vmax.f32 %v348, 0.0
      %v371 = vmax.f32 %v349, 0.0
      %v372 = vmax.f32 %v350, 0.0
      %v373 = vmax.f32 %v351, 0.0
      %v374 = vmax.f32 %v352, 0.0
      %v375 = vmax.f32 %v353, 0.0
      %v376 = vmax.f32 %v354, 0.0
      %v377 = vmax.f32 %v355, 0.0
      %v378 = vmax.f32 %v356, 0.0
      %v379 = vmax.f32 %v357, 0.0
      %v380 = vmax.f32 %v358, 0.0
      %v381 = vmax.f32 %v359, 0.0
      %v382 = vmax.f32 %v360, 0.0
      %v383 = vmax.f32 %v361, 0.0
      %v384 = vmax.f32 %v362, 0.0
      %v385 = vmax.f32 %v363, 0.0
      %v386 = vmax.f32 %v364, 0.0
      %v387 = vpack.c.bf16 %v365, %v365
      %v388 = vpack.c.bf16 %v366, %v366
      %v389 = vpack.c.bf16 %v367, %v367
      %v390 = vpack.c.bf16 %v368, %v368
      %v391 = vpack.c.bf16 %v369, %v369
      %v392 = vpack.c.bf16 %v370, %v370
      %v393 = vpack.c.bf16 %v371, %v371
      %v394 = vpack.c.bf16 %v372, %v372
      %v395 = vpack.c.bf16 %v373, %v373
      %v396 = vpack.c.bf16 %v374, %v374
      %v397 = vpack.c.bf16 %v375, %v375
      %v398 = vpack.c.bf16 %v376, %v376
      %v399 = vpack.c.bf16 %v377, %v377
      %v400 = vpack.c.bf16 %v378, %v378
      %v401 = vpack.c.bf16 %v379, %v379
      %v402 = vpack.c.bf16 %v380, %v380
      %v403 = vpack.c.bf16 %v381, %v381
      %v404 = vpack.c.bf16 %v382, %v382
      %v405 = vpack.c.bf16 %v383, %v383
      %v406 = vpack.c.bf16 %v384, %v384
      %v407 = vpack.c.bf16 %v385, %v385
      %v408 = vpack.c.bf16 %v386, %v386
      %v431 = vunpack.c.l.b16 %v387
      %v432 = vunpack.c.l.b16 %v388
      %v433 = vunpack.c.l.b16 %v389
      %v434 = vunpack.c.l.b16 %v390
      %v435 = vunpack.c.l.b16 %v391
      %v436 = vunpack.c.l.b16 %v392
      %v437 = vunpack.c.l.b16 %v393
      %v438 = vunpack.c.l.b16 %v394
      %v439 = vunpack.c.l.b16 %v395
      %v440 = vunpack.c.l.b16 %v396
      %v441 = vunpack.c.l.b16 %v397
      %v442 = vunpack.c.l.b16 %v398
      %v443 = vunpack.c.l.b16 %v399
      %v444 = vunpack.c.l.b16 %v400
      %v445 = vunpack.c.l.b16 %v401
      %v446 = vunpack.c.l.b16 %v402
      %v447 = vunpack.c.l.b16 %v403
      %v448 = vunpack.c.l.b16 %v404
      %v449 = vunpack.c.l.b16 %v405
      %v450 = vunpack.c.l.b16 %v406
      %v451 = vunpack.c.l.b16 %v407
      %v452 = vunpack.c.l.b16 %v408
      %v453 = vpack.c.b16 %v432, %v431
      %v454 = vpack.c.b16 %v434, %v433
      %v455 = vpack.c.b16 %v436, %v435
      %v456 = vpack.c.b16 %v438, %v437
      %v457 = vpack.c.b16 %v440, %v439
      %v458 = vpack.c.b16 %v442, %v441
      %v459 = vpack.c.b16 %v444, %v443
      %v460 = vpack.c.b16 %v446, %v445
      %v461 = vpack.c.b16 %v448, %v447
      %v462 = vpack.c.b16 %v450, %v449
      %v463 = vpack.c.b16 %v452, %v451
      %v465 = vshrl.u32 %v453, 16
      %v467 = vshll.u32 %v453, 16
      %v469 = vrot.slane %v467, 1
      %v470 = vor.u32 %v465, %v469
      %v472 = vshrl.u32 %v454, 16
      %v474 = vshll.u32 %v454, 16
      %v476 = vrot.slane %v474, 1
      %v477 = vor.u32 %v472, %v476
      %v479 = vshrl.u32 %v455, 16
      %v481 = vshll.u32 %v455, 16
      %v483 = vrot.slane %v481, 1
      %v484 = vor.u32 %v479, %v483
      %v486 = vshrl.u32 %v456, 16
      %v488 = vshll.u32 %v456, 16
      %v490 = vrot.slane %v488, 1
      %v491 = vor.u32 %v486, %v490
      %v493 = vshrl.u32 %v457, 16
      %v495 = vshll.u32 %v457, 16
      %v497 = vrot.slane %v495, 1
      %v498 = vor.u32 %v493, %v497
      %v500 = vshrl.u32 %v458, 16
      %v502 = vshll.u32 %v458, 16
      %v504 = vrot.slane %v502, 1
      %v505 = vor.u32 %v500, %v504
      %v507 = vshrl.u32 %v459, 16
      %v509 = vshll.u32 %v459, 16
      %v511 = vrot.slane %v509, 1
      %v512 = vor.u32 %v507, %v511
      %v514 = vshrl.u32 %v460, 16
      %v516 = vshll.u32 %v460, 16
      %v518 = vrot.slane %v516, 1
      %v519 = vor.u32 %v514, %v518
      %v521 = vshrl.u32 %v461, 16
      %v523 = vshll.u32 %v461, 16
      %v525 = vrot.slane %v523, 1
      %v526 = vor.u32 %v521, %v525
      %v528 = vshrl.u32 %v462, 16
      %v530 = vshll.u32 %v462, 16
      %v532 = vrot.slane %v530, 1
      %v533 = vor.u32 %v528, %v532
      %v535 = vshrl.u32 %v463, 16
      %v537 = vshll.u32 %v463, 16
      %v539 = vrot.slane %v537, 1
      %v540 = vor.u32 %v535, %v539
      %v552 = vpack.c.b16 %v431, %v431
      %v553 = vpack.c.b16 %v433, %v433
      %v554 = vpack.c.b16 %v435, %v435
      %v555 = vpack.c.b16 %v437, %v437
      %v556 = vpack.c.b16 %v439, %v439
      %v557 = vpack.c.b16 %v441, %v441
      %v558 = vpack.c.b16 %v443, %v443
      %v559 = vpack.c.b16 %v445, %v445
      %v560 = vpack.c.b16 %v447, %v447
      %v561 = vpack.c.b16 %v449, %v449
      %v562 = vpack.c.b16 %v451, %v451
      %v564 = vshll.u32 %v552, 16
      %v566 = vrot.slane %v564, 1
      %v568 = vshll.u32 %v553, 16
      %v570 = vrot.slane %v568, 1
      %v572 = vshll.u32 %v554, 16
      %v574 = vrot.slane %v572, 1
      %v576 = vshll.u32 %v555, 16
      %v578 = vrot.slane %v576, 1
      %v580 = vshll.u32 %v556, 16
      %v582 = vrot.slane %v580, 1
      %v584 = vshll.u32 %v557, 16
      %v586 = vrot.slane %v584, 1
      %v588 = vshll.u32 %v558, 16
      %v590 = vrot.slane %v588, 1
      %v592 = vshll.u32 %v559, 16
      %v594 = vrot.slane %v592, 1
      %v596 = vshll.u32 %v560, 16
      %v598 = vrot.slane %v596, 1
      %v600 = vshll.u32 %v561, 16
      %v602 = vrot.slane %v600, 1
      %v604 = vshll.u32 %v562, 16
      %v606 = vrot.slane %v604, 1
      %vm618 = vcmask 1047552
      %vm619 = vsmask.f32 7424
      %vm620 = vmand %vm618, %vm619
      %v621 = vsel %vm620, %v470, %v566
      %v622 = vsel %vm620, %v477, %v570
      %v623 = vsel %vm620, %v484, %v574
      %v624 = vsel %vm620, %v491, %v578
      %v625 = vsel %vm620, %v498, %v582
      %v626 = vsel %vm620, %v505, %v586
      %v627 = vsel %vm620, %v512, %v590
      %v628 = vsel %vm620, %v519, %v594
      %v629 = vsel %vm620, %v526, %v598
      %v630 = vsel %vm620, %v533, %v602
      %v631 = vsel %vm620, %v540, %v606
      %v632 = vrot.slane %v453, 1
      %v633 = vrot.slane %v454, 1
      %v634 = vrot.slane %v455, 1
      %v635 = vrot.slane %v456, 1
      %v636 = vrot.slane %v457, 1
      %v637 = vrot.slane %v458, 1
      %v638 = vrot.slane %v459, 1
      %v639 = vrot.slane %v460, 1
      %v640 = vrot.slane %v461, 1
      %v641 = vrot.slane %v462, 1
      %v642 = vrot.slane %v463, 1
      %v643 = vrot.slane %v552, 1
      %v644 = vrot.slane %v553, 1
      %v645 = vrot.slane %v554, 1
      %v646 = vrot.slane %v555, 1
      %v647 = vrot.slane %v556, 1
      %v648 = vrot.slane %v557, 1
      %v649 = vrot.slane %v558, 1
      %v650 = vrot.slane %v559, 1
      %v651 = vrot.slane %v560, 1
      %v652 = vrot.slane %v561, 1
      %v653 = vrot.slane %v562, 1
      %vm654 = vcmask 1046528
      %v657 = vsel %vm654, %v632, %v643
      %v661 = vsel %vm654, %v633, %v644
      %v665 = vsel %vm654, %v634, %v645
      %v669 = vsel %vm654, %v635, %v646
      %v673 = vsel %vm654, %v636, %v647
      %v677 = vsel %vm654, %v637, %v648
      %v681 = vsel %vm654, %v638, %v649
      %v685 = vsel %vm654, %v639, %v650
      %v689 = vsel %vm654, %v640, %v651
      %v693 = vsel %vm654, %v641, %v652
      %v697 = vsel %vm654, %v642, %v653
      %v710 = vld [vmem:[%s3] sm:$0xf]
      %v711 = vld [vmem:[%s3 + $0x4] sm:$0xf]
      %v712 = vld [vmem:[%s3 + $0x8] sm:$0xf]
      %v713 = vld [vmem:[%s3 + $0xc] sm:$0xf]
      %v714 = vld [vmem:[%s3 + $0x10] sm:$0xf]
      %v715 = vld [vmem:[%s3 + $0x14] sm:$0xf]
      %v716 = vld [vmem:[%s3 + $0x18] sm:$0xf]
      %v717 = vld [vmem:[%s3 + $0x1c] sm:$0xf]
      %v718 = vld [vmem:[%s3 + $0x20] sm:$0xf]
      %v719 = vld [vmem:[%s3 + $0x24] sm:$0xf]
      %v720 = vld [vmem:[%s3 + $0x28] sm:$0xf]
      %v721 = vld [vmem:[%s3 + $0x2c] sm:$0xf]
      %v722 = vld [vmem:[%s3 + $0x30] sm:$0xf]
      %v723 = vld [vmem:[%s3 + $0x34] sm:$0xf]
      %v724 = vld [vmem:[%s3 + $0x38] sm:$0xf]
      %v725 = vld [vmem:[%s3 + $0x3c] sm:$0xf]
      %v726 = vld [vmem:[%s3 + $0x40] sm:$0xf]
      %v727 = vld [vmem:[%s3 + $0x44] sm:$0xf]
      %v728 = vld [vmem:[%s3 + $0x48] sm:$0xf]
      %v729 = vld [vmem:[%s3 + $0x4c] sm:$0xf]
      %v730 = vld [vmem:[%s3 + $0x50] sm:$0xf]
      %v731 = vld [vmem:[%s3 + $0x54] sm:$0xf]
      %v732 = vld [vmem:[%s3 + $0x58] sm:$0xf]
      %v733 = vld [vmem:[%s3 + $0x5c] sm:$0xf]
      %v734 = vld [vmem:[%s3 + $0x60] sm:$0xf]
      %v735 = vld [vmem:[%s3 + $0x64] sm:$0xf]
      %v736 = vld [vmem:[%s3 + $0x68] sm:$0xf]
      %v737 = vld [vmem:[%s3 + $0x6c] sm:$0xf]
      %v738 = vld [vmem:[%s3 + $0x70] sm:$0xf]
      %v739 = vld [vmem:[%s3 + $0x74] sm:$0xf]
      %v740 = vld [vmem:[%s3 + $0x78] sm:$0xf]
      %v741 = vld [vmem:[%s3 + $0x7c] sm:$0xf]
      %v742 = vld [vmem:[%s3 + $0x80] sm:$0xf]
      %v743 = vld [vmem:[%s3 + $0x84] sm:$0xf]
      %v744 = vld [vmem:[%s3 + $0x88] sm:$0xf]
      %v745 = vld [vmem:[%s3 + $0x8c] sm:$0xf]
      %v746 = vld [vmem:[%s3 + $0x90] sm:$0xf]
      %v747 = vld [vmem:[%s3 + $0x94] sm:$0xf]
      %v748 = vld [vmem:[%s3 + $0x98] sm:$0xf]
      %v749 = vld [vmem:[%s3 + $0x9c] sm:$0xf]
      %v750 = vld [vmem:[%s3 + $0xa0] sm:$0xf]
      %v751 = vld [vmem:[%s3 + $0xa4] sm:$0xf]
      %v752 = vld [vmem:[%s3 + $0xa8] sm:$0xf]
      %v753 = vld [vmem:[%s3 + $0xac] sm:$0xf]
      %v754 = vld [vmem:[%s3 + $0xb0] sm:$0xf]
      %v755 = vld [vmem:[%s3 + $0xb4] sm:$0xf]
      %v756 = vld [vmem:[%s3 + $0xb8] sm:$0xf]
      %v757 = vld [vmem:[%s3 + $0xbc] sm:$0xf]
      %v758 = vld [vmem:[%s3 + $0xc0] sm:$0xf]
      %v759 = vld [vmem:[%s3 + $0xc4] sm:$0xf]
      %v760 = vld [vmem:[%s3 + $0xc8] sm:$0xf]
      %v761 = vld [vmem:[%s3 + $0xcc] sm:$0xf]
      %v762 = vld [vmem:[%s3 + $0xd0] sm:$0xf]
      %v763 = vld [vmem:[%s3 + $0xd4] sm:$0xf]
      %v764 = vld [vmem:[%s3 + $0xd8] sm:$0xf]
      %v765 = vld [vmem:[%s3 + $0xdc] sm:$0xf]
      %v766 = vld [vmem:[%s3 + $0xe0] sm:$0xf]
      %v767 = vld [vmem:[%s3 + $0xe4] sm:$0xf]
      %v768 = vld [vmem:[%s3 + $0xe8] sm:$0xf]
      %v769 = vld [vmem:[%s3 + $0xec] sm:$0xf]
      %v770 = vld [vmem:[%s3 + $0xf0] sm:$0xf]
      %v771 = vld [vmem:[%s3 + $0xf4] sm:$0xf]
      %v772 = vld [vmem:[%s3 + $0xf8] sm:$0xf]
      %v773 = vld [vmem:[%s3 + $0xfc] sm:$0xf]
      %v774 = vld [vmem:[%s3 + $0x100] sm:$0xf]
      %v775 = vld [vmem:[%s3 + $0x104] sm:$0xf]
      %v776 = vld [vmem:[%s3 + $0x108] sm:$0xf]
      %v777 = vld [vmem:[%s3 + $0x10c] sm:$0xf]
      %v778 = vld [vmem:[%s3 + $0x110] sm:$0xf]
      %v779 = vld [vmem:[%s3 + $0x114] sm:$0xf]
      %v780 = vld [vmem:[%s3 + $0x118] sm:$0xf]
      %v781 = vld [vmem:[%s3 + $0x11c] sm:$0xf]
      %v782 = vld [vmem:[%s3 + $0x120] sm:$0xf]
      %v783 = vld [vmem:[%s3 + $0x124] sm:$0xf]
      %v784 = vld [vmem:[%s3 + $0x128] sm:$0xf]
      %v785 = vld [vmem:[%s3 + $0x12c] sm:$0xf]
      %v786 = vld [vmem:[%s3 + $0x130] sm:$0xf]
      %v787 = vld [vmem:[%s3 + $0x134] sm:$0xf]
      %v788 = vld [vmem:[%s3 + $0x138] sm:$0xf]
      %v789 = vld [vmem:[%s3 + $0x13c] sm:$0xf]
      %v790 = vld [vmem:[%s3 + $0x140] sm:$0xf]
      %v791 = vld [vmem:[%s3 + $0x144] sm:$0xf]
      %v792 = vld [vmem:[%s3 + $0x148] sm:$0xf]
      %v793 = vld [vmem:[%s3 + $0x14c] sm:$0xf]
      %v794 = vld [vmem:[%s3 + $0x150] sm:$0xf]
      %v795 = vld [vmem:[%s3 + $0x154] sm:$0xf]
      %v796 = vld [vmem:[%s3 + $0x158] sm:$0xf]
      %v797 = vld [vmem:[%s3 + $0x15c] sm:$0xf]
      %v798 = vld [vmem:[%s3 + $0x160] sm:$0xf]
      %v799 = vld [vmem:[%s3 + $0x164] sm:$0xf]
      %v800 = vld [vmem:[%s3 + $0x168] sm:$0xf]
      %v801 = vld [vmem:[%s3 + $0x16c] sm:$0xf]
      %v802 = vld [vmem:[%s3 + $0x170] sm:$0xf]
      %v803 = vld [vmem:[%s3 + $0x174] sm:$0xf]
      %v804 = vld [vmem:[%s3 + $0x178] sm:$0xf]
      %v805 = vld [vmem:[%s3 + $0x17c] sm:$0xf]
      %v806 = vld [vmem:[%s3 + $0x180] sm:$0xf]
      %v807 = vld [vmem:[%s3 + $0x184] sm:$0xf]
      %v808 = vld [vmem:[%s3 + $0x188] sm:$0xf]
      %v809 = vld [vmem:[%s3 + $0x18c] sm:$0xf]
      %v810 = vld [vmem:[%s3 + $0x190] sm:$0xf]
      %v811 = vld [vmem:[%s3 + $0x194] sm:$0xf]
      %v812 = vld [vmem:[%s3 + $0x198] sm:$0xf]
      %v813 = vld [vmem:[%s3 + $0x19c] sm:$0xf]
      %v814 = vld [vmem:[%s3 + $0x1a0] sm:$0xf]
      %v815 = vld [vmem:[%s3 + $0x1a4] sm:$0xf]
      %v816 = vld [vmem:[%s3 + $0x1a8] sm:$0xf]
      %v817 = vld [vmem:[%s3 + $0x1ac] sm:$0xf]
      %v818 = vld [vmem:[%s3 + $0x1b0] sm:$0xf]
      %v819 = vld [vmem:[%s3 + $0x1b4] sm:$0xf]
      %v820 = vld [vmem:[%s3 + $0x1b8] sm:$0xf]
      %v821 = vld [vmem:[%s3 + $0x1bc] sm:$0xf]
      %v822 = vld [vmem:[%s3 + $0x1c0] sm:$0xf]
      %v823 = vld [vmem:[%s3 + $0x1c4] sm:$0xf]
      %v824 = vld [vmem:[%s3 + $0x1c8] sm:$0xf]
      %v825 = vld [vmem:[%s3 + $0x1cc] sm:$0xf]
      %v826 = vld [vmem:[%s3 + $0x1d0] sm:$0xf]
      %v827 = vld [vmem:[%s3 + $0x1d4] sm:$0xf]
      %v828 = vld [vmem:[%s3 + $0x1d8] sm:$0xf]
      %v829 = vld [vmem:[%s3 + $0x1dc] sm:$0xf]
      %v830 = vld [vmem:[%s3 + $0x1e0] sm:$0xf]
      %v831 = vld [vmem:[%s3 + $0x1e4] sm:$0xf]
      %v832 = vld [vmem:[%s3 + $0x1e8] sm:$0xf]
      %v833 = vld [vmem:[%s3 + $0x1ec] sm:$0xf]
      %v834 = vld [vmem:[%s3 + $0x1f0] sm:$0xf]
      %v835 = vld [vmem:[%s3 + $0x1f4] sm:$0xf]
      %v836 = vld [vmem:[%s3 + $0x1f8] sm:$0xf]
      %v837 = vld [vmem:[%s3 + $0x1fc] sm:$0xf]
      %v838 = vld [vmem:[%s3 + $0x200] sm:$0xf]
      %v839 = vld [vmem:[%s3 + $0x204] sm:$0xf]
      %v840 = vld [vmem:[%s3 + $0x208] sm:$0xf]
      %v841 = vld [vmem:[%s3 + $0x20c] sm:$0xf]
      %v842 = vld [vmem:[%s3 + $0x210] sm:$0xf]
      %v843 = vld [vmem:[%s3 + $0x214] sm:$0xf]
      %v844 = vld [vmem:[%s3 + $0x218] sm:$0xf]
      %v845 = vld [vmem:[%s3 + $0x21c] sm:$0xf]
      %v846 = vld [vmem:[%s3 + $0x220] sm:$0xf]
      %v847 = vld [vmem:[%s3 + $0x224] sm:$0xf]
      %v848 = vld [vmem:[%s3 + $0x228] sm:$0xf]
      %v849 = vld [vmem:[%s3 + $0x22c] sm:$0xf]
      %v850 = vld [vmem:[%s3 + $0x230] sm:$0xf]
      %v851 = vld [vmem:[%s3 + $0x234] sm:$0xf]
      %v852 = vld [vmem:[%s3 + $0x238] sm:$0xf]
      %v853 = vld [vmem:[%s3 + $0x23c] sm:$0xf]
      %v998 = vunpack.c.l.b16 %v710
      %v999 = vunpack.c.l.b16 %v711
      %v1000 = vunpack.c.l.b16 %v712
      %v1001 = vunpack.c.l.b16 %v713
      %v1002 = vunpack.c.l.b16 %v714
      %v1003 = vunpack.c.l.b16 %v715
      %v1004 = vunpack.c.l.b16 %v716
      %v1005 = vunpack.c.l.b16 %v717
      %v1006 = vunpack.c.l.b16 %v718
      %v1007 = vunpack.c.l.b16 %v719
      %v1008 = vunpack.c.l.b16 %v720
      %v1009 = vunpack.c.l.b16 %v721
      %v1010 = vunpack.c.l.b16 %v722
      %v1011 = vunpack.c.l.b16 %v723
      %v1012 = vunpack.c.l.b16 %v724
      %v1013 = vunpack.c.l.b16 %v725
      %v1014 = vunpack.c.l.b16 %v726
      %v1015 = vunpack.c.l.b16 %v727
      %v1016 = vunpack.c.l.b16 %v728
      %v1017 = vunpack.c.l.b16 %v729
      %v1018 = vunpack.c.l.b16 %v730
      %v1019 = vunpack.c.l.b16 %v731
      %v1020 = vunpack.c.l.b16 %v732
      %v1021 = vunpack.c.l.b16 %v733
      %v1022 = vunpack.c.l.b16 %v734
      %v1023 = vunpack.c.l.b16 %v735
      %v1024 = vunpack.c.l.b16 %v736
      %v1025 = vunpack.c.l.b16 %v737
      %v1026 = vunpack.c.l.b16 %v738
      %v1027 = vunpack.c.l.b16 %v739
      %v1028 = vunpack.c.l.b16 %v740
      %v1029 = vunpack.c.l.b16 %v741
      %v1030 = vunpack.c.l.b16 %v742
      %v1031 = vunpack.c.l.b16 %v743
      %v1032 = vunpack.c.l.b16 %v744
      %v1033 = vunpack.c.l.b16 %v745
      %v1034 = vunpack.c.l.b16 %v746
      %v1035 = vunpack.c.l.b16 %v747
      %v1036 = vunpack.c.l.b16 %v748
      %v1037 = vunpack.c.l.b16 %v749
      %v1038 = vunpack.c.l.b16 %v750
      %v1039 = vunpack.c.l.b16 %v751
      %v1040 = vunpack.c.l.b16 %v752
      %v1041 = vunpack.c.l.b16 %v753
      %v1042 = vunpack.c.l.b16 %v754
      %v1043 = vunpack.c.l.b16 %v755
      %v1044 = vunpack.c.l.b16 %v756
      %v1045 = vunpack.c.l.b16 %v757
      %v1046 = vunpack.c.l.b16 %v758
      %v1047 = vunpack.c.l.b16 %v759
      %v1048 = vunpack.c.l.b16 %v760
      %v1049 = vunpack.c.l.b16 %v761
      %v1050 = vunpack.c.l.b16 %v762
      %v1051 = vunpack.c.l.b16 %v763
      %v1052 = vunpack.c.l.b16 %v764
      %v1053 = vunpack.c.l.b16 %v765
      %v1054 = vunpack.c.l.b16 %v766
      %v1055 = vunpack.c.l.b16 %v767
      %v1056 = vunpack.c.l.b16 %v768
      %v1057 = vunpack.c.l.b16 %v769
      %v1058 = vunpack.c.l.b16 %v770
      %v1059 = vunpack.c.l.b16 %v771
      %v1060 = vunpack.c.l.b16 %v772
      %v1061 = vunpack.c.l.b16 %v773
      %v1062 = vunpack.c.l.b16 %v774
      %v1063 = vunpack.c.l.b16 %v775
      %v1064 = vunpack.c.l.b16 %v776
      %v1065 = vunpack.c.l.b16 %v777
      %v1066 = vunpack.c.l.b16 %v778
      %v1067 = vunpack.c.l.b16 %v779
      %v1068 = vunpack.c.l.b16 %v780
      %v1069 = vunpack.c.l.b16 %v781
      %v1070 = vunpack.c.l.b16 %v782
      %v1071 = vunpack.c.l.b16 %v783
      %v1072 = vunpack.c.l.b16 %v784
      %v1073 = vunpack.c.l.b16 %v785
      %v1074 = vunpack.c.l.b16 %v786
      %v1075 = vunpack.c.l.b16 %v787
      %v1076 = vunpack.c.l.b16 %v788
      %v1077 = vunpack.c.l.b16 %v789
      %v1078 = vunpack.c.l.b16 %v790
      %v1079 = vunpack.c.l.b16 %v791
      %v1080 = vunpack.c.l.b16 %v792
      %v1081 = vunpack.c.l.b16 %v793
      %v1082 = vunpack.c.l.b16 %v794
      %v1083 = vunpack.c.l.b16 %v795
      %v1084 = vunpack.c.l.b16 %v796
      %v1085 = vunpack.c.l.b16 %v797
      %v1086 = vunpack.c.l.b16 %v798
      %v1087 = vunpack.c.l.b16 %v799
      %v1088 = vunpack.c.l.b16 %v800
      %v1089 = vunpack.c.l.b16 %v801
      %v1090 = vunpack.c.l.b16 %v802
      %v1091 = vunpack.c.l.b16 %v803
      %v1092 = vunpack.c.l.b16 %v804
      %v1093 = vunpack.c.l.b16 %v805
      %v1094 = vunpack.c.l.b16 %v806
      %v1095 = vunpack.c.l.b16 %v807
      %v1096 = vunpack.c.l.b16 %v808
      %v1097 = vunpack.c.l.b16 %v809
      %v1098 = vunpack.c.l.b16 %v810
      %v1099 = vunpack.c.l.b16 %v811
      %v1100 = vunpack.c.l.b16 %v812
      %v1101 = vunpack.c.l.b16 %v813
      %v1102 = vunpack.c.l.b16 %v814
      %v1103 = vunpack.c.l.b16 %v815
      %v1104 = vunpack.c.l.b16 %v816
      %v1105 = vunpack.c.l.b16 %v817
      %v1106 = vunpack.c.l.b16 %v818
      %v1107 = vunpack.c.l.b16 %v819
      %v1108 = vunpack.c.l.b16 %v820
      %v1109 = vunpack.c.l.b16 %v821
      %v1110 = vunpack.c.l.b16 %v822
      %v1111 = vunpack.c.l.b16 %v823
      %v1112 = vunpack.c.l.b16 %v824
      %v1113 = vunpack.c.l.b16 %v825
      %v1114 = vunpack.c.l.b16 %v826
      %v1115 = vunpack.c.l.b16 %v827
      %v1116 = vunpack.c.l.b16 %v828
      %v1117 = vunpack.c.l.b16 %v829
      %v1118 = vunpack.c.l.b16 %v830
      %v1119 = vunpack.c.l.b16 %v831
      %v1120 = vunpack.c.l.b16 %v832
      %v1121 = vunpack.c.l.b16 %v833
      %v1122 = vunpack.c.l.b16 %v834
      %v1123 = vunpack.c.l.b16 %v835
      %v1124 = vunpack.c.l.b16 %v836
      %v1125 = vunpack.c.l.b16 %v837
      %v1126 = vunpack.c.l.b16 %v838
      %v1127 = vunpack.c.l.b16 %v839
      %v1128 = vunpack.c.l.b16 %v840
      %v1129 = vunpack.c.l.b16 %v841
      %v1130 = vunpack.c.l.b16 %v842
      %v1131 = vunpack.c.l.b16 %v843
      %v1132 = vunpack.c.l.b16 %v844
      %v1133 = vunpack.c.l.b16 %v845
      %v1134 = vunpack.c.l.b16 %v846
      %v1135 = vunpack.c.l.b16 %v847
      %v1136 = vunpack.c.l.b16 %v848
      %v1137 = vunpack.c.l.b16 %v849
      %v1138 = vunpack.c.l.b16 %v850
      %v1139 = vunpack.c.l.b16 %v851
      %v1140 = vunpack.c.l.b16 %v852
      %v1141 = vunpack.c.l.b16 %v853
      %v1142 = vpack.c.b16 %v999, %v998
      %v1143 = vpack.c.b16 %v1001, %v1000
      %v1144 = vpack.c.b16 %v1003, %v1002
      %v1145 = vpack.c.b16 %v1005, %v1004
      %v1146 = vpack.c.b16 %v1007, %v1006
      %v1147 = vpack.c.b16 %v1009, %v1008
      %v1148 = vpack.c.b16 %v1011, %v1010
      %v1149 = vpack.c.b16 %v1013, %v1012
      %v1150 = vpack.c.b16 %v1015, %v1014
      %v1151 = vpack.c.b16 %v1017, %v1016
      %v1152 = vpack.c.b16 %v1019, %v1018
      %v1153 = vpack.c.b16 %v1021, %v1020
      %v1154 = vpack.c.b16 %v1023, %v1022
      %v1155 = vpack.c.b16 %v1025, %v1024
      %v1156 = vpack.c.b16 %v1027, %v1026
      %v1157 = vpack.c.b16 %v1029, %v1028
      %v1158 = vpack.c.b16 %v1031, %v1030
      %v1159 = vpack.c.b16 %v1033, %v1032
      %v1160 = vpack.c.b16 %v1035, %v1034
      %v1161 = vpack.c.b16 %v1037, %v1036
      %v1162 = vpack.c.b16 %v1039, %v1038
      %v1163 = vpack.c.b16 %v1041, %v1040
      %v1164 = vpack.c.b16 %v1043, %v1042
      %v1165 = vpack.c.b16 %v1045, %v1044
      %v1166 = vpack.c.b16 %v1047, %v1046
      %v1167 = vpack.c.b16 %v1049, %v1048
      %v1168 = vpack.c.b16 %v1051, %v1050
      %v1169 = vpack.c.b16 %v1053, %v1052
      %v1170 = vpack.c.b16 %v1055, %v1054
      %v1171 = vpack.c.b16 %v1057, %v1056
      %v1172 = vpack.c.b16 %v1059, %v1058
      %v1173 = vpack.c.b16 %v1061, %v1060
      %v1174 = vpack.c.b16 %v1063, %v1062
      %v1175 = vpack.c.b16 %v1065, %v1064
      %v1176 = vpack.c.b16 %v1067, %v1066
      %v1177 = vpack.c.b16 %v1069, %v1068
      %v1178 = vpack.c.b16 %v1071, %v1070
      %v1179 = vpack.c.b16 %v1073, %v1072
      %v1180 = vpack.c.b16 %v1075, %v1074
      %v1181 = vpack.c.b16 %v1077, %v1076
      %v1182 = vpack.c.b16 %v1079, %v1078
      %v1183 = vpack.c.b16 %v1081, %v1080
      %v1184 = vpack.c.b16 %v1083, %v1082
      %v1185 = vpack.c.b16 %v1085, %v1084
      %v1186 = vpack.c.b16 %v1087, %v1086
      %v1187 = vpack.c.b16 %v1089, %v1088
      %v1188 = vpack.c.b16 %v1091, %v1090
      %v1189 = vpack.c.b16 %v1093, %v1092
      %v1190 = vpack.c.b16 %v1095, %v1094
      %v1191 = vpack.c.b16 %v1097, %v1096
      %v1192 = vpack.c.b16 %v1099, %v1098
      %v1193 = vpack.c.b16 %v1101, %v1100
      %v1194 = vpack.c.b16 %v1103, %v1102
      %v1195 = vpack.c.b16 %v1105, %v1104
      %v1196 = vpack.c.b16 %v1107, %v1106
      %v1197 = vpack.c.b16 %v1109, %v1108
      %v1198 = vpack.c.b16 %v1111, %v1110
      %v1199 = vpack.c.b16 %v1113, %v1112
      %v1200 = vpack.c.b16 %v1115, %v1114
      %v1201 = vpack.c.b16 %v1117, %v1116
      %v1202 = vpack.c.b16 %v1119, %v1118
      %v1203 = vpack.c.b16 %v1121, %v1120
      %v1204 = vpack.c.b16 %v1123, %v1122
      %v1205 = vpack.c.b16 %v1125, %v1124
      %v1206 = vpack.c.b16 %v1127, %v1126
      %v1207 = vpack.c.b16 %v1129, %v1128
      %v1208 = vpack.c.b16 %v1131, %v1130
      %v1209 = vpack.c.b16 %v1133, %v1132
      %v1210 = vpack.c.b16 %v1135, %v1134
      %v1211 = vpack.c.b16 %v1137, %v1136
      %v1212 = vpack.c.b16 %v1139, %v1138
      %v1213 = vpack.c.b16 %v1141, %v1140
      %1286 = vmatpush.bf16.msra.mxu0 %v1149
      %1287 = vmatpush.bf16.msra.mxu0 %v1148
      %1288 = vmatpush.bf16.msra.mxu0 %v1147
      %1289 = vmatpush.bf16.msra.mxu0 %v1146
      %1290 = vmatpush.bf16.msra.mxu0 %v1145
      %1291 = vmatpush.bf16.msra.mxu0 %v1144
      %1292 = vmatpush.bf16.msra.mxu0 %v1143
      %1293 = vmatpush.bf16.msra.mxu0 %v1142
      %1294 = vmatmul.bf16.gmra.mxu0 %v453
      %v1295 = vpop.f32.mrf.mxu0
      %v1296 = vadd.f32 0.0, %v1295
      %v1297 = vpop.f32.mrf.mxu0
      %v1298 = vadd.f32 0.0, %v1297
      %1299 = vmatmul.bf16.gmra.mxu0 %v454
      %v1300 = vpop.f32.mrf.mxu0
      %v1301 = vadd.f32 0.0, %v1300
      %v1302 = vpop.f32.mrf.mxu0
      %v1303 = vadd.f32 0.0, %v1302
      %1304 = vmatmul.bf16.gmra.mxu0 %v455
      %v1305 = vpop.f32.mrf.mxu0
      %v1306 = vadd.f32 0.0, %v1305
      %v1307 = vpop.f32.mrf.mxu0
      %v1308 = vadd.f32 0.0, %v1307
      %1309 = vmatmul.bf16.gmra.mxu0 %v456
      %v1310 = vpop.f32.mrf.mxu0
      %v1311 = vadd.f32 0.0, %v1310
      %v1312 = vpop.f32.mrf.mxu0
      %v1313 = vadd.f32 0.0, %v1312
      %1314 = vmatmul.bf16.gmra.mxu0 %v457
      %v1315 = vpop.f32.mrf.mxu0
      %v1316 = vadd.f32 0.0, %v1315
      %v1317 = vpop.f32.mrf.mxu0
      %v1318 = vadd.f32 0.0, %v1317
      %1319 = vmatmul.bf16.gmra.mxu0 %v458
      %v1320 = vpop.f32.mrf.mxu0
      %v1321 = vadd.f32 0.0, %v1320
      %v1322 = vpop.f32.mrf.mxu0
      %v1323 = vadd.f32 0.0, %v1322
      %1324 = vmatmul.bf16.gmra.mxu0 %v459
      %v1325 = vpop.f32.mrf.mxu0
      %v1326 = vadd.f32 0.0, %v1325
      %v1327 = vpop.f32.mrf.mxu0
      %v1328 = vadd.f32 0.0, %v1327
      %1329 = vmatmul.bf16.gmra.mxu0 %v460
      %v1330 = vpop.f32.mrf.mxu0
      %v1331 = vadd.f32 0.0, %v1330
      %v1332 = vpop.f32.mrf.mxu0
      %v1333 = vadd.f32 0.0, %v1332
      %1334 = vmatmul.bf16.gmra.mxu0 %v461
      %v1335 = vpop.f32.mrf.mxu0
      %v1336 = vadd.f32 0.0, %v1335
      %v1337 = vpop.f32.mrf.mxu0
      %v1338 = vadd.f32 0.0, %v1337
      %1339 = vdwg.mxu0
      %1340 = vmatpush.bf16.msra.mxu0 %v1157
      %1341 = vmatpush.bf16.msra.mxu0 %v1156
      %1342 = vmatpush.bf16.msra.mxu0 %v1155
      %1343 = vmatpush.bf16.msra.mxu0 %v1154
      %1344 = vmatpush.bf16.msra.mxu0 %v1153
      %1345 = vmatpush.bf16.msra.mxu0 %v1152
      %1346 = vmatpush.bf16.msra.mxu0 %v1151
      %1347 = vmatpush.bf16.msra.mxu0 %v1150
      %1348 = vmatmul.bf16.gmra.mxu0 %v621
      %v1349 = vpop.f32.mrf.mxu0
      %v1350 = vadd.f32 %v1296, %v1349
      %v1351 = vpop.f32.mrf.mxu0
      %v1352 = vadd.f32 %v1298, %v1351
      %1353 = vmatmul.bf16.gmra.mxu0 %v622
      %v1354 = vpop.f32.mrf.mxu0
      %v1355 = vadd.f32 %v1301, %v1354
      %v1356 = vpop.f32.mrf.mxu0
      %v1357 = vadd.f32 %v1303, %v1356
      %1358 = vmatmul.bf16.gmra.mxu0 %v623
      %v1359 = vpop.f32.mrf.mxu0
      %v1360 = vadd.f32 %v1306, %v1359
      %v1361 = vpop.f32.mrf.mxu0
      %v1362 = vadd.f32 %v1308, %v1361
      %1363 = vmatmul.bf16.gmra.mxu0 %v624
      %v1364 = vpop.f32.mrf.mxu0
      %v1365 = vadd.f32 %v1311, %v1364
      %v1366 = vpop.f32.mrf.mxu0
      %v1367 = vadd.f32 %v1313, %v1366
      %1368 = vmatmul.bf16.gmra.mxu0 %v625
      %v1369 = vpop.f32.mrf.mxu0
      %v1370 = vadd.f32 %v1316, %v1369
      %v1371 = vpop.f32.mrf.mxu0
      %v1372 = vadd.f32 %v1318, %v1371
      %1373 = vmatmul.bf16.gmra.mxu0 %v626
      %v1374 = vpop.f32.mrf.mxu0
      %v1375 = vadd.f32 %v1321, %v1374
      %v1376 = vpop.f32.mrf.mxu0
      %v1377 = vadd.f32 %v1323, %v1376
      %1378 = vmatmul.bf16.gmra.mxu0 %v627
      %v1379 = vpop.f32.mrf.mxu0
      %v1380 = vadd.f32 %v1326, %v1379
      %v1381 = vpop.f32.mrf.mxu0
      %v1382 = vadd.f32 %v1328, %v1381
      %1383 = vmatmul.bf16.gmra.mxu0 %v628
      %v1384 = vpop.f32.mrf.mxu0
      %v1385 = vadd.f32 %v1331, %v1384
      %v1386 = vpop.f32.mrf.mxu0
      %v1387 = vadd.f32 %v1333, %v1386
      %1388 = vmatmul.bf16.gmra.mxu0 %v629
      %v1389 = vpop.f32.mrf.mxu0
      %v1390 = vadd.f32 %v1336, %v1389
      %v1391 = vpop.f32.mrf.mxu0
      %v1392 = vadd.f32 %v1338, %v1391
      %1393 = vdwg.mxu0
      %1394 = vmatpush.bf16.msra.mxu0 %v1165
      %1395 = vmatpush.bf16.msra.mxu0 %v1164
      %1396 = vmatpush.bf16.msra.mxu0 %v1163
      %1397 = vmatpush.bf16.msra.mxu0 %v1162
      %1398 = vmatpush.bf16.msra.mxu0 %v1161
      %1399 = vmatpush.bf16.msra.mxu0 %v1160
      %1400 = vmatpush.bf16.msra.mxu0 %v1159
      %1401 = vmatpush.bf16.msra.mxu0 %v1158
      %1402 = vmatmul.bf16.gmra.mxu0 %v657
      %v1403 = vpop.f32.mrf.mxu0
      %v1404 = vadd.f32 %v1350, %v1403
      %v1405 = vpop.f32.mrf.mxu0
      %v1406 = vadd.f32 %v1352, %v1405
      %1407 = vmatmul.bf16.gmra.mxu0 %v661
      %v1408 = vpop.f32.mrf.mxu0
      %v1409 = vadd.f32 %v1355, %v1408
      %v1410 = vpop.f32.mrf.mxu0
      %v1411 = vadd.f32 %v1357, %v1410
      %1412 = vmatmul.bf16.gmra.mxu0 %v665
      %v1413 = vpop.f32.mrf.mxu0
      %v1414 = vadd.f32 %v1360, %v1413
      %v1415 = vpop.f32.mrf.mxu0
      %v1416 = vadd.f32 %v1362, %v1415
      %1417 = vmatmul.bf16.gmra.mxu0 %v669
      %v1418 = vpop.f32.mrf.mxu0
      %v1419 = vadd.f32 %v1365, %v1418
      %v1420 = vpop.f32.mrf.mxu0
      %v1421 = vadd.f32 %v1367, %v1420
      %1422 = vmatmul.bf16.gmra.mxu0 %v673
      %v1423 = vpop.f32.mrf.mxu0
      %v1424 = vadd.f32 %v1370, %v1423
      %v1425 = vpop.f32.mrf.mxu0
      %v1426 = vadd.f32 %v1372, %v1425
      %1427 = vmatmul.bf16.gmra.mxu0 %v677
      %v1428 = vpop.f32.mrf.mxu0
      %v1429 = vadd.f32 %v1375, %v1428
      %v1430 = vpop.f32.mrf.mxu0
      %v1431 = vadd.f32 %v1377, %v1430
      %1432 = vmatmul.bf16.gmra.mxu0 %v681
      %v1433 = vpop.f32.mrf.mxu0
      %v1434 = vadd.f32 %v1380, %v1433
      %v1435 = vpop.f32.mrf.mxu0
      %v1436 = vadd.f32 %v1382, %v1435
      %1437 = vmatmul.bf16.gmra.mxu0 %v685
      %v1438 = vpop.f32.mrf.mxu0
      %v1439 = vadd.f32 %v1385, %v1438
      %v1440 = vpop.f32.mrf.mxu0
      %v1441 = vadd.f32 %v1387, %v1440
      %1442 = vmatmul.bf16.gmra.mxu0 %v689
      %v1443 = vpop.f32.mrf.mxu0
      %v1444 = vadd.f32 %v1390, %v1443
      %v1445 = vpop.f32.mrf.mxu0
      %v1446 = vadd.f32 %v1392, %v1445
      %1447 = vdwg.mxu0
      %1448 = vmatpush.bf16.msra.mxu0 %v1173
      %1449 = vmatpush.bf16.msra.mxu0 %v1172
      %1450 = vmatpush.bf16.msra.mxu0 %v1171
      %1451 = vmatpush.bf16.msra.mxu0 %v1170
      %1452 = vmatpush.bf16.msra.mxu0 %v1169
      %1453 = vmatpush.bf16.msra.mxu0 %v1168
      %1454 = vmatpush.bf16.msra.mxu0 %v1167
      %1455 = vmatpush.bf16.msra.mxu0 %v1166
      %1456 = vmatmul.bf16.gmra.mxu0 %v454
      %v1457 = vpop.f32.mrf.mxu0
      %v1458 = vadd.f32 %v1404, %v1457
      %v1459 = vpop.f32.mrf.mxu0
      %v1460 = vadd.f32 %v1406, %v1459
      %1461 = vmatmul.bf16.gmra.mxu0 %v455
      %v1462 = vpop.f32.mrf.mxu0
      %v1463 = vadd.f32 %v1409, %v1462
      %v1464 = vpop.f32.mrf.mxu0
      %v1465 = vadd.f32 %v1411, %v1464
      %1466 = vmatmul.bf16.gmra.mxu0 %v456
      %v1467 = vpop.f32.mrf.mxu0
      %v1468 = vadd.f32 %v1414, %v1467
      %v1469 = vpop.f32.mrf.mxu0
      %v1470 = vadd.f32 %v1416, %v1469
      %1471 = vmatmul.bf16.gmra.mxu0 %v457
      %v1472 = vpop.f32.mrf.mxu0
      %v1473 = vadd.f32 %v1419, %v1472
      %v1474 = vpop.f32.mrf.mxu0
      %v1475 = vadd.f32 %v1421, %v1474
      %1476 = vmatmul.bf16.gmra.mxu0 %v458
      %v1477 = vpop.f32.mrf.mxu0
      %v1478 = vadd.f32 %v1424, %v1477
      %v1479 = vpop.f32.mrf.mxu0
      %v1480 = vadd.f32 %v1426, %v1479
      %1481 = vmatmul.bf16.gmra.mxu0 %v459
      %v1482 = vpop.f32.mrf.mxu0
      %v1483 = vadd.f32 %v1429, %v1482
      %v1484 = vpop.f32.mrf.mxu0
      %v1485 = vadd.f32 %v1431, %v1484
      %1486 = vmatmul.bf16.gmra.mxu0 %v460
      %v1487 = vpop.f32.mrf.mxu0
      %v1488 = vadd.f32 %v1434, %v1487
      %v1489 = vpop.f32.mrf.mxu0
      %v1490 = vadd.f32 %v1436, %v1489
      %1491 = vmatmul.bf16.gmra.mxu0 %v461
      %v1492 = vpop.f32.mrf.mxu0
      %v1493 = vadd.f32 %v1439, %v1492
      %v1494 = vpop.f32.mrf.mxu0
      %v1495 = vadd.f32 %v1441, %v1494
      %1496 = vmatmul.bf16.gmra.mxu0 %v462
      %v1497 = vpop.f32.mrf.mxu0
      %v1498 = vadd.f32 %v1444, %v1497
      %v1499 = vpop.f32.mrf.mxu0
      %v1500 = vadd.f32 %v1446, %v1499
      %1501 = vdwg.mxu0
      %1502 = vmatpush.bf16.msra.mxu0 %v1181
      %1503 = vmatpush.bf16.msra.mxu0 %v1180
      %1504 = vmatpush.bf16.msra.mxu0 %v1179
      %1505 = vmatpush.bf16.msra.mxu0 %v1178
      %1506 = vmatpush.bf16.msra.mxu0 %v1177
      %1507 = vmatpush.bf16.msra.mxu0 %v1176
      %1508 = vmatpush.bf16.msra.mxu0 %v1175
      %1509 = vmatpush.bf16.msra.mxu0 %v1174
      %1510 = vmatmul.bf16.gmra.mxu0 %v622
      %v1511 = vpop.f32.mrf.mxu0
      %v1512 = vadd.f32 %v1458, %v1511
      %v1513 = vpop.f32.mrf.mxu0
      %v1514 = vadd.f32 %v1460, %v1513
      %1515 = vmatmul.bf16.gmra.mxu0 %v623
      %v1516 = vpop.f32.mrf.mxu0
      %v1517 = vadd.f32 %v1463, %v1516
      %v1518 = vpop.f32.mrf.mxu0
      %v1519 = vadd.f32 %v1465, %v1518
      %1520 = vmatmul.bf16.gmra.mxu0 %v624
      %v1521 = vpop.f32.mrf.mxu0
      %v1522 = vadd.f32 %v1468, %v1521
      %v1523 = vpop.f32.mrf.mxu0
      %v1524 = vadd.f32 %v1470, %v1523
      %1525 = vmatmul.bf16.gmra.mxu0 %v625
      %v1526 = vpop.f32.mrf.mxu0
      %v1527 = vadd.f32 %v1473, %v1526
      %v1528 = vpop.f32.mrf.mxu0
      %v1529 = vadd.f32 %v1475, %v1528
      %1530 = vmatmul.bf16.gmra.mxu0 %v626
      %v1531 = vpop.f32.mrf.mxu0
      %v1532 = vadd.f32 %v1478, %v1531
      %v1533 = vpop.f32.mrf.mxu0
      %v1534 = vadd.f32 %v1480, %v1533
      %1535 = vmatmul.bf16.gmra.mxu0 %v627
      %v1536 = vpop.f32.mrf.mxu0
      %v1537 = vadd.f32 %v1483, %v1536
      %v1538 = vpop.f32.mrf.mxu0
      %v1539 = vadd.f32 %v1485, %v1538
      %1540 = vmatmul.bf16.gmra.mxu0 %v628
      %v1541 = vpop.f32.mrf.mxu0
      %v1542 = vadd.f32 %v1488, %v1541
      %v1543 = vpop.f32.mrf.mxu0
      %v1544 = vadd.f32 %v1490, %v1543
      %1545 = vmatmul.bf16.gmra.mxu0 %v629
      %v1546 = vpop.f32.mrf.mxu0
      %v1547 = vadd.f32 %v1493, %v1546
      %v1548 = vpop.f32.mrf.mxu0
      %v1549 = vadd.f32 %v1495, %v1548
      %1550 = vmatmul.bf16.gmra.mxu0 %v630
      %v1551 = vpop.f32.mrf.mxu0
      %v1552 = vadd.f32 %v1498, %v1551
      %v1553 = vpop.f32.mrf.mxu0
      %v1554 = vadd.f32 %v1500, %v1553
      %1555 = vdwg.mxu0
      %1556 = vmatpush.bf16.msra.mxu0 %v1189
      %1557 = vmatpush.bf16.msra.mxu0 %v1188
      %1558 = vmatpush.bf16.msra.mxu0 %v1187
      %1559 = vmatpush.bf16.msra.mxu0 %v1186
      %1560 = vmatpush.bf16.msra.mxu0 %v1185
      %1561 = vmatpush.bf16.msra.mxu0 %v1184
      %1562 = vmatpush.bf16.msra.mxu0 %v1183
      %1563 = vmatpush.bf16.msra.mxu0 %v1182
      %1564 = vmatmul.bf16.gmra.mxu0 %v661
      %v1565 = vpop.f32.mrf.mxu0
      %v1566 = vadd.f32 %v1512, %v1565
      %v1567 = vpop.f32.mrf.mxu0
      %v1568 = vadd.f32 %v1514, %v1567
      %1569 = vmatmul.bf16.gmra.mxu0 %v665
      %v1570 = vpop.f32.mrf.mxu0
      %v1571 = vadd.f32 %v1517, %v1570
      %v1572 = vpop.f32.mrf.mxu0
      %v1573 = vadd.f32 %v1519, %v1572
      %1574 = vmatmul.bf16.gmra.mxu0 %v669
      %v1575 = vpop.f32.mrf.mxu0
      %v1576 = vadd.f32 %v1522, %v1575
      %v1577 = vpop.f32.mrf.mxu0
      %v1578 = vadd.f32 %v1524, %v1577
      %1579 = vmatmul.bf16.gmra.mxu0 %v673
      %v1580 = vpop.f32.mrf.mxu0
      %v1581 = vadd.f32 %v1527, %v1580
      %v1582 = vpop.f32.mrf.mxu0
      %v1583 = vadd.f32 %v1529, %v1582
      %1584 = vmatmul.bf16.gmra.mxu0 %v677
      %v1585 = vpop.f32.mrf.mxu0
      %v1586 = vadd.f32 %v1532, %v1585
      %v1587 = vpop.f32.mrf.mxu0
      %v1588 = vadd.f32 %v1534, %v1587
      %1589 = vmatmul.bf16.gmra.mxu0 %v681
      %v1590 = vpop.f32.mrf.mxu0
      %v1591 = vadd.f32 %v1537, %v1590
      %v1592 = vpop.f32.mrf.mxu0
      %v1593 = vadd.f32 %v1539, %v1592
      %1594 = vmatmul.bf16.gmra.mxu0 %v685
      %v1595 = vpop.f32.mrf.mxu0
      %v1596 = vadd.f32 %v1542, %v1595
      %v1597 = vpop.f32.mrf.mxu0
      %v1598 = vadd.f32 %v1544, %v1597
      %1599 = vmatmul.bf16.gmra.mxu0 %v689
      %v1600 = vpop.f32.mrf.mxu0
      %v1601 = vadd.f32 %v1547, %v1600
      %v1602 = vpop.f32.mrf.mxu0
      %v1603 = vadd.f32 %v1549, %v1602
      %1604 = vmatmul.bf16.gmra.mxu0 %v693
      %v1605 = vpop.f32.mrf.mxu0
      %v1606 = vadd.f32 %v1552, %v1605
      %v1607 = vpop.f32.mrf.mxu0
      %v1608 = vadd.f32 %v1554, %v1607
      %1609 = vdwg.mxu0
      %1610 = vmatpush.bf16.msra.mxu0 %v1197
      %1611 = vmatpush.bf16.msra.mxu0 %v1196
      %1612 = vmatpush.bf16.msra.mxu0 %v1195
      %1613 = vmatpush.bf16.msra.mxu0 %v1194
      %1614 = vmatpush.bf16.msra.mxu0 %v1193
      %1615 = vmatpush.bf16.msra.mxu0 %v1192
      %1616 = vmatpush.bf16.msra.mxu0 %v1191
      %1617 = vmatpush.bf16.msra.mxu0 %v1190
      %1618 = vmatmul.bf16.gmra.mxu0 %v455
      %v1619 = vpop.f32.mrf.mxu0
      %v1620 = vadd.f32 %v1566, %v1619
      %v1621 = vpop.f32.mrf.mxu0
      %v1622 = vadd.f32 %v1568, %v1621
      %1623 = vmatmul.bf16.gmra.mxu0 %v456
      %v1624 = vpop.f32.mrf.mxu0
      %v1625 = vadd.f32 %v1571, %v1624
      %v1626 = vpop.f32.mrf.mxu0
      %v1627 = vadd.f32 %v1573, %v1626
      %1628 = vmatmul.bf16.gmra.mxu0 %v457
      %v1629 = vpop.f32.mrf.mxu0
      %v1630 = vadd.f32 %v1576, %v1629
      %v1631 = vpop.f32.mrf.mxu0
      %v1632 = vadd.f32 %v1578, %v1631
      %1633 = vmatmul.bf16.gmra.mxu0 %v458
      %v1634 = vpop.f32.mrf.mxu0
      %v1635 = vadd.f32 %v1581, %v1634
      %v1636 = vpop.f32.mrf.mxu0
      %v1637 = vadd.f32 %v1583, %v1636
      %1638 = vmatmul.bf16.gmra.mxu0 %v459
      %v1639 = vpop.f32.mrf.mxu0
      %v1640 = vadd.f32 %v1586, %v1639
      %v1641 = vpop.f32.mrf.mxu0
      %v1642 = vadd.f32 %v1588, %v1641
      %1643 = vmatmul.bf16.gmra.mxu0 %v460
      %v1644 = vpop.f32.mrf.mxu0
      %v1645 = vadd.f32 %v1591, %v1644
      %v1646 = vpop.f32.mrf.mxu0
      %v1647 = vadd.f32 %v1593, %v1646
      %1648 = vmatmul.bf16.gmra.mxu0 %v461
      %v1649 = vpop.f32.mrf.mxu0
      %v1650 = vadd.f32 %v1596, %v1649
      %v1651 = vpop.f32.mrf.mxu0
      %v1652 = vadd.f32 %v1598, %v1651
      %1653 = vmatmul.bf16.gmra.mxu0 %v462
      %v1654 = vpop.f32.mrf.mxu0
      %v1655 = vadd.f32 %v1601, %v1654
      %v1656 = vpop.f32.mrf.mxu0
      %v1657 = vadd.f32 %v1603, %v1656
      %1658 = vmatmul.bf16.gmra.mxu0 %v463
      %v1659 = vpop.f32.mrf.mxu0
      %v1660 = vadd.f32 %v1606, %v1659
      %v1661 = vpop.f32.mrf.mxu0
      %v1662 = vadd.f32 %v1608, %v1661
      %1663 = vdwg.mxu0
      %1664 = vmatpush.bf16.msra.mxu0 %v1205
      %1665 = vmatpush.bf16.msra.mxu0 %v1204
      %1666 = vmatpush.bf16.msra.mxu0 %v1203
      %1667 = vmatpush.bf16.msra.mxu0 %v1202
      %1668 = vmatpush.bf16.msra.mxu0 %v1201
      %1669 = vmatpush.bf16.msra.mxu0 %v1200
      %1670 = vmatpush.bf16.msra.mxu0 %v1199
      %1671 = vmatpush.bf16.msra.mxu0 %v1198
      %1672 = vmatmul.bf16.gmra.mxu0 %v623
      %v1673 = vpop.f32.mrf.mxu0
      %v1674 = vadd.f32 %v1620, %v1673
      %v1675 = vpop.f32.mrf.mxu0
      %v1676 = vadd.f32 %v1622, %v1675
      %1677 = vmatmul.bf16.gmra.mxu0 %v624
      %v1678 = vpop.f32.mrf.mxu0
      %v1679 = vadd.f32 %v1625, %v1678
      %v1680 = vpop.f32.mrf.mxu0
      %v1681 = vadd.f32 %v1627, %v1680
      %1682 = vmatmul.bf16.gmra.mxu0 %v625
      %v1683 = vpop.f32.mrf.mxu0
      %v1684 = vadd.f32 %v1630, %v1683
      %v1685 = vpop.f32.mrf.mxu0
      %v1686 = vadd.f32 %v1632, %v1685
      %1687 = vmatmul.bf16.gmra.mxu0 %v626
      %v1688 = vpop.f32.mrf.mxu0
      %v1689 = vadd.f32 %v1635, %v1688
      %v1690 = vpop.f32.mrf.mxu0
      %v1691 = vadd.f32 %v1637, %v1690
      %1692 = vmatmul.bf16.gmra.mxu0 %v627
      %v1693 = vpop.f32.mrf.mxu0
      %v1694 = vadd.f32 %v1640, %v1693
      %v1695 = vpop.f32.mrf.mxu0
      %v1696 = vadd.f32 %v1642, %v1695
      %1697 = vmatmul.bf16.gmra.mxu0 %v628
      %v1698 = vpop.f32.mrf.mxu0
      %v1699 = vadd.f32 %v1645, %v1698
      %v1700 = vpop.f32.mrf.mxu0
      %v1701 = vadd.f32 %v1647, %v1700
      %1702 = vmatmul.bf16.gmra.mxu0 %v629
      %v1703 = vpop.f32.mrf.mxu0
      %v1704 = vadd.f32 %v1650, %v1703
      %v1705 = vpop.f32.mrf.mxu0
      %v1706 = vadd.f32 %v1652, %v1705
      %1707 = vmatmul.bf16.gmra.mxu0 %v630
      %v1708 = vpop.f32.mrf.mxu0
      %v1709 = vadd.f32 %v1655, %v1708
      %v1710 = vpop.f32.mrf.mxu0
      %v1711 = vadd.f32 %v1657, %v1710
      %1712 = vmatmul.bf16.gmra.mxu0 %v631
      %v1713 = vpop.f32.mrf.mxu0
      %v1714 = vadd.f32 %v1660, %v1713
      %v1715 = vpop.f32.mrf.mxu0
      %v1716 = vadd.f32 %v1662, %v1715
      %1717 = vdwg.mxu0
      %1718 = vmatpush.bf16.msra.mxu0 %v1213
      %1719 = vmatpush.bf16.msra.mxu0 %v1212
      %1720 = vmatpush.bf16.msra.mxu0 %v1211
      %1721 = vmatpush.bf16.msra.mxu0 %v1210
      %1722 = vmatpush.bf16.msra.mxu0 %v1209
      %1723 = vmatpush.bf16.msra.mxu0 %v1208
      %1724 = vmatpush.bf16.msra.mxu0 %v1207
      %1725 = vmatpush.bf16.msra.mxu0 %v1206
      %1726 = vmatmul.bf16.gmra.mxu0 %v665
      %v1727 = vpop.f32.mrf.mxu0
      %v1728 = vadd.f32 %v1674, %v1727
      %v1729 = vpop.f32.mrf.mxu0
      %v1730 = vadd.f32 %v1676, %v1729
      %1731 = vmatmul.bf16.gmra.mxu0 %v669
      %v1732 = vpop.f32.mrf.mxu0
      %v1733 = vadd.f32 %v1679, %v1732
      %v1734 = vpop.f32.mrf.mxu0
      %v1735 = vadd.f32 %v1681, %v1734
      %1736 = vmatmul.bf16.gmra.mxu0 %v673
      %v1737 = vpop.f32.mrf.mxu0
      %v1738 = vadd.f32 %v1684, %v1737
      %v1739 = vpop.f32.mrf.mxu0
      %v1740 = vadd.f32 %v1686, %v1739
      %1741 = vmatmul.bf16.gmra.mxu0 %v677
      %v1742 = vpop.f32.mrf.mxu0
      %v1743 = vadd.f32 %v1689, %v1742
      %v1744 = vpop.f32.mrf.mxu0
      %v1745 = vadd.f32 %v1691, %v1744
      %1746 = vmatmul.bf16.gmra.mxu0 %v681
      %v1747 = vpop.f32.mrf.mxu0
      %v1748 = vadd.f32 %v1694, %v1747
      %v1749 = vpop.f32.mrf.mxu0
      %v1750 = vadd.f32 %v1696, %v1749
      %1751 = vmatmul.bf16.gmra.mxu0 %v685
      %v1752 = vpop.f32.mrf.mxu0
      %v1753 = vadd.f32 %v1699, %v1752
      %v1754 = vpop.f32.mrf.mxu0
      %v1755 = vadd.f32 %v1701, %v1754
      %1756 = vmatmul.bf16.gmra.mxu0 %v689
      %v1757 = vpop.f32.mrf.mxu0
      %v1758 = vadd.f32 %v1704, %v1757
      %v1759 = vpop.f32.mrf.mxu0
      %v1760 = vadd.f32 %v1706, %v1759
      %1761 = vmatmul.bf16.gmra.mxu0 %v693
      %v1762 = vpop.f32.mrf.mxu0
      %v1763 = vadd.f32 %v1709, %v1762
      %v1764 = vpop.f32.mrf.mxu0
      %v1765 = vadd.f32 %v1711, %v1764
      %1766 = vmatmul.bf16.gmra.mxu0 %v697
      %v1767 = vpop.f32.mrf.mxu0
      %v1768 = vadd.f32 %v1714, %v1767
      %v1769 = vpop.f32.mrf.mxu0
      %v1770 = vadd.f32 %v1716, %v1769
      %1771 = vdwg.mxu0
      %v1772 = vlaneseq
      %v1773 = vshrl.u32 %v1772, 7
      %v1774 = vadd.s32 %v1773, 8
      %vm1775 = vcmp.lt.s32.totalorder %v1773, 9
      %vm1776 = vcmp.lt.s32.totalorder %v1774, 9
      %v1777 = vsel %vm1775, %v1728, 0.0
      %v1778 = vsel %vm1776, %v1730, 0.0
      %v1779 = vsel %vm1775, %v1733, 0.0
      %v1780 = vsel %vm1776, %v1735, 0.0
      %v1781 = vsel %vm1775, %v1738, 0.0
      %v1782 = vsel %vm1776, %v1740, 0.0
      %v1783 = vsel %vm1775, %v1743, 0.0
      %v1784 = vsel %vm1776, %v1745, 0.0
      %v1785 = vsel %vm1775, %v1748, 0.0
      %v1786 = vsel %vm1776, %v1750, 0.0
      %v1787 = vsel %vm1775, %v1753, 0.0
      %v1788 = vsel %vm1776, %v1755, 0.0
      %v1789 = vsel %vm1775, %v1758, 0.0
      %v1790 = vsel %vm1776, %v1760, 0.0
      %v1791 = vsel %vm1775, %v1763, 0.0
      %v1792 = vsel %vm1776, %v1765, 0.0
      %v1793 = vsel %vm1775, %v1768, 0.0
      %v1794 = vsel %vm1776, %v1770, 0.0
      %v1795 = vpack.c.bf16 %v1777, %v1777
      %v1796 = vpack.c.bf16 %v1778, %v1778
      %v1797 = vpack.c.bf16 %v1779, %v1779
      %v1798 = vpack.c.bf16 %v1780, %v1780
      %v1799 = vpack.c.bf16 %v1781, %v1781
      %v1800 = vpack.c.bf16 %v1782, %v1782
      %v1801 = vpack.c.bf16 %v1783, %v1783
      %v1802 = vpack.c.bf16 %v1784, %v1784
      %v1803 = vpack.c.bf16 %v1785, %v1785
      %v1804 = vpack.c.bf16 %v1786, %v1786
      %v1805 = vpack.c.bf16 %v1787, %v1787
      %v1806 = vpack.c.bf16 %v1788, %v1788
      %v1807 = vpack.c.bf16 %v1789, %v1789
      %v1808 = vpack.c.bf16 %v1790, %v1790
      %v1809 = vpack.c.bf16 %v1791, %v1791
      %v1810 = vpack.c.bf16 %v1792, %v1792
      %v1811 = vpack.c.bf16 %v1793, %v1793
      %v1812 = vpack.c.bf16 %v1794, %v1794
      %1813 = vst [vmem:[%s262] sm:$0xf] %v1795
      %1814 = vst [vmem:[%s262 + $0x4] sm:$0xf] %v1796
      %1815 = vst [vmem:[%s262 + $0x8] sm:$0xf] %v1797
      %1816 = vst [vmem:[%s262 + $0xc] sm:$0xf] %v1798
      %1817 = vst [vmem:[%s262 + $0x10] sm:$0xf] %v1799
      %1818 = vst [vmem:[%s262 + $0x14] sm:$0xf] %v1800
      %1819 = vst [vmem:[%s262 + $0x18] sm:$0xf] %v1801
      %1820 = vst [vmem:[%s262 + $0x1c] sm:$0xf] %v1802
      %1821 = vst [vmem:[%s262 + $0x20] sm:$0xf] %v1803
      %1822 = vst [vmem:[%s262 + $0x24] sm:$0xf] %v1804
      %1823 = vst [vmem:[%s262 + $0x28] sm:$0xf] %v1805
      %1824 = vst [vmem:[%s262 + $0x2c] sm:$0xf] %v1806
      %1825 = vst [vmem:[%s262 + $0x30] sm:$0xf] %v1807
      %1826 = vst [vmem:[%s262 + $0x34] sm:$0xf] %v1808
      %1827 = vst [vmem:[%s262 + $0x38] sm:$0xf] %v1809
      %1828 = vst [vmem:[%s262 + $0x3c] sm:$0xf] %v1810
      %1829 = vst [vmem:[%s262 + $0x40] sm:$0xf] %v1811
      %1830 = vst [vmem:[%s262 + $0x44] sm:$0xf] %v1812
      %v1831 = vadd.f32 %v1777, %v1778
      %v1832 = vadd.f32 %v1831, %v1779
      %v1833 = vadd.f32 %v1832, %v1780
      %v1834 = vadd.f32 %v1833, %v1781
      %v1835 = vadd.f32 %v1834, %v1782
      %v1836 = vadd.f32 %v1835, %v1783
      %v1837 = vadd.f32 %v1836, %v1784
      %v1838 = vadd.f32 %v1837, %v1785
      %v1839 = vadd.f32 %v1838, %v1786
      %v1840 = vadd.f32 %v1839, %v1787
      %v1841 = vadd.f32 %v1840, %v1788
      %v1842 = vadd.f32 %v1841, %v1789
      %v1843 = vadd.f32 %v1842, %v1790
      %v1844 = vadd.f32 %v1843, %v1791
      %v1845 = vadd.f32 %v1844, %v1792
      %v1846 = vadd.f32 %v1845, %v1793
      %v1847 = vadd.f32 %v1846, %v1794
      %v1848 = vrot.slane %v1847, 4
      %v1849 = vadd.f32 %v1847, %v1848
      %v1850 = vrot.slane %v1849, 2
      %v1851 = vadd.f32 %v1849, %v1850
      %v1852 = vrot.slane %v1851, 1
      %v1853 = vadd.f32 %v1851, %v1852
      %1854 = vst [vmem:[%s265] sm:$0x1] %v1853
      %v1855 = vmul.f32 %v1777, %v1777
      %v1856 = vmul.f32 %v1778, %v1778
      %v1857 = vmul.f32 %v1779, %v1779
      %v1858 = vmul.f32 %v1780, %v1780
      %v1859 = vmul.f32 %v1781, %v1781
      %v1860 = vmul.f32 %v1782, %v1782
      %v1861 = vmul.f32 %v1783, %v1783
      %v1862 = vmul.f32 %v1784, %v1784
      %v1863 = vmul.f32 %v1785, %v1785
      %v1864 = vmul.f32 %v1786, %v1786
      %v1865 = vmul.f32 %v1787, %v1787
      %v1866 = vmul.f32 %v1788, %v1788
      %v1867 = vmul.f32 %v1789, %v1789
      %v1868 = vmul.f32 %v1790, %v1790
      %v1869 = vmul.f32 %v1791, %v1791
      %v1870 = vmul.f32 %v1792, %v1792
      %v1871 = vmul.f32 %v1793, %v1793
      %v1872 = vmul.f32 %v1794, %v1794
      %v1873 = vadd.f32 %v1855, %v1856
      %v1874 = vadd.f32 %v1873, %v1857
      %v1875 = vadd.f32 %v1874, %v1858
      %v1876 = vadd.f32 %v1875, %v1859
      %v1877 = vadd.f32 %v1876, %v1860
      %v1878 = vadd.f32 %v1877, %v1861
      %v1879 = vadd.f32 %v1878, %v1862
      %v1880 = vadd.f32 %v1879, %v1863
      %v1881 = vadd.f32 %v1880, %v1864
      %v1882 = vadd.f32 %v1881, %v1865
      %v1883 = vadd.f32 %v1882, %v1866
      %v1884 = vadd.f32 %v1883, %v1867
      %v1885 = vadd.f32 %v1884, %v1868
      %v1886 = vadd.f32 %v1885, %v1869
      %v1887 = vadd.f32 %v1886, %v1870
      %v1888 = vadd.f32 %v1887, %v1871
      %v1889 = vadd.f32 %v1888, %v1872
      %v1890 = vrot.slane %v1889, 4
      %v1891 = vadd.f32 %v1889, %v1890
      %v1892 = vrot.slane %v1891, 2
      %v1893 = vadd.f32 %v1891, %v1892
      %v1894 = vrot.slane %v1893, 1
      %v1895 = vadd.f32 %v1893, %v1894
      %1896 = vst [vmem:[%s268] sm:$0x1] %v1895
      %p1897 = scmp.lt.s32.totalorder %s18, 1
      %s1898 = scalar_select %p1897, %s18, 1
      %s1899 = smul.addr %s1898, 18
      %s1900 = smul.addr %s1899, 4
      %s1901 = scalar_lea.vmem %s4, %s1900
      %p1902 = scmp.lt.s32.totalorder %s18, 1
      %s1903 = scalar_select %p1902, %s18, 1
      %s1904 = scalar_lea.vmem %s5, %s1903
      %p1905 = scmp.lt.s32.totalorder %s18, 1
      %s1906 = scalar_select %p1905, %s18, 1
      %s1907 = scalar_lea.vmem %s6, %s1906
      // Predicated region
      $region37: #{base_forward.7} parent=35 // pred_check
        %p1908 = pneg %p125
      $region38: #{base_forward.7} parent=35 // pred_check_branch
        %1910 = sbr.rel (%p1908) target = $region40
      $region39: #{base_forward.7} parent=35 // pred_region
        _
      $region40: #{base_forward.7} parent=35 // pred_fallthru
        _
      // Predicated region
      $region41: #{base_forward.7} parent=35 // pred_check
        %p1911 = pneg %p151
      $region42: #{base_forward.7} parent=35 // pred_check_branch
        %1913 = sbr.rel (%p1911) target = $region44
      $region43: #{base_forward.7} parent=35 // pred_region
        _
      $region44: #{base_forward.7} parent=35 // pred_fallthru
        _
      // Predicated region
      $region45: #{base_forward.7} parent=35 // pred_check
        %p1914 = pneg %p177
      $region46: #{base_forward.7} parent=35 // pred_check_branch
        %1916 = sbr.rel (%p1914) target = $region48
      $region47: #{base_forward.7} parent=35 // pred_region
        _
      $region48: #{base_forward.7} parent=35 // pred_fallthru
        _
    $region36: #{base_forward.7} parent=5 // pred_fallthru
      _
    %p1917 = scmp.le.s32.totalorder 2, %s13
    // Predicated region
    $region49: #{base_forward.7} parent=5 // pred_check
      %p1918 = pneg %p1917
    $region50: #{base_forward.7} parent=5 // pred_check_branch
      %1920 = sbr.rel (%p1918) target = $region52
    $region51: #{base_forward.7} parent=5 // pred_region
      %s1921 = ssub.s32 %s13, 2
      // Predicated region
      $region53: #{base_forward.7} parent=51 // pred_check
        %p1922 = pneg %p131
      $region54: #{base_forward.7} parent=51 // pred_check_branch
        %1924 = sbr.rel (%p1922) target = $region56
      $region55: #{base_forward.7} parent=51 // pred_region
        %p1925 = scmp.lt.s32.totalorder %s19, 1
        %s1926 = scalar_select %p1925, %s19, 1
        %s1927 = smul.addr %s1926, 18
        %s1928 = smul.addr %s1927, 4
        %s1929 = scalar_lea.vmem %s4, %s1928
      $region56: #{base_forward.7} parent=51 // pred_fallthru
        _
      // Predicated region
      $region57: #{base_forward.7} parent=51 // pred_check
        %p1930 = pneg %p157
      $region58: #{base_forward.7} parent=51 // pred_check_branch
        %1932 = sbr.rel (%p1930) target = $region60
      $region59: #{base_forward.7} parent=51 // pred_region
        %p1933 = scmp.lt.s32.totalorder %s19, 1
        %s1934 = scalar_select %p1933, %s19, 1
        %s1935 = scalar_lea.vmem %s5, %s1934
      $region60: #{base_forward.7} parent=51 // pred_fallthru
        _
      // Predicated region
      $region61: #{base_forward.7} parent=51 // pred_check
        %p1936 = pneg %p183
      $region62: #{base_forward.7} parent=51 // pred_check_branch
        %1938 = sbr.rel (%p1936) target = $region64
      $region63: #{base_forward.7} parent=51 // pred_region
        %p1939 = scmp.lt.s32.totalorder %s19, 1
        %s1940 = scalar_select %p1939, %s19, 1
        %s1941 = scalar_lea.vmem %s6, %s1940
      $region64: #{base_forward.7} parent=51 // pred_fallthru
        _
    $region52: #{base_forward.7} parent=5 // pred_fallthru
      _
  $region6: #{base_forward.7} parent=0 // loop_footer
    %s17 = sadd.s32 1, %s13
  $region7: #{base_forward.7} parent=0 // loop_footer_branch
    %12 = sbr.rel target = $region3
  $region8: #{base_forward.7} parent=0 // loop_exit
    _

</llo_original>
